<compile_context>
chip_gen: v7x
topology: tpu7x:2x2x1
jax: 0.10.0
libtpu: 0.0.40
codegen_flags: <defaults>
</compile_context>

<pallas_src>
import jax
import jax.numpy as jnp
from jax.experimental import pallas as pl
from jax.experimental.pallas import tpu as pltpu


def _product_type_embed_kernel(ids_ref, x_ref, w_ref, tab_ref, o_ref):
    """One grid step processes a tile of edges.

    ids_ref : (TE, 1)   int32   -- packed pair id: center_type * T + neighbor_type
    x_ref   : (TE, B)   float32 -- radial edge features
    w_ref   : (B,  D)   float32 -- basis_linear weight
    tab_ref : (T*T, D)  float32 -- pair table: row c*T+n = concat(center_tab[c], neighbor_tab[n])
    o_ref   : (TE, D)   float32 -- output edge embedding
    """
    te = ids_ref.shape[0]
    npairs = tab_ref.shape[0]

    # basis = x @ W on the MXU (tiny K/N; this kernel is HBM-bound, not MXU-bound).
    basis = jnp.dot(x_ref[...], w_ref[...], preferred_element_type=jnp.float32)

    # Embedding "gather" as a single one-hot matmul against the fused pair table.
    pair_iota = jax.lax.broadcasted_iota(jnp.int32, (te, npairs), 1)
    onehot = (ids_ref[...] == pair_iota).astype(jnp.float32)            # (TE, T*T)
    type_embed = jnp.dot(onehot, tab_ref[...],
                         preferred_element_type=jnp.float32)            # (TE, D)

    # Single full-block store (concat already realized by the pair table layout).
    o_ref[...] = (type_embed * basis).astype(o_ref.dtype)


def product_type_embedding(edge_types, radial_feats, w_basis, center_tab, neighbor_tab,
                           *, tile_e=2048):
    """edge_types: (2, E) int; radial_feats: (E, B) f32; returns (E, D) f32."""
    E, B = radial_feats.shape
    D = w_basis.shape[1]
    T, half = center_tab.shape
    assert D == 2 * half, "initial_embedding_dim must be 2 * embedding table width"

    # Pair table: pair_tab[c*T + n] = concat(center_tab[c], neighbor_tab[n]).
    # Built once in the wrapper (cheap for the small T typical of atom-type sets).
    pair_tab = jnp.concatenate(
        [jnp.repeat(center_tab, T, axis=0),     # row c*T+n -> center_tab[c]
         jnp.tile(neighbor_tab, (T, 1))],       # row c*T+n -> neighbor_tab[n]
        axis=-1).astype(jnp.float32)            # (T*T, D)

    # Packed pair id, clamped to valid range (matches JAX gather semantics for OOB ids).
    c_ids = jnp.clip(edge_types[0].astype(jnp.int32), 0, T - 1)
    n_ids = jnp.clip(edge_types[1].astype(jnp.int32), 0, T - 1)
    pair_ids = (c_ids * T + n_ids)[:, None]     # (E, 1) int32

    # Pad edge count to a multiple of tile_e; padded rows are sliced off afterwards.
    n_tiles = pl.cdiv(E, tile_e)
    E_pad = n_tiles * tile_e
    if E_pad != E:
        pair_ids = jnp.pad(pair_ids, ((0, E_pad - E), (0, 0)))
        x_padded = jnp.pad(radial_feats, ((0, E_pad - E), (0, 0)))
    else:
        x_padded = radial_feats

    cost = pl.CostEstimate(
        flops=int(2 * E_pad * B * D + 2 * E_pad * (T * T) * D + E_pad * D),
        transcendentals=0,
        bytes_accessed=int(E_pad * (4 + 4 * B + 4 * D) + 4 * B * D + 4 * T * T * D),
    )

    out = pl.pallas_call(
        _product_type_embed_kernel,
        out_shape=jax.ShapeDtypeStruct((E_pad, D), jnp.float32),
        grid_spec=pltpu.PrefetchScalarGridSpec(
            num_scalar_prefetch=0,
            grid=(n_tiles,),
            in_specs=[
                pl.BlockSpec((tile_e, 1), lambda i: (i, 0)),   # packed pair ids
                pl.BlockSpec((tile_e, B), lambda i: (i, 0)),   # radial features
                pl.BlockSpec((B, D), lambda i: (0, 0)),        # basis_linear weight
                pl.BlockSpec((T * T, D), lambda i: (0, 0)),    # fused pair table
            ],
            out_specs=pl.BlockSpec((tile_e, D), lambda i: (i, 0)),
        ),
        compiler_params=pltpu.CompilerParams(dimension_semantics=("parallel",)),
        cost_estimate=cost,
    )(pair_ids, x_padded, w_basis, pair_tab)

    return out[:E]


def _reference(edge_types, radial_feats, w_basis, center_tab, neighbor_tab):
    c = center_tab[edge_types[0]]      # (E, D/2)
    n = neighbor_tab[edge_types[1]]    # (E, D/2)
    type_embed = jnp.concatenate([c, n], axis=-1)
    basis = radial_feats @ w_basis
    return type_embed * basis


if __name__ == "__main__":
    key = jax.random.PRNGKey(0)

    # Module hyperparameters (small, consistent with the forward pass).
    num_types = 4                  # len(type_names)
    initial_embedding_dim = 32     # even, as asserted in the module
    num_basis = 8                  # irreps_in[in_field].num_irreps (radial basis size)
    num_edges = 3000               # deliberately not a multiple of tile_e (exercises padding)

    k1, k2, k3, k4, k5 = jax.random.split(key, 5)

    # Deterministic parameter init (shapes from __init__): Embedding ~ N(0,1),
    # linear weight ~ small normal.
    center_tab = jax.random.normal(k1, (num_types, initial_embedding_dim // 2), jnp.float32)
    neighbor_tab = jax.random.normal(k2, (num_types, initial_embedding_dim // 2), jnp.float32)
    w_basis = (jax.random.normal(k3, (num_basis, initial_embedding_dim), jnp.float32)
               / jnp.sqrt(num_basis))

    # Inputs.
    radial_feats = jax.random.normal(k4, (num_edges, num_basis), jnp.float32)
    edge_types = jax.random.randint(k5, (2, num_edges), 0, num_types, jnp.int32)

    out = product_type_embedding(edge_types, radial_feats, w_basis, center_tab, neighbor_tab)
    out = jax.block_until_ready(out)

    ref = _reference(edge_types, radial_feats, w_basis, center_tab, neighbor_tab)
    assert out.shape == (num_edges, initial_embedding_dim)
    assert jnp.allclose(out, ref, atol=1e-5, rtol=1e-5), "mismatch vs JAX reference"

    print("KERNEL_OK")
</pallas_src>

<mosaic_0001>
module attributes {stable_mosaic.version = 11 : i64} {
  func.func @_product_type_embed_kernel(%arg0: i32, %arg1: memref<2048x1xi32, #tpu.memory_space<vmem>>, %arg2: memref<2048x8xf32, #tpu.memory_space<vmem>>, %arg3: memref<8x32xf32, #tpu.memory_space<vmem>>, %arg4: memref<16x32xf32, #tpu.memory_space<vmem>>, %arg5: memref<2048x32xf32, #tpu.memory_space<vmem>>) attributes {dimension_semantics = [#tpu.dimension_semantics<parallel>], iteration_bounds = array<i64: 2>, scalar_prefetch = 0 : i64, scratch_operands = 0 : i64, tpu.core_type = #tpu.core_type<tc>, window_params = [{transform_indices = @transform_0, window_bounds = array<i64: 2048, 1>}, {transform_indices = @transform_1, window_bounds = array<i64: 2048, 8>}, {pipeline_mode = #tpu.pipeline_mode<synchronous>, transform_indices = @transform_2, window_bounds = array<i64: 8, 32>}, {pipeline_mode = #tpu.pipeline_mode<synchronous>, transform_indices = @transform_3, window_bounds = array<i64: 16, 32>}, {transform_indices = @transform_4, window_bounds = array<i64: 2048, 32>}]} {
    %c0 = arith.constant 0 : index
    %c0_0 = arith.constant 0 : index
    %0 = vector.load %arg2[%c0, %c0_0] : memref<2048x8xf32, #tpu.memory_space<vmem>>, vector<2048x8xf32>
    %c0_1 = arith.constant 0 : index
    %c0_2 = arith.constant 0 : index
    %1 = vector.load %arg3[%c0_1, %c0_2] : memref<8x32xf32, #tpu.memory_space<vmem>>, vector<8x32xf32>
    %cst = arith.constant dense<0.000000e+00> : vector<2048x32xf32>
    %2 = tpu.matmul %0, %1, %cst {dimension_numbers = #tpu.dot_dimension_numbers<[1], [0], [0], [1], [0, 0, 1, 1], [], []>} : vector<2048x8xf32>, vector<8x32xf32>, vector<2048x32xf32> -> vector<2048x32xf32>
    %3 = tpu.iota {dimensions = array<i32: 1>} : vector<2048x16xi32>
    %c0_3 = arith.constant 0 : index
    %c0_4 = arith.constant 0 : index
    %4 = vector.load %arg1[%c0_3, %c0_4] : memref<2048x1xi32, #tpu.memory_space<vmem>>, vector<2048x1xi32>
    %5 = vector.broadcast %4 : vector<2048x1xi32> to vector<2048x16xi32>
    %6 = arith.cmpi eq, %5, %3 : vector<2048x16xi32>
    %7 = arith.extui %6 : vector<2048x16xi1> to vector<2048x16xi32>
    %8 = arith.sitofp %7 : vector<2048x16xi32> to vector<2048x16xf32>
    %c0_5 = arith.constant 0 : index
    %c0_6 = arith.constant 0 : index
    %9 = vector.load %arg4[%c0_5, %c0_6] : memref<16x32xf32, #tpu.memory_space<vmem>>, vector<16x32xf32>
    %cst_7 = arith.constant dense<0.000000e+00> : vector<2048x32xf32>
    %10 = tpu.matmul %8, %9, %cst_7 {dimension_numbers = #tpu.dot_dimension_numbers<[1], [0], [0], [1], [0, 0, 1, 1], [], []>} : vector<2048x16xf32>, vector<16x32xf32>, vector<2048x32xf32> -> vector<2048x32xf32>
    %11 = arith.mulf %10, %2 : vector<2048x32xf32>
    %c0_8 = arith.constant 0 : index
    %c0_9 = arith.constant 0 : index
    %12 = vector.load %arg5[%c0_8, %c0_9] : memref<2048x32xf32, #tpu.memory_space<vmem>>, vector<2048x32xf32>
    tpu.vector_store %arg5[%c0_8, %c0_9], %11 {strides = array<i32>} : memref<2048x32xf32, #tpu.memory_space<vmem>>, vector<2048x32xf32>,
    return
  }
  func.func @transform_0(%arg0: i32) -> (i32, i32) {
    %c0_i32 = arith.constant 0 : i32
    %c0_i32_0 = arith.constant 0 : i32
    return %arg0, %c0_i32 : i32, i32
  }
  func.func @transform_1(%arg0: i32) -> (i32, i32) {
    %c0_i32 = arith.constant 0 : i32
    %c0_i32_0 = arith.constant 0 : i32
    return %arg0, %c0_i32 : i32, i32
  }
  func.func @transform_2(%arg0: i32) -> (i32, i32) {
    %c0_i32 = arith.constant 0 : i32
    %c0_i32_0 = arith.constant 0 : i32
    %c0_i32_1 = arith.constant 0 : i32
    return %c0_i32, %c0_i32_0 : i32, i32
  }
  func.func @transform_3(%arg0: i32) -> (i32, i32) {
    %c0_i32 = arith.constant 0 : i32
    %c0_i32_0 = arith.constant 0 : i32
    %c0_i32_1 = arith.constant 0 : i32
    return %c0_i32, %c0_i32_0 : i32, i32
  }
  func.func @transform_4(%arg0: i32) -> (i32, i32) {
    %c0_i32 = arith.constant 0 : i32
    %c0_i32_0 = arith.constant 0 : i32
    return %arg0, %c0_i32 : i32, i32
  }
}

</mosaic_0001>

<llo_original>
// kernel: tpu_custom_call.1
$region0: #{tpu_custom_call.1}
  #allocation0 [shape = 'u32[]', space=smem, size = 0x4, offset = 0x4, fixed_abs, tag = 'smem constant byte address 0x4 - core index']
  #allocation1 [shape = 'u32[144,128]{1,0:T(1,128)}', space=vmem, size = 0x12000, scoped, tag = 'internal scratch']
  %s0 = inlined_call_operand.vmem [shape: s32[4096,1], index: 0, kind: input, shape index: {}]
  %s1 = inlined_call_operand.vmem [shape: f32[4096,8], index: 1, kind: input, shape index: {}]
  %s2 = inlined_call_operand.vmem [shape: f32[8,32], index: 2, kind: input, shape index: {}]
  %s3 = inlined_call_operand.vmem [shape: f32[16,32], index: 3, kind: input, shape index: {}]
  %s4 = inlined_call_operand.vmem [shape: f32[4096,32], index: 4, kind: output, shape index: {}]
  %s5 = sld [smem:[#allocation0]]
  $region49: #{tpu_custom_call.1} parent=0
    _
  %s7 = ssub.s32 1, %s5
  %s8 = scalar_select 0, %s7, %s5
  loop: start=0, step=1, limit=4
  $region2: #{tpu_custom_call.1} parent=0 // loop_pre_header
    _
  $region3: #{tpu_custom_call.1} parent=0 // loop_header
    %s10 = sphi 0, %s14
    %p11 = scmp.ge.s32.totalorder %s10, 4
    %s20 = sphi 0, %s22
    %s23 = sphi 0, %s20
    %s24 = sphi 0, %s23
    %s40 = sphi 0, %s24
    %s46 = sphi 0, %s48
    %s49 = sphi 0, %s46
    %s50 = sphi 0, %s49
    %s66 = sphi 0, %s50
    %s70 = sphi 0, %s70
    %s72 = sphi 0, %s70
    %s73 = sphi 0, %s72
    %s87 = sphi 0, %s73
    %s91 = sphi 0, %s91
    %s93 = sphi 0, %s91
    %s94 = sphi 0, %s93
    %s108 = sphi 0, %s94
    %s114 = sphi 0, %s116
    %s117 = sphi 0, %s114
    %s118 = sphi 0, %s117
    %s134 = sphi 0, %s118
  $region4: #{tpu_custom_call.1} parent=0 // loop_header_branch
    %13 = sbr.rel (%p11) target = $region8
  $region5: #{tpu_custom_call.1} parent=0 // loop_body
    %s15 = ssub.s32 %s10, 1
    %s16 = ssub.s32 %s10, 2
    %s17 = sadd.s32 %s10, 1
    %s18 = ssub.s32 %s10, %s17
    %p19 = scmp.eq.s32.totalorder %s18, 0
    %s21 = sadd.s32 %s20, 1
    %s22 = scalar_select %p19, %s20, %s21
    %p25 = pneg %p19
    %p26 = scmp.eq.s32.totalorder %s10, 1
    %p27 = por %p25, %p26
    %p28 = scmp.ne.s32.totalorder %s20, %s23
    %p29 = scmp.eq.s32.totalorder %s10, 0
    %p30 = por %p28, %p29
    %p31 = scmp.ne.s32.totalorder %s20, %s23
    %p32 = scmp.eq.s32.totalorder %s15, 1
    %p33 = por %p31, %p32
    %p34 = scmp.ne.s32.totalorder %s23, %s24
    %p35 = scmp.eq.s32.totalorder %s15, 0
    %p36 = por %p34, %p35
    %p37 = scmp.ne.s32.totalorder %s23, %s24
    %p38 = scmp.eq.s32.totalorder %s16, 1
    %p39 = por %p37, %p38
    %p41 = scmp.ne.s32.totalorder %s24, %s40
    %p42 = scmp.eq.s32.totalorder %s16, 0
    %p43 = por %p41, %p42
    %s44 = ssub.s32 %s10, %s17
    %p45 = scmp.eq.s32.totalorder %s44, 0
    %s47 = sadd.s32 %s46, 1
    %s48 = scalar_select %p45, %s46, %s47
    %p51 = pneg %p45
    %p52 = scmp.eq.s32.totalorder %s10, 1
    %p53 = por %p51, %p52
    %p54 = scmp.ne.s32.totalorder %s46, %s49
    %p55 = scmp.eq.s32.totalorder %s10, 0
    %p56 = por %p54, %p55
    %p57 = scmp.ne.s32.totalorder %s46, %s49
    %p58 = scmp.eq.s32.totalorder %s15, 1
    %p59 = por %p57, %p58
    %p60 = scmp.ne.s32.totalorder %s49, %s50
    %p61 = scmp.eq.s32.totalorder %s15, 0
    %p62 = por %p60, %p61
    %p63 = scmp.ne.s32.totalorder %s49, %s50
    %p64 = scmp.eq.s32.totalorder %s16, 1
    %p65 = por %p63, %p64
    %p67 = scmp.ne.s32.totalorder %s50, %s66
    %p68 = scmp.eq.s32.totalorder %s16, 0
    %p69 = por %p67, %p68
    %s71 = sadd.s32 %s70, 1
    %p74 = scmp.eq.s32.totalorder %s10, 1
    %p75 = scmp.ne.s32.totalorder %s70, %s72
    %p76 = scmp.eq.s32.totalorder %s10, 0
    %p77 = por %p75, %p76
    %p78 = scmp.ne.s32.totalorder %s70, %s72
    %p79 = scmp.eq.s32.totalorder %s15, 1
    %p80 = por %p78, %p79
    %p81 = scmp.ne.s32.totalorder %s72, %s73
    %p82 = scmp.eq.s32.totalorder %s15, 0
    %p83 = por %p81, %p82
    %p84 = scmp.ne.s32.totalorder %s72, %s73
    %p85 = scmp.eq.s32.totalorder %s16, 1
    %p86 = por %p84, %p85
    %p88 = scmp.ne.s32.totalorder %s73, %s87
    %p89 = scmp.eq.s32.totalorder %s16, 0
    %p90 = por %p88, %p89
    %s92 = sadd.s32 %s91, 1
    %p95 = scmp.eq.s32.totalorder %s10, 1
    %p96 = scmp.ne.s32.totalorder %s91, %s93
    %p97 = scmp.eq.s32.totalorder %s10, 0
    %p98 = por %p96, %p97
    %p99 = scmp.ne.s32.totalorder %s91, %s93
    %p100 = scmp.eq.s32.totalorder %s15, 1
    %p101 = por %p99, %p100
    %p102 = scmp.ne.s32.totalorder %s93, %s94
    %p103 = scmp.eq.s32.totalorder %s15, 0
    %p104 = por %p102, %p103
    %p105 = scmp.ne.s32.totalorder %s93, %s94
    %p106 = scmp.eq.s32.totalorder %s16, 1
    %p107 = por %p105, %p106
    %p109 = scmp.ne.s32.totalorder %s94, %s108
    %p110 = scmp.eq.s32.totalorder %s16, 0
    %p111 = por %p109, %p110
    %s112 = ssub.s32 %s10, %s17
    %p113 = scmp.eq.s32.totalorder %s112, 0
    %s115 = sadd.s32 %s114, 1
    %s116 = scalar_select %p113, %s114, %s115
    %p119 = pneg %p113
    %p120 = scmp.eq.s32.totalorder %s10, 1
    %p121 = por %p119, %p120
    %p122 = scmp.ne.s32.totalorder %s114, %s117
    %p123 = scmp.eq.s32.totalorder %s10, 0
    %p124 = por %p122, %p123
    %p125 = scmp.ne.s32.totalorder %s114, %s117
    %p126 = scmp.eq.s32.totalorder %s15, 1
    %p127 = por %p125, %p126
    %p128 = scmp.ne.s32.totalorder %s117, %s118
    %p129 = scmp.eq.s32.totalorder %s15, 0
    %p130 = por %p128, %p129
    %p131 = scmp.ne.s32.totalorder %s117, %s118
    %p132 = scmp.eq.s32.totalorder %s16, 1
    %p133 = por %p131, %p132
    %p135 = scmp.ne.s32.totalorder %s118, %s134
    %p136 = scmp.eq.s32.totalorder %s16, 0
    %p137 = por %p135, %p136
    %p138 = scmp.le.s32.totalorder 1, %s10
    %p139 = scmp.lt.s32.totalorder %s10, 3
    %p140 = pnand %p138, %p139
    %p141 = pneg %p140
    // Predicated region
    $region9: #{tpu_custom_call.1} parent=5 // pred_check
      _
    $region10: #{tpu_custom_call.1} parent=5 // pred_check_branch
      %143 = sbr.rel (%p140) target = $region12
    $region11: #{tpu_custom_call.1} parent=5 // pred_region
      %s144 = ssub.s32 %s10, 1
      // Predicated region
      $region13: #{tpu_custom_call.1} parent=11 // pred_check
        %p145 = pneg %p83
      $region14: #{tpu_custom_call.1} parent=11 // pred_check_branch
        %147 = sbr.rel (%p145) target = $region16
      $region15: #{tpu_custom_call.1} parent=11 // pred_region
        _
      $region16: #{tpu_custom_call.1} parent=11 // pred_fallthru
        _
      // Predicated region
      $region17: #{tpu_custom_call.1} parent=11 // pred_check
        %p148 = pneg %p104
      $region18: #{tpu_custom_call.1} parent=11 // pred_check_branch
        %150 = sbr.rel (%p148) target = $region20
      $region19: #{tpu_custom_call.1} parent=11 // pred_region
        _
      $region20: #{tpu_custom_call.1} parent=11 // pred_fallthru
        _
    $region12: #{tpu_custom_call.1} parent=5 // pred_fallthru
      _
    %p151 = scmp.lt.s32.totalorder %s10, 2
    // Predicated region
    $region21: #{tpu_custom_call.1} parent=5 // pred_check
      %p152 = pneg %p151
    $region22: #{tpu_custom_call.1} parent=5 // pred_check_branch
      %154 = sbr.rel (%p152) target = $region24
    $region23: #{tpu_custom_call.1} parent=5 // pred_region
      // Predicated region
      $region25: #{tpu_custom_call.1} parent=23 // pred_check
        %p155 = pneg %p30
      $region26: #{tpu_custom_call.1} parent=23 // pred_check_branch
        %157 = sbr.rel (%p155) target = $region28
      $region27: #{tpu_custom_call.1} parent=23 // pred_region
        %s158 = smul.u32 256, %s10
        %p159 = scmp.lt.s32.totalorder %s158, 511
        %s160 = scalar_select %p159, %s158, 511
        %s161 = smul.addr %s160, 8
        %s162 = scalar_lea.vmem %s0, %s161
        %s163 = smul.u32 256, %s10
      $region28: #{tpu_custom_call.1} parent=23 // pred_fallthru
        _
      // Predicated region
      $region29: #{tpu_custom_call.1} parent=23 // pred_check
        %p164 = pneg %p56
      $region30: #{tpu_custom_call.1} parent=23 // pred_check_branch
        %166 = sbr.rel (%p164) target = $region32
      $region31: #{tpu_custom_call.1} parent=23 // pred_region
        %s167 = smul.u32 256, %s10
        %p168 = scmp.lt.s32.totalorder %s167, 511
        %s169 = scalar_select %p168, %s167, 511
        %s170 = smul.addr %s169, 8
        %s171 = scalar_lea.vmem %s1, %s170
        %s172 = smul.u32 256, %s10
      $region32: #{tpu_custom_call.1} parent=23 // pred_fallthru
        _
    $region24: #{tpu_custom_call.1} parent=5 // pred_fallthru
      _
    %p173 = scmp.le.s32.totalorder 1, %s10
    %p174 = scmp.lt.s32.totalorder %s10, 3
    %p175 = pnand %p173, %p174
    %p176 = pneg %p175
    // Predicated region
    $region33: #{tpu_custom_call.1} parent=5 // pred_check
      _
    $region34: #{tpu_custom_call.1} parent=5 // pred_check_branch
      %178 = sbr.rel (%p175) target = $region36
    $region35: #{tpu_custom_call.1} parent=5 // pred_region
      %s179 = ssub.s32 %s10, 1
      %s180 = smul.u32 256, %s15
      %p181 = scmp.lt.s32.totalorder %s180, 511
      %s182 = scalar_select %p181, %s180, 511
      %s183 = smul.addr %s182, 8
      %s184 = scalar_lea.vmem %s0, %s183
      %p185 = pneg %p36
      %p186 = pneg %p33
      %s187 = smul.u32 256, %s15
      %p188 = scmp.lt.s32.totalorder %s187, 511
      %s189 = scalar_select %p188, %s187, 511
      %s190 = smul.addr %s189, 8
      %s191 = scalar_lea.vmem %s1, %s190
      %p192 = pneg %p62
      %p193 = pneg %p59
      %p194 = pneg %p83
      %p195 = pneg %p80
      %p196 = pneg %p104
      %p197 = pneg %p101
      %p198 = pneg %p130
      %p199 = pneg %p127
      %s200 = smul.u32 256, %s15
      %p201 = scmp.lt.s32.totalorder %s200, 511
      %s202 = scalar_select %p201, %s200, 511
      %s203 = smul.addr %s202, 8
      %s204 = scalar_lea.vmem %s4, %s203
      %s205 = smul.u32 256, %s15
      %p206 = scmp.lt.s32.totalorder %s205, 511
      %s207 = scalar_select %p206, %s205, 511
      %s208 = smul.addr %s207, 8
      %s209 = scalar_lea.vmem %s0, %s208
      %s210 = smul.u32 256, %s15
      %s211 = smul.u32 256, %s15
      %p212 = scmp.lt.s32.totalorder %s211, 511
      %s213 = scalar_select %p212, %s211, 511
      %s214 = smul.addr %s213, 8
      %s215 = scalar_lea.vmem %s1, %s214
      %s216 = smul.u32 256, %s15
      %s217 = smul.u32 256, %s15
      %p218 = scmp.lt.s32.totalorder %s217, 511
      %s219 = scalar_select %p218, %s217, 511
      %s220 = smul.addr %s219, 8
      %s221 = scalar_lea.vmem %s4, %s220
      %s222 = smul.u32 256, %s15
      %v223 = vld [vmem:[%s215] sm:$0xff]
      %v224 = vld [vmem:[%s215 + $0x8] sm:$0xff]
      %v225 = vld [vmem:[%s215 + $0x10] sm:$0xff]
      %v226 = vld [vmem:[%s215 + $0x18] sm:$0xff]
      %v227 = vld [vmem:[%s215 + $0x20] sm:$0xff]
      %v228 = vld [vmem:[%s215 + $0x28] sm:$0xff]
      %v229 = vld [vmem:[%s215 + $0x30] sm:$0xff]
      %v230 = vld [vmem:[%s215 + $0x38] sm:$0xff]
      %v231 = vld [vmem:[%s215 + $0x40] sm:$0xff]
      %v232 = vld [vmem:[%s215 + $0x48] sm:$0xff]
      %v233 = vld [vmem:[%s215 + $0x50] sm:$0xff]
      %v234 = vld [vmem:[%s215 + $0x58] sm:$0xff]
      %v235 = vld [vmem:[%s215 + $0x60] sm:$0xff]
      %v236 = vld [vmem:[%s215 + $0x68] sm:$0xff]
      %v237 = vld [vmem:[%s215 + $0x70] sm:$0xff]
      %v238 = vld [vmem:[%s215 + $0x78] sm:$0xff]
      %v239 = vld [vmem:[%s215 + $0x80] sm:$0xff]
      %v240 = vld [vmem:[%s215 + $0x88] sm:$0xff]
      %v241 = vld [vmem:[%s215 + $0x90] sm:$0xff]
      %v242 = vld [vmem:[%s215 + $0x98] sm:$0xff]
      %v243 = vld [vmem:[%s215 + $0xa0] sm:$0xff]
      %v244 = vld [vmem:[%s215 + $0xa8] sm:$0xff]
      %v245 = vld [vmem:[%s215 + $0xb0] sm:$0xff]
      %v246 = vld [vmem:[%s215 + $0xb8] sm:$0xff]
      %v247 = vld [vmem:[%s215 + $0xc0] sm:$0xff]
      %v248 = vld [vmem:[%s215 + $0xc8] sm:$0xff]
      %v249 = vld [vmem:[%s215 + $0xd0] sm:$0xff]
      %v250 = vld [vmem:[%s215 + $0xd8] sm:$0xff]
      %v251 = vld [vmem:[%s215 + $0xe0] sm:$0xff]
      %v252 = vld [vmem:[%s215 + $0xe8] sm:$0xff]
      %v253 = vld [vmem:[%s215 + $0xf0] sm:$0xff]
      %v254 = vld [vmem:[%s215 + $0xf8] sm:$0xff]
      %v255 = vld [vmem:[%s215 + $0x100] sm:$0xff]
      %v256 = vld [vmem:[%s215 + $0x108] sm:$0xff]
      %v257 = vld [vmem:[%s215 + $0x110] sm:$0xff]
      %v258 = vld [vmem:[%s215 + $0x118] sm:$0xff]
      %v259 = vld [vmem:[%s215 + $0x120] sm:$0xff]
      %v260 = vld [vmem:[%s215 + $0x128] sm:$0xff]
      %v261 = vld [vmem:[%s215 + $0x130] sm:$0xff]
      %v262 = vld [vmem:[%s215 + $0x138] sm:$0xff]
      %v263 = vld [vmem:[%s215 + $0x140] sm:$0xff]
      %v264 = vld [vmem:[%s215 + $0x148] sm:$0xff]
      %v265 = vld [vmem:[%s215 + $0x150] sm:$0xff]
      %v266 = vld [vmem:[%s215 + $0x158] sm:$0xff]
      %v267 = vld [vmem:[%s215 + $0x160] sm:$0xff]
      %v268 = vld [vmem:[%s215 + $0x168] sm:$0xff]
      %v269 = vld [vmem:[%s215 + $0x170] sm:$0xff]
      %v270 = vld [vmem:[%s215 + $0x178] sm:$0xff]
      %v271 = vld [vmem:[%s215 + $0x180] sm:$0xff]
      %v272 = vld [vmem:[%s215 + $0x188] sm:$0xff]
      %v273 = vld [vmem:[%s215 + $0x190] sm:$0xff]
      %v274 = vld [vmem:[%s215 + $0x198] sm:$0xff]
      %v275 = vld [vmem:[%s215 + $0x1a0] sm:$0xff]
      %v276 = vld [vmem:[%s215 + $0x1a8] sm:$0xff]
      %v277 = vld [vmem:[%s215 + $0x1b0] sm:$0xff]
      %v278 = vld [vmem:[%s215 + $0x1b8] sm:$0xff]
      %v279 = vld [vmem:[%s215 + $0x1c0] sm:$0xff]
      %v280 = vld [vmem:[%s215 + $0x1c8] sm:$0xff]
      %v281 = vld [vmem:[%s215 + $0x1d0] sm:$0xff]
      %v282 = vld [vmem:[%s215 + $0x1d8] sm:$0xff]
      %v283 = vld [vmem:[%s215 + $0x1e0] sm:$0xff]
      %v284 = vld [vmem:[%s215 + $0x1e8] sm:$0xff]
      %v285 = vld [vmem:[%s215 + $0x1f0] sm:$0xff]
      %v286 = vld [vmem:[%s215 + $0x1f8] sm:$0xff]
      %v287 = vld [vmem:[%s215 + $0x200] sm:$0xff]
      %v288 = vld [vmem:[%s215 + $0x208] sm:$0xff]
      %v289 = vld [vmem:[%s215 + $0x210] sm:$0xff]
      %v290 = vld [vmem:[%s215 + $0x218] sm:$0xff]
      %v291 = vld [vmem:[%s215 + $0x220] sm:$0xff]
      %v292 = vld [vmem:[%s215 + $0x228] sm:$0xff]
      %v293 = vld [vmem:[%s215 + $0x230] sm:$0xff]
      %v294 = vld [vmem:[%s215 + $0x238] sm:$0xff]
      %v295 = vld [vmem:[%s215 + $0x240] sm:$0xff]
      %v296 = vld [vmem:[%s215 + $0x248] sm:$0xff]
      %v297 = vld [vmem:[%s215 + $0x250] sm:$0xff]
      %v298 = vld [vmem:[%s215 + $0x258] sm:$0xff]
      %v299 = vld [vmem:[%s215 + $0x260] sm:$0xff]
      %v300 = vld [vmem:[%s215 + $0x268] sm:$0xff]
      %v301 = vld [vmem:[%s215 + $0x270] sm:$0xff]
      %v302 = vld [vmem:[%s215 + $0x278] sm:$0xff]
      %v303 = vld [vmem:[%s215 + $0x280] sm:$0xff]
      %v304 = vld [vmem:[%s215 + $0x288] sm:$0xff]
      %v305 = vld [vmem:[%s215 + $0x290] sm:$0xff]
      %v306 = vld [vmem:[%s215 + $0x298] sm:$0xff]
      %v307 = vld [vmem:[%s215 + $0x2a0] sm:$0xff]
      %v308 = vld [vmem:[%s215 + $0x2a8] sm:$0xff]
      %v309 = vld [vmem:[%s215 + $0x2b0] sm:$0xff]
      %v310 = vld [vmem:[%s215 + $0x2b8] sm:$0xff]
      %v311 = vld [vmem:[%s215 + $0x2c0] sm:$0xff]
      %v312 = vld [vmem:[%s215 + $0x2c8] sm:$0xff]
      %v313 = vld [vmem:[%s215 + $0x2d0] sm:$0xff]
      %v314 = vld [vmem:[%s215 + $0x2d8] sm:$0xff]
      %v315 = vld [vmem:[%s215 + $0x2e0] sm:$0xff]
      %v316 = vld [vmem:[%s215 + $0x2e8] sm:$0xff]
      %v317 = vld [vmem:[%s215 + $0x2f0] sm:$0xff]
      %v318 = vld [vmem:[%s215 + $0x2f8] sm:$0xff]
      %v319 = vld [vmem:[%s215 + $0x300] sm:$0xff]
      %v320 = vld [vmem:[%s215 + $0x308] sm:$0xff]
      %v321 = vld [vmem:[%s215 + $0x310] sm:$0xff]
      %v322 = vld [vmem:[%s215 + $0x318] sm:$0xff]
      %v323 = vld [vmem:[%s215 + $0x320] sm:$0xff]
      %v324 = vld [vmem:[%s215 + $0x328] sm:$0xff]
      %v325 = vld [vmem:[%s215 + $0x330] sm:$0xff]
      %v326 = vld [vmem:[%s215 + $0x338] sm:$0xff]
      %v327 = vld [vmem:[%s215 + $0x340] sm:$0xff]
      %v328 = vld [vmem:[%s215 + $0x348] sm:$0xff]
      %v329 = vld [vmem:[%s215 + $0x350] sm:$0xff]
      %v330 = vld [vmem:[%s215 + $0x358] sm:$0xff]
      %v331 = vld [vmem:[%s215 + $0x360] sm:$0xff]
      %v332 = vld [vmem:[%s215 + $0x368] sm:$0xff]
      %v333 = vld [vmem:[%s215 + $0x370] sm:$0xff]
      %v334 = vld [vmem:[%s215 + $0x378] sm:$0xff]
      %v335 = vld [vmem:[%s215 + $0x380] sm:$0xff]
      %v336 = vld [vmem:[%s215 + $0x388] sm:$0xff]
      %v337 = vld [vmem:[%s215 + $0x390] sm:$0xff]
      %v338 = vld [vmem:[%s215 + $0x398] sm:$0xff]
      %v339 = vld [vmem:[%s215 + $0x3a0] sm:$0xff]
      %v340 = vld [vmem:[%s215 + $0x3a8] sm:$0xff]
      %v341 = vld [vmem:[%s215 + $0x3b0] sm:$0xff]
      %v342 = vld [vmem:[%s215 + $0x3b8] sm:$0xff]
      %v343 = vld [vmem:[%s215 + $0x3c0] sm:$0xff]
      %v344 = vld [vmem:[%s215 + $0x3c8] sm:$0xff]
      %v345 = vld [vmem:[%s215 + $0x3d0] sm:$0xff]
      %v346 = vld [vmem:[%s215 + $0x3d8] sm:$0xff]
      %v347 = vld [vmem:[%s215 + $0x3e0] sm:$0xff]
      %v348 = vld [vmem:[%s215 + $0x3e8] sm:$0xff]
      %v349 = vld [vmem:[%s215 + $0x3f0] sm:$0xff]
      %v350 = vld [vmem:[%s215 + $0x3f8] sm:$0xff]
      %v351 = vld [vmem:[%s215 + $0x400] sm:$0xff]
      %v352 = vld [vmem:[%s215 + $0x408] sm:$0xff]
      %v353 = vld [vmem:[%s215 + $0x410] sm:$0xff]
      %v354 = vld [vmem:[%s215 + $0x418] sm:$0xff]
      %v355 = vld [vmem:[%s215 + $0x420] sm:$0xff]
      %v356 = vld [vmem:[%s215 + $0x428] sm:$0xff]
      %v357 = vld [vmem:[%s215 + $0x430] sm:$0xff]
      %v358 = vld [vmem:[%s215 + $0x438] sm:$0xff]
      %v359 = vld [vmem:[%s215 + $0x440] sm:$0xff]
      %v360 = vld [vmem:[%s215 + $0x448] sm:$0xff]
      %v361 = vld [vmem:[%s215 + $0x450] sm:$0xff]
      %v362 = vld [vmem:[%s215 + $0x458] sm:$0xff]
      %v363 = vld [vmem:[%s215 + $0x460] sm:$0xff]
      %v364 = vld [vmem:[%s215 + $0x468] sm:$0xff]
      %v365 = vld [vmem:[%s215 + $0x470] sm:$0xff]
      %v366 = vld [vmem:[%s215 + $0x478] sm:$0xff]
      %v367 = vld [vmem:[%s215 + $0x480] sm:$0xff]
      %v368 = vld [vmem:[%s215 + $0x488] sm:$0xff]
      %v369 = vld [vmem:[%s215 + $0x490] sm:$0xff]
      %v370 = vld [vmem:[%s215 + $0x498] sm:$0xff]
      %v371 = vld [vmem:[%s215 + $0x4a0] sm:$0xff]
      %v372 = vld [vmem:[%s215 + $0x4a8] sm:$0xff]
      %v373 = vld [vmem:[%s215 + $0x4b0] sm:$0xff]
      %v374 = vld [vmem:[%s215 + $0x4b8] sm:$0xff]
      %v375 = vld [vmem:[%s215 + $0x4c0] sm:$0xff]
      %v376 = vld [vmem:[%s215 + $0x4c8] sm:$0xff]
      %v377 = vld [vmem:[%s215 + $0x4d0] sm:$0xff]
      %v378 = vld [vmem:[%s215 + $0x4d8] sm:$0xff]
      %v379 = vld [vmem:[%s215 + $0x4e0] sm:$0xff]
      %v380 = vld [vmem:[%s215 + $0x4e8] sm:$0xff]
      %v381 = vld [vmem:[%s215 + $0x4f0] sm:$0xff]
      %v382 = vld [vmem:[%s215 + $0x4f8] sm:$0xff]
      %v383 = vld [vmem:[%s215 + $0x500] sm:$0xff]
      %v384 = vld [vmem:[%s215 + $0x508] sm:$0xff]
      %v385 = vld [vmem:[%s215 + $0x510] sm:$0xff]
      %v386 = vld [vmem:[%s215 + $0x518] sm:$0xff]
      %v387 = vld [vmem:[%s215 + $0x520] sm:$0xff]
      %v388 = vld [vmem:[%s215 + $0x528] sm:$0xff]
      %v389 = vld [vmem:[%s215 + $0x530] sm:$0xff]
      %v390 = vld [vmem:[%s215 + $0x538] sm:$0xff]
      %v391 = vld [vmem:[%s215 + $0x540] sm:$0xff]
      %v392 = vld [vmem:[%s215 + $0x548] sm:$0xff]
      %v393 = vld [vmem:[%s215 + $0x550] sm:$0xff]
      %v394 = vld [vmem:[%s215 + $0x558] sm:$0xff]
      %v395 = vld [vmem:[%s215 + $0x560] sm:$0xff]
      %v396 = vld [vmem:[%s215 + $0x568] sm:$0xff]
      %v397 = vld [vmem:[%s215 + $0x570] sm:$0xff]
      %v398 = vld [vmem:[%s215 + $0x578] sm:$0xff]
      %v399 = vld [vmem:[%s215 + $0x580] sm:$0xff]
      %v400 = vld [vmem:[%s215 + $0x588] sm:$0xff]
      %v401 = vld [vmem:[%s215 + $0x590] sm:$0xff]
      %v402 = vld [vmem:[%s215 + $0x598] sm:$0xff]
      %v403 = vld [vmem:[%s215 + $0x5a0] sm:$0xff]
      %v404 = vld [vmem:[%s215 + $0x5a8] sm:$0xff]
      %v405 = vld [vmem:[%s215 + $0x5b0] sm:$0xff]
      %v406 = vld [vmem:[%s215 + $0x5b8] sm:$0xff]
      %v407 = vld [vmem:[%s215 + $0x5c0] sm:$0xff]
      %v408 = vld [vmem:[%s215 + $0x5c8] sm:$0xff]
      %v409 = vld [vmem:[%s215 + $0x5d0] sm:$0xff]
      %v410 = vld [vmem:[%s215 + $0x5d8] sm:$0xff]
      %v411 = vld [vmem:[%s215 + $0x5e0] sm:$0xff]
      %v412 = vld [vmem:[%s215 + $0x5e8] sm:$0xff]
      %v413 = vld [vmem:[%s215 + $0x5f0] sm:$0xff]
      %v414 = vld [vmem:[%s215 + $0x5f8] sm:$0xff]
      %v415 = vld [vmem:[%s215 + $0x600] sm:$0xff]
      %v416 = vld [vmem:[%s215 + $0x608] sm:$0xff]
      %v417 = vld [vmem:[%s215 + $0x610] sm:$0xff]
      %v418 = vld [vmem:[%s215 + $0x618] sm:$0xff]
      %v419 = vld [vmem:[%s215 + $0x620] sm:$0xff]
      %v420 = vld [vmem:[%s215 + $0x628] sm:$0xff]
      %v421 = vld [vmem:[%s215 + $0x630] sm:$0xff]
      %v422 = vld [vmem:[%s215 + $0x638] sm:$0xff]
      %v423 = vld [vmem:[%s215 + $0x640] sm:$0xff]
      %v424 = vld [vmem:[%s215 + $0x648] sm:$0xff]
      %v425 = vld [vmem:[%s215 + $0x650] sm:$0xff]
      %v426 = vld [vmem:[%s215 + $0x658] sm:$0xff]
      %v427 = vld [vmem:[%s215 + $0x660] sm:$0xff]
      %v428 = vld [vmem:[%s215 + $0x668] sm:$0xff]
      %v429 = vld [vmem:[%s215 + $0x670] sm:$0xff]
      %v430 = vld [vmem:[%s215 + $0x678] sm:$0xff]
      %v431 = vld [vmem:[%s215 + $0x680] sm:$0xff]
      %v432 = vld [vmem:[%s215 + $0x688] sm:$0xff]
      %v433 = vld [vmem:[%s215 + $0x690] sm:$0xff]
      %v434 = vld [vmem:[%s215 + $0x698] sm:$0xff]
      %v435 = vld [vmem:[%s215 + $0x6a0] sm:$0xff]
      %v436 = vld [vmem:[%s215 + $0x6a8] sm:$0xff]
      %v437 = vld [vmem:[%s215 + $0x6b0] sm:$0xff]
      %v438 = vld [vmem:[%s215 + $0x6b8] sm:$0xff]
      %v439 = vld [vmem:[%s215 + $0x6c0] sm:$0xff]
      %v440 = vld [vmem:[%s215 + $0x6c8] sm:$0xff]
      %v441 = vld [vmem:[%s215 + $0x6d0] sm:$0xff]
      %v442 = vld [vmem:[%s215 + $0x6d8] sm:$0xff]
      %v443 = vld [vmem:[%s215 + $0x6e0] sm:$0xff]
      %v444 = vld [vmem:[%s215 + $0x6e8] sm:$0xff]
      %v445 = vld [vmem:[%s215 + $0x6f0] sm:$0xff]
      %v446 = vld [vmem:[%s215 + $0x6f8] sm:$0xff]
      %v447 = vld [vmem:[%s215 + $0x700] sm:$0xff]
      %v448 = vld [vmem:[%s215 + $0x708] sm:$0xff]
      %v449 = vld [vmem:[%s215 + $0x710] sm:$0xff]
      %v450 = vld [vmem:[%s215 + $0x718] sm:$0xff]
      %v451 = vld [vmem:[%s215 + $0x720] sm:$0xff]
      %v452 = vld [vmem:[%s215 + $0x728] sm:$0xff]
      %v453 = vld [vmem:[%s215 + $0x730] sm:$0xff]
      %v454 = vld [vmem:[%s215 + $0x738] sm:$0xff]
      %v455 = vld [vmem:[%s215 + $0x740] sm:$0xff]
      %v456 = vld [vmem:[%s215 + $0x748] sm:$0xff]
      %v457 = vld [vmem:[%s215 + $0x750] sm:$0xff]
      %v458 = vld [vmem:[%s215 + $0x758] sm:$0xff]
      %v459 = vld [vmem:[%s215 + $0x760] sm:$0xff]
      %v460 = vld [vmem:[%s215 + $0x768] sm:$0xff]
      %v461 = vld [vmem:[%s215 + $0x770] sm:$0xff]
      %v462 = vld [vmem:[%s215 + $0x778] sm:$0xff]
      %v463 = vld [vmem:[%s215 + $0x780] sm:$0xff]
      %v464 = vld [vmem:[%s215 + $0x788] sm:$0xff]
      %v465 = vld [vmem:[%s215 + $0x790] sm:$0xff]
      %v466 = vld [vmem:[%s215 + $0x798] sm:$0xff]
      %v467 = vld [vmem:[%s215 + $0x7a0] sm:$0xff]
      %v468 = vld [vmem:[%s215 + $0x7a8] sm:$0xff]
      %v469 = vld [vmem:[%s215 + $0x7b0] sm:$0xff]
      %v470 = vld [vmem:[%s215 + $0x7b8] sm:$0xff]
      %v471 = vld [vmem:[%s215 + $0x7c0] sm:$0xff]
      %v472 = vld [vmem:[%s215 + $0x7c8] sm:$0xff]
      %v473 = vld [vmem:[%s215 + $0x7d0] sm:$0xff]
      %v474 = vld [vmem:[%s215 + $0x7d8] sm:$0xff]
      %v475 = vld [vmem:[%s215 + $0x7e0] sm:$0xff]
      %v476 = vld [vmem:[%s215 + $0x7e8] sm:$0xff]
      %v477 = vld [vmem:[%s215 + $0x7f0] sm:$0xff]
      %v478 = vld [vmem:[%s215 + $0x7f8] sm:$0xff]
      %v479 = vld [vmem:[%s2] sm:$0xff]
      %vm480 = vcmask 64512
      %v482 = vsel %vm480, %v223, 0
      %v485 = vsel %vm480, %v224, 0
      %v488 = vsel %vm480, %v225, 0
      %v491 = vsel %vm480, %v226, 0
      %v494 = vsel %vm480, %v227, 0
      %v497 = vsel %vm480, %v228, 0
      %v500 = vsel %vm480, %v229, 0
      %v503 = vsel %vm480, %v230, 0
      %v506 = vsel %vm480, %v231, 0
      %v509 = vsel %vm480, %v232, 0
      %v512 = vsel %vm480, %v233, 0
      %v515 = vsel %vm480, %v234, 0
      %v518 = vsel %vm480, %v235, 0
      %v521 = vsel %vm480, %v236, 0
      %v524 = vsel %vm480, %v237, 0
      %v527 = vsel %vm480, %v238, 0
      %v530 = vsel %vm480, %v239, 0
      %v533 = vsel %vm480, %v240, 0
      %v536 = vsel %vm480, %v241, 0
      %v539 = vsel %vm480, %v242, 0
      %v542 = vsel %vm480, %v243, 0
      %v545 = vsel %vm480, %v244, 0
      %v548 = vsel %vm480, %v245, 0
      %v551 = vsel %vm480, %v246, 0
      %v554 = vsel %vm480, %v247, 0
      %v557 = vsel %vm480, %v248, 0
      %v560 = vsel %vm480, %v249, 0
      %v563 = vsel %vm480, %v250, 0
      %v566 = vsel %vm480, %v251, 0
      %v569 = vsel %vm480, %v252, 0
      %v572 = vsel %vm480, %v253, 0
      %v575 = vsel %vm480, %v254, 0
      %v578 = vsel %vm480, %v255, 0
      %v581 = vsel %vm480, %v256, 0
      %v584 = vsel %vm480, %v257, 0
      %v587 = vsel %vm480, %v258, 0
      %v590 = vsel %vm480, %v259, 0
      %v593 = vsel %vm480, %v260, 0
      %v596 = vsel %vm480, %v261, 0
      %v599 = vsel %vm480, %v262, 0
      %v602 = vsel %vm480, %v263, 0
      %v605 = vsel %vm480, %v264, 0
      %v608 = vsel %vm480, %v265, 0
      %v611 = vsel %vm480, %v266, 0
      %v614 = vsel %vm480, %v267, 0
      %v617 = vsel %vm480, %v268, 0
      %v620 = vsel %vm480, %v269, 0
      %v623 = vsel %vm480, %v270, 0
      %v626 = vsel %vm480, %v271, 0
      %v629 = vsel %vm480, %v272, 0
      %v632 = vsel %vm480, %v273, 0
      %v635 = vsel %vm480, %v274, 0
      %v638 = vsel %vm480, %v275, 0
      %v641 = vsel %vm480, %v276, 0
      %v644 = vsel %vm480, %v277, 0
      %v647 = vsel %vm480, %v278, 0
      %v650 = vsel %vm480, %v279, 0
      %v653 = vsel %vm480, %v280, 0
      %v656 = vsel %vm480, %v281, 0
      %v659 = vsel %vm480, %v282, 0
      %v662 = vsel %vm480, %v283, 0
      %v665 = vsel %vm480, %v284, 0
      %v668 = vsel %vm480, %v285, 0
      %v671 = vsel %vm480, %v286, 0
      %v674 = vsel %vm480, %v287, 0
      %v677 = vsel %vm480, %v288, 0
      %v680 = vsel %vm480, %v289, 0
      %v683 = vsel %vm480, %v290, 0
      %v686 = vsel %vm480, %v291, 0
      %v689 = vsel %vm480, %v292, 0
      %v692 = vsel %vm480, %v293, 0
      %v695 = vsel %vm480, %v294, 0
      %v698 = vsel %vm480, %v295, 0
      %v701 = vsel %vm480, %v296, 0
      %v704 = vsel %vm480, %v297, 0
      %v707 = vsel %vm480, %v298, 0
      %v710 = vsel %vm480, %v299, 0
      %v713 = vsel %vm480, %v300, 0
      %v716 = vsel %vm480, %v301, 0
      %v719 = vsel %vm480, %v302, 0
      %v722 = vsel %vm480, %v303, 0
      %v725 = vsel %vm480, %v304, 0
      %v728 = vsel %vm480, %v305, 0
      %v731 = vsel %vm480, %v306, 0
      %v734 = vsel %vm480, %v307, 0
      %v737 = vsel %vm480, %v308, 0
      %v740 = vsel %vm480, %v309, 0
      %v743 = vsel %vm480, %v310, 0
      %v746 = vsel %vm480, %v311, 0
      %v749 = vsel %vm480, %v312, 0
      %v752 = vsel %vm480, %v313, 0
      %v755 = vsel %vm480, %v314, 0
      %v758 = vsel %vm480, %v315, 0
      %v761 = vsel %vm480, %v316, 0
      %v764 = vsel %vm480, %v317, 0
      %v767 = vsel %vm480, %v318, 0
      %v770 = vsel %vm480, %v319, 0
      %v773 = vsel %vm480, %v320, 0
      %v776 = vsel %vm480, %v321, 0
      %v779 = vsel %vm480, %v322, 0
      %v782 = vsel %vm480, %v323, 0
      %v785 = vsel %vm480, %v324, 0
      %v788 = vsel %vm480, %v325, 0
      %v791 = vsel %vm480, %v326, 0
      %v794 = vsel %vm480, %v327, 0
      %v797 = vsel %vm480, %v328, 0
      %v800 = vsel %vm480, %v329, 0
      %v803 = vsel %vm480, %v330, 0
      %v806 = vsel %vm480, %v331, 0
      %v809 = vsel %vm480, %v332, 0
      %v812 = vsel %vm480, %v333, 0
      %v815 = vsel %vm480, %v334, 0
      %v818 = vsel %vm480, %v335, 0
      %v821 = vsel %vm480, %v336, 0
      %v824 = vsel %vm480, %v337, 0
      %v827 = vsel %vm480, %v338, 0
      %v830 = vsel %vm480, %v339, 0
      %v833 = vsel %vm480, %v340, 0
      %v836 = vsel %vm480, %v341, 0
      %v839 = vsel %vm480, %v342, 0
      %v842 = vsel %vm480, %v343, 0
      %v845 = vsel %vm480, %v344, 0
      %v848 = vsel %vm480, %v345, 0
      %v851 = vsel %vm480, %v346, 0
      %v854 = vsel %vm480, %v347, 0
      %v857 = vsel %vm480, %v348, 0
      %v860 = vsel %vm480, %v349, 0
      %v863 = vsel %vm480, %v350, 0
      %v866 = vsel %vm480, %v351, 0
      %v869 = vsel %vm480, %v352, 0
      %v872 = vsel %vm480, %v353, 0
      %v875 = vsel %vm480, %v354, 0
      %v878 = vsel %vm480, %v355, 0
      %v881 = vsel %vm480, %v356, 0
      %v884 = vsel %vm480, %v357, 0
      %v887 = vsel %vm480, %v358, 0
      %v890 = vsel %vm480, %v359, 0
      %v893 = vsel %vm480, %v360, 0
      %v896 = vsel %vm480, %v361, 0
      %v899 = vsel %vm480, %v362, 0
      %v902 = vsel %vm480, %v363, 0
      %v905 = vsel %vm480, %v364, 0
      %v908 = vsel %vm480, %v365, 0
      %v911 = vsel %vm480, %v366, 0
      %v914 = vsel %vm480, %v367, 0
      %v917 = vsel %vm480, %v368, 0
      %v920 = vsel %vm480, %v369, 0
      %v923 = vsel %vm480, %v370, 0
      %v926 = vsel %vm480, %v371, 0
      %v929 = vsel %vm480, %v372, 0
      %v932 = vsel %vm480, %v373, 0
      %v935 = vsel %vm480, %v374, 0
      %v938 = vsel %vm480, %v375, 0
      %v941 = vsel %vm480, %v376, 0
      %v944 = vsel %vm480, %v377, 0
      %v947 = vsel %vm480, %v378, 0
      %v950 = vsel %vm480, %v379, 0
      %v953 = vsel %vm480, %v380, 0
      %v956 = vsel %vm480, %v381, 0
      %v959 = vsel %vm480, %v382, 0
      %v962 = vsel %vm480, %v383, 0
      %v965 = vsel %vm480, %v384, 0
      %v968 = vsel %vm480, %v385, 0
      %v971 = vsel %vm480, %v386, 0
      %v974 = vsel %vm480, %v387, 0
      %v977 = vsel %vm480, %v388, 0
      %v980 = vsel %vm480, %v389, 0
      %v983 = vsel %vm480, %v390, 0
      %v986 = vsel %vm480, %v391, 0
      %v989 = vsel %vm480, %v392, 0
      %v992 = vsel %vm480, %v393, 0
      %v995 = vsel %vm480, %v394, 0
      %v998 = vsel %vm480, %v395, 0
      %v1001 = vsel %vm480, %v396, 0
      %v1004 = vsel %vm480, %v397, 0
      %v1007 = vsel %vm480, %v398, 0
      %v1010 = vsel %vm480, %v399, 0
      %v1013 = vsel %vm480, %v400, 0
      %v1016 = vsel %vm480, %v401, 0
      %v1019 = vsel %vm480, %v402, 0
      %v1022 = vsel %vm480, %v403, 0
      %v1025 = vsel %vm480, %v404, 0
      %v1028 = vsel %vm480, %v405, 0
      %v1031 = vsel %vm480, %v406, 0
      %v1034 = vsel %vm480, %v407, 0
      %v1037 = vsel %vm480, %v408, 0
      %v1040 = vsel %vm480, %v409, 0
      %v1043 = vsel %vm480, %v410, 0
      %v1046 = vsel %vm480, %v411, 0
      %v1049 = vsel %vm480, %v412, 0
      %v1052 = vsel %vm480, %v413, 0
      %v1055 = vsel %vm480, %v414, 0
      %v1058 = vsel %vm480, %v415, 0
      %v1061 = vsel %vm480, %v416, 0
      %v1064 = vsel %vm480, %v417, 0
      %v1067 = vsel %vm480, %v418, 0
      %v1070 = vsel %vm480, %v419, 0
      %v1073 = vsel %vm480, %v420, 0
      %v1076 = vsel %vm480, %v421, 0
      %v1079 = vsel %vm480, %v422, 0
      %v1082 = vsel %vm480, %v423, 0
      %v1085 = vsel %vm480, %v424, 0
      %v1088 = vsel %vm480, %v425, 0
      %v1091 = vsel %vm480, %v426, 0
      %v1094 = vsel %vm480, %v427, 0
      %v1097 = vsel %vm480, %v428, 0
      %v1100 = vsel %vm480, %v429, 0
      %v1103 = vsel %vm480, %v430, 0
      %v1106 = vsel %vm480, %v431, 0
      %v1109 = vsel %vm480, %v432, 0
      %v1112 = vsel %vm480, %v433, 0
      %v1115 = vsel %vm480, %v434, 0
      %v1118 = vsel %vm480, %v435, 0
      %v1121 = vsel %vm480, %v436, 0
      %v1124 = vsel %vm480, %v437, 0
      %v1127 = vsel %vm480, %v438, 0
      %v1130 = vsel %vm480, %v439, 0
      %v1133 = vsel %vm480, %v440, 0
      %v1136 = vsel %vm480, %v441, 0
      %v1139 = vsel %vm480, %v442, 0
      %v1142 = vsel %vm480, %v443, 0
      %v1145 = vsel %vm480, %v444, 0
      %v1148 = vsel %vm480, %v445, 0
      %v1151 = vsel %vm480, %v446, 0
      %v1154 = vsel %vm480, %v447, 0
      %v1157 = vsel %vm480, %v448, 0
      %v1160 = vsel %vm480, %v449, 0
      %v1163 = vsel %vm480, %v450, 0
      %v1166 = vsel %vm480, %v451, 0
      %v1169 = vsel %vm480, %v452, 0
      %v1172 = vsel %vm480, %v453, 0
      %v1175 = vsel %vm480, %v454, 0
      %v1178 = vsel %vm480, %v455, 0
      %v1181 = vsel %vm480, %v456, 0
      %v1184 = vsel %vm480, %v457, 0
      %v1187 = vsel %vm480, %v458, 0
      %v1190 = vsel %vm480, %v459, 0
      %v1193 = vsel %vm480, %v460, 0
      %v1196 = vsel %vm480, %v461, 0
      %v1199 = vsel %vm480, %v462, 0
      %v1202 = vsel %vm480, %v463, 0
      %v1205 = vsel %vm480, %v464, 0
      %v1208 = vsel %vm480, %v465, 0
      %v1211 = vsel %vm480, %v466, 0
      %v1214 = vsel %vm480, %v467, 0
      %v1217 = vsel %vm480, %v468, 0
      %v1220 = vsel %vm480, %v469, 0
      %v1223 = vsel %vm480, %v470, 0
      %v1226 = vsel %vm480, %v471, 0
      %v1229 = vsel %vm480, %v472, 0
      %v1232 = vsel %vm480, %v473, 0
      %v1235 = vsel %vm480, %v474, 0
      %v1238 = vsel %vm480, %v475, 0
      %v1241 = vsel %vm480, %v476, 0
      %v1244 = vsel %vm480, %v477, 0
      %v1247 = vsel %vm480, %v478, 0
      %1249 = vmatprep.subr.mxu0 0.0
      %1250 = vmatpush1.msra.mxu0 %v479
      %1251 = vmatprep.subr.mxu0 0.0
      %1252 = vmatpush1.msra.mxu0 0.0
      %1253 = vmatprep.subr.mxu0 0.0
      %1254 = vmatpush1.msra.mxu0 0.0
      %1255 = vmatprep.subr.mxu0 0.0
      %1256 = vmatpush1.msra.mxu0 0.0
      %1257 = vmatprep.subr.mxu0 0.0
      %1258 = vmatpush1.msra.mxu0 0.0
      %1259 = vmatprep.subr.mxu0 0.0
      %1260 = vmatpush1.msra.mxu0 0.0
      %1261 = vmatprep.subr.mxu0 0.0
      %1262 = vmatpush1.msra.mxu0 0.0
      %1263 = vmatprep.subr.mxu0 0.0
      %1264 = vmatpush1.msra.mxu0 0.0
      %1265 = vmatprep.subr.mxu0 0.0
      %1266 = vmatpush1.msra.mxu0 0.0
      %1267 = vmatprep.subr.mxu0 0.0
      %1268 = vmatpush1.msra.mxu0 0.0
      %1269 = vmatprep.subr.mxu0 0.0
      %1270 = vmatpush1.msra.mxu0 0.0
      %1271 = vmatprep.subr.mxu0 0.0
      %1272 = vmatpush1.msra.mxu0 0.0
      %1273 = vmatprep.subr.mxu0 0.0
      %1274 = vmatpush1.msra.mxu0 0.0
      %1275 = vmatprep.subr.mxu0 0.0
      %1276 = vmatpush1.msra.mxu0 0.0
      %1277 = vmatprep.subr.mxu0 0.0
      %1278 = vmatpush1.msra.mxu0 0.0
      %1279 = vmatprep.subr.mxu0 0.0
      %1280 = vmatpush1.msra.mxu0 0.0
      %1281 = vmatprep.subr.mxu0 0.0
      %1282 = vmatpush1.msra.mxu0 0.0
      %1283 = vmatprep.subr.mxu0 0.0
      %1284 = vmatpush1.msra.mxu0 0.0
      %1285 = vmatprep.subr.mxu0 0.0
      %1286 = vmatpush1.msra.mxu0 0.0
      %1287 = vmatprep.subr.mxu0 0.0
      %1288 = vmatpush1.msra.mxu0 0.0
      %1289 = vmatprep.subr.mxu0 0.0
      %1290 = vmatpush1.msra.mxu0 0.0
      %1291 = vmatprep.subr.mxu0 0.0
      %1292 = vmatpush1.msra.mxu0 0.0
      %1293 = vmatprep.subr.mxu0 0.0
      %1294 = vmatpush1.msra.mxu0 0.0
      %1295 = vmatprep.subr.mxu0 0.0
      %1296 = vmatpush1.msra.mxu0 0.0
      %1297 = vmatprep.subr.mxu0 0.0
      %1298 = vmatpush1.msra.mxu0 0.0
      %1299 = vmatprep.subr.mxu0 0.0
      %1300 = vmatpush1.msra.mxu0 0.0
      %1301 = vmatprep.subr.mxu0 0.0
      %1302 = vmatpush1.msra.mxu0 0.0
      %1303 = vmatprep.subr.mxu0 0.0
      %1304 = vmatpush1.msra.mxu0 0.0
      %1305 = vmatprep.subr.mxu0 0.0
      %1306 = vmatpush1.msra.mxu0 0.0
      %1307 = vmatprep.subr.mxu0 0.0
      %1308 = vmatpush1.msra.mxu0 0.0
      %1309 = vmatprep.subr.mxu0 0.0
      %1310 = vmatpush1.msra.mxu0 0.0
      %1311 = vmatprep.subr.mxu0 0.0
      %1312 = vmatpush1.msra.mxu0 0.0
      %1313 = vmatprep.mubr.f32.mxu0 0.0
      %1314 = vmatmul.mubr.f32.gmra.mrb[0].mxu0 %v482
      %v1315 = vpop.f32.mrb[0].mxu0
      %v1316 = vadd.f32 0.0, %v1315
      %v1317 = vpop.f32.mrb[0].mxu0
      %1318 = vmatprep.mubr.f32.mxu0 0.0
      %1319 = vmatmul.mubr.f32.gmra.mrb[0].mxu0 %v485
      %v1320 = vpop.f32.mrb[0].mxu0
      %v1321 = vadd.f32 0.0, %v1320
      %v1322 = vpop.f32.mrb[0].mxu0
      %1323 = vmatprep.mubr.f32.mxu0 0.0
      %1324 = vmatmul.mubr.f32.gmra.mrb[0].mxu0 %v488
      %v1325 = vpop.f32.mrb[0].mxu0
      %v1326 = vadd.f32 0.0, %v1325
      %v1327 = vpop.f32.mrb[0].mxu0
      %1328 = vmatprep.mubr.f32.mxu0 0.0
      %1329 = vmatmul.mubr.f32.gmra.mrb[0].mxu0 %v491
      %v1330 = vpop.f32.mrb[0].mxu0
      %v1331 = vadd.f32 0.0, %v1330
      %v1332 = vpop.f32.mrb[0].mxu0
      %1333 = vmatprep.mubr.f32.mxu0 0.0
      %1334 = vmatmul.mubr.f32.gmra.mrb[0].mxu0 %v494
      %v1335 = vpop.f32.mrb[0].mxu0
      %v1336 = vadd.f32 0.0, %v1335
      %v1337 = vpop.f32.mrb[0].mxu0
      %1338 = vmatprep.mubr.f32.mxu0 0.0
      %1339 = vmatmul.mubr.f32.gmra.mrb[0].mxu0 %v497
      %v1340 = vpop.f32.mrb[0].mxu0
      %v1341 = vadd.f32 0.0, %v1340
      %v1342 = vpop.f32.mrb[0].mxu0
      %1343 = vmatprep.mubr.f32.mxu0 0.0
      %1344 = vmatmul.mubr.f32.gmra.mrb[0].mxu0 %v500
      %v1345 = vpop.f32.mrb[0].mxu0
      %v1346 = vadd.f32 0.0, %v1345
      %v1347 = vpop.f32.mrb[0].mxu0
      %1348 = vmatprep.mubr.f32.mxu0 0.0
      %1349 = vmatmul.mubr.f32.gmra.mrb[0].mxu0 %v503
      %v1350 = vpop.f32.mrb[0].mxu0
      %v1351 = vadd.f32 0.0, %v1350
      %v1352 = vpop.f32.mrb[0].mxu0
      %1353 = vmatprep.mubr.f32.mxu0 0.0
      %1354 = vmatmul.mubr.f32.gmra.mrb[0].mxu0 %v506
      %v1355 = vpop.f32.mrb[0].mxu0
      %v1356 = vadd.f32 0.0, %v1355
      %v1357 = vpop.f32.mrb[0].mxu0
      %1358 = vmatprep.mubr.f32.mxu0 0.0
      %1359 = vmatmul.mubr.f32.gmra.mrb[0].mxu0 %v509
      %v1360 = vpop.f32.mrb[0].mxu0
      %v1361 = vadd.f32 0.0, %v1360
      %v1362 = vpop.f32.mrb[0].mxu0
      %1363 = vmatprep.mubr.f32.mxu0 0.0
      %1364 = vmatmul.mubr.f32.gmra.mrb[0].mxu0 %v512
      %v1365 = vpop.f32.mrb[0].mxu0
      %v1366 = vadd.f32 0.0, %v1365
      %v1367 = vpop.f32.mrb[0].mxu0
      %1368 = vmatprep.mubr.f32.mxu0 0.0
      %1369 = vmatmul.mubr.f32.gmra.mrb[0].mxu0 %v515
      %v1370 = vpop.f32.mrb[0].mxu0
      %v1371 = vadd.f32 0.0, %v1370
      %v1372 = vpop.f32.mrb[0].mxu0
      %1373 = vmatprep.mubr.f32.mxu0 0.0
      %1374 = vmatmul.mubr.f32.gmra.mrb[0].mxu0 %v518
      %v1375 = vpop.f32.mrb[0].mxu0
      %v1376 = vadd.f32 0.0, %v1375
      %v1377 = vpop.f32.mrb[0].mxu0
      %1378 = vmatprep.mubr.f32.mxu0 0.0
      %1379 = vmatmul.mubr.f32.gmra.mrb[0].mxu0 %v521
      %v1380 = vpop.f32.mrb[0].mxu0
      %v1381 = vadd.f32 0.0, %v1380
      %v1382 = vpop.f32.mrb[0].mxu0
      %1383 = vmatprep.mubr.f32.mxu0 0.0
      %1384 = vmatmul.mubr.f32.gmra.mrb[0].mxu0 %v524
      %v1385 = vpop.f32.mrb[0].mxu0
      %v1386 = vadd.f32 0.0, %v1385
      %v1387 = vpop.f32.mrb[0].mxu0
      %1388 = vmatprep.mubr.f32.mxu0 0.0
      %1389 = vmatmul.mubr.f32.gmra.mrb[0].mxu0 %v527
      %v1390 = vpop.f32.mrb[0].mxu0
      %v1391 = vadd.f32 0.0, %v1390
      %v1392 = vpop.f32.mrb[0].mxu0
      %1393 = vmatprep.mubr.f32.mxu0 0.0
      %1394 = vmatmul.mubr.f32.gmra.mrb[0].mxu0 %v530
      %v1395 = vpop.f32.mrb[0].mxu0
      %v1396 = vadd.f32 0.0, %v1395
      %v1397 = vpop.f32.mrb[0].mxu0
      %1398 = vmatprep.mubr.f32.mxu0 0.0
      %1399 = vmatmul.mubr.f32.gmra.mrb[0].mxu0 %v533
      %v1400 = vpop.f32.mrb[0].mxu0
      %v1401 = vadd.f32 0.0, %v1400
      %v1402 = vpop.f32.mrb[0].mxu0
      %1403 = vmatprep.mubr.f32.mxu0 0.0
      %1404 = vmatmul.mubr.f32.gmra.mrb[0].mxu0 %v536
      %v1405 = vpop.f32.mrb[0].mxu0
      %v1406 = vadd.f32 0.0, %v1405
      %v1407 = vpop.f32.mrb[0].mxu0
      %1408 = vmatprep.mubr.f32.mxu0 0.0
      %1409 = vmatmul.mubr.f32.gmra.mrb[0].mxu0 %v539
      %v1410 = vpop.f32.mrb[0].mxu0
      %v1411 = vadd.f32 0.0, %v1410
      %v1412 = vpop.f32.mrb[0].mxu0
      %1413 = vmatprep.mubr.f32.mxu0 0.0
      %1414 = vmatmul.mubr.f32.gmra.mrb[0].mxu0 %v542
      %v1415 = vpop.f32.mrb[0].mxu0
      %v1416 = vadd.f32 0.0, %v1415
      %v1417 = vpop.f32.mrb[0].mxu0
      %1418 = vmatprep.mubr.f32.mxu0 0.0
      %1419 = vmatmul.mubr.f32.gmra.mrb[0].mxu0 %v545
      %v1420 = vpop.f32.mrb[0].mxu0
      %v1421 = vadd.f32 0.0, %v1420
      %v1422 = vpop.f32.mrb[0].mxu0
      %1423 = vmatprep.mubr.f32.mxu0 0.0
      %1424 = vmatmul.mubr.f32.gmra.mrb[0].mxu0 %v548
      %v1425 = vpop.f32.mrb[0].mxu0
      %v1426 = vadd.f32 0.0, %v1425
      %v1427 = vpop.f32.mrb[0].mxu0
      %1428 = vmatprep.mubr.f32.mxu0 0.0
      %1429 = vmatmul.mubr.f32.gmra.mrb[0].mxu0 %v551
      %v1430 = vpop.f32.mrb[0].mxu0
      %v1431 = vadd.f32 0.0, %v1430
      %v1432 = vpop.f32.mrb[0].mxu0
      %1433 = vmatprep.mubr.f32.mxu0 0.0
      %1434 = vmatmul.mubr.f32.gmra.mrb[0].mxu0 %v554
      %v1435 = vpop.f32.mrb[0].mxu0
      %v1436 = vadd.f32 0.0, %v1435
      %v1437 = vpop.f32.mrb[0].mxu0
      %1438 = vmatprep.mubr.f32.mxu0 0.0
      %1439 = vmatmul.mubr.f32.gmra.mrb[0].mxu0 %v557
      %v1440 = vpop.f32.mrb[0].mxu0
      %v1441 = vadd.f32 0.0, %v1440
      %v1442 = vpop.f32.mrb[0].mxu0
      %1443 = vmatprep.mubr.f32.mxu0 0.0
      %1444 = vmatmul.mubr.f32.gmra.mrb[0].mxu0 %v560
      %v1445 = vpop.f32.mrb[0].mxu0
      %v1446 = vadd.f32 0.0, %v1445
      %v1447 = vpop.f32.mrb[0].mxu0
      %1448 = vmatprep.mubr.f32.mxu0 0.0
      %1449 = vmatmul.mubr.f32.gmra.mrb[0].mxu0 %v563
      %v1450 = vpop.f32.mrb[0].mxu0
      %v1451 = vadd.f32 0.0, %v1450
      %v1452 = vpop.f32.mrb[0].mxu0
      %1453 = vmatprep.mubr.f32.mxu0 0.0
      %1454 = vmatmul.mubr.f32.gmra.mrb[0].mxu0 %v566
      %v1455 = vpop.f32.mrb[0].mxu0
      %v1456 = vadd.f32 0.0, %v1455
      %v1457 = vpop.f32.mrb[0].mxu0
      %1458 = vmatprep.mubr.f32.mxu0 0.0
      %1459 = vmatmul.mubr.f32.gmra.mrb[0].mxu0 %v569
      %v1460 = vpop.f32.mrb[0].mxu0
      %v1461 = vadd.f32 0.0, %v1460
      %v1462 = vpop.f32.mrb[0].mxu0
      %1463 = vmatprep.mubr.f32.mxu0 0.0
      %1464 = vmatmul.mubr.f32.gmra.mrb[0].mxu0 %v572
      %v1465 = vpop.f32.mrb[0].mxu0
      %v1466 = vadd.f32 0.0, %v1465
      %v1467 = vpop.f32.mrb[0].mxu0
      %1468 = vmatprep.mubr.f32.mxu0 0.0
      %1469 = vmatmul.mubr.f32.gmra.mrb[0].mxu0 %v575
      %v1470 = vpop.f32.mrb[0].mxu0
      %v1471 = vadd.f32 0.0, %v1470
      %v1472 = vpop.f32.mrb[0].mxu0
      %1473 = vmatprep.mubr.f32.mxu0 0.0
      %1474 = vmatmul.mubr.f32.gmra.mrb[0].mxu0 %v578
      %v1475 = vpop.f32.mrb[0].mxu0
      %v1476 = vadd.f32 0.0, %v1475
      %v1477 = vpop.f32.mrb[0].mxu0
      %1478 = vmatprep.mubr.f32.mxu0 0.0
      %1479 = vmatmul.mubr.f32.gmra.mrb[0].mxu0 %v581
      %v1480 = vpop.f32.mrb[0].mxu0
      %v1481 = vadd.f32 0.0, %v1480
      %v1482 = vpop.f32.mrb[0].mxu0
      %1483 = vmatprep.mubr.f32.mxu0 0.0
      %1484 = vmatmul.mubr.f32.gmra.mrb[0].mxu0 %v584
      %v1485 = vpop.f32.mrb[0].mxu0
      %v1486 = vadd.f32 0.0, %v1485
      %v1487 = vpop.f32.mrb[0].mxu0
      %1488 = vmatprep.mubr.f32.mxu0 0.0
      %1489 = vmatmul.mubr.f32.gmra.mrb[0].mxu0 %v587
      %v1490 = vpop.f32.mrb[0].mxu0
      %v1491 = vadd.f32 0.0, %v1490
      %v1492 = vpop.f32.mrb[0].mxu0
      %1493 = vmatprep.mubr.f32.mxu0 0.0
      %1494 = vmatmul.mubr.f32.gmra.mrb[0].mxu0 %v590
      %v1495 = vpop.f32.mrb[0].mxu0
      %v1496 = vadd.f32 0.0, %v1495
      %v1497 = vpop.f32.mrb[0].mxu0
      %1498 = vmatprep.mubr.f32.mxu0 0.0
      %1499 = vmatmul.mubr.f32.gmra.mrb[0].mxu0 %v593
      %v1500 = vpop.f32.mrb[0].mxu0
      %v1501 = vadd.f32 0.0, %v1500
      %v1502 = vpop.f32.mrb[0].mxu0
      %1503 = vmatprep.mubr.f32.mxu0 0.0
      %1504 = vmatmul.mubr.f32.gmra.mrb[0].mxu0 %v596
      %v1505 = vpop.f32.mrb[0].mxu0
      %v1506 = vadd.f32 0.0, %v1505
      %v1507 = vpop.f32.mrb[0].mxu0
      %1508 = vmatprep.mubr.f32.mxu0 0.0
      %1509 = vmatmul.mubr.f32.gmra.mrb[0].mxu0 %v599
      %v1510 = vpop.f32.mrb[0].mxu0
      %v1511 = vadd.f32 0.0, %v1510
      %v1512 = vpop.f32.mrb[0].mxu0
      %1513 = vmatprep.mubr.f32.mxu0 0.0
      %1514 = vmatmul.mubr.f32.gmra.mrb[0].mxu0 %v602
      %v1515 = vpop.f32.mrb[0].mxu0
      %v1516 = vadd.f32 0.0, %v1515
      %v1517 = vpop.f32.mrb[0].mxu0
      %1518 = vmatprep.mubr.f32.mxu0 0.0
      %1519 = vmatmul.mubr.f32.gmra.mrb[0].mxu0 %v605
      %v1520 = vpop.f32.mrb[0].mxu0
      %v1521 = vadd.f32 0.0, %v1520
      %v1522 = vpop.f32.mrb[0].mxu0
      %1523 = vmatprep.mubr.f32.mxu0 0.0
      %1524 = vmatmul.mubr.f32.gmra.mrb[0].mxu0 %v608
      %v1525 = vpop.f32.mrb[0].mxu0
      %v1526 = vadd.f32 0.0, %v1525
      %v1527 = vpop.f32.mrb[0].mxu0
      %1528 = vmatprep.mubr.f32.mxu0 0.0
      %1529 = vmatmul.mubr.f32.gmra.mrb[0].mxu0 %v611
      %v1530 = vpop.f32.mrb[0].mxu0
      %v1531 = vadd.f32 0.0, %v1530
      %v1532 = vpop.f32.mrb[0].mxu0
      %1533 = vmatprep.mubr.f32.mxu0 0.0
      %1534 = vmatmul.mubr.f32.gmra.mrb[0].mxu0 %v614
      %v1535 = vpop.f32.mrb[0].mxu0
      %v1536 = vadd.f32 0.0, %v1535
      %v1537 = vpop.f32.mrb[0].mxu0
      %1538 = vmatprep.mubr.f32.mxu0 0.0
      %1539 = vmatmul.mubr.f32.gmra.mrb[0].mxu0 %v617
      %v1540 = vpop.f32.mrb[0].mxu0
      %v1541 = vadd.f32 0.0, %v1540
      %v1542 = vpop.f32.mrb[0].mxu0
      %1543 = vmatprep.mubr.f32.mxu0 0.0
      %1544 = vmatmul.mubr.f32.gmra.mrb[0].mxu0 %v620
      %v1545 = vpop.f32.mrb[0].mxu0
      %v1546 = vadd.f32 0.0, %v1545
      %v1547 = vpop.f32.mrb[0].mxu0
      %1548 = vmatprep.mubr.f32.mxu0 0.0
      %1549 = vmatmul.mubr.f32.gmra.mrb[0].mxu0 %v623
      %v1550 = vpop.f32.mrb[0].mxu0
      %v1551 = vadd.f32 0.0, %v1550
      %v1552 = vpop.f32.mrb[0].mxu0
      %1553 = vmatprep.mubr.f32.mxu0 0.0
      %1554 = vmatmul.mubr.f32.gmra.mrb[0].mxu0 %v626
      %v1555 = vpop.f32.mrb[0].mxu0
      %v1556 = vadd.f32 0.0, %v1555
      %v1557 = vpop.f32.mrb[0].mxu0
      %1558 = vmatprep.mubr.f32.mxu0 0.0
      %1559 = vmatmul.mubr.f32.gmra.mrb[0].mxu0 %v629
      %v1560 = vpop.f32.mrb[0].mxu0
      %v1561 = vadd.f32 0.0, %v1560
      %v1562 = vpop.f32.mrb[0].mxu0
      %1563 = vmatprep.mubr.f32.mxu0 0.0
      %1564 = vmatmul.mubr.f32.gmra.mrb[0].mxu0 %v632
      %v1565 = vpop.f32.mrb[0].mxu0
      %v1566 = vadd.f32 0.0, %v1565
      %v1567 = vpop.f32.mrb[0].mxu0
      %1568 = vmatprep.mubr.f32.mxu0 0.0
      %1569 = vmatmul.mubr.f32.gmra.mrb[0].mxu0 %v635
      %v1570 = vpop.f32.mrb[0].mxu0
      %v1571 = vadd.f32 0.0, %v1570
      %v1572 = vpop.f32.mrb[0].mxu0
      %1573 = vmatprep.mubr.f32.mxu0 0.0
      %1574 = vmatmul.mubr.f32.gmra.mrb[0].mxu0 %v638
      %v1575 = vpop.f32.mrb[0].mxu0
      %v1576 = vadd.f32 0.0, %v1575
      %v1577 = vpop.f32.mrb[0].mxu0
      %1578 = vmatprep.mubr.f32.mxu0 0.0
      %1579 = vmatmul.mubr.f32.gmra.mrb[0].mxu0 %v641
      %v1580 = vpop.f32.mrb[0].mxu0
      %v1581 = vadd.f32 0.0, %v1580
      %v1582 = vpop.f32.mrb[0].mxu0
      %1583 = vmatprep.mubr.f32.mxu0 0.0
      %1584 = vmatmul.mubr.f32.gmra.mrb[0].mxu0 %v644
      %v1585 = vpop.f32.mrb[0].mxu0
      %v1586 = vadd.f32 0.0, %v1585
      %v1587 = vpop.f32.mrb[0].mxu0
      %1588 = vmatprep.mubr.f32.mxu0 0.0
      %1589 = vmatmul.mubr.f32.gmra.mrb[0].mxu0 %v647
      %v1590 = vpop.f32.mrb[0].mxu0
      %v1591 = vadd.f32 0.0, %v1590
      %v1592 = vpop.f32.mrb[0].mxu0
      %1593 = vmatprep.mubr.f32.mxu0 0.0
      %1594 = vmatmul.mubr.f32.gmra.mrb[0].mxu0 %v650
      %v1595 = vpop.f32.mrb[0].mxu0
      %v1596 = vadd.f32 0.0, %v1595
      %v1597 = vpop.f32.mrb[0].mxu0
      %1598 = vmatprep.mubr.f32.mxu0 0.0
      %1599 = vmatmul.mubr.f32.gmra.mrb[0].mxu0 %v653
      %v1600 = vpop.f32.mrb[0].mxu0
      %v1601 = vadd.f32 0.0, %v1600
      %v1602 = vpop.f32.mrb[0].mxu0
      %1603 = vmatprep.mubr.f32.mxu0 0.0
      %1604 = vmatmul.mubr.f32.gmra.mrb[0].mxu0 %v656
      %v1605 = vpop.f32.mrb[0].mxu0
      %v1606 = vadd.f32 0.0, %v1605
      %v1607 = vpop.f32.mrb[0].mxu0
      %1608 = vmatprep.mubr.f32.mxu0 0.0
      %1609 = vmatmul.mubr.f32.gmra.mrb[0].mxu0 %v659
      %v1610 = vpop.f32.mrb[0].mxu0
      %v1611 = vadd.f32 0.0, %v1610
      %v1612 = vpop.f32.mrb[0].mxu0
      %1613 = vmatprep.mubr.f32.mxu0 0.0
      %1614 = vmatmul.mubr.f32.gmra.mrb[0].mxu0 %v662
      %v1615 = vpop.f32.mrb[0].mxu0
      %v1616 = vadd.f32 0.0, %v1615
      %v1617 = vpop.f32.mrb[0].mxu0
      %1618 = vmatprep.mubr.f32.mxu0 0.0
      %1619 = vmatmul.mubr.f32.gmra.mrb[0].mxu0 %v665
      %v1620 = vpop.f32.mrb[0].mxu0
      %v1621 = vadd.f32 0.0, %v1620
      %v1622 = vpop.f32.mrb[0].mxu0
      %1623 = vmatprep.mubr.f32.mxu0 0.0
      %1624 = vmatmul.mubr.f32.gmra.mrb[0].mxu0 %v668
      %v1625 = vpop.f32.mrb[0].mxu0
      %v1626 = vadd.f32 0.0, %v1625
      %v1627 = vpop.f32.mrb[0].mxu0
      %1628 = vmatprep.mubr.f32.mxu0 0.0
      %1629 = vmatmul.mubr.f32.gmra.mrb[0].mxu0 %v671
      %v1630 = vpop.f32.mrb[0].mxu0
      %v1631 = vadd.f32 0.0, %v1630
      %v1632 = vpop.f32.mrb[0].mxu0
      %1633 = vmatprep.mubr.f32.mxu0 0.0
      %1634 = vmatmul.mubr.f32.gmra.mrb[0].mxu0 %v674
      %v1635 = vpop.f32.mrb[0].mxu0
      %v1636 = vadd.f32 0.0, %v1635
      %v1637 = vpop.f32.mrb[0].mxu0
      %1638 = vmatprep.mubr.f32.mxu0 0.0
      %1639 = vmatmul.mubr.f32.gmra.mrb[0].mxu0 %v677
      %v1640 = vpop.f32.mrb[0].mxu0
      %v1641 = vadd.f32 0.0, %v1640
      %v1642 = vpop.f32.mrb[0].mxu0
      %1643 = vmatprep.mubr.f32.mxu0 0.0
      %1644 = vmatmul.mubr.f32.gmra.mrb[0].mxu0 %v680
      %v1645 = vpop.f32.mrb[0].mxu0
      %v1646 = vadd.f32 0.0, %v1645
      %v1647 = vpop.f32.mrb[0].mxu0
      %1648 = vmatprep.mubr.f32.mxu0 0.0
      %1649 = vmatmul.mubr.f32.gmra.mrb[0].mxu0 %v683
      %v1650 = vpop.f32.mrb[0].mxu0
      %v1651 = vadd.f32 0.0, %v1650
      %v1652 = vpop.f32.mrb[0].mxu0
      %1653 = vmatprep.mubr.f32.mxu0 0.0
      %1654 = vmatmul.mubr.f32.gmra.mrb[0].mxu0 %v686
      %v1655 = vpop.f32.mrb[0].mxu0
      %v1656 = vadd.f32 0.0, %v1655
      %v1657 = vpop.f32.mrb[0].mxu0
      %1658 = vmatprep.mubr.f32.mxu0 0.0
      %1659 = vmatmul.mubr.f32.gmra.mrb[0].mxu0 %v689
      %v1660 = vpop.f32.mrb[0].mxu0
      %v1661 = vadd.f32 0.0, %v1660
      %v1662 = vpop.f32.mrb[0].mxu0
      %1663 = vmatprep.mubr.f32.mxu0 0.0
      %1664 = vmatmul.mubr.f32.gmra.mrb[0].mxu0 %v692
      %v1665 = vpop.f32.mrb[0].mxu0
      %v1666 = vadd.f32 0.0, %v1665
      %v1667 = vpop.f32.mrb[0].mxu0
      %1668 = vmatprep.mubr.f32.mxu0 0.0
      %1669 = vmatmul.mubr.f32.gmra.mrb[0].mxu0 %v695
      %v1670 = vpop.f32.mrb[0].mxu0
      %v1671 = vadd.f32 0.0, %v1670
      %v1672 = vpop.f32.mrb[0].mxu0
      %1673 = vmatprep.mubr.f32.mxu0 0.0
      %1674 = vmatmul.mubr.f32.gmra.mrb[0].mxu0 %v698
      %v1675 = vpop.f32.mrb[0].mxu0
      %v1676 = vadd.f32 0.0, %v1675
      %v1677 = vpop.f32.mrb[0].mxu0
      %1678 = vmatprep.mubr.f32.mxu0 0.0
      %1679 = vmatmul.mubr.f32.gmra.mrb[0].mxu0 %v701
      %v1680 = vpop.f32.mrb[0].mxu0
      %v1681 = vadd.f32 0.0, %v1680
      %v1682 = vpop.f32.mrb[0].mxu0
      %1683 = vmatprep.mubr.f32.mxu0 0.0
      %1684 = vmatmul.mubr.f32.gmra.mrb[0].mxu0 %v704
      %v1685 = vpop.f32.mrb[0].mxu0
      %v1686 = vadd.f32 0.0, %v1685
      %v1687 = vpop.f32.mrb[0].mxu0
      %1688 = vmatprep.mubr.f32.mxu0 0.0
      %1689 = vmatmul.mubr.f32.gmra.mrb[0].mxu0 %v707
      %v1690 = vpop.f32.mrb[0].mxu0
      %v1691 = vadd.f32 0.0, %v1690
      %v1692 = vpop.f32.mrb[0].mxu0
      %1693 = vmatprep.mubr.f32.mxu0 0.0
      %1694 = vmatmul.mubr.f32.gmra.mrb[0].mxu0 %v710
      %v1695 = vpop.f32.mrb[0].mxu0
      %v1696 = vadd.f32 0.0, %v1695
      %v1697 = vpop.f32.mrb[0].mxu0
      %1698 = vmatprep.mubr.f32.mxu0 0.0
      %1699 = vmatmul.mubr.f32.gmra.mrb[0].mxu0 %v713
      %v1700 = vpop.f32.mrb[0].mxu0
      %v1701 = vadd.f32 0.0, %v1700
      %v1702 = vpop.f32.mrb[0].mxu0
      %1703 = vmatprep.mubr.f32.mxu0 0.0
      %1704 = vmatmul.mubr.f32.gmra.mrb[0].mxu0 %v716
      %v1705 = vpop.f32.mrb[0].mxu0
      %v1706 = vadd.f32 0.0, %v1705
      %v1707 = vpop.f32.mrb[0].mxu0
      %1708 = vmatprep.mubr.f32.mxu0 0.0
      %1709 = vmatmul.mubr.f32.gmra.mrb[0].mxu0 %v719
      %v1710 = vpop.f32.mrb[0].mxu0
      %v1711 = vadd.f32 0.0, %v1710
      %v1712 = vpop.f32.mrb[0].mxu0
      %1713 = vmatprep.mubr.f32.mxu0 0.0
      %1714 = vmatmul.mubr.f32.gmra.mrb[0].mxu0 %v722
      %v1715 = vpop.f32.mrb[0].mxu0
      %v1716 = vadd.f32 0.0, %v1715
      %v1717 = vpop.f32.mrb[0].mxu0
      %1718 = vmatprep.mubr.f32.mxu0 0.0
      %1719 = vmatmul.mubr.f32.gmra.mrb[0].mxu0 %v725
      %v1720 = vpop.f32.mrb[0].mxu0
      %v1721 = vadd.f32 0.0, %v1720
      %v1722 = vpop.f32.mrb[0].mxu0
      %1723 = vmatprep.mubr.f32.mxu0 0.0
      %1724 = vmatmul.mubr.f32.gmra.mrb[0].mxu0 %v728
      %v1725 = vpop.f32.mrb[0].mxu0
      %v1726 = vadd.f32 0.0, %v1725
      %v1727 = vpop.f32.mrb[0].mxu0
      %1728 = vmatprep.mubr.f32.mxu0 0.0
      %1729 = vmatmul.mubr.f32.gmra.mrb[0].mxu0 %v731
      %v1730 = vpop.f32.mrb[0].mxu0
      %v1731 = vadd.f32 0.0, %v1730
      %v1732 = vpop.f32.mrb[0].mxu0
      %1733 = vmatprep.mubr.f32.mxu0 0.0
      %1734 = vmatmul.mubr.f32.gmra.mrb[0].mxu0 %v734
      %v1735 = vpop.f32.mrb[0].mxu0
      %v1736 = vadd.f32 0.0, %v1735
      %v1737 = vpop.f32.mrb[0].mxu0
      %1738 = vmatprep.mubr.f32.mxu0 0.0
      %1739 = vmatmul.mubr.f32.gmra.mrb[0].mxu0 %v737
      %v1740 = vpop.f32.mrb[0].mxu0
      %v1741 = vadd.f32 0.0, %v1740
      %v1742 = vpop.f32.mrb[0].mxu0
      %1743 = vmatprep.mubr.f32.mxu0 0.0
      %1744 = vmatmul.mubr.f32.gmra.mrb[0].mxu0 %v740
      %v1745 = vpop.f32.mrb[0].mxu0
      %v1746 = vadd.f32 0.0, %v1745
      %v1747 = vpop.f32.mrb[0].mxu0
      %1748 = vmatprep.mubr.f32.mxu0 0.0
      %1749 = vmatmul.mubr.f32.gmra.mrb[0].mxu0 %v743
      %v1750 = vpop.f32.mrb[0].mxu0
      %v1751 = vadd.f32 0.0, %v1750
      %v1752 = vpop.f32.mrb[0].mxu0
      %1753 = vmatprep.mubr.f32.mxu0 0.0
      %1754 = vmatmul.mubr.f32.gmra.mrb[0].mxu0 %v746
      %v1755 = vpop.f32.mrb[0].mxu0
      %v1756 = vadd.f32 0.0, %v1755
      %v1757 = vpop.f32.mrb[0].mxu0
      %1758 = vmatprep.mubr.f32.mxu0 0.0
      %1759 = vmatmul.mubr.f32.gmra.mrb[0].mxu0 %v749
      %v1760 = vpop.f32.mrb[0].mxu0
      %v1761 = vadd.f32 0.0, %v1760
      %v1762 = vpop.f32.mrb[0].mxu0
      %1763 = vmatprep.mubr.f32.mxu0 0.0
      %1764 = vmatmul.mubr.f32.gmra.mrb[0].mxu0 %v752
      %v1765 = vpop.f32.mrb[0].mxu0
      %v1766 = vadd.f32 0.0, %v1765
      %v1767 = vpop.f32.mrb[0].mxu0
      %1768 = vmatprep.mubr.f32.mxu0 0.0
      %1769 = vmatmul.mubr.f32.gmra.mrb[0].mxu0 %v755
      %v1770 = vpop.f32.mrb[0].mxu0
      %v1771 = vadd.f32 0.0, %v1770
      %v1772 = vpop.f32.mrb[0].mxu0
      %1773 = vmatprep.mubr.f32.mxu0 0.0
      %1774 = vmatmul.mubr.f32.gmra.mrb[0].mxu0 %v758
      %v1775 = vpop.f32.mrb[0].mxu0
      %v1776 = vadd.f32 0.0, %v1775
      %v1777 = vpop.f32.mrb[0].mxu0
      %1778 = vmatprep.mubr.f32.mxu0 0.0
      %1779 = vmatmul.mubr.f32.gmra.mrb[0].mxu0 %v761
      %v1780 = vpop.f32.mrb[0].mxu0
      %v1781 = vadd.f32 0.0, %v1780
      %v1782 = vpop.f32.mrb[0].mxu0
      %1783 = vmatprep.mubr.f32.mxu0 0.0
      %1784 = vmatmul.mubr.f32.gmra.mrb[0].mxu0 %v764
      %v1785 = vpop.f32.mrb[0].mxu0
      %v1786 = vadd.f32 0.0, %v1785
      %v1787 = vpop.f32.mrb[0].mxu0
      %1788 = vmatprep.mubr.f32.mxu0 0.0
      %1789 = vmatmul.mubr.f32.gmra.mrb[0].mxu0 %v767
      %v1790 = vpop.f32.mrb[0].mxu0
      %v1791 = vadd.f32 0.0, %v1790
      %v1792 = vpop.f32.mrb[0].mxu0
      %1793 = vmatprep.mubr.f32.mxu0 0.0
      %1794 = vmatmul.mubr.f32.gmra.mrb[0].mxu0 %v770
      %v1795 = vpop.f32.mrb[0].mxu0
      %v1796 = vadd.f32 0.0, %v1795
      %v1797 = vpop.f32.mrb[0].mxu0
      %1798 = vmatprep.mubr.f32.mxu0 0.0
      %1799 = vmatmul.mubr.f32.gmra.mrb[0].mxu0 %v773
      %v1800 = vpop.f32.mrb[0].mxu0
      %v1801 = vadd.f32 0.0, %v1800
      %v1802 = vpop.f32.mrb[0].mxu0
      %1803 = vmatprep.mubr.f32.mxu0 0.0
      %1804 = vmatmul.mubr.f32.gmra.mrb[0].mxu0 %v776
      %v1805 = vpop.f32.mrb[0].mxu0
      %v1806 = vadd.f32 0.0, %v1805
      %v1807 = vpop.f32.mrb[0].mxu0
      %1808 = vmatprep.mubr.f32.mxu0 0.0
      %1809 = vmatmul.mubr.f32.gmra.mrb[0].mxu0 %v779
      %v1810 = vpop.f32.mrb[0].mxu0
      %v1811 = vadd.f32 0.0, %v1810
      %v1812 = vpop.f32.mrb[0].mxu0
      %1813 = vmatprep.mubr.f32.mxu0 0.0
      %1814 = vmatmul.mubr.f32.gmra.mrb[0].mxu0 %v782
      %v1815 = vpop.f32.mrb[0].mxu0
      %v1816 = vadd.f32 0.0, %v1815
      %v1817 = vpop.f32.mrb[0].mxu0
      %1818 = vmatprep.mubr.f32.mxu0 0.0
      %1819 = vmatmul.mubr.f32.gmra.mrb[0].mxu0 %v785
      %v1820 = vpop.f32.mrb[0].mxu0
      %v1821 = vadd.f32 0.0, %v1820
      %v1822 = vpop.f32.mrb[0].mxu0
      %1823 = vmatprep.mubr.f32.mxu0 0.0
      %1824 = vmatmul.mubr.f32.gmra.mrb[0].mxu0 %v788
      %v1825 = vpop.f32.mrb[0].mxu0
      %v1826 = vadd.f32 0.0, %v1825
      %v1827 = vpop.f32.mrb[0].mxu0
      %1828 = vmatprep.mubr.f32.mxu0 0.0
      %1829 = vmatmul.mubr.f32.gmra.mrb[0].mxu0 %v791
      %v1830 = vpop.f32.mrb[0].mxu0
      %v1831 = vadd.f32 0.0, %v1830
      %v1832 = vpop.f32.mrb[0].mxu0
      %1833 = vmatprep.mubr.f32.mxu0 0.0
      %1834 = vmatmul.mubr.f32.gmra.mrb[0].mxu0 %v794
      %v1835 = vpop.f32.mrb[0].mxu0
      %v1836 = vadd.f32 0.0, %v1835
      %v1837 = vpop.f32.mrb[0].mxu0
      %1838 = vmatprep.mubr.f32.mxu0 0.0
      %1839 = vmatmul.mubr.f32.gmra.mrb[0].mxu0 %v797
      %v1840 = vpop.f32.mrb[0].mxu0
      %v1841 = vadd.f32 0.0, %v1840
      %v1842 = vpop.f32.mrb[0].mxu0
      %1843 = vmatprep.mubr.f32.mxu0 0.0
      %1844 = vmatmul.mubr.f32.gmra.mrb[0].mxu0 %v800
      %v1845 = vpop.f32.mrb[0].mxu0
      %v1846 = vadd.f32 0.0, %v1845
      %v1847 = vpop.f32.mrb[0].mxu0
      %1848 = vmatprep.mubr.f32.mxu0 0.0
      %1849 = vmatmul.mubr.f32.gmra.mrb[0].mxu0 %v803
      %v1850 = vpop.f32.mrb[0].mxu0
      %v1851 = vadd.f32 0.0, %v1850
      %v1852 = vpop.f32.mrb[0].mxu0
      %1853 = vmatprep.mubr.f32.mxu0 0.0
      %1854 = vmatmul.mubr.f32.gmra.mrb[0].mxu0 %v806
      %v1855 = vpop.f32.mrb[0].mxu0
      %v1856 = vadd.f32 0.0, %v1855
      %v1857 = vpop.f32.mrb[0].mxu0
      %1858 = vmatprep.mubr.f32.mxu0 0.0
      %1859 = vmatmul.mubr.f32.gmra.mrb[0].mxu0 %v809
      %v1860 = vpop.f32.mrb[0].mxu0
      %v1861 = vadd.f32 0.0, %v1860
      %v1862 = vpop.f32.mrb[0].mxu0
      %1863 = vmatprep.mubr.f32.mxu0 0.0
      %1864 = vmatmul.mubr.f32.gmra.mrb[0].mxu0 %v812
      %v1865 = vpop.f32.mrb[0].mxu0
      %v1866 = vadd.f32 0.0, %v1865
      %v1867 = vpop.f32.mrb[0].mxu0
      %1868 = vmatprep.mubr.f32.mxu0 0.0
      %1869 = vmatmul.mubr.f32.gmra.mrb[0].mxu0 %v815
      %v1870 = vpop.f32.mrb[0].mxu0
      %v1871 = vadd.f32 0.0, %v1870
      %v1872 = vpop.f32.mrb[0].mxu0
      %1873 = vmatprep.mubr.f32.mxu0 0.0
      %1874 = vmatmul.mubr.f32.gmra.mrb[0].mxu0 %v818
      %v1875 = vpop.f32.mrb[0].mxu0
      %v1876 = vadd.f32 0.0, %v1875
      %v1877 = vpop.f32.mrb[0].mxu0
      %1878 = vmatprep.mubr.f32.mxu0 0.0
      %1879 = vmatmul.mubr.f32.gmra.mrb[0].mxu0 %v821
      %v1880 = vpop.f32.mrb[0].mxu0
      %v1881 = vadd.f32 0.0, %v1880
      %v1882 = vpop.f32.mrb[0].mxu0
      %1883 = vmatprep.mubr.f32.mxu0 0.0
      %1884 = vmatmul.mubr.f32.gmra.mrb[0].mxu0 %v824
      %v1885 = vpop.f32.mrb[0].mxu0
      %v1886 = vadd.f32 0.0, %v1885
      %v1887 = vpop.f32.mrb[0].mxu0
      %1888 = vmatprep.mubr.f32.mxu0 0.0
      %1889 = vmatmul.mubr.f32.gmra.mrb[0].mxu0 %v827
      %v1890 = vpop.f32.mrb[0].mxu0
      %v1891 = vadd.f32 0.0, %v1890
      %v1892 = vpop.f32.mrb[0].mxu0
      %1893 = vmatprep.mubr.f32.mxu0 0.0
      %1894 = vmatmul.mubr.f32.gmra.mrb[0].mxu0 %v830
      %v1895 = vpop.f32.mrb[0].mxu0
      %v1896 = vadd.f32 0.0, %v1895
      %v1897 = vpop.f32.mrb[0].mxu0
      %1898 = vmatprep.mubr.f32.mxu0 0.0
      %1899 = vmatmul.mubr.f32.gmra.mrb[0].mxu0 %v833
      %v1900 = vpop.f32.mrb[0].mxu0
      %v1901 = vadd.f32 0.0, %v1900
      %v1902 = vpop.f32.mrb[0].mxu0
      %1903 = vmatprep.mubr.f32.mxu0 0.0
      %1904 = vmatmul.mubr.f32.gmra.mrb[0].mxu0 %v836
      %v1905 = vpop.f32.mrb[0].mxu0
      %v1906 = vadd.f32 0.0, %v1905
      %v1907 = vpop.f32.mrb[0].mxu0
      %1908 = vmatprep.mubr.f32.mxu0 0.0
      %1909 = vmatmul.mubr.f32.gmra.mrb[0].mxu0 %v839
      %v1910 = vpop.f32.mrb[0].mxu0
      %v1911 = vadd.f32 0.0, %v1910
      %v1912 = vpop.f32.mrb[0].mxu0
      %1913 = vmatprep.mubr.f32.mxu0 0.0
      %1914 = vmatmul.mubr.f32.gmra.mrb[0].mxu0 %v842
      %v1915 = vpop.f32.mrb[0].mxu0
      %v1916 = vadd.f32 0.0, %v1915
      %v1917 = vpop.f32.mrb[0].mxu0
      %1918 = vmatprep.mubr.f32.mxu0 0.0
      %1919 = vmatmul.mubr.f32.gmra.mrb[0].mxu0 %v845
      %v1920 = vpop.f32.mrb[0].mxu0
      %v1921 = vadd.f32 0.0, %v1920
      %v1922 = vpop.f32.mrb[0].mxu0
      %1923 = vmatprep.mubr.f32.mxu0 0.0
      %1924 = vmatmul.mubr.f32.gmra.mrb[0].mxu0 %v848
      %v1925 = vpop.f32.mrb[0].mxu0
      %v1926 = vadd.f32 0.0, %v1925
      %v1927 = vpop.f32.mrb[0].mxu0
      %1928 = vmatprep.mubr.f32.mxu0 0.0
      %1929 = vmatmul.mubr.f32.gmra.mrb[0].mxu0 %v851
      %v1930 = vpop.f32.mrb[0].mxu0
      %v1931 = vadd.f32 0.0, %v1930
      %v1932 = vpop.f32.mrb[0].mxu0
      %1933 = vmatprep.mubr.f32.mxu0 0.0
      %1934 = vmatmul.mubr.f32.gmra.mrb[0].mxu0 %v854
      %v1935 = vpop.f32.mrb[0].mxu0
      %v1936 = vadd.f32 0.0, %v1935
      %v1937 = vpop.f32.mrb[0].mxu0
      %1938 = vmatprep.mubr.f32.mxu0 0.0
      %1939 = vmatmul.mubr.f32.gmra.mrb[0].mxu0 %v857
      %v1940 = vpop.f32.mrb[0].mxu0
      %v1941 = vadd.f32 0.0, %v1940
      %v1942 = vpop.f32.mrb[0].mxu0
      %1943 = vmatprep.mubr.f32.mxu0 0.0
      %1944 = vmatmul.mubr.f32.gmra.mrb[0].mxu0 %v860
      %v1945 = vpop.f32.mrb[0].mxu0
      %v1946 = vadd.f32 0.0, %v1945
      %v1947 = vpop.f32.mrb[0].mxu0
      %1948 = vmatprep.mubr.f32.mxu0 0.0
      %1949 = vmatmul.mubr.f32.gmra.mrb[0].mxu0 %v863
      %v1950 = vpop.f32.mrb[0].mxu0
      %v1951 = vadd.f32 0.0, %v1950
      %v1952 = vpop.f32.mrb[0].mxu0
      %1953 = vmatprep.mubr.f32.mxu0 0.0
      %1954 = vmatmul.mubr.f32.gmra.mrb[0].mxu0 %v866
      %v1955 = vpop.f32.mrb[0].mxu0
      %v1956 = vadd.f32 0.0, %v1955
      %v1957 = vpop.f32.mrb[0].mxu0
      %1958 = vmatprep.mubr.f32.mxu0 0.0
      %1959 = vmatmul.mubr.f32.gmra.mrb[0].mxu0 %v869
      %v1960 = vpop.f32.mrb[0].mxu0
      %v1961 = vadd.f32 0.0, %v1960
      %v1962 = vpop.f32.mrb[0].mxu0
      %1963 = vmatprep.mubr.f32.mxu0 0.0
      %1964 = vmatmul.mubr.f32.gmra.mrb[0].mxu0 %v872
      %v1965 = vpop.f32.mrb[0].mxu0
      %v1966 = vadd.f32 0.0, %v1965
      %v1967 = vpop.f32.mrb[0].mxu0
      %1968 = vmatprep.mubr.f32.mxu0 0.0
      %1969 = vmatmul.mubr.f32.gmra.mrb[0].mxu0 %v875
      %v1970 = vpop.f32.mrb[0].mxu0
      %v1971 = vadd.f32 0.0, %v1970
      %v1972 = vpop.f32.mrb[0].mxu0
      %1973 = vmatprep.mubr.f32.mxu0 0.0
      %1974 = vmatmul.mubr.f32.gmra.mrb[0].mxu0 %v878
      %v1975 = vpop.f32.mrb[0].mxu0
      %v1976 = vadd.f32 0.0, %v1975
      %v1977 = vpop.f32.mrb[0].mxu0
      %1978 = vmatprep.mubr.f32.mxu0 0.0
      %1979 = vmatmul.mubr.f32.gmra.mrb[0].mxu0 %v881
      %v1980 = vpop.f32.mrb[0].mxu0
      %v1981 = vadd.f32 0.0, %v1980
      %v1982 = vpop.f32.mrb[0].mxu0
      %1983 = vmatprep.mubr.f32.mxu0 0.0
      %1984 = vmatmul.mubr.f32.gmra.mrb[0].mxu0 %v884
      %v1985 = vpop.f32.mrb[0].mxu0
      %v1986 = vadd.f32 0.0, %v1985
      %v1987 = vpop.f32.mrb[0].mxu0
      %1988 = vmatprep.mubr.f32.mxu0 0.0
      %1989 = vmatmul.mubr.f32.gmra.mrb[0].mxu0 %v887
      %v1990 = vpop.f32.mrb[0].mxu0
      %v1991 = vadd.f32 0.0, %v1990
      %v1992 = vpop.f32.mrb[0].mxu0
      %1993 = vmatprep.mubr.f32.mxu0 0.0
      %1994 = vmatmul.mubr.f32.gmra.mrb[0].mxu0 %v890
      %v1995 = vpop.f32.mrb[0].mxu0
      %v1996 = vadd.f32 0.0, %v1995
      %v1997 = vpop.f32.mrb[0].mxu0
      %1998 = vmatprep.mubr.f32.mxu0 0.0
      %1999 = vmatmul.mubr.f32.gmra.mrb[0].mxu0 %v893
      %v2000 = vpop.f32.mrb[0].mxu0
      %v2001 = vadd.f32 0.0, %v2000
      %v2002 = vpop.f32.mrb[0].mxu0
      %2003 = vmatprep.mubr.f32.mxu0 0.0
      %2004 = vmatmul.mubr.f32.gmra.mrb[0].mxu0 %v896
      %v2005 = vpop.f32.mrb[0].mxu0
      %v2006 = vadd.f32 0.0, %v2005
      %v2007 = vpop.f32.mrb[0].mxu0
      %2008 = vmatprep.mubr.f32.mxu0 0.0
      %2009 = vmatmul.mubr.f32.gmra.mrb[0].mxu0 %v899
      %v2010 = vpop.f32.mrb[0].mxu0
      %v2011 = vadd.f32 0.0, %v2010
      %v2012 = vpop.f32.mrb[0].mxu0
      %2013 = vmatprep.mubr.f32.mxu0 0.0
      %2014 = vmatmul.mubr.f32.gmra.mrb[0].mxu0 %v902
      %v2015 = vpop.f32.mrb[0].mxu0
      %v2016 = vadd.f32 0.0, %v2015
      %v2017 = vpop.f32.mrb[0].mxu0
      %2018 = vmatprep.mubr.f32.mxu0 0.0
      %2019 = vmatmul.mubr.f32.gmra.mrb[0].mxu0 %v905
      %v2020 = vpop.f32.mrb[0].mxu0
      %v2021 = vadd.f32 0.0, %v2020
      %v2022 = vpop.f32.mrb[0].mxu0
      %2023 = vmatprep.mubr.f32.mxu0 0.0
      %2024 = vmatmul.mubr.f32.gmra.mrb[0].mxu0 %v908
      %v2025 = vpop.f32.mrb[0].mxu0
      %v2026 = vadd.f32 0.0, %v2025
      %v2027 = vpop.f32.mrb[0].mxu0
      %2028 = vmatprep.mubr.f32.mxu0 0.0
      %2029 = vmatmul.mubr.f32.gmra.mrb[0].mxu0 %v911
      %v2030 = vpop.f32.mrb[0].mxu0
      %v2031 = vadd.f32 0.0, %v2030
      %v2032 = vpop.f32.mrb[0].mxu0
      %2033 = vmatprep.mubr.f32.mxu0 0.0
      %2034 = vmatmul.mubr.f32.gmra.mrb[0].mxu0 %v914
      %v2035 = vpop.f32.mrb[0].mxu0
      %v2036 = vadd.f32 0.0, %v2035
      %v2037 = vpop.f32.mrb[0].mxu0
      %2038 = vmatprep.mubr.f32.mxu0 0.0
      %2039 = vmatmul.mubr.f32.gmra.mrb[0].mxu0 %v917
      %v2040 = vpop.f32.mrb[0].mxu0
      %v2041 = vadd.f32 0.0, %v2040
      %v2042 = vpop.f32.mrb[0].mxu0
      %2043 = vmatprep.mubr.f32.mxu0 0.0
      %2044 = vmatmul.mubr.f32.gmra.mrb[0].mxu0 %v920
      %v2045 = vpop.f32.mrb[0].mxu0
      %v2046 = vadd.f32 0.0, %v2045
      %v2047 = vpop.f32.mrb[0].mxu0
      %2048 = vmatprep.mubr.f32.mxu0 0.0
      %2049 = vmatmul.mubr.f32.gmra.mrb[0].mxu0 %v923
      %v2050 = vpop.f32.mrb[0].mxu0
      %v2051 = vadd.f32 0.0, %v2050
      %v2052 = vpop.f32.mrb[0].mxu0
      %2053 = vmatprep.mubr.f32.mxu0 0.0
      %2054 = vmatmul.mubr.f32.gmra.mrb[0].mxu0 %v926
      %v2055 = vpop.f32.mrb[0].mxu0
      %v2056 = vadd.f32 0.0, %v2055
      %v2057 = vpop.f32.mrb[0].mxu0
      %2058 = vmatprep.mubr.f32.mxu0 0.0
      %2059 = vmatmul.mubr.f32.gmra.mrb[0].mxu0 %v929
      %v2060 = vpop.f32.mrb[0].mxu0
      %v2061 = vadd.f32 0.0, %v2060
      %v2062 = vpop.f32.mrb[0].mxu0
      %2063 = vmatprep.mubr.f32.mxu0 0.0
      %2064 = vmatmul.mubr.f32.gmra.mrb[0].mxu0 %v932
      %v2065 = vpop.f32.mrb[0].mxu0
      %v2066 = vadd.f32 0.0, %v2065
      %v2067 = vpop.f32.mrb[0].mxu0
      %2068 = vmatprep.mubr.f32.mxu0 0.0
      %2069 = vmatmul.mubr.f32.gmra.mrb[0].mxu0 %v935
      %v2070 = vpop.f32.mrb[0].mxu0
      %v2071 = vadd.f32 0.0, %v2070
      %v2072 = vpop.f32.mrb[0].mxu0
      %2073 = vmatprep.mubr.f32.mxu0 0.0
      %2074 = vmatmul.mubr.f32.gmra.mrb[0].mxu0 %v938
      %v2075 = vpop.f32.mrb[0].mxu0
      %v2076 = vadd.f32 0.0, %v2075
      %v2077 = vpop.f32.mrb[0].mxu0
      %2078 = vmatprep.mubr.f32.mxu0 0.0
      %2079 = vmatmul.mubr.f32.gmra.mrb[0].mxu0 %v941
      %v2080 = vpop.f32.mrb[0].mxu0
      %v2081 = vadd.f32 0.0, %v2080
      %v2082 = vpop.f32.mrb[0].mxu0
      %2083 = vmatprep.mubr.f32.mxu0 0.0
      %2084 = vmatmul.mubr.f32.gmra.mrb[0].mxu0 %v944
      %v2085 = vpop.f32.mrb[0].mxu0
      %v2086 = vadd.f32 0.0, %v2085
      %v2087 = vpop.f32.mrb[0].mxu0
      %2088 = vmatprep.mubr.f32.mxu0 0.0
      %2089 = vmatmul.mubr.f32.gmra.mrb[0].mxu0 %v947
      %v2090 = vpop.f32.mrb[0].mxu0
      %v2091 = vadd.f32 0.0, %v2090
      %v2092 = vpop.f32.mrb[0].mxu0
      %2093 = vmatprep.mubr.f32.mxu0 0.0
      %2094 = vmatmul.mubr.f32.gmra.mrb[0].mxu0 %v950
      %v2095 = vpop.f32.mrb[0].mxu0
      %v2096 = vadd.f32 0.0, %v2095
      %v2097 = vpop.f32.mrb[0].mxu0
      %2098 = vmatprep.mubr.f32.mxu0 0.0
      %2099 = vmatmul.mubr.f32.gmra.mrb[0].mxu0 %v953
      %v2100 = vpop.f32.mrb[0].mxu0
      %v2101 = vadd.f32 0.0, %v2100
      %v2102 = vpop.f32.mrb[0].mxu0
      %2103 = vmatprep.mubr.f32.mxu0 0.0
      %2104 = vmatmul.mubr.f32.gmra.mrb[0].mxu0 %v956
      %v2105 = vpop.f32.mrb[0].mxu0
      %v2106 = vadd.f32 0.0, %v2105
      %v2107 = vpop.f32.mrb[0].mxu0
      %2108 = vmatprep.mubr.f32.mxu0 0.0
      %2109 = vmatmul.mubr.f32.gmra.mrb[0].mxu0 %v959
      %v2110 = vpop.f32.mrb[0].mxu0
      %v2111 = vadd.f32 0.0, %v2110
      %v2112 = vpop.f32.mrb[0].mxu0
      %2113 = vmatprep.mubr.f32.mxu0 0.0
      %2114 = vmatmul.mubr.f32.gmra.mrb[0].mxu0 %v962
      %v2115 = vpop.f32.mrb[0].mxu0
      %v2116 = vadd.f32 0.0, %v2115
      %v2117 = vpop.f32.mrb[0].mxu0
      %2118 = vmatprep.mubr.f32.mxu0 0.0
      %2119 = vmatmul.mubr.f32.gmra.mrb[0].mxu0 %v965
      %v2120 = vpop.f32.mrb[0].mxu0
      %v2121 = vadd.f32 0.0, %v2120
      %v2122 = vpop.f32.mrb[0].mxu0
      %2123 = vmatprep.mubr.f32.mxu0 0.0
      %2124 = vmatmul.mubr.f32.gmra.mrb[0].mxu0 %v968
      %v2125 = vpop.f32.mrb[0].mxu0
      %v2126 = vadd.f32 0.0, %v2125
      %v2127 = vpop.f32.mrb[0].mxu0
      %2128 = vmatprep.mubr.f32.mxu0 0.0
      %2129 = vmatmul.mubr.f32.gmra.mrb[0].mxu0 %v971
      %v2130 = vpop.f32.mrb[0].mxu0
      %v2131 = vadd.f32 0.0, %v2130
      %v2132 = vpop.f32.mrb[0].mxu0
      %2133 = vmatprep.mubr.f32.mxu0 0.0
      %2134 = vmatmul.mubr.f32.gmra.mrb[0].mxu0 %v974
      %v2135 = vpop.f32.mrb[0].mxu0
      %v2136 = vadd.f32 0.0, %v2135
      %v2137 = vpop.f32.mrb[0].mxu0
      %2138 = vmatprep.mubr.f32.mxu0 0.0
      %2139 = vmatmul.mubr.f32.gmra.mrb[0].mxu0 %v977
      %v2140 = vpop.f32.mrb[0].mxu0
      %v2141 = vadd.f32 0.0, %v2140
      %v2142 = vpop.f32.mrb[0].mxu0
      %2143 = vmatprep.mubr.f32.mxu0 0.0
      %2144 = vmatmul.mubr.f32.gmra.mrb[0].mxu0 %v980
      %v2145 = vpop.f32.mrb[0].mxu0
      %v2146 = vadd.f32 0.0, %v2145
      %v2147 = vpop.f32.mrb[0].mxu0
      %2148 = vmatprep.mubr.f32.mxu0 0.0
      %2149 = vmatmul.mubr.f32.gmra.mrb[0].mxu0 %v983
      %v2150 = vpop.f32.mrb[0].mxu0
      %v2151 = vadd.f32 0.0, %v2150
      %v2152 = vpop.f32.mrb[0].mxu0
      %2153 = vmatprep.mubr.f32.mxu0 0.0
      %2154 = vmatmul.mubr.f32.gmra.mrb[0].mxu0 %v986
      %v2155 = vpop.f32.mrb[0].mxu0
      %v2156 = vadd.f32 0.0, %v2155
      %v2157 = vpop.f32.mrb[0].mxu0
      %2158 = vmatprep.mubr.f32.mxu0 0.0
      %2159 = vmatmul.mubr.f32.gmra.mrb[0].mxu0 %v989
      %v2160 = vpop.f32.mrb[0].mxu0
      %v2161 = vadd.f32 0.0, %v2160
      %v2162 = vpop.f32.mrb[0].mxu0
      %2163 = vmatprep.mubr.f32.mxu0 0.0
      %2164 = vmatmul.mubr.f32.gmra.mrb[0].mxu0 %v992
      %v2165 = vpop.f32.mrb[0].mxu0
      %v2166 = vadd.f32 0.0, %v2165
      %v2167 = vpop.f32.mrb[0].mxu0
      %2168 = vmatprep.mubr.f32.mxu0 0.0
      %2169 = vmatmul.mubr.f32.gmra.mrb[0].mxu0 %v995
      %v2170 = vpop.f32.mrb[0].mxu0
      %v2171 = vadd.f32 0.0, %v2170
      %v2172 = vpop.f32.mrb[0].mxu0
      %2173 = vmatprep.mubr.f32.mxu0 0.0
      %2174 = vmatmul.mubr.f32.gmra.mrb[0].mxu0 %v998
      %v2175 = vpop.f32.mrb[0].mxu0
      %v2176 = vadd.f32 0.0, %v2175
      %v2177 = vpop.f32.mrb[0].mxu0
      %2178 = vmatprep.mubr.f32.mxu0 0.0
      %2179 = vmatmul.mubr.f32.gmra.mrb[0].mxu0 %v1001
      %v2180 = vpop.f32.mrb[0].mxu0
      %v2181 = vadd.f32 0.0, %v2180
      %v2182 = vpop.f32.mrb[0].mxu0
      %2183 = vmatprep.mubr.f32.mxu0 0.0
      %2184 = vmatmul.mubr.f32.gmra.mrb[0].mxu0 %v1004
      %v2185 = vpop.f32.mrb[0].mxu0
      %v2186 = vadd.f32 0.0, %v2185
      %v2187 = vpop.f32.mrb[0].mxu0
      %2188 = vmatprep.mubr.f32.mxu0 0.0
      %2189 = vmatmul.mubr.f32.gmra.mrb[0].mxu0 %v1007
      %v2190 = vpop.f32.mrb[0].mxu0
      %v2191 = vadd.f32 0.0, %v2190
      %v2192 = vpop.f32.mrb[0].mxu0
      %2193 = vmatprep.mubr.f32.mxu0 0.0
      %2194 = vmatmul.mubr.f32.gmra.mrb[0].mxu0 %v1010
      %v2195 = vpop.f32.mrb[0].mxu0
      %v2196 = vadd.f32 0.0, %v2195
      %v2197 = vpop.f32.mrb[0].mxu0
      %2198 = vmatprep.mubr.f32.mxu0 0.0
      %2199 = vmatmul.mubr.f32.gmra.mrb[0].mxu0 %v1013
      %v2200 = vpop.f32.mrb[0].mxu0
      %v2201 = vadd.f32 0.0, %v2200
      %v2202 = vpop.f32.mrb[0].mxu0
      %2203 = vmatprep.mubr.f32.mxu0 0.0
      %2204 = vmatmul.mubr.f32.gmra.mrb[0].mxu0 %v1016
      %v2205 = vpop.f32.mrb[0].mxu0
      %v2206 = vadd.f32 0.0, %v2205
      %v2207 = vpop.f32.mrb[0].mxu0
      %2208 = vmatprep.mubr.f32.mxu0 0.0
      %2209 = vmatmul.mubr.f32.gmra.mrb[0].mxu0 %v1019
      %v2210 = vpop.f32.mrb[0].mxu0
      %v2211 = vadd.f32 0.0, %v2210
      %v2212 = vpop.f32.mrb[0].mxu0
      %2213 = vmatprep.mubr.f32.mxu0 0.0
      %2214 = vmatmul.mubr.f32.gmra.mrb[0].mxu0 %v1022
      %v2215 = vpop.f32.mrb[0].mxu0
      %v2216 = vadd.f32 0.0, %v2215
      %v2217 = vpop.f32.mrb[0].mxu0
      %2218 = vmatprep.mubr.f32.mxu0 0.0
      %2219 = vmatmul.mubr.f32.gmra.mrb[0].mxu0 %v1025
      %v2220 = vpop.f32.mrb[0].mxu0
      %v2221 = vadd.f32 0.0, %v2220
      %v2222 = vpop.f32.mrb[0].mxu0
      %2223 = vmatprep.mubr.f32.mxu0 0.0
      %2224 = vmatmul.mubr.f32.gmra.mrb[0].mxu0 %v1028
      %v2225 = vpop.f32.mrb[0].mxu0
      %v2226 = vadd.f32 0.0, %v2225
      %v2227 = vpop.f32.mrb[0].mxu0
      %2228 = vmatprep.mubr.f32.mxu0 0.0
      %2229 = vmatmul.mubr.f32.gmra.mrb[0].mxu0 %v1031
      %v2230 = vpop.f32.mrb[0].mxu0
      %v2231 = vadd.f32 0.0, %v2230
      %v2232 = vpop.f32.mrb[0].mxu0
      %2233 = vmatprep.mubr.f32.mxu0 0.0
      %2234 = vmatmul.mubr.f32.gmra.mrb[0].mxu0 %v1034
      %v2235 = vpop.f32.mrb[0].mxu0
      %v2236 = vadd.f32 0.0, %v2235
      %v2237 = vpop.f32.mrb[0].mxu0
      %2238 = vmatprep.mubr.f32.mxu0 0.0
      %2239 = vmatmul.mubr.f32.gmra.mrb[0].mxu0 %v1037
      %v2240 = vpop.f32.mrb[0].mxu0
      %v2241 = vadd.f32 0.0, %v2240
      %v2242 = vpop.f32.mrb[0].mxu0
      %2243 = vmatprep.mubr.f32.mxu0 0.0
      %2244 = vmatmul.mubr.f32.gmra.mrb[0].mxu0 %v1040
      %v2245 = vpop.f32.mrb[0].mxu0
      %v2246 = vadd.f32 0.0, %v2245
      %v2247 = vpop.f32.mrb[0].mxu0
      %2248 = vmatprep.mubr.f32.mxu0 0.0
      %2249 = vmatmul.mubr.f32.gmra.mrb[0].mxu0 %v1043
      %v2250 = vpop.f32.mrb[0].mxu0
      %v2251 = vadd.f32 0.0, %v2250
      %v2252 = vpop.f32.mrb[0].mxu0
      %2253 = vmatprep.mubr.f32.mxu0 0.0
      %2254 = vmatmul.mubr.f32.gmra.mrb[0].mxu0 %v1046
      %v2255 = vpop.f32.mrb[0].mxu0
      %v2256 = vadd.f32 0.0, %v2255
      %v2257 = vpop.f32.mrb[0].mxu0
      %2258 = vmatprep.mubr.f32.mxu0 0.0
      %2259 = vmatmul.mubr.f32.gmra.mrb[0].mxu0 %v1049
      %v2260 = vpop.f32.mrb[0].mxu0
      %v2261 = vadd.f32 0.0, %v2260
      %v2262 = vpop.f32.mrb[0].mxu0
      %2263 = vmatprep.mubr.f32.mxu0 0.0
      %2264 = vmatmul.mubr.f32.gmra.mrb[0].mxu0 %v1052
      %v2265 = vpop.f32.mrb[0].mxu0
      %v2266 = vadd.f32 0.0, %v2265
      %v2267 = vpop.f32.mrb[0].mxu0
      %2268 = vmatprep.mubr.f32.mxu0 0.0
      %2269 = vmatmul.mubr.f32.gmra.mrb[0].mxu0 %v1055
      %v2270 = vpop.f32.mrb[0].mxu0
      %v2271 = vadd.f32 0.0, %v2270
      %v2272 = vpop.f32.mrb[0].mxu0
      %2273 = vmatprep.mubr.f32.mxu0 0.0
      %2274 = vmatmul.mubr.f32.gmra.mrb[0].mxu0 %v1058
      %v2275 = vpop.f32.mrb[0].mxu0
      %v2276 = vadd.f32 0.0, %v2275
      %v2277 = vpop.f32.mrb[0].mxu0
      %2278 = vmatprep.mubr.f32.mxu0 0.0
      %2279 = vmatmul.mubr.f32.gmra.mrb[0].mxu0 %v1061
      %v2280 = vpop.f32.mrb[0].mxu0
      %v2281 = vadd.f32 0.0, %v2280
      %v2282 = vpop.f32.mrb[0].mxu0
      %2283 = vmatprep.mubr.f32.mxu0 0.0
      %2284 = vmatmul.mubr.f32.gmra.mrb[0].mxu0 %v1064
      %v2285 = vpop.f32.mrb[0].mxu0
      %v2286 = vadd.f32 0.0, %v2285
      %v2287 = vpop.f32.mrb[0].mxu0
      %2288 = vmatprep.mubr.f32.mxu0 0.0
      %2289 = vmatmul.mubr.f32.gmra.mrb[0].mxu0 %v1067
      %v2290 = vpop.f32.mrb[0].mxu0
      %v2291 = vadd.f32 0.0, %v2290
      %v2292 = vpop.f32.mrb[0].mxu0
      %2293 = vmatprep.mubr.f32.mxu0 0.0
      %2294 = vmatmul.mubr.f32.gmra.mrb[0].mxu0 %v1070
      %v2295 = vpop.f32.mrb[0].mxu0
      %v2296 = vadd.f32 0.0, %v2295
      %v2297 = vpop.f32.mrb[0].mxu0
      %2298 = vmatprep.mubr.f32.mxu0 0.0
      %2299 = vmatmul.mubr.f32.gmra.mrb[0].mxu0 %v1073
      %v2300 = vpop.f32.mrb[0].mxu0
      %v2301 = vadd.f32 0.0, %v2300
      %v2302 = vpop.f32.mrb[0].mxu0
      %2303 = vmatprep.mubr.f32.mxu0 0.0
      %2304 = vmatmul.mubr.f32.gmra.mrb[0].mxu0 %v1076
      %v2305 = vpop.f32.mrb[0].mxu0
      %v2306 = vadd.f32 0.0, %v2305
      %v2307 = vpop.f32.mrb[0].mxu0
      %2308 = vmatprep.mubr.f32.mxu0 0.0
      %2309 = vmatmul.mubr.f32.gmra.mrb[0].mxu0 %v1079
      %v2310 = vpop.f32.mrb[0].mxu0
      %v2311 = vadd.f32 0.0, %v2310
      %v2312 = vpop.f32.mrb[0].mxu0
      %2313 = vmatprep.mubr.f32.mxu0 0.0
      %2314 = vmatmul.mubr.f32.gmra.mrb[0].mxu0 %v1082
      %v2315 = vpop.f32.mrb[0].mxu0
      %v2316 = vadd.f32 0.0, %v2315
      %v2317 = vpop.f32.mrb[0].mxu0
      %2318 = vmatprep.mubr.f32.mxu0 0.0
      %2319 = vmatmul.mubr.f32.gmra.mrb[0].mxu0 %v1085
      %v2320 = vpop.f32.mrb[0].mxu0
      %v2321 = vadd.f32 0.0, %v2320
      %v2322 = vpop.f32.mrb[0].mxu0
      %2323 = vmatprep.mubr.f32.mxu0 0.0
      %2324 = vmatmul.mubr.f32.gmra.mrb[0].mxu0 %v1088
      %v2325 = vpop.f32.mrb[0].mxu0
      %v2326 = vadd.f32 0.0, %v2325
      %v2327 = vpop.f32.mrb[0].mxu0
      %2328 = vmatprep.mubr.f32.mxu0 0.0
      %2329 = vmatmul.mubr.f32.gmra.mrb[0].mxu0 %v1091
      %v2330 = vpop.f32.mrb[0].mxu0
      %v2331 = vadd.f32 0.0, %v2330
      %v2332 = vpop.f32.mrb[0].mxu0
      %2333 = vmatprep.mubr.f32.mxu0 0.0
      %2334 = vmatmul.mubr.f32.gmra.mrb[0].mxu0 %v1094
      %v2335 = vpop.f32.mrb[0].mxu0
      %v2336 = vadd.f32 0.0, %v2335
      %v2337 = vpop.f32.mrb[0].mxu0
      %2338 = vmatprep.mubr.f32.mxu0 0.0
      %2339 = vmatmul.mubr.f32.gmra.mrb[0].mxu0 %v1097
      %v2340 = vpop.f32.mrb[0].mxu0
      %v2341 = vadd.f32 0.0, %v2340
      %v2342 = vpop.f32.mrb[0].mxu0
      %2343 = vmatprep.mubr.f32.mxu0 0.0
      %2344 = vmatmul.mubr.f32.gmra.mrb[0].mxu0 %v1100
      %v2345 = vpop.f32.mrb[0].mxu0
      %v2346 = vadd.f32 0.0, %v2345
      %v2347 = vpop.f32.mrb[0].mxu0
      %2348 = vmatprep.mubr.f32.mxu0 0.0
      %2349 = vmatmul.mubr.f32.gmra.mrb[0].mxu0 %v1103
      %v2350 = vpop.f32.mrb[0].mxu0
      %v2351 = vadd.f32 0.0, %v2350
      %v2352 = vpop.f32.mrb[0].mxu0
      %2353 = vmatprep.mubr.f32.mxu0 0.0
      %2354 = vmatmul.mubr.f32.gmra.mrb[0].mxu0 %v1106
      %v2355 = vpop.f32.mrb[0].mxu0
      %v2356 = vadd.f32 0.0, %v2355
      %v2357 = vpop.f32.mrb[0].mxu0
      %2358 = vmatprep.mubr.f32.mxu0 0.0
      %2359 = vmatmul.mubr.f32.gmra.mrb[0].mxu0 %v1109
      %v2360 = vpop.f32.mrb[0].mxu0
      %v2361 = vadd.f32 0.0, %v2360
      %v2362 = vpop.f32.mrb[0].mxu0
      %2363 = vmatprep.mubr.f32.mxu0 0.0
      %2364 = vmatmul.mubr.f32.gmra.mrb[0].mxu0 %v1112
      %v2365 = vpop.f32.mrb[0].mxu0
      %v2366 = vadd.f32 0.0, %v2365
      %v2367 = vpop.f32.mrb[0].mxu0
      %2368 = vmatprep.mubr.f32.mxu0 0.0
      %2369 = vmatmul.mubr.f32.gmra.mrb[0].mxu0 %v1115
      %v2370 = vpop.f32.mrb[0].mxu0
      %v2371 = vadd.f32 0.0, %v2370
      %v2372 = vpop.f32.mrb[0].mxu0
      %2373 = vmatprep.mubr.f32.mxu0 0.0
      %2374 = vmatmul.mubr.f32.gmra.mrb[0].mxu0 %v1118
      %v2375 = vpop.f32.mrb[0].mxu0
      %v2376 = vadd.f32 0.0, %v2375
      %v2377 = vpop.f32.mrb[0].mxu0
      %2378 = vmatprep.mubr.f32.mxu0 0.0
      %2379 = vmatmul.mubr.f32.gmra.mrb[0].mxu0 %v1121
      %v2380 = vpop.f32.mrb[0].mxu0
      %v2381 = vadd.f32 0.0, %v2380
      %v2382 = vpop.f32.mrb[0].mxu0
      %2383 = vmatprep.mubr.f32.mxu0 0.0
      %2384 = vmatmul.mubr.f32.gmra.mrb[0].mxu0 %v1124
      %v2385 = vpop.f32.mrb[0].mxu0
      %v2386 = vadd.f32 0.0, %v2385
      %v2387 = vpop.f32.mrb[0].mxu0
      %2388 = vmatprep.mubr.f32.mxu0 0.0
      %2389 = vmatmul.mubr.f32.gmra.mrb[0].mxu0 %v1127
      %v2390 = vpop.f32.mrb[0].mxu0
      %v2391 = vadd.f32 0.0, %v2390
      %v2392 = vpop.f32.mrb[0].mxu0
      %2393 = vmatprep.mubr.f32.mxu0 0.0
      %2394 = vmatmul.mubr.f32.gmra.mrb[0].mxu0 %v1130
      %v2395 = vpop.f32.mrb[0].mxu0
      %v2396 = vadd.f32 0.0, %v2395
      %v2397 = vpop.f32.mrb[0].mxu0
      %2398 = vmatprep.mubr.f32.mxu0 0.0
      %2399 = vmatmul.mubr.f32.gmra.mrb[0].mxu0 %v1133
      %v2400 = vpop.f32.mrb[0].mxu0
      %v2401 = vadd.f32 0.0, %v2400
      %v2402 = vpop.f32.mrb[0].mxu0
      %2403 = vmatprep.mubr.f32.mxu0 0.0
      %2404 = vmatmul.mubr.f32.gmra.mrb[0].mxu0 %v1136
      %v2405 = vpop.f32.mrb[0].mxu0
      %v2406 = vadd.f32 0.0, %v2405
      %v2407 = vpop.f32.mrb[0].mxu0
      %2408 = vmatprep.mubr.f32.mxu0 0.0
      %2409 = vmatmul.mubr.f32.gmra.mrb[0].mxu0 %v1139
      %v2410 = vpop.f32.mrb[0].mxu0
      %v2411 = vadd.f32 0.0, %v2410
      %v2412 = vpop.f32.mrb[0].mxu0
      %2413 = vmatprep.mubr.f32.mxu0 0.0
      %2414 = vmatmul.mubr.f32.gmra.mrb[0].mxu0 %v1142
      %v2415 = vpop.f32.mrb[0].mxu0
      %v2416 = vadd.f32 0.0, %v2415
      %v2417 = vpop.f32.mrb[0].mxu0
      %2418 = vmatprep.mubr.f32.mxu0 0.0
      %2419 = vmatmul.mubr.f32.gmra.mrb[0].mxu0 %v1145
      %v2420 = vpop.f32.mrb[0].mxu0
      %v2421 = vadd.f32 0.0, %v2420
      %v2422 = vpop.f32.mrb[0].mxu0
      %2423 = vmatprep.mubr.f32.mxu0 0.0
      %2424 = vmatmul.mubr.f32.gmra.mrb[0].mxu0 %v1148
      %v2425 = vpop.f32.mrb[0].mxu0
      %v2426 = vadd.f32 0.0, %v2425
      %v2427 = vpop.f32.mrb[0].mxu0
      %2428 = vmatprep.mubr.f32.mxu0 0.0
      %2429 = vmatmul.mubr.f32.gmra.mrb[0].mxu0 %v1151
      %v2430 = vpop.f32.mrb[0].mxu0
      %v2431 = vadd.f32 0.0, %v2430
      %v2432 = vpop.f32.mrb[0].mxu0
      %2433 = vmatprep.mubr.f32.mxu0 0.0
      %2434 = vmatmul.mubr.f32.gmra.mrb[0].mxu0 %v1154
      %v2435 = vpop.f32.mrb[0].mxu0
      %v2436 = vadd.f32 0.0, %v2435
      %v2437 = vpop.f32.mrb[0].mxu0
      %2438 = vmatprep.mubr.f32.mxu0 0.0
      %2439 = vmatmul.mubr.f32.gmra.mrb[0].mxu0 %v1157
      %v2440 = vpop.f32.mrb[0].mxu0
      %v2441 = vadd.f32 0.0, %v2440
      %v2442 = vpop.f32.mrb[0].mxu0
      %2443 = vmatprep.mubr.f32.mxu0 0.0
      %2444 = vmatmul.mubr.f32.gmra.mrb[0].mxu0 %v1160
      %v2445 = vpop.f32.mrb[0].mxu0
      %v2446 = vadd.f32 0.0, %v2445
      %v2447 = vpop.f32.mrb[0].mxu0
      %2448 = vmatprep.mubr.f32.mxu0 0.0
      %2449 = vmatmul.mubr.f32.gmra.mrb[0].mxu0 %v1163
      %v2450 = vpop.f32.mrb[0].mxu0
      %v2451 = vadd.f32 0.0, %v2450
      %v2452 = vpop.f32.mrb[0].mxu0
      %2453 = vmatprep.mubr.f32.mxu0 0.0
      %2454 = vmatmul.mubr.f32.gmra.mrb[0].mxu0 %v1166
      %v2455 = vpop.f32.mrb[0].mxu0
      %v2456 = vadd.f32 0.0, %v2455
      %v2457 = vpop.f32.mrb[0].mxu0
      %2458 = vmatprep.mubr.f32.mxu0 0.0
      %2459 = vmatmul.mubr.f32.gmra.mrb[0].mxu0 %v1169
      %v2460 = vpop.f32.mrb[0].mxu0
      %v2461 = vadd.f32 0.0, %v2460
      %v2462 = vpop.f32.mrb[0].mxu0
      %2463 = vmatprep.mubr.f32.mxu0 0.0
      %2464 = vmatmul.mubr.f32.gmra.mrb[0].mxu0 %v1172
      %v2465 = vpop.f32.mrb[0].mxu0
      %v2466 = vadd.f32 0.0, %v2465
      %v2467 = vpop.f32.mrb[0].mxu0
      %2468 = vmatprep.mubr.f32.mxu0 0.0
      %2469 = vmatmul.mubr.f32.gmra.mrb[0].mxu0 %v1175
      %v2470 = vpop.f32.mrb[0].mxu0
      %v2471 = vadd.f32 0.0, %v2470
      %v2472 = vpop.f32.mrb[0].mxu0
      %2473 = vmatprep.mubr.f32.mxu0 0.0
      %2474 = vmatmul.mubr.f32.gmra.mrb[0].mxu0 %v1178
      %v2475 = vpop.f32.mrb[0].mxu0
      %v2476 = vadd.f32 0.0, %v2475
      %v2477 = vpop.f32.mrb[0].mxu0
      %2478 = vmatprep.mubr.f32.mxu0 0.0
      %2479 = vmatmul.mubr.f32.gmra.mrb[0].mxu0 %v1181
      %v2480 = vpop.f32.mrb[0].mxu0
      %v2481 = vadd.f32 0.0, %v2480
      %v2482 = vpop.f32.mrb[0].mxu0
      %2483 = vmatprep.mubr.f32.mxu0 0.0
      %2484 = vmatmul.mubr.f32.gmra.mrb[0].mxu0 %v1184
      %v2485 = vpop.f32.mrb[0].mxu0
      %v2486 = vadd.f32 0.0, %v2485
      %v2487 = vpop.f32.mrb[0].mxu0
      %2488 = vmatprep.mubr.f32.mxu0 0.0
      %2489 = vmatmul.mubr.f32.gmra.mrb[0].mxu0 %v1187
      %v2490 = vpop.f32.mrb[0].mxu0
      %v2491 = vadd.f32 0.0, %v2490
      %v2492 = vpop.f32.mrb[0].mxu0
      %2493 = vmatprep.mubr.f32.mxu0 0.0
      %2494 = vmatmul.mubr.f32.gmra.mrb[0].mxu0 %v1190
      %v2495 = vpop.f32.mrb[0].mxu0
      %v2496 = vadd.f32 0.0, %v2495
      %v2497 = vpop.f32.mrb[0].mxu0
      %2498 = vmatprep.mubr.f32.mxu0 0.0
      %2499 = vmatmul.mubr.f32.gmra.mrb[0].mxu0 %v1193
      %v2500 = vpop.f32.mrb[0].mxu0
      %v2501 = vadd.f32 0.0, %v2500
      %v2502 = vpop.f32.mrb[0].mxu0
      %2503 = vmatprep.mubr.f32.mxu0 0.0
      %2504 = vmatmul.mubr.f32.gmra.mrb[0].mxu0 %v1196
      %v2505 = vpop.f32.mrb[0].mxu0
      %v2506 = vadd.f32 0.0, %v2505
      %v2507 = vpop.f32.mrb[0].mxu0
      %2508 = vmatprep.mubr.f32.mxu0 0.0
      %2509 = vmatmul.mubr.f32.gmra.mrb[0].mxu0 %v1199
      %v2510 = vpop.f32.mrb[0].mxu0
      %v2511 = vadd.f32 0.0, %v2510
      %v2512 = vpop.f32.mrb[0].mxu0
      %2513 = vmatprep.mubr.f32.mxu0 0.0
      %2514 = vmatmul.mubr.f32.gmra.mrb[0].mxu0 %v1202
      %v2515 = vpop.f32.mrb[0].mxu0
      %v2516 = vadd.f32 0.0, %v2515
      %v2517 = vpop.f32.mrb[0].mxu0
      %2518 = vmatprep.mubr.f32.mxu0 0.0
      %2519 = vmatmul.mubr.f32.gmra.mrb[0].mxu0 %v1205
      %v2520 = vpop.f32.mrb[0].mxu0
      %v2521 = vadd.f32 0.0, %v2520
      %v2522 = vpop.f32.mrb[0].mxu0
      %2523 = vmatprep.mubr.f32.mxu0 0.0
      %2524 = vmatmul.mubr.f32.gmra.mrb[0].mxu0 %v1208
      %v2525 = vpop.f32.mrb[0].mxu0
      %v2526 = vadd.f32 0.0, %v2525
      %v2527 = vpop.f32.mrb[0].mxu0
      %2528 = vmatprep.mubr.f32.mxu0 0.0
      %2529 = vmatmul.mubr.f32.gmra.mrb[0].mxu0 %v1211
      %v2530 = vpop.f32.mrb[0].mxu0
      %v2531 = vadd.f32 0.0, %v2530
      %v2532 = vpop.f32.mrb[0].mxu0
      %2533 = vmatprep.mubr.f32.mxu0 0.0
      %2534 = vmatmul.mubr.f32.gmra.mrb[0].mxu0 %v1214
      %v2535 = vpop.f32.mrb[0].mxu0
      %v2536 = vadd.f32 0.0, %v2535
      %v2537 = vpop.f32.mrb[0].mxu0
      %2538 = vmatprep.mubr.f32.mxu0 0.0
      %2539 = vmatmul.mubr.f32.gmra.mrb[0].mxu0 %v1217
      %v2540 = vpop.f32.mrb[0].mxu0
      %v2541 = vadd.f32 0.0, %v2540
      %v2542 = vpop.f32.mrb[0].mxu0
      %2543 = vmatprep.mubr.f32.mxu0 0.0
      %2544 = vmatmul.mubr.f32.gmra.mrb[0].mxu0 %v1220
      %v2545 = vpop.f32.mrb[0].mxu0
      %v2546 = vadd.f32 0.0, %v2545
      %v2547 = vpop.f32.mrb[0].mxu0
      %2548 = vmatprep.mubr.f32.mxu0 0.0
      %2549 = vmatmul.mubr.f32.gmra.mrb[0].mxu0 %v1223
      %v2550 = vpop.f32.mrb[0].mxu0
      %v2551 = vadd.f32 0.0, %v2550
      %v2552 = vpop.f32.mrb[0].mxu0
      %2553 = vmatprep.mubr.f32.mxu0 0.0
      %2554 = vmatmul.mubr.f32.gmra.mrb[0].mxu0 %v1226
      %v2555 = vpop.f32.mrb[0].mxu0
      %v2556 = vadd.f32 0.0, %v2555
      %v2557 = vpop.f32.mrb[0].mxu0
      %2558 = vmatprep.mubr.f32.mxu0 0.0
      %2559 = vmatmul.mubr.f32.gmra.mrb[0].mxu0 %v1229
      %v2560 = vpop.f32.mrb[0].mxu0
      %v2561 = vadd.f32 0.0, %v2560
      %v2562 = vpop.f32.mrb[0].mxu0
      %2563 = vmatprep.mubr.f32.mxu0 0.0
      %2564 = vmatmul.mubr.f32.gmra.mrb[0].mxu0 %v1232
      %v2565 = vpop.f32.mrb[0].mxu0
      %v2566 = vadd.f32 0.0, %v2565
      %v2567 = vpop.f32.mrb[0].mxu0
      %2568 = vmatprep.mubr.f32.mxu0 0.0
      %2569 = vmatmul.mubr.f32.gmra.mrb[0].mxu0 %v1235
      %v2570 = vpop.f32.mrb[0].mxu0
      %v2571 = vadd.f32 0.0, %v2570
      %v2572 = vpop.f32.mrb[0].mxu0
      %2573 = vmatprep.mubr.f32.mxu0 0.0
      %2574 = vmatmul.mubr.f32.gmra.mrb[0].mxu0 %v1238
      %v2575 = vpop.f32.mrb[0].mxu0
      %v2576 = vadd.f32 0.0, %v2575
      %v2577 = vpop.f32.mrb[0].mxu0
      %2578 = vmatprep.mubr.f32.mxu0 0.0
      %2579 = vmatmul.mubr.f32.gmra.mrb[0].mxu0 %v1241
      %v2580 = vpop.f32.mrb[0].mxu0
      %v2581 = vadd.f32 0.0, %v2580
      %v2582 = vpop.f32.mrb[0].mxu0
      %2583 = vmatprep.mubr.f32.mxu0 0.0
      %2584 = vmatmul.mubr.f32.gmra.mrb[0].mxu0 %v1244
      %v2585 = vpop.f32.mrb[0].mxu0
      %v2586 = vadd.f32 0.0, %v2585
      %v2587 = vpop.f32.mrb[0].mxu0
      %2588 = vmatprep.mubr.f32.mxu0 0.0
      %2589 = vmatmul.mubr.f32.gmra.mrb[0].mxu0 %v1247
      %v2590 = vpop.f32.mrb[0].mxu0
      %v2591 = vadd.f32 0.0, %v2590
      %v2592 = vpop.f32.mrb[0].mxu0
      %2593 = vdwg.mxu0
      %v2594 = vlaneseq
      %v2595 = vand.u32 %v2594, 127
      %v2596 = vld [vmem:[%s209] sm:$0xff]
      %v2597 = vld [vmem:[%s209 + $0x8] sm:$0xff]
      %v2598 = vld [vmem:[%s209 + $0x10] sm:$0xff]
      %v2599 = vld [vmem:[%s209 + $0x18] sm:$0xff]
      %v2600 = vld [vmem:[%s209 + $0x20] sm:$0xff]
      %v2601 = vld [vmem:[%s209 + $0x28] sm:$0xff]
      %v2602 = vld [vmem:[%s209 + $0x30] sm:$0xff]
      %v2603 = vld [vmem:[%s209 + $0x38] sm:$0xff]
      %v2604 = vld [vmem:[%s209 + $0x40] sm:$0xff]
      %v2605 = vld [vmem:[%s209 + $0x48] sm:$0xff]
      %v2606 = vld [vmem:[%s209 + $0x50] sm:$0xff]
      %v2607 = vld [vmem:[%s209 + $0x58] sm:$0xff]
      %v2608 = vld [vmem:[%s209 + $0x60] sm:$0xff]
      %v2609 = vld [vmem:[%s209 + $0x68] sm:$0xff]
      %v2610 = vld [vmem:[%s209 + $0x70] sm:$0xff]
      %v2611 = vld [vmem:[%s209 + $0x78] sm:$0xff]
      %v2612 = vld [vmem:[%s209 + $0x80] sm:$0xff]
      %v2613 = vld [vmem:[%s209 + $0x88] sm:$0xff]
      %v2614 = vld [vmem:[%s209 + $0x90] sm:$0xff]
      %v2615 = vld [vmem:[%s209 + $0x98] sm:$0xff]
      %v2616 = vld [vmem:[%s209 + $0xa0] sm:$0xff]
      %v2617 = vld [vmem:[%s209 + $0xa8] sm:$0xff]
      %v2618 = vld [vmem:[%s209 + $0xb0] sm:$0xff]
      %v2619 = vld [vmem:[%s209 + $0xb8] sm:$0xff]
      %v2620 = vld [vmem:[%s209 + $0xc0] sm:$0xff]
      %v2621 = vld [vmem:[%s209 + $0xc8] sm:$0xff]
      %v2622 = vld [vmem:[%s209 + $0xd0] sm:$0xff]
      %v2623 = vld [vmem:[%s209 + $0xd8] sm:$0xff]
      %v2624 = vld [vmem:[%s209 + $0xe0] sm:$0xff]
      %v2625 = vld [vmem:[%s209 + $0xe8] sm:$0xff]
      %v2626 = vld [vmem:[%s209 + $0xf0] sm:$0xff]
      %v2627 = vld [vmem:[%s209 + $0xf8] sm:$0xff]
      %v2628 = vld [vmem:[%s209 + $0x100] sm:$0xff]
      %v2629 = vld [vmem:[%s209 + $0x108] sm:$0xff]
      %v2630 = vld [vmem:[%s209 + $0x110] sm:$0xff]
      %v2631 = vld [vmem:[%s209 + $0x118] sm:$0xff]
      %v2632 = vld [vmem:[%s209 + $0x120] sm:$0xff]
      %v2633 = vld [vmem:[%s209 + $0x128] sm:$0xff]
      %v2634 = vld [vmem:[%s209 + $0x130] sm:$0xff]
      %v2635 = vld [vmem:[%s209 + $0x138] sm:$0xff]
      %v2636 = vld [vmem:[%s209 + $0x140] sm:$0xff]
      %v2637 = vld [vmem:[%s209 + $0x148] sm:$0xff]
      %v2638 = vld [vmem:[%s209 + $0x150] sm:$0xff]
      %v2639 = vld [vmem:[%s209 + $0x158] sm:$0xff]
      %v2640 = vld [vmem:[%s209 + $0x160] sm:$0xff]
      %v2641 = vld [vmem:[%s209 + $0x168] sm:$0xff]
      %v2642 = vld [vmem:[%s209 + $0x170] sm:$0xff]
      %v2643 = vld [vmem:[%s209 + $0x178] sm:$0xff]
      %v2644 = vld [vmem:[%s209 + $0x180] sm:$0xff]
      %v2645 = vld [vmem:[%s209 + $0x188] sm:$0xff]
      %v2646 = vld [vmem:[%s209 + $0x190] sm:$0xff]
      %v2647 = vld [vmem:[%s209 + $0x198] sm:$0xff]
      %v2648 = vld [vmem:[%s209 + $0x1a0] sm:$0xff]
      %v2649 = vld [vmem:[%s209 + $0x1a8] sm:$0xff]
      %v2650 = vld [vmem:[%s209 + $0x1b0] sm:$0xff]
      %v2651 = vld [vmem:[%s209 + $0x1b8] sm:$0xff]
      %v2652 = vld [vmem:[%s209 + $0x1c0] sm:$0xff]
      %v2653 = vld [vmem:[%s209 + $0x1c8] sm:$0xff]
      %v2654 = vld [vmem:[%s209 + $0x1d0] sm:$0xff]
      %v2655 = vld [vmem:[%s209 + $0x1d8] sm:$0xff]
      %v2656 = vld [vmem:[%s209 + $0x1e0] sm:$0xff]
      %v2657 = vld [vmem:[%s209 + $0x1e8] sm:$0xff]
      %v2658 = vld [vmem:[%s209 + $0x1f0] sm:$0xff]
      %v2659 = vld [vmem:[%s209 + $0x1f8] sm:$0xff]
      %v2660 = vld [vmem:[%s209 + $0x200] sm:$0xff]
      %v2661 = vld [vmem:[%s209 + $0x208] sm:$0xff]
      %v2662 = vld [vmem:[%s209 + $0x210] sm:$0xff]
      %v2663 = vld [vmem:[%s209 + $0x218] sm:$0xff]
      %v2664 = vld [vmem:[%s209 + $0x220] sm:$0xff]
      %v2665 = vld [vmem:[%s209 + $0x228] sm:$0xff]
      %v2666 = vld [vmem:[%s209 + $0x230] sm:$0xff]
      %v2667 = vld [vmem:[%s209 + $0x238] sm:$0xff]
      %v2668 = vld [vmem:[%s209 + $0x240] sm:$0xff]
      %v2669 = vld [vmem:[%s209 + $0x248] sm:$0xff]
      %v2670 = vld [vmem:[%s209 + $0x250] sm:$0xff]
      %v2671 = vld [vmem:[%s209 + $0x258] sm:$0xff]
      %v2672 = vld [vmem:[%s209 + $0x260] sm:$0xff]
      %v2673 = vld [vmem:[%s209 + $0x268] sm:$0xff]
      %v2674 = vld [vmem:[%s209 + $0x270] sm:$0xff]
      %v2675 = vld [vmem:[%s209 + $0x278] sm:$0xff]
      %v2676 = vld [vmem:[%s209 + $0x280] sm:$0xff]
      %v2677 = vld [vmem:[%s209 + $0x288] sm:$0xff]
      %v2678 = vld [vmem:[%s209 + $0x290] sm:$0xff]
      %v2679 = vld [vmem:[%s209 + $0x298] sm:$0xff]
      %v2680 = vld [vmem:[%s209 + $0x2a0] sm:$0xff]
      %v2681 = vld [vmem:[%s209 + $0x2a8] sm:$0xff]
      %v2682 = vld [vmem:[%s209 + $0x2b0] sm:$0xff]
      %v2683 = vld [vmem:[%s209 + $0x2b8] sm:$0xff]
      %v2684 = vld [vmem:[%s209 + $0x2c0] sm:$0xff]
      %v2685 = vld [vmem:[%s209 + $0x2c8] sm:$0xff]
      %v2686 = vld [vmem:[%s209 + $0x2d0] sm:$0xff]
      %v2687 = vld [vmem:[%s209 + $0x2d8] sm:$0xff]
      %v2688 = vld [vmem:[%s209 + $0x2e0] sm:$0xff]
      %v2689 = vld [vmem:[%s209 + $0x2e8] sm:$0xff]
      %v2690 = vld [vmem:[%s209 + $0x2f0] sm:$0xff]
      %v2691 = vld [vmem:[%s209 + $0x2f8] sm:$0xff]
      %v2692 = vld [vmem:[%s209 + $0x300] sm:$0xff]
      %v2693 = vld [vmem:[%s209 + $0x308] sm:$0xff]
      %v2694 = vld [vmem:[%s209 + $0x310] sm:$0xff]
      %v2695 = vld [vmem:[%s209 + $0x318] sm:$0xff]
      %v2696 = vld [vmem:[%s209 + $0x320] sm:$0xff]
      %v2697 = vld [vmem:[%s209 + $0x328] sm:$0xff]
      %v2698 = vld [vmem:[%s209 + $0x330] sm:$0xff]
      %v2699 = vld [vmem:[%s209 + $0x338] sm:$0xff]
      %v2700 = vld [vmem:[%s209 + $0x340] sm:$0xff]
      %v2701 = vld [vmem:[%s209 + $0x348] sm:$0xff]
      %v2702 = vld [vmem:[%s209 + $0x350] sm:$0xff]
      %v2703 = vld [vmem:[%s209 + $0x358] sm:$0xff]
      %v2704 = vld [vmem:[%s209 + $0x360] sm:$0xff]
      %v2705 = vld [vmem:[%s209 + $0x368] sm:$0xff]
      %v2706 = vld [vmem:[%s209 + $0x370] sm:$0xff]
      %v2707 = vld [vmem:[%s209 + $0x378] sm:$0xff]
      %v2708 = vld [vmem:[%s209 + $0x380] sm:$0xff]
      %v2709 = vld [vmem:[%s209 + $0x388] sm:$0xff]
      %v2710 = vld [vmem:[%s209 + $0x390] sm:$0xff]
      %v2711 = vld [vmem:[%s209 + $0x398] sm:$0xff]
      %v2712 = vld [vmem:[%s209 + $0x3a0] sm:$0xff]
      %v2713 = vld [vmem:[%s209 + $0x3a8] sm:$0xff]
      %v2714 = vld [vmem:[%s209 + $0x3b0] sm:$0xff]
      %v2715 = vld [vmem:[%s209 + $0x3b8] sm:$0xff]
      %v2716 = vld [vmem:[%s209 + $0x3c0] sm:$0xff]
      %v2717 = vld [vmem:[%s209 + $0x3c8] sm:$0xff]
      %v2718 = vld [vmem:[%s209 + $0x3d0] sm:$0xff]
      %v2719 = vld [vmem:[%s209 + $0x3d8] sm:$0xff]
      %v2720 = vld [vmem:[%s209 + $0x3e0] sm:$0xff]
      %v2721 = vld [vmem:[%s209 + $0x3e8] sm:$0xff]
      %v2722 = vld [vmem:[%s209 + $0x3f0] sm:$0xff]
      %v2723 = vld [vmem:[%s209 + $0x3f8] sm:$0xff]
      %v2724 = vld [vmem:[%s209 + $0x400] sm:$0xff]
      %v2725 = vld [vmem:[%s209 + $0x408] sm:$0xff]
      %v2726 = vld [vmem:[%s209 + $0x410] sm:$0xff]
      %v2727 = vld [vmem:[%s209 + $0x418] sm:$0xff]
      %v2728 = vld [vmem:[%s209 + $0x420] sm:$0xff]
      %v2729 = vld [vmem:[%s209 + $0x428] sm:$0xff]
      %v2730 = vld [vmem:[%s209 + $0x430] sm:$0xff]
      %v2731 = vld [vmem:[%s209 + $0x438] sm:$0xff]
      %v2732 = vld [vmem:[%s209 + $0x440] sm:$0xff]
      %v2733 = vld [vmem:[%s209 + $0x448] sm:$0xff]
      %v2734 = vld [vmem:[%s209 + $0x450] sm:$0xff]
      %v2735 = vld [vmem:[%s209 + $0x458] sm:$0xff]
      %v2736 = vld [vmem:[%s209 + $0x460] sm:$0xff]
      %v2737 = vld [vmem:[%s209 + $0x468] sm:$0xff]
      %v2738 = vld [vmem:[%s209 + $0x470] sm:$0xff]
      %v2739 = vld [vmem:[%s209 + $0x478] sm:$0xff]
      %v2740 = vld [vmem:[%s209 + $0x480] sm:$0xff]
      %v2741 = vld [vmem:[%s209 + $0x488] sm:$0xff]
      %v2742 = vld [vmem:[%s209 + $0x490] sm:$0xff]
      %v2743 = vld [vmem:[%s209 + $0x498] sm:$0xff]
      %v2744 = vld [vmem:[%s209 + $0x4a0] sm:$0xff]
      %v2745 = vld [vmem:[%s209 + $0x4a8] sm:$0xff]
      %v2746 = vld [vmem:[%s209 + $0x4b0] sm:$0xff]
      %v2747 = vld [vmem:[%s209 + $0x4b8] sm:$0xff]
      %v2748 = vld [vmem:[%s209 + $0x4c0] sm:$0xff]
      %v2749 = vld [vmem:[%s209 + $0x4c8] sm:$0xff]
      %v2750 = vld [vmem:[%s209 + $0x4d0] sm:$0xff]
      %v2751 = vld [vmem:[%s209 + $0x4d8] sm:$0xff]
      %v2752 = vld [vmem:[%s209 + $0x4e0] sm:$0xff]
      %v2753 = vld [vmem:[%s209 + $0x4e8] sm:$0xff]
      %v2754 = vld [vmem:[%s209 + $0x4f0] sm:$0xff]
      %v2755 = vld [vmem:[%s209 + $0x4f8] sm:$0xff]
      %v2756 = vld [vmem:[%s209 + $0x500] sm:$0xff]
      %v2757 = vld [vmem:[%s209 + $0x508] sm:$0xff]
      %v2758 = vld [vmem:[%s209 + $0x510] sm:$0xff]
      %v2759 = vld [vmem:[%s209 + $0x518] sm:$0xff]
      %v2760 = vld [vmem:[%s209 + $0x520] sm:$0xff]
      %v2761 = vld [vmem:[%s209 + $0x528] sm:$0xff]
      %v2762 = vld [vmem:[%s209 + $0x530] sm:$0xff]
      %v2763 = vld [vmem:[%s209 + $0x538] sm:$0xff]
      %v2764 = vld [vmem:[%s209 + $0x540] sm:$0xff]
      %v2765 = vld [vmem:[%s209 + $0x548] sm:$0xff]
      %v2766 = vld [vmem:[%s209 + $0x550] sm:$0xff]
      %v2767 = vld [vmem:[%s209 + $0x558] sm:$0xff]
      %v2768 = vld [vmem:[%s209 + $0x560] sm:$0xff]
      %v2769 = vld [vmem:[%s209 + $0x568] sm:$0xff]
      %v2770 = vld [vmem:[%s209 + $0x570] sm:$0xff]
      %v2771 = vld [vmem:[%s209 + $0x578] sm:$0xff]
      %v2772 = vld [vmem:[%s209 + $0x580] sm:$0xff]
      %v2773 = vld [vmem:[%s209 + $0x588] sm:$0xff]
      %v2774 = vld [vmem:[%s209 + $0x590] sm:$0xff]
      %v2775 = vld [vmem:[%s209 + $0x598] sm:$0xff]
      %v2776 = vld [vmem:[%s209 + $0x5a0] sm:$0xff]
      %v2777 = vld [vmem:[%s209 + $0x5a8] sm:$0xff]
      %v2778 = vld [vmem:[%s209 + $0x5b0] sm:$0xff]
      %v2779 = vld [vmem:[%s209 + $0x5b8] sm:$0xff]
      %v2780 = vld [vmem:[%s209 + $0x5c0] sm:$0xff]
      %v2781 = vld [vmem:[%s209 + $0x5c8] sm:$0xff]
      %v2782 = vld [vmem:[%s209 + $0x5d0] sm:$0xff]
      %v2783 = vld [vmem:[%s209 + $0x5d8] sm:$0xff]
      %v2784 = vld [vmem:[%s209 + $0x5e0] sm:$0xff]
      %v2785 = vld [vmem:[%s209 + $0x5e8] sm:$0xff]
      %v2786 = vld [vmem:[%s209 + $0x5f0] sm:$0xff]
      %v2787 = vld [vmem:[%s209 + $0x5f8] sm:$0xff]
      %v2788 = vld [vmem:[%s209 + $0x600] sm:$0xff]
      %v2789 = vld [vmem:[%s209 + $0x608] sm:$0xff]
      %v2790 = vld [vmem:[%s209 + $0x610] sm:$0xff]
      %v2791 = vld [vmem:[%s209 + $0x618] sm:$0xff]
      %v2792 = vld [vmem:[%s209 + $0x620] sm:$0xff]
      %v2793 = vld [vmem:[%s209 + $0x628] sm:$0xff]
      %v2794 = vld [vmem:[%s209 + $0x630] sm:$0xff]
      %v2795 = vld [vmem:[%s209 + $0x638] sm:$0xff]
      %v2796 = vld [vmem:[%s209 + $0x640] sm:$0xff]
      %v2797 = vld [vmem:[%s209 + $0x648] sm:$0xff]
      %v2798 = vld [vmem:[%s209 + $0x650] sm:$0xff]
      %v2799 = vld [vmem:[%s209 + $0x658] sm:$0xff]
      %v2800 = vld [vmem:[%s209 + $0x660] sm:$0xff]
      %v2801 = vld [vmem:[%s209 + $0x668] sm:$0xff]
      %v2802 = vld [vmem:[%s209 + $0x670] sm:$0xff]
      %v2803 = vld [vmem:[%s209 + $0x678] sm:$0xff]
      %v2804 = vld [vmem:[%s209 + $0x680] sm:$0xff]
      %v2805 = vld [vmem:[%s209 + $0x688] sm:$0xff]
      %v2806 = vld [vmem:[%s209 + $0x690] sm:$0xff]
      %v2807 = vld [vmem:[%s209 + $0x698] sm:$0xff]
      %v2808 = vld [vmem:[%s209 + $0x6a0] sm:$0xff]
      %v2809 = vld [vmem:[%s209 + $0x6a8] sm:$0xff]
      %v2810 = vld [vmem:[%s209 + $0x6b0] sm:$0xff]
      %v2811 = vld [vmem:[%s209 + $0x6b8] sm:$0xff]
      %v2812 = vld [vmem:[%s209 + $0x6c0] sm:$0xff]
      %v2813 = vld [vmem:[%s209 + $0x6c8] sm:$0xff]
      %v2814 = vld [vmem:[%s209 + $0x6d0] sm:$0xff]
      %v2815 = vld [vmem:[%s209 + $0x6d8] sm:$0xff]
      %v2816 = vld [vmem:[%s209 + $0x6e0] sm:$0xff]
      %v2817 = vld [vmem:[%s209 + $0x6e8] sm:$0xff]
      %v2818 = vld [vmem:[%s209 + $0x6f0] sm:$0xff]
      %v2819 = vld [vmem:[%s209 + $0x6f8] sm:$0xff]
      %v2820 = vld [vmem:[%s209 + $0x700] sm:$0xff]
      %v2821 = vld [vmem:[%s209 + $0x708] sm:$0xff]
      %v2822 = vld [vmem:[%s209 + $0x710] sm:$0xff]
      %v2823 = vld [vmem:[%s209 + $0x718] sm:$0xff]
      %v2824 = vld [vmem:[%s209 + $0x720] sm:$0xff]
      %v2825 = vld [vmem:[%s209 + $0x728] sm:$0xff]
      %v2826 = vld [vmem:[%s209 + $0x730] sm:$0xff]
      %v2827 = vld [vmem:[%s209 + $0x738] sm:$0xff]
      %v2828 = vld [vmem:[%s209 + $0x740] sm:$0xff]
      %v2829 = vld [vmem:[%s209 + $0x748] sm:$0xff]
      %v2830 = vld [vmem:[%s209 + $0x750] sm:$0xff]
      %v2831 = vld [vmem:[%s209 + $0x758] sm:$0xff]
      %v2832 = vld [vmem:[%s209 + $0x760] sm:$0xff]
      %v2833 = vld [vmem:[%s209 + $0x768] sm:$0xff]
      %v2834 = vld [vmem:[%s209 + $0x770] sm:$0xff]
      %v2835 = vld [vmem:[%s209 + $0x778] sm:$0xff]
      %v2836 = vld [vmem:[%s209 + $0x780] sm:$0xff]
      %v2837 = vld [vmem:[%s209 + $0x788] sm:$0xff]
      %v2838 = vld [vmem:[%s209 + $0x790] sm:$0xff]
      %v2839 = vld [vmem:[%s209 + $0x798] sm:$0xff]
      %v2840 = vld [vmem:[%s209 + $0x7a0] sm:$0xff]
      %v2841 = vld [vmem:[%s209 + $0x7a8] sm:$0xff]
      %v2842 = vld [vmem:[%s209 + $0x7b0] sm:$0xff]
      %v2843 = vld [vmem:[%s209 + $0x7b8] sm:$0xff]
      %v2844 = vld [vmem:[%s209 + $0x7c0] sm:$0xff]
      %v2845 = vld [vmem:[%s209 + $0x7c8] sm:$0xff]
      %v2846 = vld [vmem:[%s209 + $0x7d0] sm:$0xff]
      %v2847 = vld [vmem:[%s209 + $0x7d8] sm:$0xff]
      %v2848 = vld [vmem:[%s209 + $0x7e0] sm:$0xff]
      %v2849 = vld [vmem:[%s209 + $0x7e8] sm:$0xff]
      %v2850 = vld [vmem:[%s209 + $0x7f0] sm:$0xff]
      %v2851 = vld [vmem:[%s209 + $0x7f8] sm:$0xff]
      %2852 = vset.pattern.permute.xlu0 0
      %2853 = vperm.xlu0 %2852, %v2596
      %v2854 = vpop.permute.xlu0 %2853
      %2855 = vset.pattern.permute.xlu0 0
      %2856 = vperm.xlu0 %2855, %v2597
      %v2857 = vpop.permute.xlu0 %2856
      %2858 = vset.pattern.permute.xlu0 0
      %2859 = vperm.xlu0 %2858, %v2598
      %v2860 = vpop.permute.xlu0 %2859
      %2861 = vset.pattern.permute.xlu0 0
      %2862 = vperm.xlu0 %2861, %v2599
      %v2863 = vpop.permute.xlu0 %2862
      %2864 = vset.pattern.permute.xlu0 0
      %2865 = vperm.xlu0 %2864, %v2600
      %v2866 = vpop.permute.xlu0 %2865
      %2867 = vset.pattern.permute.xlu0 0
      %2868 = vperm.xlu0 %2867, %v2601
      %v2869 = vpop.permute.xlu0 %2868
      %2870 = vset.pattern.permute.xlu0 0
      %2871 = vperm.xlu0 %2870, %v2602
      %v2872 = vpop.permute.xlu0 %2871
      %2873 = vset.pattern.permute.xlu0 0
      %2874 = vperm.xlu0 %2873, %v2603
      %v2875 = vpop.permute.xlu0 %2874
      %2876 = vset.pattern.permute.xlu0 0
      %2877 = vperm.xlu0 %2876, %v2604
      %v2878 = vpop.permute.xlu0 %2877
      %2879 = vset.pattern.permute.xlu0 0
      %2880 = vperm.xlu0 %2879, %v2605
      %v2881 = vpop.permute.xlu0 %2880
      %2882 = vset.pattern.permute.xlu0 0
      %2883 = vperm.xlu0 %2882, %v2606
      %v2884 = vpop.permute.xlu0 %2883
      %2885 = vset.pattern.permute.xlu0 0
      %2886 = vperm.xlu0 %2885, %v2607
      %v2887 = vpop.permute.xlu0 %2886
      %2888 = vset.pattern.permute.xlu0 0
      %2889 = vperm.xlu0 %2888, %v2608
      %v2890 = vpop.permute.xlu0 %2889
      %2891 = vset.pattern.permute.xlu0 0
      %2892 = vperm.xlu0 %2891, %v2609
      %v2893 = vpop.permute.xlu0 %2892
      %2894 = vset.pattern.permute.xlu0 0
      %2895 = vperm.xlu0 %2894, %v2610
      %v2896 = vpop.permute.xlu0 %2895
      %2897 = vset.pattern.permute.xlu0 0
      %2898 = vperm.xlu0 %2897, %v2611
      %v2899 = vpop.permute.xlu0 %2898
      %2900 = vset.pattern.permute.xlu0 0
      %2901 = vperm.xlu0 %2900, %v2612
      %v2902 = vpop.permute.xlu0 %2901
      %2903 = vset.pattern.permute.xlu0 0
      %2904 = vperm.xlu0 %2903, %v2613
      %v2905 = vpop.permute.xlu0 %2904
      %2906 = vset.pattern.permute.xlu0 0
      %2907 = vperm.xlu0 %2906, %v2614
      %v2908 = vpop.permute.xlu0 %2907
      %2909 = vset.pattern.permute.xlu0 0
      %2910 = vperm.xlu0 %2909, %v2615
      %v2911 = vpop.permute.xlu0 %2910
      %2912 = vset.pattern.permute.xlu0 0
      %2913 = vperm.xlu0 %2912, %v2616
      %v2914 = vpop.permute.xlu0 %2913
      %2915 = vset.pattern.permute.xlu0 0
      %2916 = vperm.xlu0 %2915, %v2617
      %v2917 = vpop.permute.xlu0 %2916
      %2918 = vset.pattern.permute.xlu0 0
      %2919 = vperm.xlu0 %2918, %v2618
      %v2920 = vpop.permute.xlu0 %2919
      %2921 = vset.pattern.permute.xlu0 0
      %2922 = vperm.xlu0 %2921, %v2619
      %v2923 = vpop.permute.xlu0 %2922
      %2924 = vset.pattern.permute.xlu0 0
      %2925 = vperm.xlu0 %2924, %v2620
      %v2926 = vpop.permute.xlu0 %2925
      %2927 = vset.pattern.permute.xlu0 0
      %2928 = vperm.xlu0 %2927, %v2621
      %v2929 = vpop.permute.xlu0 %2928
      %2930 = vset.pattern.permute.xlu0 0
      %2931 = vperm.xlu0 %2930, %v2622
      %v2932 = vpop.permute.xlu0 %2931
      %2933 = vset.pattern.permute.xlu0 0
      %2934 = vperm.xlu0 %2933, %v2623
      %v2935 = vpop.permute.xlu0 %2934
      %2936 = vset.pattern.permute.xlu0 0
      %2937 = vperm.xlu0 %2936, %v2624
      %v2938 = vpop.permute.xlu0 %2937
      %2939 = vset.pattern.permute.xlu0 0
      %2940 = vperm.xlu0 %2939, %v2625
      %v2941 = vpop.permute.xlu0 %2940
      %2942 = vset.pattern.permute.xlu0 0
      %2943 = vperm.xlu0 %2942, %v2626
      %v2944 = vpop.permute.xlu0 %2943
      %2945 = vset.pattern.permute.xlu0 0
      %2946 = vperm.xlu0 %2945, %v2627
      %v2947 = vpop.permute.xlu0 %2946
      %2948 = vset.pattern.permute.xlu0 0
      %2949 = vperm.xlu0 %2948, %v2628
      %v2950 = vpop.permute.xlu0 %2949
      %2951 = vset.pattern.permute.xlu0 0
      %2952 = vperm.xlu0 %2951, %v2629
      %v2953 = vpop.permute.xlu0 %2952
      %2954 = vset.pattern.permute.xlu0 0
      %2955 = vperm.xlu0 %2954, %v2630
      %v2956 = vpop.permute.xlu0 %2955
      %2957 = vset.pattern.permute.xlu0 0
      %2958 = vperm.xlu0 %2957, %v2631
      %v2959 = vpop.permute.xlu0 %2958
      %2960 = vset.pattern.permute.xlu0 0
      %2961 = vperm.xlu0 %2960, %v2632
      %v2962 = vpop.permute.xlu0 %2961
      %2963 = vset.pattern.permute.xlu0 0
      %2964 = vperm.xlu0 %2963, %v2633
      %v2965 = vpop.permute.xlu0 %2964
      %2966 = vset.pattern.permute.xlu0 0
      %2967 = vperm.xlu0 %2966, %v2634
      %v2968 = vpop.permute.xlu0 %2967
      %2969 = vset.pattern.permute.xlu0 0
      %2970 = vperm.xlu0 %2969, %v2635
      %v2971 = vpop.permute.xlu0 %2970
      %2972 = vset.pattern.permute.xlu0 0
      %2973 = vperm.xlu0 %2972, %v2636
      %v2974 = vpop.permute.xlu0 %2973
      %2975 = vset.pattern.permute.xlu0 0
      %2976 = vperm.xlu0 %2975, %v2637
      %v2977 = vpop.permute.xlu0 %2976
      %2978 = vset.pattern.permute.xlu0 0
      %2979 = vperm.xlu0 %2978, %v2638
      %v2980 = vpop.permute.xlu0 %2979
      %2981 = vset.pattern.permute.xlu0 0
      %2982 = vperm.xlu0 %2981, %v2639
      %v2983 = vpop.permute.xlu0 %2982
      %2984 = vset.pattern.permute.xlu0 0
      %2985 = vperm.xlu0 %2984, %v2640
      %v2986 = vpop.permute.xlu0 %2985
      %2987 = vset.pattern.permute.xlu0 0
      %2988 = vperm.xlu0 %2987, %v2641
      %v2989 = vpop.permute.xlu0 %2988
      %2990 = vset.pattern.permute.xlu0 0
      %2991 = vperm.xlu0 %2990, %v2642
      %v2992 = vpop.permute.xlu0 %2991
      %2993 = vset.pattern.permute.xlu0 0
      %2994 = vperm.xlu0 %2993, %v2643
      %v2995 = vpop.permute.xlu0 %2994
      %2996 = vset.pattern.permute.xlu0 0
      %2997 = vperm.xlu0 %2996, %v2644
      %v2998 = vpop.permute.xlu0 %2997
      %2999 = vset.pattern.permute.xlu0 0
      %3000 = vperm.xlu0 %2999, %v2645
      %v3001 = vpop.permute.xlu0 %3000
      %3002 = vset.pattern.permute.xlu0 0
      %3003 = vperm.xlu0 %3002, %v2646
      %v3004 = vpop.permute.xlu0 %3003
      %3005 = vset.pattern.permute.xlu0 0
      %3006 = vperm.xlu0 %3005, %v2647
      %v3007 = vpop.permute.xlu0 %3006
      %3008 = vset.pattern.permute.xlu0 0
      %3009 = vperm.xlu0 %3008, %v2648
      %v3010 = vpop.permute.xlu0 %3009
      %3011 = vset.pattern.permute.xlu0 0
      %3012 = vperm.xlu0 %3011, %v2649
      %v3013 = vpop.permute.xlu0 %3012
      %3014 = vset.pattern.permute.xlu0 0
      %3015 = vperm.xlu0 %3014, %v2650
      %v3016 = vpop.permute.xlu0 %3015
      %3017 = vset.pattern.permute.xlu0 0
      %3018 = vperm.xlu0 %3017, %v2651
      %v3019 = vpop.permute.xlu0 %3018
      %3020 = vset.pattern.permute.xlu0 0
      %3021 = vperm.xlu0 %3020, %v2652
      %v3022 = vpop.permute.xlu0 %3021
      %3023 = vset.pattern.permute.xlu0 0
      %3024 = vperm.xlu0 %3023, %v2653
      %v3025 = vpop.permute.xlu0 %3024
      %3026 = vset.pattern.permute.xlu0 0
      %3027 = vperm.xlu0 %3026, %v2654
      %v3028 = vpop.permute.xlu0 %3027
      %3029 = vset.pattern.permute.xlu0 0
      %3030 = vperm.xlu0 %3029, %v2655
      %v3031 = vpop.permute.xlu0 %3030
      %3032 = vset.pattern.permute.xlu0 0
      %3033 = vperm.xlu0 %3032, %v2656
      %v3034 = vpop.permute.xlu0 %3033
      %3035 = vset.pattern.permute.xlu0 0
      %3036 = vperm.xlu0 %3035, %v2657
      %v3037 = vpop.permute.xlu0 %3036
      %3038 = vset.pattern.permute.xlu0 0
      %3039 = vperm.xlu0 %3038, %v2658
      %v3040 = vpop.permute.xlu0 %3039
      %3041 = vset.pattern.permute.xlu0 0
      %3042 = vperm.xlu0 %3041, %v2659
      %v3043 = vpop.permute.xlu0 %3042
      %3044 = vset.pattern.permute.xlu0 0
      %3045 = vperm.xlu0 %3044, %v2660
      %v3046 = vpop.permute.xlu0 %3045
      %3047 = vset.pattern.permute.xlu0 0
      %3048 = vperm.xlu0 %3047, %v2661
      %v3049 = vpop.permute.xlu0 %3048
      %3050 = vset.pattern.permute.xlu0 0
      %3051 = vperm.xlu0 %3050, %v2662
      %v3052 = vpop.permute.xlu0 %3051
      %3053 = vset.pattern.permute.xlu0 0
      %3054 = vperm.xlu0 %3053, %v2663
      %v3055 = vpop.permute.xlu0 %3054
      %3056 = vset.pattern.permute.xlu0 0
      %3057 = vperm.xlu0 %3056, %v2664
      %v3058 = vpop.permute.xlu0 %3057
      %3059 = vset.pattern.permute.xlu0 0
      %3060 = vperm.xlu0 %3059, %v2665
      %v3061 = vpop.permute.xlu0 %3060
      %3062 = vset.pattern.permute.xlu0 0
      %3063 = vperm.xlu0 %3062, %v2666
      %v3064 = vpop.permute.xlu0 %3063
      %3065 = vset.pattern.permute.xlu0 0
      %3066 = vperm.xlu0 %3065, %v2667
      %v3067 = vpop.permute.xlu0 %3066
      %3068 = vset.pattern.permute.xlu0 0
      %3069 = vperm.xlu0 %3068, %v2668
      %v3070 = vpop.permute.xlu0 %3069
      %3071 = vset.pattern.permute.xlu0 0
      %3072 = vperm.xlu0 %3071, %v2669
      %v3073 = vpop.permute.xlu0 %3072
      %3074 = vset.pattern.permute.xlu0 0
      %3075 = vperm.xlu0 %3074, %v2670
      %v3076 = vpop.permute.xlu0 %3075
      %3077 = vset.pattern.permute.xlu0 0
      %3078 = vperm.xlu0 %3077, %v2671
      %v3079 = vpop.permute.xlu0 %3078
      %3080 = vset.pattern.permute.xlu0 0
      %3081 = vperm.xlu0 %3080, %v2672
      %v3082 = vpop.permute.xlu0 %3081
      %3083 = vset.pattern.permute.xlu0 0
      %3084 = vperm.xlu0 %3083, %v2673
      %v3085 = vpop.permute.xlu0 %3084
      %3086 = vset.pattern.permute.xlu0 0
      %3087 = vperm.xlu0 %3086, %v2674
      %v3088 = vpop.permute.xlu0 %3087
      %3089 = vset.pattern.permute.xlu0 0
      %3090 = vperm.xlu0 %3089, %v2675
      %v3091 = vpop.permute.xlu0 %3090
      %3092 = vset.pattern.permute.xlu0 0
      %3093 = vperm.xlu0 %3092, %v2676
      %v3094 = vpop.permute.xlu0 %3093
      %3095 = vset.pattern.permute.xlu0 0
      %3096 = vperm.xlu0 %3095, %v2677
      %v3097 = vpop.permute.xlu0 %3096
      %3098 = vset.pattern.permute.xlu0 0
      %3099 = vperm.xlu0 %3098, %v2678
      %v3100 = vpop.permute.xlu0 %3099
      %3101 = vset.pattern.permute.xlu0 0
      %3102 = vperm.xlu0 %3101, %v2679
      %v3103 = vpop.permute.xlu0 %3102
      %3104 = vset.pattern.permute.xlu0 0
      %3105 = vperm.xlu0 %3104, %v2680
      %v3106 = vpop.permute.xlu0 %3105
      %3107 = vset.pattern.permute.xlu0 0
      %3108 = vperm.xlu0 %3107, %v2681
      %v3109 = vpop.permute.xlu0 %3108
      %3110 = vset.pattern.permute.xlu0 0
      %3111 = vperm.xlu0 %3110, %v2682
      %v3112 = vpop.permute.xlu0 %3111
      %3113 = vset.pattern.permute.xlu0 0
      %3114 = vperm.xlu0 %3113, %v2683
      %v3115 = vpop.permute.xlu0 %3114
      %3116 = vset.pattern.permute.xlu0 0
      %3117 = vperm.xlu0 %3116, %v2684
      %v3118 = vpop.permute.xlu0 %3117
      %3119 = vset.pattern.permute.xlu0 0
      %3120 = vperm.xlu0 %3119, %v2685
      %v3121 = vpop.permute.xlu0 %3120
      %3122 = vset.pattern.permute.xlu0 0
      %3123 = vperm.xlu0 %3122, %v2686
      %v3124 = vpop.permute.xlu0 %3123
      %3125 = vset.pattern.permute.xlu0 0
      %3126 = vperm.xlu0 %3125, %v2687
      %v3127 = vpop.permute.xlu0 %3126
      %3128 = vset.pattern.permute.xlu0 0
      %3129 = vperm.xlu0 %3128, %v2688
      %v3130 = vpop.permute.xlu0 %3129
      %3131 = vset.pattern.permute.xlu0 0
      %3132 = vperm.xlu0 %3131, %v2689
      %v3133 = vpop.permute.xlu0 %3132
      %3134 = vset.pattern.permute.xlu0 0
      %3135 = vperm.xlu0 %3134, %v2690
      %v3136 = vpop.permute.xlu0 %3135
      %3137 = vset.pattern.permute.xlu0 0
      %3138 = vperm.xlu0 %3137, %v2691
      %v3139 = vpop.permute.xlu0 %3138
      %3140 = vset.pattern.permute.xlu0 0
      %3141 = vperm.xlu0 %3140, %v2692
      %v3142 = vpop.permute.xlu0 %3141
      %3143 = vset.pattern.permute.xlu0 0
      %3144 = vperm.xlu0 %3143, %v2693
      %v3145 = vpop.permute.xlu0 %3144
      %3146 = vset.pattern.permute.xlu0 0
      %3147 = vperm.xlu0 %3146, %v2694
      %v3148 = vpop.permute.xlu0 %3147
      %3149 = vset.pattern.permute.xlu0 0
      %3150 = vperm.xlu0 %3149, %v2695
      %v3151 = vpop.permute.xlu0 %3150
      %3152 = vset.pattern.permute.xlu0 0
      %3153 = vperm.xlu0 %3152, %v2696
      %v3154 = vpop.permute.xlu0 %3153
      %3155 = vset.pattern.permute.xlu0 0
      %3156 = vperm.xlu0 %3155, %v2697
      %v3157 = vpop.permute.xlu0 %3156
      %3158 = vset.pattern.permute.xlu0 0
      %3159 = vperm.xlu0 %3158, %v2698
      %v3160 = vpop.permute.xlu0 %3159
      %3161 = vset.pattern.permute.xlu0 0
      %3162 = vperm.xlu0 %3161, %v2699
      %v3163 = vpop.permute.xlu0 %3162
      %3164 = vset.pattern.permute.xlu0 0
      %3165 = vperm.xlu0 %3164, %v2700
      %v3166 = vpop.permute.xlu0 %3165
      %3167 = vset.pattern.permute.xlu0 0
      %3168 = vperm.xlu0 %3167, %v2701
      %v3169 = vpop.permute.xlu0 %3168
      %3170 = vset.pattern.permute.xlu0 0
      %3171 = vperm.xlu0 %3170, %v2702
      %v3172 = vpop.permute.xlu0 %3171
      %3173 = vset.pattern.permute.xlu0 0
      %3174 = vperm.xlu0 %3173, %v2703
      %v3175 = vpop.permute.xlu0 %3174
      %3176 = vset.pattern.permute.xlu0 0
      %3177 = vperm.xlu0 %3176, %v2704
      %v3178 = vpop.permute.xlu0 %3177
      %3179 = vset.pattern.permute.xlu0 0
      %3180 = vperm.xlu0 %3179, %v2705
      %v3181 = vpop.permute.xlu0 %3180
      %3182 = vset.pattern.permute.xlu0 0
      %3183 = vperm.xlu0 %3182, %v2706
      %v3184 = vpop.permute.xlu0 %3183
      %3185 = vset.pattern.permute.xlu0 0
      %3186 = vperm.xlu0 %3185, %v2707
      %v3187 = vpop.permute.xlu0 %3186
      %3188 = vset.pattern.permute.xlu0 0
      %3189 = vperm.xlu0 %3188, %v2708
      %v3190 = vpop.permute.xlu0 %3189
      %3191 = vset.pattern.permute.xlu0 0
      %3192 = vperm.xlu0 %3191, %v2709
      %v3193 = vpop.permute.xlu0 %3192
      %3194 = vset.pattern.permute.xlu0 0
      %3195 = vperm.xlu0 %3194, %v2710
      %v3196 = vpop.permute.xlu0 %3195
      %3197 = vset.pattern.permute.xlu0 0
      %3198 = vperm.xlu0 %3197, %v2711
      %v3199 = vpop.permute.xlu0 %3198
      %3200 = vset.pattern.permute.xlu0 0
      %3201 = vperm.xlu0 %3200, %v2712
      %v3202 = vpop.permute.xlu0 %3201
      %3203 = vset.pattern.permute.xlu0 0
      %3204 = vperm.xlu0 %3203, %v2713
      %v3205 = vpop.permute.xlu0 %3204
      %3206 = vset.pattern.permute.xlu0 0
      %3207 = vperm.xlu0 %3206, %v2714
      %v3208 = vpop.permute.xlu0 %3207
      %3209 = vset.pattern.permute.xlu0 0
      %3210 = vperm.xlu0 %3209, %v2715
      %v3211 = vpop.permute.xlu0 %3210
      %3212 = vset.pattern.permute.xlu0 0
      %3213 = vperm.xlu0 %3212, %v2716
      %v3214 = vpop.permute.xlu0 %3213
      %3215 = vset.pattern.permute.xlu0 0
      %3216 = vperm.xlu0 %3215, %v2717
      %v3217 = vpop.permute.xlu0 %3216
      %3218 = vset.pattern.permute.xlu0 0
      %3219 = vperm.xlu0 %3218, %v2718
      %v3220 = vpop.permute.xlu0 %3219
      %3221 = vset.pattern.permute.xlu0 0
      %3222 = vperm.xlu0 %3221, %v2719
      %v3223 = vpop.permute.xlu0 %3222
      %3224 = vset.pattern.permute.xlu0 0
      %3225 = vperm.xlu0 %3224, %v2720
      %v3226 = vpop.permute.xlu0 %3225
      %3227 = vset.pattern.permute.xlu0 0
      %3228 = vperm.xlu0 %3227, %v2721
      %v3229 = vpop.permute.xlu0 %3228
      %3230 = vset.pattern.permute.xlu0 0
      %3231 = vperm.xlu0 %3230, %v2722
      %v3232 = vpop.permute.xlu0 %3231
      %3233 = vset.pattern.permute.xlu0 0
      %3234 = vperm.xlu0 %3233, %v2723
      %v3235 = vpop.permute.xlu0 %3234
      %3236 = vset.pattern.permute.xlu0 0
      %3237 = vperm.xlu0 %3236, %v2724
      %v3238 = vpop.permute.xlu0 %3237
      %3239 = vset.pattern.permute.xlu0 0
      %3240 = vperm.xlu0 %3239, %v2725
      %v3241 = vpop.permute.xlu0 %3240
      %3242 = vset.pattern.permute.xlu0 0
      %3243 = vperm.xlu0 %3242, %v2726
      %v3244 = vpop.permute.xlu0 %3243
      %3245 = vset.pattern.permute.xlu0 0
      %3246 = vperm.xlu0 %3245, %v2727
      %v3247 = vpop.permute.xlu0 %3246
      %3248 = vset.pattern.permute.xlu0 0
      %3249 = vperm.xlu0 %3248, %v2728
      %v3250 = vpop.permute.xlu0 %3249
      %3251 = vset.pattern.permute.xlu0 0
      %3252 = vperm.xlu0 %3251, %v2729
      %v3253 = vpop.permute.xlu0 %3252
      %3254 = vset.pattern.permute.xlu0 0
      %3255 = vperm.xlu0 %3254, %v2730
      %v3256 = vpop.permute.xlu0 %3255
      %3257 = vset.pattern.permute.xlu0 0
      %3258 = vperm.xlu0 %3257, %v2731
      %v3259 = vpop.permute.xlu0 %3258
      %3260 = vset.pattern.permute.xlu0 0
      %3261 = vperm.xlu0 %3260, %v2732
      %v3262 = vpop.permute.xlu0 %3261
      %3263 = vset.pattern.permute.xlu0 0
      %3264 = vperm.xlu0 %3263, %v2733
      %v3265 = vpop.permute.xlu0 %3264
      %3266 = vset.pattern.permute.xlu0 0
      %3267 = vperm.xlu0 %3266, %v2734
      %v3268 = vpop.permute.xlu0 %3267
      %3269 = vset.pattern.permute.xlu0 0
      %3270 = vperm.xlu0 %3269, %v2735
      %v3271 = vpop.permute.xlu0 %3270
      %3272 = vset.pattern.permute.xlu0 0
      %3273 = vperm.xlu0 %3272, %v2736
      %v3274 = vpop.permute.xlu0 %3273
      %3275 = vset.pattern.permute.xlu0 0
      %3276 = vperm.xlu0 %3275, %v2737
      %v3277 = vpop.permute.xlu0 %3276
      %3278 = vset.pattern.permute.xlu0 0
      %3279 = vperm.xlu0 %3278, %v2738
      %v3280 = vpop.permute.xlu0 %3279
      %3281 = vset.pattern.permute.xlu0 0
      %3282 = vperm.xlu0 %3281, %v2739
      %v3283 = vpop.permute.xlu0 %3282
      %3284 = vset.pattern.permute.xlu0 0
      %3285 = vperm.xlu0 %3284, %v2740
      %v3286 = vpop.permute.xlu0 %3285
      %3287 = vset.pattern.permute.xlu0 0
      %3288 = vperm.xlu0 %3287, %v2741
      %v3289 = vpop.permute.xlu0 %3288
      %3290 = vset.pattern.permute.xlu0 0
      %3291 = vperm.xlu0 %3290, %v2742
      %v3292 = vpop.permute.xlu0 %3291
      %3293 = vset.pattern.permute.xlu0 0
      %3294 = vperm.xlu0 %3293, %v2743
      %v3295 = vpop.permute.xlu0 %3294
      %3296 = vset.pattern.permute.xlu0 0
      %3297 = vperm.xlu0 %3296, %v2744
      %v3298 = vpop.permute.xlu0 %3297
      %3299 = vset.pattern.permute.xlu0 0
      %3300 = vperm.xlu0 %3299, %v2745
      %v3301 = vpop.permute.xlu0 %3300
      %3302 = vset.pattern.permute.xlu0 0
      %3303 = vperm.xlu0 %3302, %v2746
      %v3304 = vpop.permute.xlu0 %3303
      %3305 = vset.pattern.permute.xlu0 0
      %3306 = vperm.xlu0 %3305, %v2747
      %v3307 = vpop.permute.xlu0 %3306
      %3308 = vset.pattern.permute.xlu0 0
      %3309 = vperm.xlu0 %3308, %v2748
      %v3310 = vpop.permute.xlu0 %3309
      %3311 = vset.pattern.permute.xlu0 0
      %3312 = vperm.xlu0 %3311, %v2749
      %v3313 = vpop.permute.xlu0 %3312
      %3314 = vset.pattern.permute.xlu0 0
      %3315 = vperm.xlu0 %3314, %v2750
      %v3316 = vpop.permute.xlu0 %3315
      %3317 = vset.pattern.permute.xlu0 0
      %3318 = vperm.xlu0 %3317, %v2751
      %v3319 = vpop.permute.xlu0 %3318
      %3320 = vset.pattern.permute.xlu0 0
      %3321 = vperm.xlu0 %3320, %v2752
      %v3322 = vpop.permute.xlu0 %3321
      %3323 = vset.pattern.permute.xlu0 0
      %3324 = vperm.xlu0 %3323, %v2753
      %v3325 = vpop.permute.xlu0 %3324
      %3326 = vset.pattern.permute.xlu0 0
      %3327 = vperm.xlu0 %3326, %v2754
      %v3328 = vpop.permute.xlu0 %3327
      %3329 = vset.pattern.permute.xlu0 0
      %3330 = vperm.xlu0 %3329, %v2755
      %v3331 = vpop.permute.xlu0 %3330
      %3332 = vset.pattern.permute.xlu0 0
      %3333 = vperm.xlu0 %3332, %v2756
      %v3334 = vpop.permute.xlu0 %3333
      %3335 = vset.pattern.permute.xlu0 0
      %3336 = vperm.xlu0 %3335, %v2757
      %v3337 = vpop.permute.xlu0 %3336
      %3338 = vset.pattern.permute.xlu0 0
      %3339 = vperm.xlu0 %3338, %v2758
      %v3340 = vpop.permute.xlu0 %3339
      %3341 = vset.pattern.permute.xlu0 0
      %3342 = vperm.xlu0 %3341, %v2759
      %v3343 = vpop.permute.xlu0 %3342
      %3344 = vset.pattern.permute.xlu0 0
      %3345 = vperm.xlu0 %3344, %v2760
      %v3346 = vpop.permute.xlu0 %3345
      %3347 = vset.pattern.permute.xlu0 0
      %3348 = vperm.xlu0 %3347, %v2761
      %v3349 = vpop.permute.xlu0 %3348
      %3350 = vset.pattern.permute.xlu0 0
      %3351 = vperm.xlu0 %3350, %v2762
      %v3352 = vpop.permute.xlu0 %3351
      %3353 = vset.pattern.permute.xlu0 0
      %3354 = vperm.xlu0 %3353, %v2763
      %v3355 = vpop.permute.xlu0 %3354
      %3356 = vset.pattern.permute.xlu0 0
      %3357 = vperm.xlu0 %3356, %v2764
      %v3358 = vpop.permute.xlu0 %3357
      %3359 = vset.pattern.permute.xlu0 0
      %3360 = vperm.xlu0 %3359, %v2765
      %v3361 = vpop.permute.xlu0 %3360
      %3362 = vset.pattern.permute.xlu0 0
      %3363 = vperm.xlu0 %3362, %v2766
      %v3364 = vpop.permute.xlu0 %3363
      %3365 = vset.pattern.permute.xlu0 0
      %3366 = vperm.xlu0 %3365, %v2767
      %v3367 = vpop.permute.xlu0 %3366
      %3368 = vset.pattern.permute.xlu0 0
      %3369 = vperm.xlu0 %3368, %v2768
      %v3370 = vpop.permute.xlu0 %3369
      %3371 = vset.pattern.permute.xlu0 0
      %3372 = vperm.xlu0 %3371, %v2769
      %v3373 = vpop.permute.xlu0 %3372
      %3374 = vset.pattern.permute.xlu0 0
      %3375 = vperm.xlu0 %3374, %v2770
      %v3376 = vpop.permute.xlu0 %3375
      %3377 = vset.pattern.permute.xlu0 0
      %3378 = vperm.xlu0 %3377, %v2771
      %v3379 = vpop.permute.xlu0 %3378
      %3380 = vset.pattern.permute.xlu0 0
      %3381 = vperm.xlu0 %3380, %v2772
      %v3382 = vpop.permute.xlu0 %3381
      %3383 = vset.pattern.permute.xlu0 0
      %3384 = vperm.xlu0 %3383, %v2773
      %v3385 = vpop.permute.xlu0 %3384
      %3386 = vset.pattern.permute.xlu0 0
      %3387 = vperm.xlu0 %3386, %v2774
      %v3388 = vpop.permute.xlu0 %3387
      %3389 = vset.pattern.permute.xlu0 0
      %3390 = vperm.xlu0 %3389, %v2775
      %v3391 = vpop.permute.xlu0 %3390
      %3392 = vset.pattern.permute.xlu0 0
      %3393 = vperm.xlu0 %3392, %v2776
      %v3394 = vpop.permute.xlu0 %3393
      %3395 = vset.pattern.permute.xlu0 0
      %3396 = vperm.xlu0 %3395, %v2777
      %v3397 = vpop.permute.xlu0 %3396
      %3398 = vset.pattern.permute.xlu0 0
      %3399 = vperm.xlu0 %3398, %v2778
      %v3400 = vpop.permute.xlu0 %3399
      %3401 = vset.pattern.permute.xlu0 0
      %3402 = vperm.xlu0 %3401, %v2779
      %v3403 = vpop.permute.xlu0 %3402
      %3404 = vset.pattern.permute.xlu0 0
      %3405 = vperm.xlu0 %3404, %v2780
      %v3406 = vpop.permute.xlu0 %3405
      %3407 = vset.pattern.permute.xlu0 0
      %3408 = vperm.xlu0 %3407, %v2781
      %v3409 = vpop.permute.xlu0 %3408
      %3410 = vset.pattern.permute.xlu0 0
      %3411 = vperm.xlu0 %3410, %v2782
      %v3412 = vpop.permute.xlu0 %3411
      %3413 = vset.pattern.permute.xlu0 0
      %3414 = vperm.xlu0 %3413, %v2783
      %v3415 = vpop.permute.xlu0 %3414
      %3416 = vset.pattern.permute.xlu0 0
      %3417 = vperm.xlu0 %3416, %v2784
      %v3418 = vpop.permute.xlu0 %3417
      %3419 = vset.pattern.permute.xlu0 0
      %3420 = vperm.xlu0 %3419, %v2785
      %v3421 = vpop.permute.xlu0 %3420
      %3422 = vset.pattern.permute.xlu0 0
      %3423 = vperm.xlu0 %3422, %v2786
      %v3424 = vpop.permute.xlu0 %3423
      %3425 = vset.pattern.permute.xlu0 0
      %3426 = vperm.xlu0 %3425, %v2787
      %v3427 = vpop.permute.xlu0 %3426
      %3428 = vset.pattern.permute.xlu0 0
      %3429 = vperm.xlu0 %3428, %v2788
      %v3430 = vpop.permute.xlu0 %3429
      %3431 = vset.pattern.permute.xlu0 0
      %3432 = vperm.xlu0 %3431, %v2789
      %v3433 = vpop.permute.xlu0 %3432
      %3434 = vset.pattern.permute.xlu0 0
      %3435 = vperm.xlu0 %3434, %v2790
      %v3436 = vpop.permute.xlu0 %3435
      %3437 = vset.pattern.permute.xlu0 0
      %3438 = vperm.xlu0 %3437, %v2791
      %v3439 = vpop.permute.xlu0 %3438
      %3440 = vset.pattern.permute.xlu0 0
      %3441 = vperm.xlu0 %3440, %v2792
      %v3442 = vpop.permute.xlu0 %3441
      %3443 = vset.pattern.permute.xlu0 0
      %3444 = vperm.xlu0 %3443, %v2793
      %v3445 = vpop.permute.xlu0 %3444
      %3446 = vset.pattern.permute.xlu0 0
      %3447 = vperm.xlu0 %3446, %v2794
      %v3448 = vpop.permute.xlu0 %3447
      %3449 = vset.pattern.permute.xlu0 0
      %3450 = vperm.xlu0 %3449, %v2795
      %v3451 = vpop.permute.xlu0 %3450
      %3452 = vset.pattern.permute.xlu0 0
      %3453 = vperm.xlu0 %3452, %v2796
      %v3454 = vpop.permute.xlu0 %3453
      %3455 = vset.pattern.permute.xlu0 0
      %3456 = vperm.xlu0 %3455, %v2797
      %v3457 = vpop.permute.xlu0 %3456
      %3458 = vset.pattern.permute.xlu0 0
      %3459 = vperm.xlu0 %3458, %v2798
      %v3460 = vpop.permute.xlu0 %3459
      %3461 = vset.pattern.permute.xlu0 0
      %3462 = vperm.xlu0 %3461, %v2799
      %v3463 = vpop.permute.xlu0 %3462
      %3464 = vset.pattern.permute.xlu0 0
      %3465 = vperm.xlu0 %3464, %v2800
      %v3466 = vpop.permute.xlu0 %3465
      %3467 = vset.pattern.permute.xlu0 0
      %3468 = vperm.xlu0 %3467, %v2801
      %v3469 = vpop.permute.xlu0 %3468
      %3470 = vset.pattern.permute.xlu0 0
      %3471 = vperm.xlu0 %3470, %v2802
      %v3472 = vpop.permute.xlu0 %3471
      %3473 = vset.pattern.permute.xlu0 0
      %3474 = vperm.xlu0 %3473, %v2803
      %v3475 = vpop.permute.xlu0 %3474
      %3476 = vset.pattern.permute.xlu0 0
      %3477 = vperm.xlu0 %3476, %v2804
      %v3478 = vpop.permute.xlu0 %3477
      %3479 = vset.pattern.permute.xlu0 0
      %3480 = vperm.xlu0 %3479, %v2805
      %v3481 = vpop.permute.xlu0 %3480
      %3482 = vset.pattern.permute.xlu0 0
      %3483 = vperm.xlu0 %3482, %v2806
      %v3484 = vpop.permute.xlu0 %3483
      %3485 = vset.pattern.permute.xlu0 0
      %3486 = vperm.xlu0 %3485, %v2807
      %v3487 = vpop.permute.xlu0 %3486
      %3488 = vset.pattern.permute.xlu0 0
      %3489 = vperm.xlu0 %3488, %v2808
      %v3490 = vpop.permute.xlu0 %3489
      %3491 = vset.pattern.permute.xlu0 0
      %3492 = vperm.xlu0 %3491, %v2809
      %v3493 = vpop.permute.xlu0 %3492
      %3494 = vset.pattern.permute.xlu0 0
      %3495 = vperm.xlu0 %3494, %v2810
      %v3496 = vpop.permute.xlu0 %3495
      %3497 = vset.pattern.permute.xlu0 0
      %3498 = vperm.xlu0 %3497, %v2811
      %v3499 = vpop.permute.xlu0 %3498
      %3500 = vset.pattern.permute.xlu0 0
      %3501 = vperm.xlu0 %3500, %v2812
      %v3502 = vpop.permute.xlu0 %3501
      %3503 = vset.pattern.permute.xlu0 0
      %3504 = vperm.xlu0 %3503, %v2813
      %v3505 = vpop.permute.xlu0 %3504
      %3506 = vset.pattern.permute.xlu0 0
      %3507 = vperm.xlu0 %3506, %v2814
      %v3508 = vpop.permute.xlu0 %3507
      %3509 = vset.pattern.permute.xlu0 0
      %3510 = vperm.xlu0 %3509, %v2815
      %v3511 = vpop.permute.xlu0 %3510
      %3512 = vset.pattern.permute.xlu0 0
      %3513 = vperm.xlu0 %3512, %v2816
      %v3514 = vpop.permute.xlu0 %3513
      %3515 = vset.pattern.permute.xlu0 0
      %3516 = vperm.xlu0 %3515, %v2817
      %v3517 = vpop.permute.xlu0 %3516
      %3518 = vset.pattern.permute.xlu0 0
      %3519 = vperm.xlu0 %3518, %v2818
      %v3520 = vpop.permute.xlu0 %3519
      %3521 = vset.pattern.permute.xlu0 0
      %3522 = vperm.xlu0 %3521, %v2819
      %v3523 = vpop.permute.xlu0 %3522
      %3524 = vset.pattern.permute.xlu0 0
      %3525 = vperm.xlu0 %3524, %v2820
      %v3526 = vpop.permute.xlu0 %3525
      %3527 = vset.pattern.permute.xlu0 0
      %3528 = vperm.xlu0 %3527, %v2821
      %v3529 = vpop.permute.xlu0 %3528
      %3530 = vset.pattern.permute.xlu0 0
      %3531 = vperm.xlu0 %3530, %v2822
      %v3532 = vpop.permute.xlu0 %3531
      %3533 = vset.pattern.permute.xlu0 0
      %3534 = vperm.xlu0 %3533, %v2823
      %v3535 = vpop.permute.xlu0 %3534
      %3536 = vset.pattern.permute.xlu0 0
      %3537 = vperm.xlu0 %3536, %v2824
      %v3538 = vpop.permute.xlu0 %3537
      %3539 = vset.pattern.permute.xlu0 0
      %3540 = vperm.xlu0 %3539, %v2825
      %v3541 = vpop.permute.xlu0 %3540
      %3542 = vset.pattern.permute.xlu0 0
      %3543 = vperm.xlu0 %3542, %v2826
      %v3544 = vpop.permute.xlu0 %3543
      %3545 = vset.pattern.permute.xlu0 0
      %3546 = vperm.xlu0 %3545, %v2827
      %v3547 = vpop.permute.xlu0 %3546
      %3548 = vset.pattern.permute.xlu0 0
      %3549 = vperm.xlu0 %3548, %v2828
      %v3550 = vpop.permute.xlu0 %3549
      %3551 = vset.pattern.permute.xlu0 0
      %3552 = vperm.xlu0 %3551, %v2829
      %v3553 = vpop.permute.xlu0 %3552
      %3554 = vset.pattern.permute.xlu0 0
      %3555 = vperm.xlu0 %3554, %v2830
      %v3556 = vpop.permute.xlu0 %3555
      %3557 = vset.pattern.permute.xlu0 0
      %3558 = vperm.xlu0 %3557, %v2831
      %v3559 = vpop.permute.xlu0 %3558
      %3560 = vset.pattern.permute.xlu0 0
      %3561 = vperm.xlu0 %3560, %v2832
      %v3562 = vpop.permute.xlu0 %3561
      %3563 = vset.pattern.permute.xlu0 0
      %3564 = vperm.xlu0 %3563, %v2833
      %v3565 = vpop.permute.xlu0 %3564
      %3566 = vset.pattern.permute.xlu0 0
      %3567 = vperm.xlu0 %3566, %v2834
      %v3568 = vpop.permute.xlu0 %3567
      %3569 = vset.pattern.permute.xlu0 0
      %3570 = vperm.xlu0 %3569, %v2835
      %v3571 = vpop.permute.xlu0 %3570
      %3572 = vset.pattern.permute.xlu0 0
      %3573 = vperm.xlu0 %3572, %v2836
      %v3574 = vpop.permute.xlu0 %3573
      %3575 = vset.pattern.permute.xlu0 0
      %3576 = vperm.xlu0 %3575, %v2837
      %v3577 = vpop.permute.xlu0 %3576
      %3578 = vset.pattern.permute.xlu0 0
      %3579 = vperm.xlu0 %3578, %v2838
      %v3580 = vpop.permute.xlu0 %3579
      %3581 = vset.pattern.permute.xlu0 0
      %3582 = vperm.xlu0 %3581, %v2839
      %v3583 = vpop.permute.xlu0 %3582
      %3584 = vset.pattern.permute.xlu0 0
      %3585 = vperm.xlu0 %3584, %v2840
      %v3586 = vpop.permute.xlu0 %3585
      %3587 = vset.pattern.permute.xlu0 0
      %3588 = vperm.xlu0 %3587, %v2841
      %v3589 = vpop.permute.xlu0 %3588
      %3590 = vset.pattern.permute.xlu0 0
      %3591 = vperm.xlu0 %3590, %v2842
      %v3592 = vpop.permute.xlu0 %3591
      %3593 = vset.pattern.permute.xlu0 0
      %3594 = vperm.xlu0 %3593, %v2843
      %v3595 = vpop.permute.xlu0 %3594
      %3596 = vset.pattern.permute.xlu0 0
      %3597 = vperm.xlu0 %3596, %v2844
      %v3598 = vpop.permute.xlu0 %3597
      %3599 = vset.pattern.permute.xlu0 0
      %3600 = vperm.xlu0 %3599, %v2845
      %v3601 = vpop.permute.xlu0 %3600
      %3602 = vset.pattern.permute.xlu0 0
      %3603 = vperm.xlu0 %3602, %v2846
      %v3604 = vpop.permute.xlu0 %3603
      %3605 = vset.pattern.permute.xlu0 0
      %3606 = vperm.xlu0 %3605, %v2847
      %v3607 = vpop.permute.xlu0 %3606
      %3608 = vset.pattern.permute.xlu0 0
      %3609 = vperm.xlu0 %3608, %v2848
      %v3610 = vpop.permute.xlu0 %3609
      %3611 = vset.pattern.permute.xlu0 0
      %3612 = vperm.xlu0 %3611, %v2849
      %v3613 = vpop.permute.xlu0 %3612
      %3614 = vset.pattern.permute.xlu0 0
      %3615 = vperm.xlu0 %3614, %v2850
      %v3616 = vpop.permute.xlu0 %3615
      %3617 = vset.pattern.permute.xlu0 0
      %3618 = vperm.xlu0 %3617, %v2851
      %v3619 = vpop.permute.xlu0 %3618
      %vm3620 = vcmp.eq.s32.totalorder %v2854, %v2595
      %vm3621 = vcmp.eq.s32.totalorder %v2857, %v2595
      %vm3622 = vcmp.eq.s32.totalorder %v2860, %v2595
      %vm3623 = vcmp.eq.s32.totalorder %v2863, %v2595
      %vm3624 = vcmp.eq.s32.totalorder %v2866, %v2595
      %vm3625 = vcmp.eq.s32.totalorder %v2869, %v2595
      %vm3626 = vcmp.eq.s32.totalorder %v2872, %v2595
      %vm3627 = vcmp.eq.s32.totalorder %v2875, %v2595
      %vm3628 = vcmp.eq.s32.totalorder %v2878, %v2595
      %vm3629 = vcmp.eq.s32.totalorder %v2881, %v2595
      %vm3630 = vcmp.eq.s32.totalorder %v2884, %v2595
      %vm3631 = vcmp.eq.s32.totalorder %v2887, %v2595
      %vm3632 = vcmp.eq.s32.totalorder %v2890, %v2595
      %vm3633 = vcmp.eq.s32.totalorder %v2893, %v2595
      %vm3634 = vcmp.eq.s32.totalorder %v2896, %v2595
      %vm3635 = vcmp.eq.s32.totalorder %v2899, %v2595
      %vm3636 = vcmp.eq.s32.totalorder %v2902, %v2595
      %vm3637 = vcmp.eq.s32.totalorder %v2905, %v2595
      %vm3638 = vcmp.eq.s32.totalorder %v2908, %v2595
      %vm3639 = vcmp.eq.s32.totalorder %v2911, %v2595
      %vm3640 = vcmp.eq.s32.totalorder %v2914, %v2595
      %vm3641 = vcmp.eq.s32.totalorder %v2917, %v2595
      %vm3642 = vcmp.eq.s32.totalorder %v2920, %v2595
      %vm3643 = vcmp.eq.s32.totalorder %v2923, %v2595
      %vm3644 = vcmp.eq.s32.totalorder %v2926, %v2595
      %vm3645 = vcmp.eq.s32.totalorder %v2929, %v2595
      %vm3646 = vcmp.eq.s32.totalorder %v2932, %v2595
      %vm3647 = vcmp.eq.s32.totalorder %v2935, %v2595
      %vm3648 = vcmp.eq.s32.totalorder %v2938, %v2595
      %vm3649 = vcmp.eq.s32.totalorder %v2941, %v2595
      %vm3650 = vcmp.eq.s32.totalorder %v2944, %v2595
      %vm3651 = vcmp.eq.s32.totalorder %v2947, %v2595
      %vm3652 = vcmp.eq.s32.totalorder %v2950, %v2595
      %vm3653 = vcmp.eq.s32.totalorder %v2953, %v2595
      %vm3654 = vcmp.eq.s32.totalorder %v2956, %v2595
      %vm3655 = vcmp.eq.s32.totalorder %v2959, %v2595
      %vm3656 = vcmp.eq.s32.totalorder %v2962, %v2595
      %vm3657 = vcmp.eq.s32.totalorder %v2965, %v2595
      %vm3658 = vcmp.eq.s32.totalorder %v2968, %v2595
      %vm3659 = vcmp.eq.s32.totalorder %v2971, %v2595
      %vm3660 = vcmp.eq.s32.totalorder %v2974, %v2595
      %vm3661 = vcmp.eq.s32.totalorder %v2977, %v2595
      %vm3662 = vcmp.eq.s32.totalorder %v2980, %v2595
      %vm3663 = vcmp.eq.s32.totalorder %v2983, %v2595
      %vm3664 = vcmp.eq.s32.totalorder %v2986, %v2595
      %vm3665 = vcmp.eq.s32.totalorder %v2989, %v2595
      %vm3666 = vcmp.eq.s32.totalorder %v2992, %v2595
      %vm3667 = vcmp.eq.s32.totalorder %v2995, %v2595
      %vm3668 = vcmp.eq.s32.totalorder %v2998, %v2595
      %vm3669 = vcmp.eq.s32.totalorder %v3001, %v2595
      %vm3670 = vcmp.eq.s32.totalorder %v3004, %v2595
      %vm3671 = vcmp.eq.s32.totalorder %v3007, %v2595
      %vm3672 = vcmp.eq.s32.totalorder %v3010, %v2595
      %vm3673 = vcmp.eq.s32.totalorder %v3013, %v2595
      %vm3674 = vcmp.eq.s32.totalorder %v3016, %v2595
      %vm3675 = vcmp.eq.s32.totalorder %v3019, %v2595
      %vm3676 = vcmp.eq.s32.totalorder %v3022, %v2595
      %vm3677 = vcmp.eq.s32.totalorder %v3025, %v2595
      %vm3678 = vcmp.eq.s32.totalorder %v3028, %v2595
      %vm3679 = vcmp.eq.s32.totalorder %v3031, %v2595
      %vm3680 = vcmp.eq.s32.totalorder %v3034, %v2595
      %vm3681 = vcmp.eq.s32.totalorder %v3037, %v2595
      %vm3682 = vcmp.eq.s32.totalorder %v3040, %v2595
      %vm3683 = vcmp.eq.s32.totalorder %v3043, %v2595
      %vm3684 = vcmp.eq.s32.totalorder %v3046, %v2595
      %vm3685 = vcmp.eq.s32.totalorder %v3049, %v2595
      %vm3686 = vcmp.eq.s32.totalorder %v3052, %v2595
      %vm3687 = vcmp.eq.s32.totalorder %v3055, %v2595
      %vm3688 = vcmp.eq.s32.totalorder %v3058, %v2595
      %vm3689 = vcmp.eq.s32.totalorder %v3061, %v2595
      %vm3690 = vcmp.eq.s32.totalorder %v3064, %v2595
      %vm3691 = vcmp.eq.s32.totalorder %v3067, %v2595
      %vm3692 = vcmp.eq.s32.totalorder %v3070, %v2595
      %vm3693 = vcmp.eq.s32.totalorder %v3073, %v2595
      %vm3694 = vcmp.eq.s32.totalorder %v3076, %v2595
      %vm3695 = vcmp.eq.s32.totalorder %v3079, %v2595
      %vm3696 = vcmp.eq.s32.totalorder %v3082, %v2595
      %vm3697 = vcmp.eq.s32.totalorder %v3085, %v2595
      %vm3698 = vcmp.eq.s32.totalorder %v3088, %v2595
      %vm3699 = vcmp.eq.s32.totalorder %v3091, %v2595
      %vm3700 = vcmp.eq.s32.totalorder %v3094, %v2595
      %vm3701 = vcmp.eq.s32.totalorder %v3097, %v2595
      %vm3702 = vcmp.eq.s32.totalorder %v3100, %v2595
      %vm3703 = vcmp.eq.s32.totalorder %v3103, %v2595
      %vm3704 = vcmp.eq.s32.totalorder %v3106, %v2595
      %vm3705 = vcmp.eq.s32.totalorder %v3109, %v2595
      %vm3706 = vcmp.eq.s32.totalorder %v3112, %v2595
      %vm3707 = vcmp.eq.s32.totalorder %v3115, %v2595
      %vm3708 = vcmp.eq.s32.totalorder %v3118, %v2595
      %vm3709 = vcmp.eq.s32.totalorder %v3121, %v2595
      %vm3710 = vcmp.eq.s32.totalorder %v3124, %v2595
      %vm3711 = vcmp.eq.s32.totalorder %v3127, %v2595
      %vm3712 = vcmp.eq.s32.totalorder %v3130, %v2595
      %vm3713 = vcmp.eq.s32.totalorder %v3133, %v2595
      %vm3714 = vcmp.eq.s32.totalorder %v3136, %v2595
      %vm3715 = vcmp.eq.s32.totalorder %v3139, %v2595
      %vm3716 = vcmp.eq.s32.totalorder %v3142, %v2595
      %vm3717 = vcmp.eq.s32.totalorder %v3145, %v2595
      %vm3718 = vcmp.eq.s32.totalorder %v3148, %v2595
      %vm3719 = vcmp.eq.s32.totalorder %v3151, %v2595
      %vm3720 = vcmp.eq.s32.totalorder %v3154, %v2595
      %vm3721 = vcmp.eq.s32.totalorder %v3157, %v2595
      %vm3722 = vcmp.eq.s32.totalorder %v3160, %v2595
      %vm3723 = vcmp.eq.s32.totalorder %v3163, %v2595
      %vm3724 = vcmp.eq.s32.totalorder %v3166, %v2595
      %vm3725 = vcmp.eq.s32.totalorder %v3169, %v2595
      %vm3726 = vcmp.eq.s32.totalorder %v3172, %v2595
      %vm3727 = vcmp.eq.s32.totalorder %v3175, %v2595
      %vm3728 = vcmp.eq.s32.totalorder %v3178, %v2595
      %vm3729 = vcmp.eq.s32.totalorder %v3181, %v2595
      %vm3730 = vcmp.eq.s32.totalorder %v3184, %v2595
      %vm3731 = vcmp.eq.s32.totalorder %v3187, %v2595
      %vm3732 = vcmp.eq.s32.totalorder %v3190, %v2595
      %vm3733 = vcmp.eq.s32.totalorder %v3193, %v2595
      %vm3734 = vcmp.eq.s32.totalorder %v3196, %v2595
      %vm3735 = vcmp.eq.s32.totalorder %v3199, %v2595
      %vm3736 = vcmp.eq.s32.totalorder %v3202, %v2595
      %vm3737 = vcmp.eq.s32.totalorder %v3205, %v2595
      %vm3738 = vcmp.eq.s32.totalorder %v3208, %v2595
      %vm3739 = vcmp.eq.s32.totalorder %v3211, %v2595
      %vm3740 = vcmp.eq.s32.totalorder %v3214, %v2595
      %vm3741 = vcmp.eq.s32.totalorder %v3217, %v2595
      %vm3742 = vcmp.eq.s32.totalorder %v3220, %v2595
      %vm3743 = vcmp.eq.s32.totalorder %v3223, %v2595
      %vm3744 = vcmp.eq.s32.totalorder %v3226, %v2595
      %vm3745 = vcmp.eq.s32.totalorder %v3229, %v2595
      %vm3746 = vcmp.eq.s32.totalorder %v3232, %v2595
      %vm3747 = vcmp.eq.s32.totalorder %v3235, %v2595
      %vm3748 = vcmp.eq.s32.totalorder %v3238, %v2595
      %vm3749 = vcmp.eq.s32.totalorder %v3241, %v2595
      %vm3750 = vcmp.eq.s32.totalorder %v3244, %v2595
      %vm3751 = vcmp.eq.s32.totalorder %v3247, %v2595
      %vm3752 = vcmp.eq.s32.totalorder %v3250, %v2595
      %vm3753 = vcmp.eq.s32.totalorder %v3253, %v2595
      %vm3754 = vcmp.eq.s32.totalorder %v3256, %v2595
      %vm3755 = vcmp.eq.s32.totalorder %v3259, %v2595
      %vm3756 = vcmp.eq.s32.totalorder %v3262, %v2595
      %vm3757 = vcmp.eq.s32.totalorder %v3265, %v2595
      %vm3758 = vcmp.eq.s32.totalorder %v3268, %v2595
      %vm3759 = vcmp.eq.s32.totalorder %v3271, %v2595
      %vm3760 = vcmp.eq.s32.totalorder %v3274, %v2595
      %vm3761 = vcmp.eq.s32.totalorder %v3277, %v2595
      %vm3762 = vcmp.eq.s32.totalorder %v3280, %v2595
      %vm3763 = vcmp.eq.s32.totalorder %v3283, %v2595
      %vm3764 = vcmp.eq.s32.totalorder %v3286, %v2595
      %vm3765 = vcmp.eq.s32.totalorder %v3289, %v2595
      %vm3766 = vcmp.eq.s32.totalorder %v3292, %v2595
      %vm3767 = vcmp.eq.s32.totalorder %v3295, %v2595
      %vm3768 = vcmp.eq.s32.totalorder %v3298, %v2595
      %vm3769 = vcmp.eq.s32.totalorder %v3301, %v2595
      %vm3770 = vcmp.eq.s32.totalorder %v3304, %v2595
      %vm3771 = vcmp.eq.s32.totalorder %v3307, %v2595
      %vm3772 = vcmp.eq.s32.totalorder %v3310, %v2595
      %vm3773 = vcmp.eq.s32.totalorder %v3313, %v2595
      %vm3774 = vcmp.eq.s32.totalorder %v3316, %v2595
      %vm3775 = vcmp.eq.s32.totalorder %v3319, %v2595
      %vm3776 = vcmp.eq.s32.totalorder %v3322, %v2595
      %vm3777 = vcmp.eq.s32.totalorder %v3325, %v2595
      %vm3778 = vcmp.eq.s32.totalorder %v3328, %v2595
      %vm3779 = vcmp.eq.s32.totalorder %v3331, %v2595
      %vm3780 = vcmp.eq.s32.totalorder %v3334, %v2595
      %vm3781 = vcmp.eq.s32.totalorder %v3337, %v2595
      %vm3782 = vcmp.eq.s32.totalorder %v3340, %v2595
      %vm3783 = vcmp.eq.s32.totalorder %v3343, %v2595
      %vm3784 = vcmp.eq.s32.totalorder %v3346, %v2595
      %vm3785 = vcmp.eq.s32.totalorder %v3349, %v2595
      %vm3786 = vcmp.eq.s32.totalorder %v3352, %v2595
      %vm3787 = vcmp.eq.s32.totalorder %v3355, %v2595
      %vm3788 = vcmp.eq.s32.totalorder %v3358, %v2595
      %vm3789 = vcmp.eq.s32.totalorder %v3361, %v2595
      %vm3790 = vcmp.eq.s32.totalorder %v3364, %v2595
      %vm3791 = vcmp.eq.s32.totalorder %v3367, %v2595
      %vm3792 = vcmp.eq.s32.totalorder %v3370, %v2595
      %vm3793 = vcmp.eq.s32.totalorder %v3373, %v2595
      %vm3794 = vcmp.eq.s32.totalorder %v3376, %v2595
      %vm3795 = vcmp.eq.s32.totalorder %v3379, %v2595
      %vm3796 = vcmp.eq.s32.totalorder %v3382, %v2595
      %vm3797 = vcmp.eq.s32.totalorder %v3385, %v2595
      %vm3798 = vcmp.eq.s32.totalorder %v3388, %v2595
      %vm3799 = vcmp.eq.s32.totalorder %v3391, %v2595
      %vm3800 = vcmp.eq.s32.totalorder %v3394, %v2595
      %vm3801 = vcmp.eq.s32.totalorder %v3397, %v2595
      %vm3802 = vcmp.eq.s32.totalorder %v3400, %v2595
      %vm3803 = vcmp.eq.s32.totalorder %v3403, %v2595
      %vm3804 = vcmp.eq.s32.totalorder %v3406, %v2595
      %vm3805 = vcmp.eq.s32.totalorder %v3409, %v2595
      %vm3806 = vcmp.eq.s32.totalorder %v3412, %v2595
      %vm3807 = vcmp.eq.s32.totalorder %v3415, %v2595
      %vm3808 = vcmp.eq.s32.totalorder %v3418, %v2595
      %vm3809 = vcmp.eq.s32.totalorder %v3421, %v2595
      %vm3810 = vcmp.eq.s32.totalorder %v3424, %v2595
      %vm3811 = vcmp.eq.s32.totalorder %v3427, %v2595
      %vm3812 = vcmp.eq.s32.totalorder %v3430, %v2595
      %vm3813 = vcmp.eq.s32.totalorder %v3433, %v2595
      %vm3814 = vcmp.eq.s32.totalorder %v3436, %v2595
      %vm3815 = vcmp.eq.s32.totalorder %v3439, %v2595
      %vm3816 = vcmp.eq.s32.totalorder %v3442, %v2595
      %vm3817 = vcmp.eq.s32.totalorder %v3445, %v2595
      %vm3818 = vcmp.eq.s32.totalorder %v3448, %v2595
      %vm3819 = vcmp.eq.s32.totalorder %v3451, %v2595
      %vm3820 = vcmp.eq.s32.totalorder %v3454, %v2595
      %vm3821 = vcmp.eq.s32.totalorder %v3457, %v2595
      %vm3822 = vcmp.eq.s32.totalorder %v3460, %v2595
      %vm3823 = vcmp.eq.s32.totalorder %v3463, %v2595
      %vm3824 = vcmp.eq.s32.totalorder %v3466, %v2595
      %vm3825 = vcmp.eq.s32.totalorder %v3469, %v2595
      %vm3826 = vcmp.eq.s32.totalorder %v3472, %v2595
      %vm3827 = vcmp.eq.s32.totalorder %v3475, %v2595
      %vm3828 = vcmp.eq.s32.totalorder %v3478, %v2595
      %vm3829 = vcmp.eq.s32.totalorder %v3481, %v2595
      %vm3830 = vcmp.eq.s32.totalorder %v3484, %v2595
      %vm3831 = vcmp.eq.s32.totalorder %v3487, %v2595
      %vm3832 = vcmp.eq.s32.totalorder %v3490, %v2595
      %vm3833 = vcmp.eq.s32.totalorder %v3493, %v2595
      %vm3834 = vcmp.eq.s32.totalorder %v3496, %v2595
      %vm3835 = vcmp.eq.s32.totalorder %v3499, %v2595
      %vm3836 = vcmp.eq.s32.totalorder %v3502, %v2595
      %vm3837 = vcmp.eq.s32.totalorder %v3505, %v2595
      %vm3838 = vcmp.eq.s32.totalorder %v3508, %v2595
      %vm3839 = vcmp.eq.s32.totalorder %v3511, %v2595
      %vm3840 = vcmp.eq.s32.totalorder %v3514, %v2595
      %vm3841 = vcmp.eq.s32.totalorder %v3517, %v2595
      %vm3842 = vcmp.eq.s32.totalorder %v3520, %v2595
      %vm3843 = vcmp.eq.s32.totalorder %v3523, %v2595
      %vm3844 = vcmp.eq.s32.totalorder %v3526, %v2595
      %vm3845 = vcmp.eq.s32.totalorder %v3529, %v2595
      %vm3846 = vcmp.eq.s32.totalorder %v3532, %v2595
      %vm3847 = vcmp.eq.s32.totalorder %v3535, %v2595
      %vm3848 = vcmp.eq.s32.totalorder %v3538, %v2595
      %vm3849 = vcmp.eq.s32.totalorder %v3541, %v2595
      %vm3850 = vcmp.eq.s32.totalorder %v3544, %v2595
      %vm3851 = vcmp.eq.s32.totalorder %v3547, %v2595
      %vm3852 = vcmp.eq.s32.totalorder %v3550, %v2595
      %vm3853 = vcmp.eq.s32.totalorder %v3553, %v2595
      %vm3854 = vcmp.eq.s32.totalorder %v3556, %v2595
      %vm3855 = vcmp.eq.s32.totalorder %v3559, %v2595
      %vm3856 = vcmp.eq.s32.totalorder %v3562, %v2595
      %vm3857 = vcmp.eq.s32.totalorder %v3565, %v2595
      %vm3858 = vcmp.eq.s32.totalorder %v3568, %v2595
      %vm3859 = vcmp.eq.s32.totalorder %v3571, %v2595
      %vm3860 = vcmp.eq.s32.totalorder %v3574, %v2595
      %vm3861 = vcmp.eq.s32.totalorder %v3577, %v2595
      %vm3862 = vcmp.eq.s32.totalorder %v3580, %v2595
      %vm3863 = vcmp.eq.s32.totalorder %v3583, %v2595
      %vm3864 = vcmp.eq.s32.totalorder %v3586, %v2595
      %vm3865 = vcmp.eq.s32.totalorder %v3589, %v2595
      %vm3866 = vcmp.eq.s32.totalorder %v3592, %v2595
      %vm3867 = vcmp.eq.s32.totalorder %v3595, %v2595
      %vm3868 = vcmp.eq.s32.totalorder %v3598, %v2595
      %vm3869 = vcmp.eq.s32.totalorder %v3601, %v2595
      %vm3870 = vcmp.eq.s32.totalorder %v3604, %v2595
      %vm3871 = vcmp.eq.s32.totalorder %v3607, %v2595
      %vm3872 = vcmp.eq.s32.totalorder %v3610, %v2595
      %vm3873 = vcmp.eq.s32.totalorder %v3613, %v2595
      %vm3874 = vcmp.eq.s32.totalorder %v3616, %v2595
      %vm3875 = vcmp.eq.s32.totalorder %v3619, %v2595
      %v3876 = vsel %vm3620, 1, 0
      %v3877 = vsel %vm3621, 1, 0
      %v3878 = vsel %vm3622, 1, 0
      %v3879 = vsel %vm3623, 1, 0
      %v3880 = vsel %vm3624, 1, 0
      %v3881 = vsel %vm3625, 1, 0
      %v3882 = vsel %vm3626, 1, 0
      %v3883 = vsel %vm3627, 1, 0
      %v3884 = vsel %vm3628, 1, 0
      %v3885 = vsel %vm3629, 1, 0
      %v3886 = vsel %vm3630, 1, 0
      %v3887 = vsel %vm3631, 1, 0
      %v3888 = vsel %vm3632, 1, 0
      %v3889 = vsel %vm3633, 1, 0
      %v3890 = vsel %vm3634, 1, 0
      %v3891 = vsel %vm3635, 1, 0
      %v3892 = vsel %vm3636, 1, 0
      %v3893 = vsel %vm3637, 1, 0
      %v3894 = vsel %vm3638, 1, 0
      %v3895 = vsel %vm3639, 1, 0
      %v3896 = vsel %vm3640, 1, 0
      %v3897 = vsel %vm3641, 1, 0
      %v3898 = vsel %vm3642, 1, 0
      %v3899 = vsel %vm3643, 1, 0
      %v3900 = vsel %vm3644, 1, 0
      %v3901 = vsel %vm3645, 1, 0
      %v3902 = vsel %vm3646, 1, 0
      %v3903 = vsel %vm3647, 1, 0
      %v3904 = vsel %vm3648, 1, 0
      %v3905 = vsel %vm3649, 1, 0
      %v3906 = vsel %vm3650, 1, 0
      %v3907 = vsel %vm3651, 1, 0
      %v3908 = vsel %vm3652, 1, 0
      %v3909 = vsel %vm3653, 1, 0
      %v3910 = vsel %vm3654, 1, 0
      %v3911 = vsel %vm3655, 1, 0
      %v3912 = vsel %vm3656, 1, 0
      %v3913 = vsel %vm3657, 1, 0
      %v3914 = vsel %vm3658, 1, 0
      %v3915 = vsel %vm3659, 1, 0
      %v3916 = vsel %vm3660, 1, 0
      %v3917 = vsel %vm3661, 1, 0
      %v3918 = vsel %vm3662, 1, 0
      %v3919 = vsel %vm3663, 1, 0
      %v3920 = vsel %vm3664, 1, 0
      %v3921 = vsel %vm3665, 1, 0
      %v3922 = vsel %vm3666, 1, 0
      %v3923 = vsel %vm3667, 1, 0
      %v3924 = vsel %vm3668, 1, 0
      %v3925 = vsel %vm3669, 1, 0
      %v3926 = vsel %vm3670, 1, 0
      %v3927 = vsel %vm3671, 1, 0
      %v3928 = vsel %vm3672, 1, 0
      %v3929 = vsel %vm3673, 1, 0
      %v3930 = vsel %vm3674, 1, 0
      %v3931 = vsel %vm3675, 1, 0
      %v3932 = vsel %vm3676, 1, 0
      %v3933 = vsel %vm3677, 1, 0
      %v3934 = vsel %vm3678, 1, 0
      %v3935 = vsel %vm3679, 1, 0
      %v3936 = vsel %vm3680, 1, 0
      %v3937 = vsel %vm3681, 1, 0
      %v3938 = vsel %vm3682, 1, 0
      %v3939 = vsel %vm3683, 1, 0
      %v3940 = vsel %vm3684, 1, 0
      %v3941 = vsel %vm3685, 1, 0
      %v3942 = vsel %vm3686, 1, 0
      %v3943 = vsel %vm3687, 1, 0
      %v3944 = vsel %vm3688, 1, 0
      %v3945 = vsel %vm3689, 1, 0
      %v3946 = vsel %vm3690, 1, 0
      %v3947 = vsel %vm3691, 1, 0
      %v3948 = vsel %vm3692, 1, 0
      %v3949 = vsel %vm3693, 1, 0
      %v3950 = vsel %vm3694, 1, 0
      %v3951 = vsel %vm3695, 1, 0
      %v3952 = vsel %vm3696, 1, 0
      %v3953 = vsel %vm3697, 1, 0
      %v3954 = vsel %vm3698, 1, 0
      %v3955 = vsel %vm3699, 1, 0
      %v3956 = vsel %vm3700, 1, 0
      %v3957 = vsel %vm3701, 1, 0
      %v3958 = vsel %vm3702, 1, 0
      %v3959 = vsel %vm3703, 1, 0
      %v3960 = vsel %vm3704, 1, 0
      %v3961 = vsel %vm3705, 1, 0
      %v3962 = vsel %vm3706, 1, 0
      %v3963 = vsel %vm3707, 1, 0
      %v3964 = vsel %vm3708, 1, 0
      %v3965 = vsel %vm3709, 1, 0
      %v3966 = vsel %vm3710, 1, 0
      %v3967 = vsel %vm3711, 1, 0
      %v3968 = vsel %vm3712, 1, 0
      %v3969 = vsel %vm3713, 1, 0
      %v3970 = vsel %vm3714, 1, 0
      %v3971 = vsel %vm3715, 1, 0
      %v3972 = vsel %vm3716, 1, 0
      %v3973 = vsel %vm3717, 1, 0
      %v3974 = vsel %vm3718, 1, 0
      %v3975 = vsel %vm3719, 1, 0
      %v3976 = vsel %vm3720, 1, 0
      %v3977 = vsel %vm3721, 1, 0
      %v3978 = vsel %vm3722, 1, 0
      %v3979 = vsel %vm3723, 1, 0
      %v3980 = vsel %vm3724, 1, 0
      %v3981 = vsel %vm3725, 1, 0
      %v3982 = vsel %vm3726, 1, 0
      %v3983 = vsel %vm3727, 1, 0
      %v3984 = vsel %vm3728, 1, 0
      %v3985 = vsel %vm3729, 1, 0
      %v3986 = vsel %vm3730, 1, 0
      %v3987 = vsel %vm3731, 1, 0
      %v3988 = vsel %vm3732, 1, 0
      %v3989 = vsel %vm3733, 1, 0
      %v3990 = vsel %vm3734, 1, 0
      %v3991 = vsel %vm3735, 1, 0
      %v3992 = vsel %vm3736, 1, 0
      %v3993 = vsel %vm3737, 1, 0
      %v3994 = vsel %vm3738, 1, 0
      %v3995 = vsel %vm3739, 1, 0
      %v3996 = vsel %vm3740, 1, 0
      %v3997 = vsel %vm3741, 1, 0
      %v3998 = vsel %vm3742, 1, 0
      %v3999 = vsel %vm3743, 1, 0
      %v4000 = vsel %vm3744, 1, 0
      %v4001 = vsel %vm3745, 1, 0
      %v4002 = vsel %vm3746, 1, 0
      %v4003 = vsel %vm3747, 1, 0
      %v4004 = vsel %vm3748, 1, 0
      %v4005 = vsel %vm3749, 1, 0
      %v4006 = vsel %vm3750, 1, 0
      %v4007 = vsel %vm3751, 1, 0
      %v4008 = vsel %vm3752, 1, 0
      %v4009 = vsel %vm3753, 1, 0
      %v4010 = vsel %vm3754, 1, 0
      %v4011 = vsel %vm3755, 1, 0
      %v4012 = vsel %vm3756, 1, 0
      %v4013 = vsel %vm3757, 1, 0
      %v4014 = vsel %vm3758, 1, 0
      %v4015 = vsel %vm3759, 1, 0
      %v4016 = vsel %vm3760, 1, 0
      %v4017 = vsel %vm3761, 1, 0
      %v4018 = vsel %vm3762, 1, 0
      %v4019 = vsel %vm3763, 1, 0
      %v4020 = vsel %vm3764, 1, 0
      %v4021 = vsel %vm3765, 1, 0
      %v4022 = vsel %vm3766, 1, 0
      %v4023 = vsel %vm3767, 1, 0
      %v4024 = vsel %vm3768, 1, 0
      %v4025 = vsel %vm3769, 1, 0
      %v4026 = vsel %vm3770, 1, 0
      %v4027 = vsel %vm3771, 1, 0
      %v4028 = vsel %vm3772, 1, 0
      %v4029 = vsel %vm3773, 1, 0
      %v4030 = vsel %vm3774, 1, 0
      %v4031 = vsel %vm3775, 1, 0
      %v4032 = vsel %vm3776, 1, 0
      %v4033 = vsel %vm3777, 1, 0
      %v4034 = vsel %vm3778, 1, 0
      %v4035 = vsel %vm3779, 1, 0
      %v4036 = vsel %vm3780, 1, 0
      %v4037 = vsel %vm3781, 1, 0
      %v4038 = vsel %vm3782, 1, 0
      %v4039 = vsel %vm3783, 1, 0
      %v4040 = vsel %vm3784, 1, 0
      %v4041 = vsel %vm3785, 1, 0
      %v4042 = vsel %vm3786, 1, 0
      %v4043 = vsel %vm3787, 1, 0
      %v4044 = vsel %vm3788, 1, 0
      %v4045 = vsel %vm3789, 1, 0
      %v4046 = vsel %vm3790, 1, 0
      %v4047 = vsel %vm3791, 1, 0
      %v4048 = vsel %vm3792, 1, 0
      %v4049 = vsel %vm3793, 1, 0
      %v4050 = vsel %vm3794, 1, 0
      %v4051 = vsel %vm3795, 1, 0
      %v4052 = vsel %vm3796, 1, 0
      %v4053 = vsel %vm3797, 1, 0
      %v4054 = vsel %vm3798, 1, 0
      %v4055 = vsel %vm3799, 1, 0
      %v4056 = vsel %vm3800, 1, 0
      %v4057 = vsel %vm3801, 1, 0
      %v4058 = vsel %vm3802, 1, 0
      %v4059 = vsel %vm3803, 1, 0
      %v4060 = vsel %vm3804, 1, 0
      %v4061 = vsel %vm3805, 1, 0
      %v4062 = vsel %vm3806, 1, 0
      %v4063 = vsel %vm3807, 1, 0
      %v4064 = vsel %vm3808, 1, 0
      %v4065 = vsel %vm3809, 1, 0
      %v4066 = vsel %vm3810, 1, 0
      %v4067 = vsel %vm3811, 1, 0
      %v4068 = vsel %vm3812, 1, 0
      %v4069 = vsel %vm3813, 1, 0
      %v4070 = vsel %vm3814, 1, 0
      %v4071 = vsel %vm3815, 1, 0
      %v4072 = vsel %vm3816, 1, 0
      %v4073 = vsel %vm3817, 1, 0
      %v4074 = vsel %vm3818, 1, 0
      %v4075 = vsel %vm3819, 1, 0
      %v4076 = vsel %vm3820, 1, 0
      %v4077 = vsel %vm3821, 1, 0
      %v4078 = vsel %vm3822, 1, 0
      %v4079 = vsel %vm3823, 1, 0
      %v4080 = vsel %vm3824, 1, 0
      %v4081 = vsel %vm3825, 1, 0
      %v4082 = vsel %vm3826, 1, 0
      %v4083 = vsel %vm3827, 1, 0
      %v4084 = vsel %vm3828, 1, 0
      %v4085 = vsel %vm3829, 1, 0
      %v4086 = vsel %vm3830, 1, 0
      %v4087 = vsel %vm3831, 1, 0
      %v4088 = vsel %vm3832, 1, 0
      %v4089 = vsel %vm3833, 1, 0
      %v4090 = vsel %vm3834, 1, 0
      %v4091 = vsel %vm3835, 1, 0
      %v4092 = vsel %vm3836, 1, 0
      %v4093 = vsel %vm3837, 1, 0
      %v4094 = vsel %vm3838, 1, 0
      %v4095 = vsel %vm3839, 1, 0
      %v4096 = vsel %vm3840, 1, 0
      %v4097 = vsel %vm3841, 1, 0
      %v4098 = vsel %vm3842, 1, 0
      %v4099 = vsel %vm3843, 1, 0
      %v4100 = vsel %vm3844, 1, 0
      %v4101 = vsel %vm3845, 1, 0
      %v4102 = vsel %vm3846, 1, 0
      %v4103 = vsel %vm3847, 1, 0
      %v4104 = vsel %vm3848, 1, 0
      %v4105 = vsel %vm3849, 1, 0
      %v4106 = vsel %vm3850, 1, 0
      %v4107 = vsel %vm3851, 1, 0
      %v4108 = vsel %vm3852, 1, 0
      %v4109 = vsel %vm3853, 1, 0
      %v4110 = vsel %vm3854, 1, 0
      %v4111 = vsel %vm3855, 1, 0
      %v4112 = vsel %vm3856, 1, 0
      %v4113 = vsel %vm3857, 1, 0
      %v4114 = vsel %vm3858, 1, 0
      %v4115 = vsel %vm3859, 1, 0
      %v4116 = vsel %vm3860, 1, 0
      %v4117 = vsel %vm3861, 1, 0
      %v4118 = vsel %vm3862, 1, 0
      %v4119 = vsel %vm3863, 1, 0
      %v4120 = vsel %vm3864, 1, 0
      %v4121 = vsel %vm3865, 1, 0
      %v4122 = vsel %vm3866, 1, 0
      %v4123 = vsel %vm3867, 1, 0
      %v4124 = vsel %vm3868, 1, 0
      %v4125 = vsel %vm3869, 1, 0
      %v4126 = vsel %vm3870, 1, 0
      %v4127 = vsel %vm3871, 1, 0
      %v4128 = vsel %vm3872, 1, 0
      %v4129 = vsel %vm3873, 1, 0
      %v4130 = vsel %vm3874, 1, 0
      %v4131 = vsel %vm3875, 1, 0
      %v4132 = vcvt.s32.f32 %v3876
      %v4133 = vcvt.s32.f32 %v3877
      %v4134 = vcvt.s32.f32 %v3878
      %v4135 = vcvt.s32.f32 %v3879
      %v4136 = vcvt.s32.f32 %v3880
      %v4137 = vcvt.s32.f32 %v3881
      %v4138 = vcvt.s32.f32 %v3882
      %v4139 = vcvt.s32.f32 %v3883
      %v4140 = vcvt.s32.f32 %v3884
      %v4141 = vcvt.s32.f32 %v3885
      %v4142 = vcvt.s32.f32 %v3886
      %v4143 = vcvt.s32.f32 %v3887
      %v4144 = vcvt.s32.f32 %v3888
      %v4145 = vcvt.s32.f32 %v3889
      %v4146 = vcvt.s32.f32 %v3890
      %v4147 = vcvt.s32.f32 %v3891
      %v4148 = vcvt.s32.f32 %v3892
      %v4149 = vcvt.s32.f32 %v3893
      %v4150 = vcvt.s32.f32 %v3894
      %v4151 = vcvt.s32.f32 %v3895
      %v4152 = vcvt.s32.f32 %v3896
      %v4153 = vcvt.s32.f32 %v3897
      %v4154 = vcvt.s32.f32 %v3898
      %v4155 = vcvt.s32.f32 %v3899
      %v4156 = vcvt.s32.f32 %v3900
      %v4157 = vcvt.s32.f32 %v3901
      %v4158 = vcvt.s32.f32 %v3902
      %v4159 = vcvt.s32.f32 %v3903
      %v4160 = vcvt.s32.f32 %v3904
      %v4161 = vcvt.s32.f32 %v3905
      %v4162 = vcvt.s32.f32 %v3906
      %v4163 = vcvt.s32.f32 %v3907
      %v4164 = vcvt.s32.f32 %v3908
      %v4165 = vcvt.s32.f32 %v3909
      %v4166 = vcvt.s32.f32 %v3910
      %v4167 = vcvt.s32.f32 %v3911
      %v4168 = vcvt.s32.f32 %v3912
      %v4169 = vcvt.s32.f32 %v3913
      %v4170 = vcvt.s32.f32 %v3914
      %v4171 = vcvt.s32.f32 %v3915
      %v4172 = vcvt.s32.f32 %v3916
      %v4173 = vcvt.s32.f32 %v3917
      %v4174 = vcvt.s32.f32 %v3918
      %v4175 = vcvt.s32.f32 %v3919
      %v4176 = vcvt.s32.f32 %v3920
      %v4177 = vcvt.s32.f32 %v3921
      %v4178 = vcvt.s32.f32 %v3922
      %v4179 = vcvt.s32.f32 %v3923
      %v4180 = vcvt.s32.f32 %v3924
      %v4181 = vcvt.s32.f32 %v3925
      %v4182 = vcvt.s32.f32 %v3926
      %v4183 = vcvt.s32.f32 %v3927
      %v4184 = vcvt.s32.f32 %v3928
      %v4185 = vcvt.s32.f32 %v3929
      %v4186 = vcvt.s32.f32 %v3930
      %v4187 = vcvt.s32.f32 %v3931
      %v4188 = vcvt.s32.f32 %v3932
      %v4189 = vcvt.s32.f32 %v3933
      %v4190 = vcvt.s32.f32 %v3934
      %v4191 = vcvt.s32.f32 %v3935
      %v4192 = vcvt.s32.f32 %v3936
      %v4193 = vcvt.s32.f32 %v3937
      %v4194 = vcvt.s32.f32 %v3938
      %v4195 = vcvt.s32.f32 %v3939
      %v4196 = vcvt.s32.f32 %v3940
      %v4197 = vcvt.s32.f32 %v3941
      %v4198 = vcvt.s32.f32 %v3942
      %v4199 = vcvt.s32.f32 %v3943
      %v4200 = vcvt.s32.f32 %v3944
      %v4201 = vcvt.s32.f32 %v3945
      %v4202 = vcvt.s32.f32 %v3946
      %v4203 = vcvt.s32.f32 %v3947
      %v4204 = vcvt.s32.f32 %v3948
      %v4205 = vcvt.s32.f32 %v3949
      %v4206 = vcvt.s32.f32 %v3950
      %v4207 = vcvt.s32.f32 %v3951
      %v4208 = vcvt.s32.f32 %v3952
      %v4209 = vcvt.s32.f32 %v3953
      %v4210 = vcvt.s32.f32 %v3954
      %v4211 = vcvt.s32.f32 %v3955
      %v4212 = vcvt.s32.f32 %v3956
      %v4213 = vcvt.s32.f32 %v3957
      %v4214 = vcvt.s32.f32 %v3958
      %v4215 = vcvt.s32.f32 %v3959
      %v4216 = vcvt.s32.f32 %v3960
      %v4217 = vcvt.s32.f32 %v3961
      %v4218 = vcvt.s32.f32 %v3962
      %v4219 = vcvt.s32.f32 %v3963
      %v4220 = vcvt.s32.f32 %v3964
      %v4221 = vcvt.s32.f32 %v3965
      %v4222 = vcvt.s32.f32 %v3966
      %v4223 = vcvt.s32.f32 %v3967
      %v4224 = vcvt.s32.f32 %v3968
      %v4225 = vcvt.s32.f32 %v3969
      %v4226 = vcvt.s32.f32 %v3970
      %v4227 = vcvt.s32.f32 %v3971
      %v4228 = vcvt.s32.f32 %v3972
      %v4229 = vcvt.s32.f32 %v3973
      %v4230 = vcvt.s32.f32 %v3974
      %v4231 = vcvt.s32.f32 %v3975
      %v4232 = vcvt.s32.f32 %v3976
      %v4233 = vcvt.s32.f32 %v3977
      %v4234 = vcvt.s32.f32 %v3978
      %v4235 = vcvt.s32.f32 %v3979
      %v4236 = vcvt.s32.f32 %v3980
      %v4237 = vcvt.s32.f32 %v3981
      %v4238 = vcvt.s32.f32 %v3982
      %v4239 = vcvt.s32.f32 %v3983
      %v4240 = vcvt.s32.f32 %v3984
      %v4241 = vcvt.s32.f32 %v3985
      %v4242 = vcvt.s32.f32 %v3986
      %v4243 = vcvt.s32.f32 %v3987
      %v4244 = vcvt.s32.f32 %v3988
      %v4245 = vcvt.s32.f32 %v3989
      %v4246 = vcvt.s32.f32 %v3990
      %v4247 = vcvt.s32.f32 %v3991
      %v4248 = vcvt.s32.f32 %v3992
      %v4249 = vcvt.s32.f32 %v3993
      %v4250 = vcvt.s32.f32 %v3994
      %v4251 = vcvt.s32.f32 %v3995
      %v4252 = vcvt.s32.f32 %v3996
      %v4253 = vcvt.s32.f32 %v3997
      %v4254 = vcvt.s32.f32 %v3998
      %v4255 = vcvt.s32.f32 %v3999
      %v4256 = vcvt.s32.f32 %v4000
      %v4257 = vcvt.s32.f32 %v4001
      %v4258 = vcvt.s32.f32 %v4002
      %v4259 = vcvt.s32.f32 %v4003
      %v4260 = vcvt.s32.f32 %v4004
      %v4261 = vcvt.s32.f32 %v4005
      %v4262 = vcvt.s32.f32 %v4006
      %v4263 = vcvt.s32.f32 %v4007
      %v4264 = vcvt.s32.f32 %v4008
      %v4265 = vcvt.s32.f32 %v4009
      %v4266 = vcvt.s32.f32 %v4010
      %v4267 = vcvt.s32.f32 %v4011
      %v4268 = vcvt.s32.f32 %v4012
      %v4269 = vcvt.s32.f32 %v4013
      %v4270 = vcvt.s32.f32 %v4014
      %v4271 = vcvt.s32.f32 %v4015
      %v4272 = vcvt.s32.f32 %v4016
      %v4273 = vcvt.s32.f32 %v4017
      %v4274 = vcvt.s32.f32 %v4018
      %v4275 = vcvt.s32.f32 %v4019
      %v4276 = vcvt.s32.f32 %v4020
      %v4277 = vcvt.s32.f32 %v4021
      %v4278 = vcvt.s32.f32 %v4022
      %v4279 = vcvt.s32.f32 %v4023
      %v4280 = vcvt.s32.f32 %v4024
      %v4281 = vcvt.s32.f32 %v4025
      %v4282 = vcvt.s32.f32 %v4026
      %v4283 = vcvt.s32.f32 %v4027
      %v4284 = vcvt.s32.f32 %v4028
      %v4285 = vcvt.s32.f32 %v4029
      %v4286 = vcvt.s32.f32 %v4030
      %v4287 = vcvt.s32.f32 %v4031
      %v4288 = vcvt.s32.f32 %v4032
      %v4289 = vcvt.s32.f32 %v4033
      %v4290 = vcvt.s32.f32 %v4034
      %v4291 = vcvt.s32.f32 %v4035
      %v4292 = vcvt.s32.f32 %v4036
      %v4293 = vcvt.s32.f32 %v4037
      %v4294 = vcvt.s32.f32 %v4038
      %v4295 = vcvt.s32.f32 %v4039
      %v4296 = vcvt.s32.f32 %v4040
      %v4297 = vcvt.s32.f32 %v4041
      %v4298 = vcvt.s32.f32 %v4042
      %v4299 = vcvt.s32.f32 %v4043
      %v4300 = vcvt.s32.f32 %v4044
      %v4301 = vcvt.s32.f32 %v4045
      %v4302 = vcvt.s32.f32 %v4046
      %v4303 = vcvt.s32.f32 %v4047
      %v4304 = vcvt.s32.f32 %v4048
      %v4305 = vcvt.s32.f32 %v4049
      %v4306 = vcvt.s32.f32 %v4050
      %v4307 = vcvt.s32.f32 %v4051
      %v4308 = vcvt.s32.f32 %v4052
      %v4309 = vcvt.s32.f32 %v4053
      %v4310 = vcvt.s32.f32 %v4054
      %v4311 = vcvt.s32.f32 %v4055
      %v4312 = vcvt.s32.f32 %v4056
      %v4313 = vcvt.s32.f32 %v4057
      %v4314 = vcvt.s32.f32 %v4058
      %v4315 = vcvt.s32.f32 %v4059
      %v4316 = vcvt.s32.f32 %v4060
      %v4317 = vcvt.s32.f32 %v4061
      %v4318 = vcvt.s32.f32 %v4062
      %v4319 = vcvt.s32.f32 %v4063
      %v4320 = vcvt.s32.f32 %v4064
      %v4321 = vcvt.s32.f32 %v4065
      %v4322 = vcvt.s32.f32 %v4066
      %v4323 = vcvt.s32.f32 %v4067
      %v4324 = vcvt.s32.f32 %v4068
      %v4325 = vcvt.s32.f32 %v4069
      %v4326 = vcvt.s32.f32 %v4070
      %v4327 = vcvt.s32.f32 %v4071
      %v4328 = vcvt.s32.f32 %v4072
      %v4329 = vcvt.s32.f32 %v4073
      %v4330 = vcvt.s32.f32 %v4074
      %v4331 = vcvt.s32.f32 %v4075
      %v4332 = vcvt.s32.f32 %v4076
      %v4333 = vcvt.s32.f32 %v4077
      %v4334 = vcvt.s32.f32 %v4078
      %v4335 = vcvt.s32.f32 %v4079
      %v4336 = vcvt.s32.f32 %v4080
      %v4337 = vcvt.s32.f32 %v4081
      %v4338 = vcvt.s32.f32 %v4082
      %v4339 = vcvt.s32.f32 %v4083
      %v4340 = vcvt.s32.f32 %v4084
      %v4341 = vcvt.s32.f32 %v4085
      %v4342 = vcvt.s32.f32 %v4086
      %v4343 = vcvt.s32.f32 %v4087
      %v4344 = vcvt.s32.f32 %v4088
      %v4345 = vcvt.s32.f32 %v4089
      %v4346 = vcvt.s32.f32 %v4090
      %v4347 = vcvt.s32.f32 %v4091
      %v4348 = vcvt.s32.f32 %v4092
      %v4349 = vcvt.s32.f32 %v4093
      %v4350 = vcvt.s32.f32 %v4094
      %v4351 = vcvt.s32.f32 %v4095
      %v4352 = vcvt.s32.f32 %v4096
      %v4353 = vcvt.s32.f32 %v4097
      %v4354 = vcvt.s32.f32 %v4098
      %v4355 = vcvt.s32.f32 %v4099
      %v4356 = vcvt.s32.f32 %v4100
      %v4357 = vcvt.s32.f32 %v4101
      %v4358 = vcvt.s32.f32 %v4102
      %v4359 = vcvt.s32.f32 %v4103
      %v4360 = vcvt.s32.f32 %v4104
      %v4361 = vcvt.s32.f32 %v4105
      %v4362 = vcvt.s32.f32 %v4106
      %v4363 = vcvt.s32.f32 %v4107
      %v4364 = vcvt.s32.f32 %v4108
      %v4365 = vcvt.s32.f32 %v4109
      %v4366 = vcvt.s32.f32 %v4110
      %v4367 = vcvt.s32.f32 %v4111
      %v4368 = vcvt.s32.f32 %v4112
      %v4369 = vcvt.s32.f32 %v4113
      %v4370 = vcvt.s32.f32 %v4114
      %v4371 = vcvt.s32.f32 %v4115
      %v4372 = vcvt.s32.f32 %v4116
      %v4373 = vcvt.s32.f32 %v4117
      %v4374 = vcvt.s32.f32 %v4118
      %v4375 = vcvt.s32.f32 %v4119
      %v4376 = vcvt.s32.f32 %v4120
      %v4377 = vcvt.s32.f32 %v4121
      %v4378 = vcvt.s32.f32 %v4122
      %v4379 = vcvt.s32.f32 %v4123
      %v4380 = vcvt.s32.f32 %v4124
      %v4381 = vcvt.s32.f32 %v4125
      %v4382 = vcvt.s32.f32 %v4126
      %v4383 = vcvt.s32.f32 %v4127
      %v4384 = vcvt.s32.f32 %v4128
      %v4385 = vcvt.s32.f32 %v4129
      %v4386 = vcvt.s32.f32 %v4130
      %v4387 = vcvt.s32.f32 %v4131
      %v4388 = vld [vmem:[%s3] sm:$0xff]
      %v4389 = vld [vmem:[%s3 + $0x8] sm:$0xff]
      %vm4390 = vcmask 130048
      %v4392 = vsel %vm4390, %v4132, 0
      %v4395 = vsel %vm4390, %v4133, 0
      %v4398 = vsel %vm4390, %v4134, 0
      %v4401 = vsel %vm4390, %v4135, 0
      %v4404 = vsel %vm4390, %v4136, 0
      %v4407 = vsel %vm4390, %v4137, 0
      %v4410 = vsel %vm4390, %v4138, 0
      %v4413 = vsel %vm4390, %v4139, 0
      %v4416 = vsel %vm4390, %v4140, 0
      %v4419 = vsel %vm4390, %v4141, 0
      %v4422 = vsel %vm4390, %v4142, 0
      %v4425 = vsel %vm4390, %v4143, 0
      %v4428 = vsel %vm4390, %v4144, 0
      %v4431 = vsel %vm4390, %v4145, 0
      %v4434 = vsel %vm4390, %v4146, 0
      %v4437 = vsel %vm4390, %v4147, 0
      %v4440 = vsel %vm4390, %v4148, 0
      %v4443 = vsel %vm4390, %v4149, 0
      %v4446 = vsel %vm4390, %v4150, 0
      %v4449 = vsel %vm4390, %v4151, 0
      %v4452 = vsel %vm4390, %v4152, 0
      %v4455 = vsel %vm4390, %v4153, 0
      %v4458 = vsel %vm4390, %v4154, 0
      %v4461 = vsel %vm4390, %v4155, 0
      %v4464 = vsel %vm4390, %v4156, 0
      %v4467 = vsel %vm4390, %v4157, 0
      %v4470 = vsel %vm4390, %v4158, 0
      %v4473 = vsel %vm4390, %v4159, 0
      %v4476 = vsel %vm4390, %v4160, 0
      %v4479 = vsel %vm4390, %v4161, 0
      %v4482 = vsel %vm4390, %v4162, 0
      %v4485 = vsel %vm4390, %v4163, 0
      %v4488 = vsel %vm4390, %v4164, 0
      %v4491 = vsel %vm4390, %v4165, 0
      %v4494 = vsel %vm4390, %v4166, 0
      %v4497 = vsel %vm4390, %v4167, 0
      %v4500 = vsel %vm4390, %v4168, 0
      %v4503 = vsel %vm4390, %v4169, 0
      %v4506 = vsel %vm4390, %v4170, 0
      %v4509 = vsel %vm4390, %v4171, 0
      %v4512 = vsel %vm4390, %v4172, 0
      %v4515 = vsel %vm4390, %v4173, 0
      %v4518 = vsel %vm4390, %v4174, 0
      %v4521 = vsel %vm4390, %v4175, 0
      %v4524 = vsel %vm4390, %v4176, 0
      %v4527 = vsel %vm4390, %v4177, 0
      %v4530 = vsel %vm4390, %v4178, 0
      %v4533 = vsel %vm4390, %v4179, 0
      %v4536 = vsel %vm4390, %v4180, 0
      %v4539 = vsel %vm4390, %v4181, 0
      %v4542 = vsel %vm4390, %v4182, 0
      %v4545 = vsel %vm4390, %v4183, 0
      %v4548 = vsel %vm4390, %v4184, 0
      %v4551 = vsel %vm4390, %v4185, 0
      %v4554 = vsel %vm4390, %v4186, 0
      %v4557 = vsel %vm4390, %v4187, 0
      %v4560 = vsel %vm4390, %v4188, 0
      %v4563 = vsel %vm4390, %v4189, 0
      %v4566 = vsel %vm4390, %v4190, 0
      %v4569 = vsel %vm4390, %v4191, 0
      %v4572 = vsel %vm4390, %v4192, 0
      %v4575 = vsel %vm4390, %v4193, 0
      %v4578 = vsel %vm4390, %v4194, 0
      %v4581 = vsel %vm4390, %v4195, 0
      %v4584 = vsel %vm4390, %v4196, 0
      %v4587 = vsel %vm4390, %v4197, 0
      %v4590 = vsel %vm4390, %v4198, 0
      %v4593 = vsel %vm4390, %v4199, 0
      %v4596 = vsel %vm4390, %v4200, 0
      %v4599 = vsel %vm4390, %v4201, 0
      %v4602 = vsel %vm4390, %v4202, 0
      %v4605 = vsel %vm4390, %v4203, 0
      %v4608 = vsel %vm4390, %v4204, 0
      %v4611 = vsel %vm4390, %v4205, 0
      %v4614 = vsel %vm4390, %v4206, 0
      %v4617 = vsel %vm4390, %v4207, 0
      %v4620 = vsel %vm4390, %v4208, 0
      %v4623 = vsel %vm4390, %v4209, 0
      %v4626 = vsel %vm4390, %v4210, 0
      %v4629 = vsel %vm4390, %v4211, 0
      %v4632 = vsel %vm4390, %v4212, 0
      %v4635 = vsel %vm4390, %v4213, 0
      %v4638 = vsel %vm4390, %v4214, 0
      %v4641 = vsel %vm4390, %v4215, 0
      %v4644 = vsel %vm4390, %v4216, 0
      %v4647 = vsel %vm4390, %v4217, 0
      %v4650 = vsel %vm4390, %v4218, 0
      %v4653 = vsel %vm4390, %v4219, 0
      %v4656 = vsel %vm4390, %v4220, 0
      %v4659 = vsel %vm4390, %v4221, 0
      %v4662 = vsel %vm4390, %v4222, 0
      %v4665 = vsel %vm4390, %v4223, 0
      %v4668 = vsel %vm4390, %v4224, 0
      %v4671 = vsel %vm4390, %v4225, 0
      %v4674 = vsel %vm4390, %v4226, 0
      %v4677 = vsel %vm4390, %v4227, 0
      %v4680 = vsel %vm4390, %v4228, 0
      %v4683 = vsel %vm4390, %v4229, 0
      %v4686 = vsel %vm4390, %v4230, 0
      %v4689 = vsel %vm4390, %v4231, 0
      %v4692 = vsel %vm4390, %v4232, 0
      %v4695 = vsel %vm4390, %v4233, 0
      %v4698 = vsel %vm4390, %v4234, 0
      %v4701 = vsel %vm4390, %v4235, 0
      %v4704 = vsel %vm4390, %v4236, 0
      %v4707 = vsel %vm4390, %v4237, 0
      %v4710 = vsel %vm4390, %v4238, 0
      %v4713 = vsel %vm4390, %v4239, 0
      %v4716 = vsel %vm4390, %v4240, 0
      %v4719 = vsel %vm4390, %v4241, 0
      %v4722 = vsel %vm4390, %v4242, 0
      %v4725 = vsel %vm4390, %v4243, 0
      %v4728 = vsel %vm4390, %v4244, 0
      %v4731 = vsel %vm4390, %v4245, 0
      %v4734 = vsel %vm4390, %v4246, 0
      %v4737 = vsel %vm4390, %v4247, 0
      %v4740 = vsel %vm4390, %v4248, 0
      %v4743 = vsel %vm4390, %v4249, 0
      %v4746 = vsel %vm4390, %v4250, 0
      %v4749 = vsel %vm4390, %v4251, 0
      %v4752 = vsel %vm4390, %v4252, 0
      %v4755 = vsel %vm4390, %v4253, 0
      %v4758 = vsel %vm4390, %v4254, 0
      %v4761 = vsel %vm4390, %v4255, 0
      %v4764 = vsel %vm4390, %v4256, 0
      %v4767 = vsel %vm4390, %v4257, 0
      %v4770 = vsel %vm4390, %v4258, 0
      %v4773 = vsel %vm4390, %v4259, 0
      %v4776 = vsel %vm4390, %v4260, 0
      %v4779 = vsel %vm4390, %v4261, 0
      %v4782 = vsel %vm4390, %v4262, 0
      %v4785 = vsel %vm4390, %v4263, 0
      %v4788 = vsel %vm4390, %v4264, 0
      %v4791 = vsel %vm4390, %v4265, 0
      %v4794 = vsel %vm4390, %v4266, 0
      %v4797 = vsel %vm4390, %v4267, 0
      %v4800 = vsel %vm4390, %v4268, 0
      %v4803 = vsel %vm4390, %v4269, 0
      %v4806 = vsel %vm4390, %v4270, 0
      %v4809 = vsel %vm4390, %v4271, 0
      %v4812 = vsel %vm4390, %v4272, 0
      %v4815 = vsel %vm4390, %v4273, 0
      %v4818 = vsel %vm4390, %v4274, 0
      %v4821 = vsel %vm4390, %v4275, 0
      %v4824 = vsel %vm4390, %v4276, 0
      %v4827 = vsel %vm4390, %v4277, 0
      %v4830 = vsel %vm4390, %v4278, 0
      %v4833 = vsel %vm4390, %v4279, 0
      %v4836 = vsel %vm4390, %v4280, 0
      %v4839 = vsel %vm4390, %v4281, 0
      %v4842 = vsel %vm4390, %v4282, 0
      %v4845 = vsel %vm4390, %v4283, 0
      %v4848 = vsel %vm4390, %v4284, 0
      %v4851 = vsel %vm4390, %v4285, 0
      %v4854 = vsel %vm4390, %v4286, 0
      %v4857 = vsel %vm4390, %v4287, 0
      %v4860 = vsel %vm4390, %v4288, 0
      %v4863 = vsel %vm4390, %v4289, 0
      %v4866 = vsel %vm4390, %v4290, 0
      %v4869 = vsel %vm4390, %v4291, 0
      %v4872 = vsel %vm4390, %v4292, 0
      %v4875 = vsel %vm4390, %v4293, 0
      %v4878 = vsel %vm4390, %v4294, 0
      %v4881 = vsel %vm4390, %v4295, 0
      %v4884 = vsel %vm4390, %v4296, 0
      %v4887 = vsel %vm4390, %v4297, 0
      %v4890 = vsel %vm4390, %v4298, 0
      %v4893 = vsel %vm4390, %v4299, 0
      %v4896 = vsel %vm4390, %v4300, 0
      %v4899 = vsel %vm4390, %v4301, 0
      %v4902 = vsel %vm4390, %v4302, 0
      %v4905 = vsel %vm4390, %v4303, 0
      %v4908 = vsel %vm4390, %v4304, 0
      %v4911 = vsel %vm4390, %v4305, 0
      %v4914 = vsel %vm4390, %v4306, 0
      %v4917 = vsel %vm4390, %v4307, 0
      %v4920 = vsel %vm4390, %v4308, 0
      %v4923 = vsel %vm4390, %v4309, 0
      %v4926 = vsel %vm4390, %v4310, 0
      %v4929 = vsel %vm4390, %v4311, 0
      %v4932 = vsel %vm4390, %v4312, 0
      %v4935 = vsel %vm4390, %v4313, 0
      %v4938 = vsel %vm4390, %v4314, 0
      %v4941 = vsel %vm4390, %v4315, 0
      %v4944 = vsel %vm4390, %v4316, 0
      %v4947 = vsel %vm4390, %v4317, 0
      %v4950 = vsel %vm4390, %v4318, 0
      %v4953 = vsel %vm4390, %v4319, 0
      %v4956 = vsel %vm4390, %v4320, 0
      %v4959 = vsel %vm4390, %v4321, 0
      %v4962 = vsel %vm4390, %v4322, 0
      %v4965 = vsel %vm4390, %v4323, 0
      %v4968 = vsel %vm4390, %v4324, 0
      %v4971 = vsel %vm4390, %v4325, 0
      %v4974 = vsel %vm4390, %v4326, 0
      %v4977 = vsel %vm4390, %v4327, 0
      %v4980 = vsel %vm4390, %v4328, 0
      %v4983 = vsel %vm4390, %v4329, 0
      %v4986 = vsel %vm4390, %v4330, 0
      %v4989 = vsel %vm4390, %v4331, 0
      %v4992 = vsel %vm4390, %v4332, 0
      %v4995 = vsel %vm4390, %v4333, 0
      %v4998 = vsel %vm4390, %v4334, 0
      %v5001 = vsel %vm4390, %v4335, 0
      %v5004 = vsel %vm4390, %v4336, 0
      %v5007 = vsel %vm4390, %v4337, 0
      %v5010 = vsel %vm4390, %v4338, 0
      %v5013 = vsel %vm4390, %v4339, 0
      %v5016 = vsel %vm4390, %v4340, 0
      %v5019 = vsel %vm4390, %v4341, 0
      %v5022 = vsel %vm4390, %v4342, 0
      %v5025 = vsel %vm4390, %v4343, 0
      %v5028 = vsel %vm4390, %v4344, 0
      %v5031 = vsel %vm4390, %v4345, 0
      %v5034 = vsel %vm4390, %v4346, 0
      %v5037 = vsel %vm4390, %v4347, 0
      %v5040 = vsel %vm4390, %v4348, 0
      %v5043 = vsel %vm4390, %v4349, 0
      %v5046 = vsel %vm4390, %v4350, 0
      %v5049 = vsel %vm4390, %v4351, 0
      %v5052 = vsel %vm4390, %v4352, 0
      %v5055 = vsel %vm4390, %v4353, 0
      %v5058 = vsel %vm4390, %v4354, 0
      %v5061 = vsel %vm4390, %v4355, 0
      %v5064 = vsel %vm4390, %v4356, 0
      %v5067 = vsel %vm4390, %v4357, 0
      %v5070 = vsel %vm4390, %v4358, 0
      %v5073 = vsel %vm4390, %v4359, 0
      %v5076 = vsel %vm4390, %v4360, 0
      %v5079 = vsel %vm4390, %v4361, 0
      %v5082 = vsel %vm4390, %v4362, 0
      %v5085 = vsel %vm4390, %v4363, 0
      %v5088 = vsel %vm4390, %v4364, 0
      %v5091 = vsel %vm4390, %v4365, 0
      %v5094 = vsel %vm4390, %v4366, 0
      %v5097 = vsel %vm4390, %v4367, 0
      %v5100 = vsel %vm4390, %v4368, 0
      %v5103 = vsel %vm4390, %v4369, 0
      %v5106 = vsel %vm4390, %v4370, 0
      %v5109 = vsel %vm4390, %v4371, 0
      %v5112 = vsel %vm4390, %v4372, 0
      %v5115 = vsel %vm4390, %v4373, 0
      %v5118 = vsel %vm4390, %v4374, 0
      %v5121 = vsel %vm4390, %v4375, 0
      %v5124 = vsel %vm4390, %v4376, 0
      %v5127 = vsel %vm4390, %v4377, 0
      %v5130 = vsel %vm4390, %v4378, 0
      %v5133 = vsel %vm4390, %v4379, 0
      %v5136 = vsel %vm4390, %v4380, 0
      %v5139 = vsel %vm4390, %v4381, 0
      %v5142 = vsel %vm4390, %v4382, 0
      %v5145 = vsel %vm4390, %v4383, 0
      %v5148 = vsel %vm4390, %v4384, 0
      %v5151 = vsel %vm4390, %v4385, 0
      %v5154 = vsel %vm4390, %v4386, 0
      %v5157 = vsel %vm4390, %v4387, 0
      %5159 = vmatprep.subr.mxu0 0.0
      %5160 = vmatpush1.msra.mxu0 %v4388
      %5161 = vmatprep.subr.mxu0 0.0
      %5162 = vmatpush1.msra.mxu0 %v4389
      %5163 = vmatprep.subr.mxu0 0.0
      %5164 = vmatpush1.msra.mxu0 0.0
      %5165 = vmatprep.subr.mxu0 0.0
      %5166 = vmatpush1.msra.mxu0 0.0
      %5167 = vmatprep.subr.mxu0 0.0
      %5168 = vmatpush1.msra.mxu0 0.0
      %5169 = vmatprep.subr.mxu0 0.0
      %5170 = vmatpush1.msra.mxu0 0.0
      %5171 = vmatprep.subr.mxu0 0.0
      %5172 = vmatpush1.msra.mxu0 0.0
      %5173 = vmatprep.subr.mxu0 0.0
      %5174 = vmatpush1.msra.mxu0 0.0
      %5175 = vmatprep.subr.mxu0 0.0
      %5176 = vmatpush1.msra.mxu0 0.0
      %5177 = vmatprep.subr.mxu0 0.0
      %5178 = vmatpush1.msra.mxu0 0.0
      %5179 = vmatprep.subr.mxu0 0.0
      %5180 = vmatpush1.msra.mxu0 0.0
      %5181 = vmatprep.subr.mxu0 0.0
      %5182 = vmatpush1.msra.mxu0 0.0
      %5183 = vmatprep.subr.mxu0 0.0
      %5184 = vmatpush1.msra.mxu0 0.0
      %5185 = vmatprep.subr.mxu0 0.0
      %5186 = vmatpush1.msra.mxu0 0.0
      %5187 = vmatprep.subr.mxu0 0.0
      %5188 = vmatpush1.msra.mxu0 0.0
      %5189 = vmatprep.subr.mxu0 0.0
      %5190 = vmatpush1.msra.mxu0 0.0
      %5191 = vmatprep.subr.mxu0 0.0
      %5192 = vmatpush1.msra.mxu0 0.0
      %5193 = vmatprep.subr.mxu0 0.0
      %5194 = vmatpush1.msra.mxu0 0.0
      %5195 = vmatprep.subr.mxu0 0.0
      %5196 = vmatpush1.msra.mxu0 0.0
      %5197 = vmatprep.subr.mxu0 0.0
      %5198 = vmatpush1.msra.mxu0 0.0
      %5199 = vmatprep.subr.mxu0 0.0
      %5200 = vmatpush1.msra.mxu0 0.0
      %5201 = vmatprep.subr.mxu0 0.0
      %5202 = vmatpush1.msra.mxu0 0.0
      %5203 = vmatprep.subr.mxu0 0.0
      %5204 = vmatpush1.msra.mxu0 0.0
      %5205 = vmatprep.subr.mxu0 0.0
      %5206 = vmatpush1.msra.mxu0 0.0
      %5207 = vmatprep.subr.mxu0 0.0
      %5208 = vmatpush1.msra.mxu0 0.0
      %5209 = vmatprep.subr.mxu0 0.0
      %5210 = vmatpush1.msra.mxu0 0.0
      %5211 = vmatprep.subr.mxu0 0.0
      %5212 = vmatpush1.msra.mxu0 0.0
      %5213 = vmatprep.subr.mxu0 0.0
      %5214 = vmatpush1.msra.mxu0 0.0
      %5215 = vmatprep.subr.mxu0 0.0
      %5216 = vmatpush1.msra.mxu0 0.0
      %5217 = vmatprep.subr.mxu0 0.0
      %5218 = vmatpush1.msra.mxu0 0.0
      %5219 = vmatprep.subr.mxu0 0.0
      %5220 = vmatpush1.msra.mxu0 0.0
      %5221 = vmatprep.subr.mxu0 0.0
      %5222 = vmatpush1.msra.mxu0 0.0
      %5223 = vmatprep.mubr.f32.mxu0 0.0
      %5224 = vmatmul.mubr.f32.gmra.mrb[0].mxu0 %v4392
      %v5225 = vpop.f32.mrb[0].mxu0
      %v5226 = vadd.f32 0.0, %v5225
      %v5227 = vpop.f32.mrb[0].mxu0
      %5228 = vmatprep.mubr.f32.mxu0 0.0
      %5229 = vmatmul.mubr.f32.gmra.mrb[0].mxu0 %v4395
      %v5230 = vpop.f32.mrb[0].mxu0
      %v5231 = vadd.f32 0.0, %v5230
      %v5232 = vpop.f32.mrb[0].mxu0
      %5233 = vmatprep.mubr.f32.mxu0 0.0
      %5234 = vmatmul.mubr.f32.gmra.mrb[0].mxu0 %v4398
      %v5235 = vpop.f32.mrb[0].mxu0
      %v5236 = vadd.f32 0.0, %v5235
      %v5237 = vpop.f32.mrb[0].mxu0
      %5238 = vmatprep.mubr.f32.mxu0 0.0
      %5239 = vmatmul.mubr.f32.gmra.mrb[0].mxu0 %v4401
      %v5240 = vpop.f32.mrb[0].mxu0
      %v5241 = vadd.f32 0.0, %v5240
      %v5242 = vpop.f32.mrb[0].mxu0
      %5243 = vmatprep.mubr.f32.mxu0 0.0
      %5244 = vmatmul.mubr.f32.gmra.mrb[0].mxu0 %v4404
      %v5245 = vpop.f32.mrb[0].mxu0
      %v5246 = vadd.f32 0.0, %v5245
      %v5247 = vpop.f32.mrb[0].mxu0
      %5248 = vmatprep.mubr.f32.mxu0 0.0
      %5249 = vmatmul.mubr.f32.gmra.mrb[0].mxu0 %v4407
      %v5250 = vpop.f32.mrb[0].mxu0
      %v5251 = vadd.f32 0.0, %v5250
      %v5252 = vpop.f32.mrb[0].mxu0
      %5253 = vmatprep.mubr.f32.mxu0 0.0
      %5254 = vmatmul.mubr.f32.gmra.mrb[0].mxu0 %v4410
      %v5255 = vpop.f32.mrb[0].mxu0
      %v5256 = vadd.f32 0.0, %v5255
      %v5257 = vpop.f32.mrb[0].mxu0
      %5258 = vmatprep.mubr.f32.mxu0 0.0
      %5259 = vmatmul.mubr.f32.gmra.mrb[0].mxu0 %v4413
      %v5260 = vpop.f32.mrb[0].mxu0
      %v5261 = vadd.f32 0.0, %v5260
      %v5262 = vpop.f32.mrb[0].mxu0
      %5263 = vmatprep.mubr.f32.mxu0 0.0
      %5264 = vmatmul.mubr.f32.gmra.mrb[0].mxu0 %v4416
      %v5265 = vpop.f32.mrb[0].mxu0
      %v5266 = vadd.f32 0.0, %v5265
      %v5267 = vpop.f32.mrb[0].mxu0
      %5268 = vmatprep.mubr.f32.mxu0 0.0
      %5269 = vmatmul.mubr.f32.gmra.mrb[0].mxu0 %v4419
      %v5270 = vpop.f32.mrb[0].mxu0
      %v5271 = vadd.f32 0.0, %v5270
      %v5272 = vpop.f32.mrb[0].mxu0
      %5273 = vmatprep.mubr.f32.mxu0 0.0
      %5274 = vmatmul.mubr.f32.gmra.mrb[0].mxu0 %v4422
      %v5275 = vpop.f32.mrb[0].mxu0
      %v5276 = vadd.f32 0.0, %v5275
      %v5277 = vpop.f32.mrb[0].mxu0
      %5278 = vmatprep.mubr.f32.mxu0 0.0
      %5279 = vmatmul.mubr.f32.gmra.mrb[0].mxu0 %v4425
      %v5280 = vpop.f32.mrb[0].mxu0
      %v5281 = vadd.f32 0.0, %v5280
      %v5282 = vpop.f32.mrb[0].mxu0
      %5283 = vmatprep.mubr.f32.mxu0 0.0
      %5284 = vmatmul.mubr.f32.gmra.mrb[0].mxu0 %v4428
      %v5285 = vpop.f32.mrb[0].mxu0
      %v5286 = vadd.f32 0.0, %v5285
      %v5287 = vpop.f32.mrb[0].mxu0
      %5288 = vmatprep.mubr.f32.mxu0 0.0
      %5289 = vmatmul.mubr.f32.gmra.mrb[0].mxu0 %v4431
      %v5290 = vpop.f32.mrb[0].mxu0
      %v5291 = vadd.f32 0.0, %v5290
      %v5292 = vpop.f32.mrb[0].mxu0
      %5293 = vmatprep.mubr.f32.mxu0 0.0
      %5294 = vmatmul.mubr.f32.gmra.mrb[0].mxu0 %v4434
      %v5295 = vpop.f32.mrb[0].mxu0
      %v5296 = vadd.f32 0.0, %v5295
      %v5297 = vpop.f32.mrb[0].mxu0
      %5298 = vmatprep.mubr.f32.mxu0 0.0
      %5299 = vmatmul.mubr.f32.gmra.mrb[0].mxu0 %v4437
      %v5300 = vpop.f32.mrb[0].mxu0
      %v5301 = vadd.f32 0.0, %v5300
      %v5302 = vpop.f32.mrb[0].mxu0
      %5303 = vmatprep.mubr.f32.mxu0 0.0
      %5304 = vmatmul.mubr.f32.gmra.mrb[0].mxu0 %v4440
      %v5305 = vpop.f32.mrb[0].mxu0
      %v5306 = vadd.f32 0.0, %v5305
      %v5307 = vpop.f32.mrb[0].mxu0
      %5308 = vmatprep.mubr.f32.mxu0 0.0
      %5309 = vmatmul.mubr.f32.gmra.mrb[0].mxu0 %v4443
      %v5310 = vpop.f32.mrb[0].mxu0
      %v5311 = vadd.f32 0.0, %v5310
      %v5312 = vpop.f32.mrb[0].mxu0
      %5313 = vmatprep.mubr.f32.mxu0 0.0
      %5314 = vmatmul.mubr.f32.gmra.mrb[0].mxu0 %v4446
      %v5315 = vpop.f32.mrb[0].mxu0
      %v5316 = vadd.f32 0.0, %v5315
      %v5317 = vpop.f32.mrb[0].mxu0
      %5318 = vmatprep.mubr.f32.mxu0 0.0
      %5319 = vmatmul.mubr.f32.gmra.mrb[0].mxu0 %v4449
      %v5320 = vpop.f32.mrb[0].mxu0
      %v5321 = vadd.f32 0.0, %v5320
      %v5322 = vpop.f32.mrb[0].mxu0
      %5323 = vmatprep.mubr.f32.mxu0 0.0
      %5324 = vmatmul.mubr.f32.gmra.mrb[0].mxu0 %v4452
      %v5325 = vpop.f32.mrb[0].mxu0
      %v5326 = vadd.f32 0.0, %v5325
      %v5327 = vpop.f32.mrb[0].mxu0
      %5328 = vmatprep.mubr.f32.mxu0 0.0
      %5329 = vmatmul.mubr.f32.gmra.mrb[0].mxu0 %v4455
      %v5330 = vpop.f32.mrb[0].mxu0
      %v5331 = vadd.f32 0.0, %v5330
      %v5332 = vpop.f32.mrb[0].mxu0
      %5333 = vmatprep.mubr.f32.mxu0 0.0
      %5334 = vmatmul.mubr.f32.gmra.mrb[0].mxu0 %v4458
      %v5335 = vpop.f32.mrb[0].mxu0
      %v5336 = vadd.f32 0.0, %v5335
      %v5337 = vpop.f32.mrb[0].mxu0
      %5338 = vmatprep.mubr.f32.mxu0 0.0
      %5339 = vmatmul.mubr.f32.gmra.mrb[0].mxu0 %v4461
      %v5340 = vpop.f32.mrb[0].mxu0
      %v5341 = vadd.f32 0.0, %v5340
      %v5342 = vpop.f32.mrb[0].mxu0
      %5343 = vmatprep.mubr.f32.mxu0 0.0
      %5344 = vmatmul.mubr.f32.gmra.mrb[0].mxu0 %v4464
      %v5345 = vpop.f32.mrb[0].mxu0
      %v5346 = vadd.f32 0.0, %v5345
      %v5347 = vpop.f32.mrb[0].mxu0
      %5348 = vmatprep.mubr.f32.mxu0 0.0
      %5349 = vmatmul.mubr.f32.gmra.mrb[0].mxu0 %v4467
      %v5350 = vpop.f32.mrb[0].mxu0
      %v5351 = vadd.f32 0.0, %v5350
      %v5352 = vpop.f32.mrb[0].mxu0
      %5353 = vmatprep.mubr.f32.mxu0 0.0
      %5354 = vmatmul.mubr.f32.gmra.mrb[0].mxu0 %v4470
      %v5355 = vpop.f32.mrb[0].mxu0
      %v5356 = vadd.f32 0.0, %v5355
      %v5357 = vpop.f32.mrb[0].mxu0
      %5358 = vmatprep.mubr.f32.mxu0 0.0
      %5359 = vmatmul.mubr.f32.gmra.mrb[0].mxu0 %v4473
      %v5360 = vpop.f32.mrb[0].mxu0
      %v5361 = vadd.f32 0.0, %v5360
      %v5362 = vpop.f32.mrb[0].mxu0
      %5363 = vmatprep.mubr.f32.mxu0 0.0
      %5364 = vmatmul.mubr.f32.gmra.mrb[0].mxu0 %v4476
      %v5365 = vpop.f32.mrb[0].mxu0
      %v5366 = vadd.f32 0.0, %v5365
      %v5367 = vpop.f32.mrb[0].mxu0
      %5368 = vmatprep.mubr.f32.mxu0 0.0
      %5369 = vmatmul.mubr.f32.gmra.mrb[0].mxu0 %v4479
      %v5370 = vpop.f32.mrb[0].mxu0
      %v5371 = vadd.f32 0.0, %v5370
      %v5372 = vpop.f32.mrb[0].mxu0
      %5373 = vmatprep.mubr.f32.mxu0 0.0
      %5374 = vmatmul.mubr.f32.gmra.mrb[0].mxu0 %v4482
      %v5375 = vpop.f32.mrb[0].mxu0
      %v5376 = vadd.f32 0.0, %v5375
      %v5377 = vpop.f32.mrb[0].mxu0
      %5378 = vmatprep.mubr.f32.mxu0 0.0
      %5379 = vmatmul.mubr.f32.gmra.mrb[0].mxu0 %v4485
      %v5380 = vpop.f32.mrb[0].mxu0
      %v5381 = vadd.f32 0.0, %v5380
      %v5382 = vpop.f32.mrb[0].mxu0
      %5383 = vmatprep.mubr.f32.mxu0 0.0
      %5384 = vmatmul.mubr.f32.gmra.mrb[0].mxu0 %v4488
      %v5385 = vpop.f32.mrb[0].mxu0
      %v5386 = vadd.f32 0.0, %v5385
      %v5387 = vpop.f32.mrb[0].mxu0
      %5388 = vmatprep.mubr.f32.mxu0 0.0
      %5389 = vmatmul.mubr.f32.gmra.mrb[0].mxu0 %v4491
      %v5390 = vpop.f32.mrb[0].mxu0
      %v5391 = vadd.f32 0.0, %v5390
      %v5392 = vpop.f32.mrb[0].mxu0
      %5393 = vmatprep.mubr.f32.mxu0 0.0
      %5394 = vmatmul.mubr.f32.gmra.mrb[0].mxu0 %v4494
      %v5395 = vpop.f32.mrb[0].mxu0
      %v5396 = vadd.f32 0.0, %v5395
      %v5397 = vpop.f32.mrb[0].mxu0
      %5398 = vmatprep.mubr.f32.mxu0 0.0
      %5399 = vmatmul.mubr.f32.gmra.mrb[0].mxu0 %v4497
      %v5400 = vpop.f32.mrb[0].mxu0
      %v5401 = vadd.f32 0.0, %v5400
      %v5402 = vpop.f32.mrb[0].mxu0
      %5403 = vmatprep.mubr.f32.mxu0 0.0
      %5404 = vmatmul.mubr.f32.gmra.mrb[0].mxu0 %v4500
      %v5405 = vpop.f32.mrb[0].mxu0
      %v5406 = vadd.f32 0.0, %v5405
      %v5407 = vpop.f32.mrb[0].mxu0
      %5408 = vmatprep.mubr.f32.mxu0 0.0
      %5409 = vmatmul.mubr.f32.gmra.mrb[0].mxu0 %v4503
      %v5410 = vpop.f32.mrb[0].mxu0
      %v5411 = vadd.f32 0.0, %v5410
      %v5412 = vpop.f32.mrb[0].mxu0
      %5413 = vmatprep.mubr.f32.mxu0 0.0
      %5414 = vmatmul.mubr.f32.gmra.mrb[0].mxu0 %v4506
      %v5415 = vpop.f32.mrb[0].mxu0
      %v5416 = vadd.f32 0.0, %v5415
      %v5417 = vpop.f32.mrb[0].mxu0
      %5418 = vmatprep.mubr.f32.mxu0 0.0
      %5419 = vmatmul.mubr.f32.gmra.mrb[0].mxu0 %v4509
      %v5420 = vpop.f32.mrb[0].mxu0
      %v5421 = vadd.f32 0.0, %v5420
      %v5422 = vpop.f32.mrb[0].mxu0
      %5423 = vmatprep.mubr.f32.mxu0 0.0
      %5424 = vmatmul.mubr.f32.gmra.mrb[0].mxu0 %v4512
      %v5425 = vpop.f32.mrb[0].mxu0
      %v5426 = vadd.f32 0.0, %v5425
      %v5427 = vpop.f32.mrb[0].mxu0
      %5428 = vmatprep.mubr.f32.mxu0 0.0
      %5429 = vmatmul.mubr.f32.gmra.mrb[0].mxu0 %v4515
      %v5430 = vpop.f32.mrb[0].mxu0
      %v5431 = vadd.f32 0.0, %v5430
      %v5432 = vpop.f32.mrb[0].mxu0
      %5433 = vmatprep.mubr.f32.mxu0 0.0
      %5434 = vmatmul.mubr.f32.gmra.mrb[0].mxu0 %v4518
      %v5435 = vpop.f32.mrb[0].mxu0
      %v5436 = vadd.f32 0.0, %v5435
      %v5437 = vpop.f32.mrb[0].mxu0
      %5438 = vmatprep.mubr.f32.mxu0 0.0
      %5439 = vmatmul.mubr.f32.gmra.mrb[0].mxu0 %v4521
      %v5440 = vpop.f32.mrb[0].mxu0
      %v5441 = vadd.f32 0.0, %v5440
      %v5442 = vpop.f32.mrb[0].mxu0
      %5443 = vmatprep.mubr.f32.mxu0 0.0
      %5444 = vmatmul.mubr.f32.gmra.mrb[0].mxu0 %v4524
      %v5445 = vpop.f32.mrb[0].mxu0
      %v5446 = vadd.f32 0.0, %v5445
      %v5447 = vpop.f32.mrb[0].mxu0
      %5448 = vmatprep.mubr.f32.mxu0 0.0
      %5449 = vmatmul.mubr.f32.gmra.mrb[0].mxu0 %v4527
      %v5450 = vpop.f32.mrb[0].mxu0
      %v5451 = vadd.f32 0.0, %v5450
      %v5452 = vpop.f32.mrb[0].mxu0
      %5453 = vmatprep.mubr.f32.mxu0 0.0
      %5454 = vmatmul.mubr.f32.gmra.mrb[0].mxu0 %v4530
      %v5455 = vpop.f32.mrb[0].mxu0
      %v5456 = vadd.f32 0.0, %v5455
      %v5457 = vpop.f32.mrb[0].mxu0
      %5458 = vmatprep.mubr.f32.mxu0 0.0
      %5459 = vmatmul.mubr.f32.gmra.mrb[0].mxu0 %v4533
      %v5460 = vpop.f32.mrb[0].mxu0
      %v5461 = vadd.f32 0.0, %v5460
      %v5462 = vpop.f32.mrb[0].mxu0
      %5463 = vmatprep.mubr.f32.mxu0 0.0
      %5464 = vmatmul.mubr.f32.gmra.mrb[0].mxu0 %v4536
      %v5465 = vpop.f32.mrb[0].mxu0
      %v5466 = vadd.f32 0.0, %v5465
      %v5467 = vpop.f32.mrb[0].mxu0
      %5468 = vmatprep.mubr.f32.mxu0 0.0
      %5469 = vmatmul.mubr.f32.gmra.mrb[0].mxu0 %v4539
      %v5470 = vpop.f32.mrb[0].mxu0
      %v5471 = vadd.f32 0.0, %v5470
      %v5472 = vpop.f32.mrb[0].mxu0
      %5473 = vmatprep.mubr.f32.mxu0 0.0
      %5474 = vmatmul.mubr.f32.gmra.mrb[0].mxu0 %v4542
      %v5475 = vpop.f32.mrb[0].mxu0
      %v5476 = vadd.f32 0.0, %v5475
      %v5477 = vpop.f32.mrb[0].mxu0
      %5478 = vmatprep.mubr.f32.mxu0 0.0
      %5479 = vmatmul.mubr.f32.gmra.mrb[0].mxu0 %v4545
      %v5480 = vpop.f32.mrb[0].mxu0
      %v5481 = vadd.f32 0.0, %v5480
      %v5482 = vpop.f32.mrb[0].mxu0
      %5483 = vmatprep.mubr.f32.mxu0 0.0
      %5484 = vmatmul.mubr.f32.gmra.mrb[0].mxu0 %v4548
      %v5485 = vpop.f32.mrb[0].mxu0
      %v5486 = vadd.f32 0.0, %v5485
      %v5487 = vpop.f32.mrb[0].mxu0
      %5488 = vmatprep.mubr.f32.mxu0 0.0
      %5489 = vmatmul.mubr.f32.gmra.mrb[0].mxu0 %v4551
      %v5490 = vpop.f32.mrb[0].mxu0
      %v5491 = vadd.f32 0.0, %v5490
      %v5492 = vpop.f32.mrb[0].mxu0
      %5493 = vmatprep.mubr.f32.mxu0 0.0
      %5494 = vmatmul.mubr.f32.gmra.mrb[0].mxu0 %v4554
      %v5495 = vpop.f32.mrb[0].mxu0
      %v5496 = vadd.f32 0.0, %v5495
      %v5497 = vpop.f32.mrb[0].mxu0
      %5498 = vmatprep.mubr.f32.mxu0 0.0
      %5499 = vmatmul.mubr.f32.gmra.mrb[0].mxu0 %v4557
      %v5500 = vpop.f32.mrb[0].mxu0
      %v5501 = vadd.f32 0.0, %v5500
      %v5502 = vpop.f32.mrb[0].mxu0
      %5503 = vmatprep.mubr.f32.mxu0 0.0
      %5504 = vmatmul.mubr.f32.gmra.mrb[0].mxu0 %v4560
      %v5505 = vpop.f32.mrb[0].mxu0
      %v5506 = vadd.f32 0.0, %v5505
      %v5507 = vpop.f32.mrb[0].mxu0
      %5508 = vmatprep.mubr.f32.mxu0 0.0
      %5509 = vmatmul.mubr.f32.gmra.mrb[0].mxu0 %v4563
      %v5510 = vpop.f32.mrb[0].mxu0
      %v5511 = vadd.f32 0.0, %v5510
      %v5512 = vpop.f32.mrb[0].mxu0
      %5513 = vmatprep.mubr.f32.mxu0 0.0
      %5514 = vmatmul.mubr.f32.gmra.mrb[0].mxu0 %v4566
      %v5515 = vpop.f32.mrb[0].mxu0
      %v5516 = vadd.f32 0.0, %v5515
      %v5517 = vpop.f32.mrb[0].mxu0
      %5518 = vmatprep.mubr.f32.mxu0 0.0
      %5519 = vmatmul.mubr.f32.gmra.mrb[0].mxu0 %v4569
      %v5520 = vpop.f32.mrb[0].mxu0
      %v5521 = vadd.f32 0.0, %v5520
      %v5522 = vpop.f32.mrb[0].mxu0
      %5523 = vmatprep.mubr.f32.mxu0 0.0
      %5524 = vmatmul.mubr.f32.gmra.mrb[0].mxu0 %v4572
      %v5525 = vpop.f32.mrb[0].mxu0
      %v5526 = vadd.f32 0.0, %v5525
      %v5527 = vpop.f32.mrb[0].mxu0
      %5528 = vmatprep.mubr.f32.mxu0 0.0
      %5529 = vmatmul.mubr.f32.gmra.mrb[0].mxu0 %v4575
      %v5530 = vpop.f32.mrb[0].mxu0
      %v5531 = vadd.f32 0.0, %v5530
      %v5532 = vpop.f32.mrb[0].mxu0
      %5533 = vmatprep.mubr.f32.mxu0 0.0
      %5534 = vmatmul.mubr.f32.gmra.mrb[0].mxu0 %v4578
      %v5535 = vpop.f32.mrb[0].mxu0
      %v5536 = vadd.f32 0.0, %v5535
      %v5537 = vpop.f32.mrb[0].mxu0
      %5538 = vmatprep.mubr.f32.mxu0 0.0
      %5539 = vmatmul.mubr.f32.gmra.mrb[0].mxu0 %v4581
      %v5540 = vpop.f32.mrb[0].mxu0
      %v5541 = vadd.f32 0.0, %v5540
      %v5542 = vpop.f32.mrb[0].mxu0
      %5543 = vmatprep.mubr.f32.mxu0 0.0
      %5544 = vmatmul.mubr.f32.gmra.mrb[0].mxu0 %v4584
      %v5545 = vpop.f32.mrb[0].mxu0
      %v5546 = vadd.f32 0.0, %v5545
      %v5547 = vpop.f32.mrb[0].mxu0
      %5548 = vmatprep.mubr.f32.mxu0 0.0
      %5549 = vmatmul.mubr.f32.gmra.mrb[0].mxu0 %v4587
      %v5550 = vpop.f32.mrb[0].mxu0
      %v5551 = vadd.f32 0.0, %v5550
      %v5552 = vpop.f32.mrb[0].mxu0
      %5553 = vmatprep.mubr.f32.mxu0 0.0
      %5554 = vmatmul.mubr.f32.gmra.mrb[0].mxu0 %v4590
      %v5555 = vpop.f32.mrb[0].mxu0
      %v5556 = vadd.f32 0.0, %v5555
      %v5557 = vpop.f32.mrb[0].mxu0
      %5558 = vmatprep.mubr.f32.mxu0 0.0
      %5559 = vmatmul.mubr.f32.gmra.mrb[0].mxu0 %v4593
      %v5560 = vpop.f32.mrb[0].mxu0
      %v5561 = vadd.f32 0.0, %v5560
      %v5562 = vpop.f32.mrb[0].mxu0
      %5563 = vmatprep.mubr.f32.mxu0 0.0
      %5564 = vmatmul.mubr.f32.gmra.mrb[0].mxu0 %v4596
      %v5565 = vpop.f32.mrb[0].mxu0
      %v5566 = vadd.f32 0.0, %v5565
      %v5567 = vpop.f32.mrb[0].mxu0
      %5568 = vmatprep.mubr.f32.mxu0 0.0
      %5569 = vmatmul.mubr.f32.gmra.mrb[0].mxu0 %v4599
      %v5570 = vpop.f32.mrb[0].mxu0
      %v5571 = vadd.f32 0.0, %v5570
      %v5572 = vpop.f32.mrb[0].mxu0
      %5573 = vmatprep.mubr.f32.mxu0 0.0
      %5574 = vmatmul.mubr.f32.gmra.mrb[0].mxu0 %v4602
      %v5575 = vpop.f32.mrb[0].mxu0
      %v5576 = vadd.f32 0.0, %v5575
      %v5577 = vpop.f32.mrb[0].mxu0
      %5578 = vmatprep.mubr.f32.mxu0 0.0
      %5579 = vmatmul.mubr.f32.gmra.mrb[0].mxu0 %v4605
      %v5580 = vpop.f32.mrb[0].mxu0
      %v5581 = vadd.f32 0.0, %v5580
      %v5582 = vpop.f32.mrb[0].mxu0
      %5583 = vmatprep.mubr.f32.mxu0 0.0
      %5584 = vmatmul.mubr.f32.gmra.mrb[0].mxu0 %v4608
      %v5585 = vpop.f32.mrb[0].mxu0
      %v5586 = vadd.f32 0.0, %v5585
      %v5587 = vpop.f32.mrb[0].mxu0
      %5588 = vmatprep.mubr.f32.mxu0 0.0
      %5589 = vmatmul.mubr.f32.gmra.mrb[0].mxu0 %v4611
      %v5590 = vpop.f32.mrb[0].mxu0
      %v5591 = vadd.f32 0.0, %v5590
      %v5592 = vpop.f32.mrb[0].mxu0
      %5593 = vmatprep.mubr.f32.mxu0 0.0
      %5594 = vmatmul.mubr.f32.gmra.mrb[0].mxu0 %v4614
      %v5595 = vpop.f32.mrb[0].mxu0
      %v5596 = vadd.f32 0.0, %v5595
      %v5597 = vpop.f32.mrb[0].mxu0
      %5598 = vmatprep.mubr.f32.mxu0 0.0
      %5599 = vmatmul.mubr.f32.gmra.mrb[0].mxu0 %v4617
      %v5600 = vpop.f32.mrb[0].mxu0
      %v5601 = vadd.f32 0.0, %v5600
      %v5602 = vpop.f32.mrb[0].mxu0
      %5603 = vmatprep.mubr.f32.mxu0 0.0
      %5604 = vmatmul.mubr.f32.gmra.mrb[0].mxu0 %v4620
      %v5605 = vpop.f32.mrb[0].mxu0
      %v5606 = vadd.f32 0.0, %v5605
      %v5607 = vpop.f32.mrb[0].mxu0
      %5608 = vmatprep.mubr.f32.mxu0 0.0
      %5609 = vmatmul.mubr.f32.gmra.mrb[0].mxu0 %v4623
      %v5610 = vpop.f32.mrb[0].mxu0
      %v5611 = vadd.f32 0.0, %v5610
      %v5612 = vpop.f32.mrb[0].mxu0
      %5613 = vmatprep.mubr.f32.mxu0 0.0
      %5614 = vmatmul.mubr.f32.gmra.mrb[0].mxu0 %v4626
      %v5615 = vpop.f32.mrb[0].mxu0
      %v5616 = vadd.f32 0.0, %v5615
      %v5617 = vpop.f32.mrb[0].mxu0
      %5618 = vmatprep.mubr.f32.mxu0 0.0
      %5619 = vmatmul.mubr.f32.gmra.mrb[0].mxu0 %v4629
      %v5620 = vpop.f32.mrb[0].mxu0
      %v5621 = vadd.f32 0.0, %v5620
      %v5622 = vpop.f32.mrb[0].mxu0
      %5623 = vmatprep.mubr.f32.mxu0 0.0
      %5624 = vmatmul.mubr.f32.gmra.mrb[0].mxu0 %v4632
      %v5625 = vpop.f32.mrb[0].mxu0
      %v5626 = vadd.f32 0.0, %v5625
      %v5627 = vpop.f32.mrb[0].mxu0
      %5628 = vmatprep.mubr.f32.mxu0 0.0
      %5629 = vmatmul.mubr.f32.gmra.mrb[0].mxu0 %v4635
      %v5630 = vpop.f32.mrb[0].mxu0
      %v5631 = vadd.f32 0.0, %v5630
      %v5632 = vpop.f32.mrb[0].mxu0
      %5633 = vmatprep.mubr.f32.mxu0 0.0
      %5634 = vmatmul.mubr.f32.gmra.mrb[0].mxu0 %v4638
      %v5635 = vpop.f32.mrb[0].mxu0
      %v5636 = vadd.f32 0.0, %v5635
      %v5637 = vpop.f32.mrb[0].mxu0
      %5638 = vmatprep.mubr.f32.mxu0 0.0
      %5639 = vmatmul.mubr.f32.gmra.mrb[0].mxu0 %v4641
      %v5640 = vpop.f32.mrb[0].mxu0
      %v5641 = vadd.f32 0.0, %v5640
      %v5642 = vpop.f32.mrb[0].mxu0
      %5643 = vmatprep.mubr.f32.mxu0 0.0
      %5644 = vmatmul.mubr.f32.gmra.mrb[0].mxu0 %v4644
      %v5645 = vpop.f32.mrb[0].mxu0
      %v5646 = vadd.f32 0.0, %v5645
      %v5647 = vpop.f32.mrb[0].mxu0
      %5648 = vmatprep.mubr.f32.mxu0 0.0
      %5649 = vmatmul.mubr.f32.gmra.mrb[0].mxu0 %v4647
      %v5650 = vpop.f32.mrb[0].mxu0
      %v5651 = vadd.f32 0.0, %v5650
      %v5652 = vpop.f32.mrb[0].mxu0
      %5653 = vmatprep.mubr.f32.mxu0 0.0
      %5654 = vmatmul.mubr.f32.gmra.mrb[0].mxu0 %v4650
      %v5655 = vpop.f32.mrb[0].mxu0
      %v5656 = vadd.f32 0.0, %v5655
      %v5657 = vpop.f32.mrb[0].mxu0
      %5658 = vmatprep.mubr.f32.mxu0 0.0
      %5659 = vmatmul.mubr.f32.gmra.mrb[0].mxu0 %v4653
      %v5660 = vpop.f32.mrb[0].mxu0
      %v5661 = vadd.f32 0.0, %v5660
      %v5662 = vpop.f32.mrb[0].mxu0
      %5663 = vmatprep.mubr.f32.mxu0 0.0
      %5664 = vmatmul.mubr.f32.gmra.mrb[0].mxu0 %v4656
      %v5665 = vpop.f32.mrb[0].mxu0
      %v5666 = vadd.f32 0.0, %v5665
      %v5667 = vpop.f32.mrb[0].mxu0
      %5668 = vmatprep.mubr.f32.mxu0 0.0
      %5669 = vmatmul.mubr.f32.gmra.mrb[0].mxu0 %v4659
      %v5670 = vpop.f32.mrb[0].mxu0
      %v5671 = vadd.f32 0.0, %v5670
      %v5672 = vpop.f32.mrb[0].mxu0
      %5673 = vmatprep.mubr.f32.mxu0 0.0
      %5674 = vmatmul.mubr.f32.gmra.mrb[0].mxu0 %v4662
      %v5675 = vpop.f32.mrb[0].mxu0
      %v5676 = vadd.f32 0.0, %v5675
      %v5677 = vpop.f32.mrb[0].mxu0
      %5678 = vmatprep.mubr.f32.mxu0 0.0
      %5679 = vmatmul.mubr.f32.gmra.mrb[0].mxu0 %v4665
      %v5680 = vpop.f32.mrb[0].mxu0
      %v5681 = vadd.f32 0.0, %v5680
      %v5682 = vpop.f32.mrb[0].mxu0
      %5683 = vmatprep.mubr.f32.mxu0 0.0
      %5684 = vmatmul.mubr.f32.gmra.mrb[0].mxu0 %v4668
      %v5685 = vpop.f32.mrb[0].mxu0
      %v5686 = vadd.f32 0.0, %v5685
      %v5687 = vpop.f32.mrb[0].mxu0
      %5688 = vmatprep.mubr.f32.mxu0 0.0
      %5689 = vmatmul.mubr.f32.gmra.mrb[0].mxu0 %v4671
      %v5690 = vpop.f32.mrb[0].mxu0
      %v5691 = vadd.f32 0.0, %v5690
      %v5692 = vpop.f32.mrb[0].mxu0
      %5693 = vmatprep.mubr.f32.mxu0 0.0
      %5694 = vmatmul.mubr.f32.gmra.mrb[0].mxu0 %v4674
      %v5695 = vpop.f32.mrb[0].mxu0
      %v5696 = vadd.f32 0.0, %v5695
      %v5697 = vpop.f32.mrb[0].mxu0
      %5698 = vmatprep.mubr.f32.mxu0 0.0
      %5699 = vmatmul.mubr.f32.gmra.mrb[0].mxu0 %v4677
      %v5700 = vpop.f32.mrb[0].mxu0
      %v5701 = vadd.f32 0.0, %v5700
      %v5702 = vpop.f32.mrb[0].mxu0
      %5703 = vmatprep.mubr.f32.mxu0 0.0
      %5704 = vmatmul.mubr.f32.gmra.mrb[0].mxu0 %v4680
      %v5705 = vpop.f32.mrb[0].mxu0
      %v5706 = vadd.f32 0.0, %v5705
      %v5707 = vpop.f32.mrb[0].mxu0
      %5708 = vmatprep.mubr.f32.mxu0 0.0
      %5709 = vmatmul.mubr.f32.gmra.mrb[0].mxu0 %v4683
      %v5710 = vpop.f32.mrb[0].mxu0
      %v5711 = vadd.f32 0.0, %v5710
      %v5712 = vpop.f32.mrb[0].mxu0
      %5713 = vmatprep.mubr.f32.mxu0 0.0
      %5714 = vmatmul.mubr.f32.gmra.mrb[0].mxu0 %v4686
      %v5715 = vpop.f32.mrb[0].mxu0
      %v5716 = vadd.f32 0.0, %v5715
      %v5717 = vpop.f32.mrb[0].mxu0
      %5718 = vmatprep.mubr.f32.mxu0 0.0
      %5719 = vmatmul.mubr.f32.gmra.mrb[0].mxu0 %v4689
      %v5720 = vpop.f32.mrb[0].mxu0
      %v5721 = vadd.f32 0.0, %v5720
      %v5722 = vpop.f32.mrb[0].mxu0
      %5723 = vmatprep.mubr.f32.mxu0 0.0
      %5724 = vmatmul.mubr.f32.gmra.mrb[0].mxu0 %v4692
      %v5725 = vpop.f32.mrb[0].mxu0
      %v5726 = vadd.f32 0.0, %v5725
      %v5727 = vpop.f32.mrb[0].mxu0
      %5728 = vmatprep.mubr.f32.mxu0 0.0
      %5729 = vmatmul.mubr.f32.gmra.mrb[0].mxu0 %v4695
      %v5730 = vpop.f32.mrb[0].mxu0
      %v5731 = vadd.f32 0.0, %v5730
      %v5732 = vpop.f32.mrb[0].mxu0
      %5733 = vmatprep.mubr.f32.mxu0 0.0
      %5734 = vmatmul.mubr.f32.gmra.mrb[0].mxu0 %v4698
      %v5735 = vpop.f32.mrb[0].mxu0
      %v5736 = vadd.f32 0.0, %v5735
      %v5737 = vpop.f32.mrb[0].mxu0
      %5738 = vmatprep.mubr.f32.mxu0 0.0
      %5739 = vmatmul.mubr.f32.gmra.mrb[0].mxu0 %v4701
      %v5740 = vpop.f32.mrb[0].mxu0
      %v5741 = vadd.f32 0.0, %v5740
      %v5742 = vpop.f32.mrb[0].mxu0
      %5743 = vmatprep.mubr.f32.mxu0 0.0
      %5744 = vmatmul.mubr.f32.gmra.mrb[0].mxu0 %v4704
      %v5745 = vpop.f32.mrb[0].mxu0
      %v5746 = vadd.f32 0.0, %v5745
      %v5747 = vpop.f32.mrb[0].mxu0
      %5748 = vmatprep.mubr.f32.mxu0 0.0
      %5749 = vmatmul.mubr.f32.gmra.mrb[0].mxu0 %v4707
      %v5750 = vpop.f32.mrb[0].mxu0
      %v5751 = vadd.f32 0.0, %v5750
      %v5752 = vpop.f32.mrb[0].mxu0
      %5753 = vmatprep.mubr.f32.mxu0 0.0
      %5754 = vmatmul.mubr.f32.gmra.mrb[0].mxu0 %v4710
      %v5755 = vpop.f32.mrb[0].mxu0
      %v5756 = vadd.f32 0.0, %v5755
      %v5757 = vpop.f32.mrb[0].mxu0
      %5758 = vmatprep.mubr.f32.mxu0 0.0
      %5759 = vmatmul.mubr.f32.gmra.mrb[0].mxu0 %v4713
      %v5760 = vpop.f32.mrb[0].mxu0
      %v5761 = vadd.f32 0.0, %v5760
      %v5762 = vpop.f32.mrb[0].mxu0
      %5763 = vmatprep.mubr.f32.mxu0 0.0
      %5764 = vmatmul.mubr.f32.gmra.mrb[0].mxu0 %v4716
      %v5765 = vpop.f32.mrb[0].mxu0
      %v5766 = vadd.f32 0.0, %v5765
      %v5767 = vpop.f32.mrb[0].mxu0
      %5768 = vmatprep.mubr.f32.mxu0 0.0
      %5769 = vmatmul.mubr.f32.gmra.mrb[0].mxu0 %v4719
      %v5770 = vpop.f32.mrb[0].mxu0
      %v5771 = vadd.f32 0.0, %v5770
      %v5772 = vpop.f32.mrb[0].mxu0
      %5773 = vmatprep.mubr.f32.mxu0 0.0
      %5774 = vmatmul.mubr.f32.gmra.mrb[0].mxu0 %v4722
      %v5775 = vpop.f32.mrb[0].mxu0
      %v5776 = vadd.f32 0.0, %v5775
      %v5777 = vpop.f32.mrb[0].mxu0
      %5778 = vmatprep.mubr.f32.mxu0 0.0
      %5779 = vmatmul.mubr.f32.gmra.mrb[0].mxu0 %v4725
      %v5780 = vpop.f32.mrb[0].mxu0
      %v5781 = vadd.f32 0.0, %v5780
      %v5782 = vpop.f32.mrb[0].mxu0
      %5783 = vmatprep.mubr.f32.mxu0 0.0
      %5784 = vmatmul.mubr.f32.gmra.mrb[0].mxu0 %v4728
      %v5785 = vpop.f32.mrb[0].mxu0
      %v5786 = vadd.f32 0.0, %v5785
      %v5787 = vpop.f32.mrb[0].mxu0
      %5788 = vmatprep.mubr.f32.mxu0 0.0
      %5789 = vmatmul.mubr.f32.gmra.mrb[0].mxu0 %v4731
      %v5790 = vpop.f32.mrb[0].mxu0
      %v5791 = vadd.f32 0.0, %v5790
      %v5792 = vpop.f32.mrb[0].mxu0
      %5793 = vmatprep.mubr.f32.mxu0 0.0
      %5794 = vmatmul.mubr.f32.gmra.mrb[0].mxu0 %v4734
      %v5795 = vpop.f32.mrb[0].mxu0
      %v5796 = vadd.f32 0.0, %v5795
      %v5797 = vpop.f32.mrb[0].mxu0
      %5798 = vmatprep.mubr.f32.mxu0 0.0
      %5799 = vmatmul.mubr.f32.gmra.mrb[0].mxu0 %v4737
      %v5800 = vpop.f32.mrb[0].mxu0
      %v5801 = vadd.f32 0.0, %v5800
      %v5802 = vpop.f32.mrb[0].mxu0
      %5803 = vmatprep.mubr.f32.mxu0 0.0
      %5804 = vmatmul.mubr.f32.gmra.mrb[0].mxu0 %v4740
      %v5805 = vpop.f32.mrb[0].mxu0
      %v5806 = vadd.f32 0.0, %v5805
      %v5807 = vpop.f32.mrb[0].mxu0
      %5808 = vmatprep.mubr.f32.mxu0 0.0
      %5809 = vmatmul.mubr.f32.gmra.mrb[0].mxu0 %v4743
      %v5810 = vpop.f32.mrb[0].mxu0
      %v5811 = vadd.f32 0.0, %v5810
      %v5812 = vpop.f32.mrb[0].mxu0
      %5813 = vmatprep.mubr.f32.mxu0 0.0
      %5814 = vmatmul.mubr.f32.gmra.mrb[0].mxu0 %v4746
      %v5815 = vpop.f32.mrb[0].mxu0
      %v5816 = vadd.f32 0.0, %v5815
      %v5817 = vpop.f32.mrb[0].mxu0
      %5818 = vmatprep.mubr.f32.mxu0 0.0
      %5819 = vmatmul.mubr.f32.gmra.mrb[0].mxu0 %v4749
      %v5820 = vpop.f32.mrb[0].mxu0
      %v5821 = vadd.f32 0.0, %v5820
      %v5822 = vpop.f32.mrb[0].mxu0
      %5823 = vmatprep.mubr.f32.mxu0 0.0
      %5824 = vmatmul.mubr.f32.gmra.mrb[0].mxu0 %v4752
      %v5825 = vpop.f32.mrb[0].mxu0
      %v5826 = vadd.f32 0.0, %v5825
      %v5827 = vpop.f32.mrb[0].mxu0
      %5828 = vmatprep.mubr.f32.mxu0 0.0
      %5829 = vmatmul.mubr.f32.gmra.mrb[0].mxu0 %v4755
      %v5830 = vpop.f32.mrb[0].mxu0
      %v5831 = vadd.f32 0.0, %v5830
      %v5832 = vpop.f32.mrb[0].mxu0
      %5833 = vmatprep.mubr.f32.mxu0 0.0
      %5834 = vmatmul.mubr.f32.gmra.mrb[0].mxu0 %v4758
      %v5835 = vpop.f32.mrb[0].mxu0
      %v5836 = vadd.f32 0.0, %v5835
      %v5837 = vpop.f32.mrb[0].mxu0
      %5838 = vmatprep.mubr.f32.mxu0 0.0
      %5839 = vmatmul.mubr.f32.gmra.mrb[0].mxu0 %v4761
      %v5840 = vpop.f32.mrb[0].mxu0
      %v5841 = vadd.f32 0.0, %v5840
      %v5842 = vpop.f32.mrb[0].mxu0
      %5843 = vmatprep.mubr.f32.mxu0 0.0
      %5844 = vmatmul.mubr.f32.gmra.mrb[0].mxu0 %v4764
      %v5845 = vpop.f32.mrb[0].mxu0
      %v5846 = vadd.f32 0.0, %v5845
      %v5847 = vpop.f32.mrb[0].mxu0
      %5848 = vmatprep.mubr.f32.mxu0 0.0
      %5849 = vmatmul.mubr.f32.gmra.mrb[0].mxu0 %v4767
      %v5850 = vpop.f32.mrb[0].mxu0
      %v5851 = vadd.f32 0.0, %v5850
      %v5852 = vpop.f32.mrb[0].mxu0
      %5853 = vmatprep.mubr.f32.mxu0 0.0
      %5854 = vmatmul.mubr.f32.gmra.mrb[0].mxu0 %v4770
      %v5855 = vpop.f32.mrb[0].mxu0
      %v5856 = vadd.f32 0.0, %v5855
      %v5857 = vpop.f32.mrb[0].mxu0
      %5858 = vmatprep.mubr.f32.mxu0 0.0
      %5859 = vmatmul.mubr.f32.gmra.mrb[0].mxu0 %v4773
      %v5860 = vpop.f32.mrb[0].mxu0
      %v5861 = vadd.f32 0.0, %v5860
      %v5862 = vpop.f32.mrb[0].mxu0
      %5863 = vmatprep.mubr.f32.mxu0 0.0
      %5864 = vmatmul.mubr.f32.gmra.mrb[0].mxu0 %v4776
      %v5865 = vpop.f32.mrb[0].mxu0
      %v5866 = vadd.f32 0.0, %v5865
      %v5867 = vpop.f32.mrb[0].mxu0
      %5868 = vmatprep.mubr.f32.mxu0 0.0
      %5869 = vmatmul.mubr.f32.gmra.mrb[0].mxu0 %v4779
      %v5870 = vpop.f32.mrb[0].mxu0
      %v5871 = vadd.f32 0.0, %v5870
      %v5872 = vpop.f32.mrb[0].mxu0
      %5873 = vmatprep.mubr.f32.mxu0 0.0
      %5874 = vmatmul.mubr.f32.gmra.mrb[0].mxu0 %v4782
      %v5875 = vpop.f32.mrb[0].mxu0
      %v5876 = vadd.f32 0.0, %v5875
      %v5877 = vpop.f32.mrb[0].mxu0
      %5878 = vmatprep.mubr.f32.mxu0 0.0
      %5879 = vmatmul.mubr.f32.gmra.mrb[0].mxu0 %v4785
      %v5880 = vpop.f32.mrb[0].mxu0
      %v5881 = vadd.f32 0.0, %v5880
      %v5882 = vpop.f32.mrb[0].mxu0
      %5883 = vmatprep.mubr.f32.mxu0 0.0
      %5884 = vmatmul.mubr.f32.gmra.mrb[0].mxu0 %v4788
      %v5885 = vpop.f32.mrb[0].mxu0
      %v5886 = vadd.f32 0.0, %v5885
      %v5887 = vpop.f32.mrb[0].mxu0
      %5888 = vmatprep.mubr.f32.mxu0 0.0
      %5889 = vmatmul.mubr.f32.gmra.mrb[0].mxu0 %v4791
      %v5890 = vpop.f32.mrb[0].mxu0
      %v5891 = vadd.f32 0.0, %v5890
      %v5892 = vpop.f32.mrb[0].mxu0
      %5893 = vmatprep.mubr.f32.mxu0 0.0
      %5894 = vmatmul.mubr.f32.gmra.mrb[0].mxu0 %v4794
      %v5895 = vpop.f32.mrb[0].mxu0
      %v5896 = vadd.f32 0.0, %v5895
      %v5897 = vpop.f32.mrb[0].mxu0
      %5898 = vmatprep.mubr.f32.mxu0 0.0
      %5899 = vmatmul.mubr.f32.gmra.mrb[0].mxu0 %v4797
      %v5900 = vpop.f32.mrb[0].mxu0
      %v5901 = vadd.f32 0.0, %v5900
      %v5902 = vpop.f32.mrb[0].mxu0
      %5903 = vmatprep.mubr.f32.mxu0 0.0
      %5904 = vmatmul.mubr.f32.gmra.mrb[0].mxu0 %v4800
      %v5905 = vpop.f32.mrb[0].mxu0
      %v5906 = vadd.f32 0.0, %v5905
      %v5907 = vpop.f32.mrb[0].mxu0
      %5908 = vmatprep.mubr.f32.mxu0 0.0
      %5909 = vmatmul.mubr.f32.gmra.mrb[0].mxu0 %v4803
      %v5910 = vpop.f32.mrb[0].mxu0
      %v5911 = vadd.f32 0.0, %v5910
      %v5912 = vpop.f32.mrb[0].mxu0
      %5913 = vmatprep.mubr.f32.mxu0 0.0
      %5914 = vmatmul.mubr.f32.gmra.mrb[0].mxu0 %v4806
      %v5915 = vpop.f32.mrb[0].mxu0
      %v5916 = vadd.f32 0.0, %v5915
      %v5917 = vpop.f32.mrb[0].mxu0
      %5918 = vmatprep.mubr.f32.mxu0 0.0
      %5919 = vmatmul.mubr.f32.gmra.mrb[0].mxu0 %v4809
      %v5920 = vpop.f32.mrb[0].mxu0
      %v5921 = vadd.f32 0.0, %v5920
      %v5922 = vpop.f32.mrb[0].mxu0
      %5923 = vmatprep.mubr.f32.mxu0 0.0
      %5924 = vmatmul.mubr.f32.gmra.mrb[0].mxu0 %v4812
      %v5925 = vpop.f32.mrb[0].mxu0
      %v5926 = vadd.f32 0.0, %v5925
      %v5927 = vpop.f32.mrb[0].mxu0
      %5928 = vmatprep.mubr.f32.mxu0 0.0
      %5929 = vmatmul.mubr.f32.gmra.mrb[0].mxu0 %v4815
      %v5930 = vpop.f32.mrb[0].mxu0
      %v5931 = vadd.f32 0.0, %v5930
      %v5932 = vpop.f32.mrb[0].mxu0
      %5933 = vmatprep.mubr.f32.mxu0 0.0
      %5934 = vmatmul.mubr.f32.gmra.mrb[0].mxu0 %v4818
      %v5935 = vpop.f32.mrb[0].mxu0
      %v5936 = vadd.f32 0.0, %v5935
      %v5937 = vpop.f32.mrb[0].mxu0
      %5938 = vmatprep.mubr.f32.mxu0 0.0
      %5939 = vmatmul.mubr.f32.gmra.mrb[0].mxu0 %v4821
      %v5940 = vpop.f32.mrb[0].mxu0
      %v5941 = vadd.f32 0.0, %v5940
      %v5942 = vpop.f32.mrb[0].mxu0
      %5943 = vmatprep.mubr.f32.mxu0 0.0
      %5944 = vmatmul.mubr.f32.gmra.mrb[0].mxu0 %v4824
      %v5945 = vpop.f32.mrb[0].mxu0
      %v5946 = vadd.f32 0.0, %v5945
      %v5947 = vpop.f32.mrb[0].mxu0
      %5948 = vmatprep.mubr.f32.mxu0 0.0
      %5949 = vmatmul.mubr.f32.gmra.mrb[0].mxu0 %v4827
      %v5950 = vpop.f32.mrb[0].mxu0
      %v5951 = vadd.f32 0.0, %v5950
      %v5952 = vpop.f32.mrb[0].mxu0
      %5953 = vmatprep.mubr.f32.mxu0 0.0
      %5954 = vmatmul.mubr.f32.gmra.mrb[0].mxu0 %v4830
      %v5955 = vpop.f32.mrb[0].mxu0
      %v5956 = vadd.f32 0.0, %v5955
      %v5957 = vpop.f32.mrb[0].mxu0
      %5958 = vmatprep.mubr.f32.mxu0 0.0
      %5959 = vmatmul.mubr.f32.gmra.mrb[0].mxu0 %v4833
      %v5960 = vpop.f32.mrb[0].mxu0
      %v5961 = vadd.f32 0.0, %v5960
      %v5962 = vpop.f32.mrb[0].mxu0
      %5963 = vmatprep.mubr.f32.mxu0 0.0
      %5964 = vmatmul.mubr.f32.gmra.mrb[0].mxu0 %v4836
      %v5965 = vpop.f32.mrb[0].mxu0
      %v5966 = vadd.f32 0.0, %v5965
      %v5967 = vpop.f32.mrb[0].mxu0
      %5968 = vmatprep.mubr.f32.mxu0 0.0
      %5969 = vmatmul.mubr.f32.gmra.mrb[0].mxu0 %v4839
      %v5970 = vpop.f32.mrb[0].mxu0
      %v5971 = vadd.f32 0.0, %v5970
      %v5972 = vpop.f32.mrb[0].mxu0
      %5973 = vmatprep.mubr.f32.mxu0 0.0
      %5974 = vmatmul.mubr.f32.gmra.mrb[0].mxu0 %v4842
      %v5975 = vpop.f32.mrb[0].mxu0
      %v5976 = vadd.f32 0.0, %v5975
      %v5977 = vpop.f32.mrb[0].mxu0
      %5978 = vmatprep.mubr.f32.mxu0 0.0
      %5979 = vmatmul.mubr.f32.gmra.mrb[0].mxu0 %v4845
      %v5980 = vpop.f32.mrb[0].mxu0
      %v5981 = vadd.f32 0.0, %v5980
      %v5982 = vpop.f32.mrb[0].mxu0
      %5983 = vmatprep.mubr.f32.mxu0 0.0
      %5984 = vmatmul.mubr.f32.gmra.mrb[0].mxu0 %v4848
      %v5985 = vpop.f32.mrb[0].mxu0
      %v5986 = vadd.f32 0.0, %v5985
      %v5987 = vpop.f32.mrb[0].mxu0
      %5988 = vmatprep.mubr.f32.mxu0 0.0
      %5989 = vmatmul.mubr.f32.gmra.mrb[0].mxu0 %v4851
      %v5990 = vpop.f32.mrb[0].mxu0
      %v5991 = vadd.f32 0.0, %v5990
      %v5992 = vpop.f32.mrb[0].mxu0
      %5993 = vmatprep.mubr.f32.mxu0 0.0
      %5994 = vmatmul.mubr.f32.gmra.mrb[0].mxu0 %v4854
      %v5995 = vpop.f32.mrb[0].mxu0
      %v5996 = vadd.f32 0.0, %v5995
      %v5997 = vpop.f32.mrb[0].mxu0
      %5998 = vmatprep.mubr.f32.mxu0 0.0
      %5999 = vmatmul.mubr.f32.gmra.mrb[0].mxu0 %v4857
      %v6000 = vpop.f32.mrb[0].mxu0
      %v6001 = vadd.f32 0.0, %v6000
      %v6002 = vpop.f32.mrb[0].mxu0
      %6003 = vmatprep.mubr.f32.mxu0 0.0
      %6004 = vmatmul.mubr.f32.gmra.mrb[0].mxu0 %v4860
      %v6005 = vpop.f32.mrb[0].mxu0
      %v6006 = vadd.f32 0.0, %v6005
      %v6007 = vpop.f32.mrb[0].mxu0
      %6008 = vmatprep.mubr.f32.mxu0 0.0
      %6009 = vmatmul.mubr.f32.gmra.mrb[0].mxu0 %v4863
      %v6010 = vpop.f32.mrb[0].mxu0
      %v6011 = vadd.f32 0.0, %v6010
      %v6012 = vpop.f32.mrb[0].mxu0
      %6013 = vmatprep.mubr.f32.mxu0 0.0
      %6014 = vmatmul.mubr.f32.gmra.mrb[0].mxu0 %v4866
      %v6015 = vpop.f32.mrb[0].mxu0
      %v6016 = vadd.f32 0.0, %v6015
      %v6017 = vpop.f32.mrb[0].mxu0
      %6018 = vmatprep.mubr.f32.mxu0 0.0
      %6019 = vmatmul.mubr.f32.gmra.mrb[0].mxu0 %v4869
      %v6020 = vpop.f32.mrb[0].mxu0
      %v6021 = vadd.f32 0.0, %v6020
      %v6022 = vpop.f32.mrb[0].mxu0
      %6023 = vmatprep.mubr.f32.mxu0 0.0
      %6024 = vmatmul.mubr.f32.gmra.mrb[0].mxu0 %v4872
      %v6025 = vpop.f32.mrb[0].mxu0
      %v6026 = vadd.f32 0.0, %v6025
      %v6027 = vpop.f32.mrb[0].mxu0
      %6028 = vmatprep.mubr.f32.mxu0 0.0
      %6029 = vmatmul.mubr.f32.gmra.mrb[0].mxu0 %v4875
      %v6030 = vpop.f32.mrb[0].mxu0
      %v6031 = vadd.f32 0.0, %v6030
      %v6032 = vpop.f32.mrb[0].mxu0
      %6033 = vmatprep.mubr.f32.mxu0 0.0
      %6034 = vmatmul.mubr.f32.gmra.mrb[0].mxu0 %v4878
      %v6035 = vpop.f32.mrb[0].mxu0
      %v6036 = vadd.f32 0.0, %v6035
      %v6037 = vpop.f32.mrb[0].mxu0
      %6038 = vmatprep.mubr.f32.mxu0 0.0
      %6039 = vmatmul.mubr.f32.gmra.mrb[0].mxu0 %v4881
      %v6040 = vpop.f32.mrb[0].mxu0
      %v6041 = vadd.f32 0.0, %v6040
      %v6042 = vpop.f32.mrb[0].mxu0
      %6043 = vmatprep.mubr.f32.mxu0 0.0
      %6044 = vmatmul.mubr.f32.gmra.mrb[0].mxu0 %v4884
      %v6045 = vpop.f32.mrb[0].mxu0
      %v6046 = vadd.f32 0.0, %v6045
      %v6047 = vpop.f32.mrb[0].mxu0
      %6048 = vmatprep.mubr.f32.mxu0 0.0
      %6049 = vmatmul.mubr.f32.gmra.mrb[0].mxu0 %v4887
      %v6050 = vpop.f32.mrb[0].mxu0
      %v6051 = vadd.f32 0.0, %v6050
      %v6052 = vpop.f32.mrb[0].mxu0
      %6053 = vmatprep.mubr.f32.mxu0 0.0
      %6054 = vmatmul.mubr.f32.gmra.mrb[0].mxu0 %v4890
      %v6055 = vpop.f32.mrb[0].mxu0
      %v6056 = vadd.f32 0.0, %v6055
      %v6057 = vpop.f32.mrb[0].mxu0
      %6058 = vmatprep.mubr.f32.mxu0 0.0
      %6059 = vmatmul.mubr.f32.gmra.mrb[0].mxu0 %v4893
      %v6060 = vpop.f32.mrb[0].mxu0
      %v6061 = vadd.f32 0.0, %v6060
      %v6062 = vpop.f32.mrb[0].mxu0
      %6063 = vmatprep.mubr.f32.mxu0 0.0
      %6064 = vmatmul.mubr.f32.gmra.mrb[0].mxu0 %v4896
      %v6065 = vpop.f32.mrb[0].mxu0
      %v6066 = vadd.f32 0.0, %v6065
      %v6067 = vpop.f32.mrb[0].mxu0
      %6068 = vmatprep.mubr.f32.mxu0 0.0
      %6069 = vmatmul.mubr.f32.gmra.mrb[0].mxu0 %v4899
      %v6070 = vpop.f32.mrb[0].mxu0
      %v6071 = vadd.f32 0.0, %v6070
      %v6072 = vpop.f32.mrb[0].mxu0
      %6073 = vmatprep.mubr.f32.mxu0 0.0
      %6074 = vmatmul.mubr.f32.gmra.mrb[0].mxu0 %v4902
      %v6075 = vpop.f32.mrb[0].mxu0
      %v6076 = vadd.f32 0.0, %v6075
      %v6077 = vpop.f32.mrb[0].mxu0
      %6078 = vmatprep.mubr.f32.mxu0 0.0
      %6079 = vmatmul.mubr.f32.gmra.mrb[0].mxu0 %v4905
      %v6080 = vpop.f32.mrb[0].mxu0
      %v6081 = vadd.f32 0.0, %v6080
      %v6082 = vpop.f32.mrb[0].mxu0
      %6083 = vmatprep.mubr.f32.mxu0 0.0
      %6084 = vmatmul.mubr.f32.gmra.mrb[0].mxu0 %v4908
      %v6085 = vpop.f32.mrb[0].mxu0
      %v6086 = vadd.f32 0.0, %v6085
      %v6087 = vpop.f32.mrb[0].mxu0
      %6088 = vmatprep.mubr.f32.mxu0 0.0
      %6089 = vmatmul.mubr.f32.gmra.mrb[0].mxu0 %v4911
      %v6090 = vpop.f32.mrb[0].mxu0
      %v6091 = vadd.f32 0.0, %v6090
      %v6092 = vpop.f32.mrb[0].mxu0
      %6093 = vmatprep.mubr.f32.mxu0 0.0
      %6094 = vmatmul.mubr.f32.gmra.mrb[0].mxu0 %v4914
      %v6095 = vpop.f32.mrb[0].mxu0
      %v6096 = vadd.f32 0.0, %v6095
      %v6097 = vpop.f32.mrb[0].mxu0
      %6098 = vmatprep.mubr.f32.mxu0 0.0
      %6099 = vmatmul.mubr.f32.gmra.mrb[0].mxu0 %v4917
      %v6100 = vpop.f32.mrb[0].mxu0
      %v6101 = vadd.f32 0.0, %v6100
      %v6102 = vpop.f32.mrb[0].mxu0
      %6103 = vmatprep.mubr.f32.mxu0 0.0
      %6104 = vmatmul.mubr.f32.gmra.mrb[0].mxu0 %v4920
      %v6105 = vpop.f32.mrb[0].mxu0
      %v6106 = vadd.f32 0.0, %v6105
      %v6107 = vpop.f32.mrb[0].mxu0
      %6108 = vmatprep.mubr.f32.mxu0 0.0
      %6109 = vmatmul.mubr.f32.gmra.mrb[0].mxu0 %v4923
      %v6110 = vpop.f32.mrb[0].mxu0
      %v6111 = vadd.f32 0.0, %v6110
      %v6112 = vpop.f32.mrb[0].mxu0
      %6113 = vmatprep.mubr.f32.mxu0 0.0
      %6114 = vmatmul.mubr.f32.gmra.mrb[0].mxu0 %v4926
      %v6115 = vpop.f32.mrb[0].mxu0
      %v6116 = vadd.f32 0.0, %v6115
      %v6117 = vpop.f32.mrb[0].mxu0
      %6118 = vmatprep.mubr.f32.mxu0 0.0
      %6119 = vmatmul.mubr.f32.gmra.mrb[0].mxu0 %v4929
      %v6120 = vpop.f32.mrb[0].mxu0
      %v6121 = vadd.f32 0.0, %v6120
      %v6122 = vpop.f32.mrb[0].mxu0
      %6123 = vmatprep.mubr.f32.mxu0 0.0
      %6124 = vmatmul.mubr.f32.gmra.mrb[0].mxu0 %v4932
      %v6125 = vpop.f32.mrb[0].mxu0
      %v6126 = vadd.f32 0.0, %v6125
      %v6127 = vpop.f32.mrb[0].mxu0
      %6128 = vmatprep.mubr.f32.mxu0 0.0
      %6129 = vmatmul.mubr.f32.gmra.mrb[0].mxu0 %v4935
      %v6130 = vpop.f32.mrb[0].mxu0
      %v6131 = vadd.f32 0.0, %v6130
      %v6132 = vpop.f32.mrb[0].mxu0
      %6133 = vmatprep.mubr.f32.mxu0 0.0
      %6134 = vmatmul.mubr.f32.gmra.mrb[0].mxu0 %v4938
      %v6135 = vpop.f32.mrb[0].mxu0
      %v6136 = vadd.f32 0.0, %v6135
      %v6137 = vpop.f32.mrb[0].mxu0
      %6138 = vmatprep.mubr.f32.mxu0 0.0
      %6139 = vmatmul.mubr.f32.gmra.mrb[0].mxu0 %v4941
      %v6140 = vpop.f32.mrb[0].mxu0
      %v6141 = vadd.f32 0.0, %v6140
      %v6142 = vpop.f32.mrb[0].mxu0
      %6143 = vmatprep.mubr.f32.mxu0 0.0
      %6144 = vmatmul.mubr.f32.gmra.mrb[0].mxu0 %v4944
      %v6145 = vpop.f32.mrb[0].mxu0
      %v6146 = vadd.f32 0.0, %v6145
      %v6147 = vpop.f32.mrb[0].mxu0
      %6148 = vmatprep.mubr.f32.mxu0 0.0
      %6149 = vmatmul.mubr.f32.gmra.mrb[0].mxu0 %v4947
      %v6150 = vpop.f32.mrb[0].mxu0
      %v6151 = vadd.f32 0.0, %v6150
      %v6152 = vpop.f32.mrb[0].mxu0
      %6153 = vmatprep.mubr.f32.mxu0 0.0
      %6154 = vmatmul.mubr.f32.gmra.mrb[0].mxu0 %v4950
      %v6155 = vpop.f32.mrb[0].mxu0
      %v6156 = vadd.f32 0.0, %v6155
      %v6157 = vpop.f32.mrb[0].mxu0
      %6158 = vmatprep.mubr.f32.mxu0 0.0
      %6159 = vmatmul.mubr.f32.gmra.mrb[0].mxu0 %v4953
      %v6160 = vpop.f32.mrb[0].mxu0
      %v6161 = vadd.f32 0.0, %v6160
      %v6162 = vpop.f32.mrb[0].mxu0
      %6163 = vmatprep.mubr.f32.mxu0 0.0
      %6164 = vmatmul.mubr.f32.gmra.mrb[0].mxu0 %v4956
      %v6165 = vpop.f32.mrb[0].mxu0
      %v6166 = vadd.f32 0.0, %v6165
      %v6167 = vpop.f32.mrb[0].mxu0
      %6168 = vmatprep.mubr.f32.mxu0 0.0
      %6169 = vmatmul.mubr.f32.gmra.mrb[0].mxu0 %v4959
      %v6170 = vpop.f32.mrb[0].mxu0
      %v6171 = vadd.f32 0.0, %v6170
      %v6172 = vpop.f32.mrb[0].mxu0
      %6173 = vmatprep.mubr.f32.mxu0 0.0
      %6174 = vmatmul.mubr.f32.gmra.mrb[0].mxu0 %v4962
      %v6175 = vpop.f32.mrb[0].mxu0
      %v6176 = vadd.f32 0.0, %v6175
      %v6177 = vpop.f32.mrb[0].mxu0
      %6178 = vmatprep.mubr.f32.mxu0 0.0
      %6179 = vmatmul.mubr.f32.gmra.mrb[0].mxu0 %v4965
      %v6180 = vpop.f32.mrb[0].mxu0
      %v6181 = vadd.f32 0.0, %v6180
      %v6182 = vpop.f32.mrb[0].mxu0
      %6183 = vmatprep.mubr.f32.mxu0 0.0
      %6184 = vmatmul.mubr.f32.gmra.mrb[0].mxu0 %v4968
      %v6185 = vpop.f32.mrb[0].mxu0
      %v6186 = vadd.f32 0.0, %v6185
      %v6187 = vpop.f32.mrb[0].mxu0
      %6188 = vmatprep.mubr.f32.mxu0 0.0
      %6189 = vmatmul.mubr.f32.gmra.mrb[0].mxu0 %v4971
      %v6190 = vpop.f32.mrb[0].mxu0
      %v6191 = vadd.f32 0.0, %v6190
      %v6192 = vpop.f32.mrb[0].mxu0
      %6193 = vmatprep.mubr.f32.mxu0 0.0
      %6194 = vmatmul.mubr.f32.gmra.mrb[0].mxu0 %v4974
      %v6195 = vpop.f32.mrb[0].mxu0
      %v6196 = vadd.f32 0.0, %v6195
      %v6197 = vpop.f32.mrb[0].mxu0
      %6198 = vmatprep.mubr.f32.mxu0 0.0
      %6199 = vmatmul.mubr.f32.gmra.mrb[0].mxu0 %v4977
      %v6200 = vpop.f32.mrb[0].mxu0
      %v6201 = vadd.f32 0.0, %v6200
      %v6202 = vpop.f32.mrb[0].mxu0
      %6203 = vmatprep.mubr.f32.mxu0 0.0
      %6204 = vmatmul.mubr.f32.gmra.mrb[0].mxu0 %v4980
      %v6205 = vpop.f32.mrb[0].mxu0
      %v6206 = vadd.f32 0.0, %v6205
      %v6207 = vpop.f32.mrb[0].mxu0
      %6208 = vmatprep.mubr.f32.mxu0 0.0
      %6209 = vmatmul.mubr.f32.gmra.mrb[0].mxu0 %v4983
      %v6210 = vpop.f32.mrb[0].mxu0
      %v6211 = vadd.f32 0.0, %v6210
      %v6212 = vpop.f32.mrb[0].mxu0
      %6213 = vmatprep.mubr.f32.mxu0 0.0
      %6214 = vmatmul.mubr.f32.gmra.mrb[0].mxu0 %v4986
      %v6215 = vpop.f32.mrb[0].mxu0
      %v6216 = vadd.f32 0.0, %v6215
      %v6217 = vpop.f32.mrb[0].mxu0
      %6218 = vmatprep.mubr.f32.mxu0 0.0
      %6219 = vmatmul.mubr.f32.gmra.mrb[0].mxu0 %v4989
      %v6220 = vpop.f32.mrb[0].mxu0
      %v6221 = vadd.f32 0.0, %v6220
      %v6222 = vpop.f32.mrb[0].mxu0
      %6223 = vmatprep.mubr.f32.mxu0 0.0
      %6224 = vmatmul.mubr.f32.gmra.mrb[0].mxu0 %v4992
      %v6225 = vpop.f32.mrb[0].mxu0
      %v6226 = vadd.f32 0.0, %v6225
      %v6227 = vpop.f32.mrb[0].mxu0
      %6228 = vmatprep.mubr.f32.mxu0 0.0
      %6229 = vmatmul.mubr.f32.gmra.mrb[0].mxu0 %v4995
      %v6230 = vpop.f32.mrb[0].mxu0
      %v6231 = vadd.f32 0.0, %v6230
      %v6232 = vpop.f32.mrb[0].mxu0
      %6233 = vmatprep.mubr.f32.mxu0 0.0
      %6234 = vmatmul.mubr.f32.gmra.mrb[0].mxu0 %v4998
      %v6235 = vpop.f32.mrb[0].mxu0
      %v6236 = vadd.f32 0.0, %v6235
      %v6237 = vpop.f32.mrb[0].mxu0
      %6238 = vmatprep.mubr.f32.mxu0 0.0
      %6239 = vmatmul.mubr.f32.gmra.mrb[0].mxu0 %v5001
      %v6240 = vpop.f32.mrb[0].mxu0
      %v6241 = vadd.f32 0.0, %v6240
      %v6242 = vpop.f32.mrb[0].mxu0
      %6243 = vmatprep.mubr.f32.mxu0 0.0
      %6244 = vmatmul.mubr.f32.gmra.mrb[0].mxu0 %v5004
      %v6245 = vpop.f32.mrb[0].mxu0
      %v6246 = vadd.f32 0.0, %v6245
      %v6247 = vpop.f32.mrb[0].mxu0
      %6248 = vmatprep.mubr.f32.mxu0 0.0
      %6249 = vmatmul.mubr.f32.gmra.mrb[0].mxu0 %v5007
      %v6250 = vpop.f32.mrb[0].mxu0
      %v6251 = vadd.f32 0.0, %v6250
      %v6252 = vpop.f32.mrb[0].mxu0
      %6253 = vmatprep.mubr.f32.mxu0 0.0
      %6254 = vmatmul.mubr.f32.gmra.mrb[0].mxu0 %v5010
      %v6255 = vpop.f32.mrb[0].mxu0
      %v6256 = vadd.f32 0.0, %v6255
      %v6257 = vpop.f32.mrb[0].mxu0
      %6258 = vmatprep.mubr.f32.mxu0 0.0
      %6259 = vmatmul.mubr.f32.gmra.mrb[0].mxu0 %v5013
      %v6260 = vpop.f32.mrb[0].mxu0
      %v6261 = vadd.f32 0.0, %v6260
      %v6262 = vpop.f32.mrb[0].mxu0
      %6263 = vmatprep.mubr.f32.mxu0 0.0
      %6264 = vmatmul.mubr.f32.gmra.mrb[0].mxu0 %v5016
      %v6265 = vpop.f32.mrb[0].mxu0
      %v6266 = vadd.f32 0.0, %v6265
      %v6267 = vpop.f32.mrb[0].mxu0
      %6268 = vmatprep.mubr.f32.mxu0 0.0
      %6269 = vmatmul.mubr.f32.gmra.mrb[0].mxu0 %v5019
      %v6270 = vpop.f32.mrb[0].mxu0
      %v6271 = vadd.f32 0.0, %v6270
      %v6272 = vpop.f32.mrb[0].mxu0
      %6273 = vmatprep.mubr.f32.mxu0 0.0
      %6274 = vmatmul.mubr.f32.gmra.mrb[0].mxu0 %v5022
      %v6275 = vpop.f32.mrb[0].mxu0
      %v6276 = vadd.f32 0.0, %v6275
      %v6277 = vpop.f32.mrb[0].mxu0
      %6278 = vmatprep.mubr.f32.mxu0 0.0
      %6279 = vmatmul.mubr.f32.gmra.mrb[0].mxu0 %v5025
      %v6280 = vpop.f32.mrb[0].mxu0
      %v6281 = vadd.f32 0.0, %v6280
      %v6282 = vpop.f32.mrb[0].mxu0
      %6283 = vmatprep.mubr.f32.mxu0 0.0
      %6284 = vmatmul.mubr.f32.gmra.mrb[0].mxu0 %v5028
      %v6285 = vpop.f32.mrb[0].mxu0
      %v6286 = vadd.f32 0.0, %v6285
      %v6287 = vpop.f32.mrb[0].mxu0
      %6288 = vmatprep.mubr.f32.mxu0 0.0
      %6289 = vmatmul.mubr.f32.gmra.mrb[0].mxu0 %v5031
      %v6290 = vpop.f32.mrb[0].mxu0
      %v6291 = vadd.f32 0.0, %v6290
      %v6292 = vpop.f32.mrb[0].mxu0
      %6293 = vmatprep.mubr.f32.mxu0 0.0
      %6294 = vmatmul.mubr.f32.gmra.mrb[0].mxu0 %v5034
      %v6295 = vpop.f32.mrb[0].mxu0
      %v6296 = vadd.f32 0.0, %v6295
      %v6297 = vpop.f32.mrb[0].mxu0
      %6298 = vmatprep.mubr.f32.mxu0 0.0
      %6299 = vmatmul.mubr.f32.gmra.mrb[0].mxu0 %v5037
      %v6300 = vpop.f32.mrb[0].mxu0
      %v6301 = vadd.f32 0.0, %v6300
      %v6302 = vpop.f32.mrb[0].mxu0
      %6303 = vmatprep.mubr.f32.mxu0 0.0
      %6304 = vmatmul.mubr.f32.gmra.mrb[0].mxu0 %v5040
      %v6305 = vpop.f32.mrb[0].mxu0
      %v6306 = vadd.f32 0.0, %v6305
      %v6307 = vpop.f32.mrb[0].mxu0
      %6308 = vmatprep.mubr.f32.mxu0 0.0
      %6309 = vmatmul.mubr.f32.gmra.mrb[0].mxu0 %v5043
      %v6310 = vpop.f32.mrb[0].mxu0
      %v6311 = vadd.f32 0.0, %v6310
      %v6312 = vpop.f32.mrb[0].mxu0
      %6313 = vmatprep.mubr.f32.mxu0 0.0
      %6314 = vmatmul.mubr.f32.gmra.mrb[0].mxu0 %v5046
      %v6315 = vpop.f32.mrb[0].mxu0
      %v6316 = vadd.f32 0.0, %v6315
      %v6317 = vpop.f32.mrb[0].mxu0
      %6318 = vmatprep.mubr.f32.mxu0 0.0
      %6319 = vmatmul.mubr.f32.gmra.mrb[0].mxu0 %v5049
      %v6320 = vpop.f32.mrb[0].mxu0
      %v6321 = vadd.f32 0.0, %v6320
      %v6322 = vpop.f32.mrb[0].mxu0
      %6323 = vmatprep.mubr.f32.mxu0 0.0
      %6324 = vmatmul.mubr.f32.gmra.mrb[0].mxu0 %v5052
      %v6325 = vpop.f32.mrb[0].mxu0
      %v6326 = vadd.f32 0.0, %v6325
      %v6327 = vpop.f32.mrb[0].mxu0
      %6328 = vmatprep.mubr.f32.mxu0 0.0
      %6329 = vmatmul.mubr.f32.gmra.mrb[0].mxu0 %v5055
      %v6330 = vpop.f32.mrb[0].mxu0
      %v6331 = vadd.f32 0.0, %v6330
      %v6332 = vpop.f32.mrb[0].mxu0
      %6333 = vmatprep.mubr.f32.mxu0 0.0
      %6334 = vmatmul.mubr.f32.gmra.mrb[0].mxu0 %v5058
      %v6335 = vpop.f32.mrb[0].mxu0
      %v6336 = vadd.f32 0.0, %v6335
      %v6337 = vpop.f32.mrb[0].mxu0
      %6338 = vmatprep.mubr.f32.mxu0 0.0
      %6339 = vmatmul.mubr.f32.gmra.mrb[0].mxu0 %v5061
      %v6340 = vpop.f32.mrb[0].mxu0
      %v6341 = vadd.f32 0.0, %v6340
      %v6342 = vpop.f32.mrb[0].mxu0
      %6343 = vmatprep.mubr.f32.mxu0 0.0
      %6344 = vmatmul.mubr.f32.gmra.mrb[0].mxu0 %v5064
      %v6345 = vpop.f32.mrb[0].mxu0
      %v6346 = vadd.f32 0.0, %v6345
      %v6347 = vpop.f32.mrb[0].mxu0
      %6348 = vmatprep.mubr.f32.mxu0 0.0
      %6349 = vmatmul.mubr.f32.gmra.mrb[0].mxu0 %v5067
      %v6350 = vpop.f32.mrb[0].mxu0
      %v6351 = vadd.f32 0.0, %v6350
      %v6352 = vpop.f32.mrb[0].mxu0
      %6353 = vmatprep.mubr.f32.mxu0 0.0
      %6354 = vmatmul.mubr.f32.gmra.mrb[0].mxu0 %v5070
      %v6355 = vpop.f32.mrb[0].mxu0
      %v6356 = vadd.f32 0.0, %v6355
      %v6357 = vpop.f32.mrb[0].mxu0
      %6358 = vmatprep.mubr.f32.mxu0 0.0
      %6359 = vmatmul.mubr.f32.gmra.mrb[0].mxu0 %v5073
      %v6360 = vpop.f32.mrb[0].mxu0
      %v6361 = vadd.f32 0.0, %v6360
      %v6362 = vpop.f32.mrb[0].mxu0
      %6363 = vmatprep.mubr.f32.mxu0 0.0
      %6364 = vmatmul.mubr.f32.gmra.mrb[0].mxu0 %v5076
      %v6365 = vpop.f32.mrb[0].mxu0
      %v6366 = vadd.f32 0.0, %v6365
      %v6367 = vpop.f32.mrb[0].mxu0
      %6368 = vmatprep.mubr.f32.mxu0 0.0
      %6369 = vmatmul.mubr.f32.gmra.mrb[0].mxu0 %v5079
      %v6370 = vpop.f32.mrb[0].mxu0
      %v6371 = vadd.f32 0.0, %v6370
      %v6372 = vpop.f32.mrb[0].mxu0
      %6373 = vmatprep.mubr.f32.mxu0 0.0
      %6374 = vmatmul.mubr.f32.gmra.mrb[0].mxu0 %v5082
      %v6375 = vpop.f32.mrb[0].mxu0
      %v6376 = vadd.f32 0.0, %v6375
      %v6377 = vpop.f32.mrb[0].mxu0
      %6378 = vmatprep.mubr.f32.mxu0 0.0
      %6379 = vmatmul.mubr.f32.gmra.mrb[0].mxu0 %v5085
      %v6380 = vpop.f32.mrb[0].mxu0
      %v6381 = vadd.f32 0.0, %v6380
      %v6382 = vpop.f32.mrb[0].mxu0
      %6383 = vmatprep.mubr.f32.mxu0 0.0
      %6384 = vmatmul.mubr.f32.gmra.mrb[0].mxu0 %v5088
      %v6385 = vpop.f32.mrb[0].mxu0
      %v6386 = vadd.f32 0.0, %v6385
      %v6387 = vpop.f32.mrb[0].mxu0
      %6388 = vmatprep.mubr.f32.mxu0 0.0
      %6389 = vmatmul.mubr.f32.gmra.mrb[0].mxu0 %v5091
      %v6390 = vpop.f32.mrb[0].mxu0
      %v6391 = vadd.f32 0.0, %v6390
      %v6392 = vpop.f32.mrb[0].mxu0
      %6393 = vmatprep.mubr.f32.mxu0 0.0
      %6394 = vmatmul.mubr.f32.gmra.mrb[0].mxu0 %v5094
      %v6395 = vpop.f32.mrb[0].mxu0
      %v6396 = vadd.f32 0.0, %v6395
      %v6397 = vpop.f32.mrb[0].mxu0
      %6398 = vmatprep.mubr.f32.mxu0 0.0
      %6399 = vmatmul.mubr.f32.gmra.mrb[0].mxu0 %v5097
      %v6400 = vpop.f32.mrb[0].mxu0
      %v6401 = vadd.f32 0.0, %v6400
      %v6402 = vpop.f32.mrb[0].mxu0
      %6403 = vmatprep.mubr.f32.mxu0 0.0
      %6404 = vmatmul.mubr.f32.gmra.mrb[0].mxu0 %v5100
      %v6405 = vpop.f32.mrb[0].mxu0
      %v6406 = vadd.f32 0.0, %v6405
      %v6407 = vpop.f32.mrb[0].mxu0
      %6408 = vmatprep.mubr.f32.mxu0 0.0
      %6409 = vmatmul.mubr.f32.gmra.mrb[0].mxu0 %v5103
      %v6410 = vpop.f32.mrb[0].mxu0
      %v6411 = vadd.f32 0.0, %v6410
      %v6412 = vpop.f32.mrb[0].mxu0
      %6413 = vmatprep.mubr.f32.mxu0 0.0
      %6414 = vmatmul.mubr.f32.gmra.mrb[0].mxu0 %v5106
      %v6415 = vpop.f32.mrb[0].mxu0
      %v6416 = vadd.f32 0.0, %v6415
      %v6417 = vpop.f32.mrb[0].mxu0
      %6418 = vmatprep.mubr.f32.mxu0 0.0
      %6419 = vmatmul.mubr.f32.gmra.mrb[0].mxu0 %v5109
      %v6420 = vpop.f32.mrb[0].mxu0
      %v6421 = vadd.f32 0.0, %v6420
      %v6422 = vpop.f32.mrb[0].mxu0
      %6423 = vmatprep.mubr.f32.mxu0 0.0
      %6424 = vmatmul.mubr.f32.gmra.mrb[0].mxu0 %v5112
      %v6425 = vpop.f32.mrb[0].mxu0
      %v6426 = vadd.f32 0.0, %v6425
      %v6427 = vpop.f32.mrb[0].mxu0
      %6428 = vmatprep.mubr.f32.mxu0 0.0
      %6429 = vmatmul.mubr.f32.gmra.mrb[0].mxu0 %v5115
      %v6430 = vpop.f32.mrb[0].mxu0
      %v6431 = vadd.f32 0.0, %v6430
      %v6432 = vpop.f32.mrb[0].mxu0
      %6433 = vmatprep.mubr.f32.mxu0 0.0
      %6434 = vmatmul.mubr.f32.gmra.mrb[0].mxu0 %v5118
      %v6435 = vpop.f32.mrb[0].mxu0
      %v6436 = vadd.f32 0.0, %v6435
      %v6437 = vpop.f32.mrb[0].mxu0
      %6438 = vmatprep.mubr.f32.mxu0 0.0
      %6439 = vmatmul.mubr.f32.gmra.mrb[0].mxu0 %v5121
      %v6440 = vpop.f32.mrb[0].mxu0
      %v6441 = vadd.f32 0.0, %v6440
      %v6442 = vpop.f32.mrb[0].mxu0
      %6443 = vmatprep.mubr.f32.mxu0 0.0
      %6444 = vmatmul.mubr.f32.gmra.mrb[0].mxu0 %v5124
      %v6445 = vpop.f32.mrb[0].mxu0
      %v6446 = vadd.f32 0.0, %v6445
      %v6447 = vpop.f32.mrb[0].mxu0
      %6448 = vmatprep.mubr.f32.mxu0 0.0
      %6449 = vmatmul.mubr.f32.gmra.mrb[0].mxu0 %v5127
      %v6450 = vpop.f32.mrb[0].mxu0
      %v6451 = vadd.f32 0.0, %v6450
      %v6452 = vpop.f32.mrb[0].mxu0
      %6453 = vmatprep.mubr.f32.mxu0 0.0
      %6454 = vmatmul.mubr.f32.gmra.mrb[0].mxu0 %v5130
      %v6455 = vpop.f32.mrb[0].mxu0
      %v6456 = vadd.f32 0.0, %v6455
      %v6457 = vpop.f32.mrb[0].mxu0
      %6458 = vmatprep.mubr.f32.mxu0 0.0
      %6459 = vmatmul.mubr.f32.gmra.mrb[0].mxu0 %v5133
      %v6460 = vpop.f32.mrb[0].mxu0
      %v6461 = vadd.f32 0.0, %v6460
      %v6462 = vpop.f32.mrb[0].mxu0
      %6463 = vmatprep.mubr.f32.mxu0 0.0
      %6464 = vmatmul.mubr.f32.gmra.mrb[0].mxu0 %v5136
      %v6465 = vpop.f32.mrb[0].mxu0
      %v6466 = vadd.f32 0.0, %v6465
      %v6467 = vpop.f32.mrb[0].mxu0
      %6468 = vmatprep.mubr.f32.mxu0 0.0
      %6469 = vmatmul.mubr.f32.gmra.mrb[0].mxu0 %v5139
      %v6470 = vpop.f32.mrb[0].mxu0
      %v6471 = vadd.f32 0.0, %v6470
      %v6472 = vpop.f32.mrb[0].mxu0
      %6473 = vmatprep.mubr.f32.mxu0 0.0
      %6474 = vmatmul.mubr.f32.gmra.mrb[0].mxu0 %v5142
      %v6475 = vpop.f32.mrb[0].mxu0
      %v6476 = vadd.f32 0.0, %v6475
      %v6477 = vpop.f32.mrb[0].mxu0
      %6478 = vmatprep.mubr.f32.mxu0 0.0
      %6479 = vmatmul.mubr.f32.gmra.mrb[0].mxu0 %v5145
      %v6480 = vpop.f32.mrb[0].mxu0
      %v6481 = vadd.f32 0.0, %v6480
      %v6482 = vpop.f32.mrb[0].mxu0
      %6483 = vmatprep.mubr.f32.mxu0 0.0
      %6484 = vmatmul.mubr.f32.gmra.mrb[0].mxu0 %v5148
      %v6485 = vpop.f32.mrb[0].mxu0
      %v6486 = vadd.f32 0.0, %v6485
      %v6487 = vpop.f32.mrb[0].mxu0
      %6488 = vmatprep.mubr.f32.mxu0 0.0
      %6489 = vmatmul.mubr.f32.gmra.mrb[0].mxu0 %v5151
      %v6490 = vpop.f32.mrb[0].mxu0
      %v6491 = vadd.f32 0.0, %v6490
      %v6492 = vpop.f32.mrb[0].mxu0
      %6493 = vmatprep.mubr.f32.mxu0 0.0
      %6494 = vmatmul.mubr.f32.gmra.mrb[0].mxu0 %v5154
      %v6495 = vpop.f32.mrb[0].mxu0
      %v6496 = vadd.f32 0.0, %v6495
      %v6497 = vpop.f32.mrb[0].mxu0
      %6498 = vmatprep.mubr.f32.mxu0 0.0
      %6499 = vmatmul.mubr.f32.gmra.mrb[0].mxu0 %v5157
      %v6500 = vpop.f32.mrb[0].mxu0
      %v6501 = vadd.f32 0.0, %v6500
      %v6502 = vpop.f32.mrb[0].mxu0
      %6503 = vdwg.mxu0
      %v6504 = vmul.f32 %v5226, %v1316
      %v6505 = vmul.f32 %v5231, %v1321
      %v6506 = vmul.f32 %v5236, %v1326
      %v6507 = vmul.f32 %v5241, %v1331
      %v6508 = vmul.f32 %v5246, %v1336
      %v6509 = vmul.f32 %v5251, %v1341
      %v6510 = vmul.f32 %v5256, %v1346
      %v6511 = vmul.f32 %v5261, %v1351
      %v6512 = vmul.f32 %v5266, %v1356
      %v6513 = vmul.f32 %v5271, %v1361
      %v6514 = vmul.f32 %v5276, %v1366
      %v6515 = vmul.f32 %v5281, %v1371
      %v6516 = vmul.f32 %v5286, %v1376
      %v6517 = vmul.f32 %v5291, %v1381
      %v6518 = vmul.f32 %v5296, %v1386
      %v6519 = vmul.f32 %v5301, %v1391
      %v6520 = vmul.f32 %v5306, %v1396
      %v6521 = vmul.f32 %v5311, %v1401
      %v6522 = vmul.f32 %v5316, %v1406
      %v6523 = vmul.f32 %v5321, %v1411
      %v6524 = vmul.f32 %v5326, %v1416
      %v6525 = vmul.f32 %v5331, %v1421
      %v6526 = vmul.f32 %v5336, %v1426
      %v6527 = vmul.f32 %v5341, %v1431
      %v6528 = vmul.f32 %v5346, %v1436
      %v6529 = vmul.f32 %v5351, %v1441
      %v6530 = vmul.f32 %v5356, %v1446
      %v6531 = vmul.f32 %v5361, %v1451
      %v6532 = vmul.f32 %v5366, %v1456
      %v6533 = vmul.f32 %v5371, %v1461
      %v6534 = vmul.f32 %v5376, %v1466
      %v6535 = vmul.f32 %v5381, %v1471
      %v6536 = vmul.f32 %v5386, %v1476
      %v6537 = vmul.f32 %v5391, %v1481
      %v6538 = vmul.f32 %v5396, %v1486
      %v6539 = vmul.f32 %v5401, %v1491
      %v6540 = vmul.f32 %v5406, %v1496
      %v6541 = vmul.f32 %v5411, %v1501
      %v6542 = vmul.f32 %v5416, %v1506
      %v6543 = vmul.f32 %v5421, %v1511
      %v6544 = vmul.f32 %v5426, %v1516
      %v6545 = vmul.f32 %v5431, %v1521
      %v6546 = vmul.f32 %v5436, %v1526
      %v6547 = vmul.f32 %v5441, %v1531
      %v6548 = vmul.f32 %v5446, %v1536
      %v6549 = vmul.f32 %v5451, %v1541
      %v6550 = vmul.f32 %v5456, %v1546
      %v6551 = vmul.f32 %v5461, %v1551
      %v6552 = vmul.f32 %v5466, %v1556
      %v6553 = vmul.f32 %v5471, %v1561
      %v6554 = vmul.f32 %v5476, %v1566
      %v6555 = vmul.f32 %v5481, %v1571
      %v6556 = vmul.f32 %v5486, %v1576
      %v6557 = vmul.f32 %v5491, %v1581
      %v6558 = vmul.f32 %v5496, %v1586
      %v6559 = vmul.f32 %v5501, %v1591
      %v6560 = vmul.f32 %v5506, %v1596
      %v6561 = vmul.f32 %v5511, %v1601
      %v6562 = vmul.f32 %v5516, %v1606
      %v6563 = vmul.f32 %v5521, %v1611
      %v6564 = vmul.f32 %v5526, %v1616
      %v6565 = vmul.f32 %v5531, %v1621
      %v6566 = vmul.f32 %v5536, %v1626
      %v6567 = vmul.f32 %v5541, %v1631
      %v6568 = vmul.f32 %v5546, %v1636
      %v6569 = vmul.f32 %v5551, %v1641
      %v6570 = vmul.f32 %v5556, %v1646
      %v6571 = vmul.f32 %v5561, %v1651
      %v6572 = vmul.f32 %v5566, %v1656
      %v6573 = vmul.f32 %v5571, %v1661
      %v6574 = vmul.f32 %v5576, %v1666
      %v6575 = vmul.f32 %v5581, %v1671
      %v6576 = vmul.f32 %v5586, %v1676
      %v6577 = vmul.f32 %v5591, %v1681
      %v6578 = vmul.f32 %v5596, %v1686
      %v6579 = vmul.f32 %v5601, %v1691
      %v6580 = vmul.f32 %v5606, %v1696
      %v6581 = vmul.f32 %v5611, %v1701
      %v6582 = vmul.f32 %v5616, %v1706
      %v6583 = vmul.f32 %v5621, %v1711
      %v6584 = vmul.f32 %v5626, %v1716
      %v6585 = vmul.f32 %v5631, %v1721
      %v6586 = vmul.f32 %v5636, %v1726
      %v6587 = vmul.f32 %v5641, %v1731
      %v6588 = vmul.f32 %v5646, %v1736
      %v6589 = vmul.f32 %v5651, %v1741
      %v6590 = vmul.f32 %v5656, %v1746
      %v6591 = vmul.f32 %v5661, %v1751
      %v6592 = vmul.f32 %v5666, %v1756
      %v6593 = vmul.f32 %v5671, %v1761
      %v6594 = vmul.f32 %v5676, %v1766
      %v6595 = vmul.f32 %v5681, %v1771
      %v6596 = vmul.f32 %v5686, %v1776
      %v6597 = vmul.f32 %v5691, %v1781
      %v6598 = vmul.f32 %v5696, %v1786
      %v6599 = vmul.f32 %v5701, %v1791
      %v6600 = vmul.f32 %v5706, %v1796
      %v6601 = vmul.f32 %v5711, %v1801
      %v6602 = vmul.f32 %v5716, %v1806
      %v6603 = vmul.f32 %v5721, %v1811
      %v6604 = vmul.f32 %v5726, %v1816
      %v6605 = vmul.f32 %v5731, %v1821
      %v6606 = vmul.f32 %v5736, %v1826
      %v6607 = vmul.f32 %v5741, %v1831
      %v6608 = vmul.f32 %v5746, %v1836
      %v6609 = vmul.f32 %v5751, %v1841
      %v6610 = vmul.f32 %v5756, %v1846
      %v6611 = vmul.f32 %v5761, %v1851
      %v6612 = vmul.f32 %v5766, %v1856
      %v6613 = vmul.f32 %v5771, %v1861
      %v6614 = vmul.f32 %v5776, %v1866
      %v6615 = vmul.f32 %v5781, %v1871
      %v6616 = vmul.f32 %v5786, %v1876
      %v6617 = vmul.f32 %v5791, %v1881
      %v6618 = vmul.f32 %v5796, %v1886
      %v6619 = vmul.f32 %v5801, %v1891
      %v6620 = vmul.f32 %v5806, %v1896
      %v6621 = vmul.f32 %v5811, %v1901
      %v6622 = vmul.f32 %v5816, %v1906
      %v6623 = vmul.f32 %v5821, %v1911
      %v6624 = vmul.f32 %v5826, %v1916
      %v6625 = vmul.f32 %v5831, %v1921
      %v6626 = vmul.f32 %v5836, %v1926
      %v6627 = vmul.f32 %v5841, %v1931
      %v6628 = vmul.f32 %v5846, %v1936
      %v6629 = vmul.f32 %v5851, %v1941
      %v6630 = vmul.f32 %v5856, %v1946
      %v6631 = vmul.f32 %v5861, %v1951
      %v6632 = vmul.f32 %v5866, %v1956
      %v6633 = vmul.f32 %v5871, %v1961
      %v6634 = vmul.f32 %v5876, %v1966
      %v6635 = vmul.f32 %v5881, %v1971
      %v6636 = vmul.f32 %v5886, %v1976
      %v6637 = vmul.f32 %v5891, %v1981
      %v6638 = vmul.f32 %v5896, %v1986
      %v6639 = vmul.f32 %v5901, %v1991
      %v6640 = vmul.f32 %v5906, %v1996
      %v6641 = vmul.f32 %v5911, %v2001
      %v6642 = vmul.f32 %v5916, %v2006
      %v6643 = vmul.f32 %v5921, %v2011
      %v6644 = vmul.f32 %v5926, %v2016
      %v6645 = vmul.f32 %v5931, %v2021
      %v6646 = vmul.f32 %v5936, %v2026
      %v6647 = vmul.f32 %v5941, %v2031
      %v6648 = vmul.f32 %v5946, %v2036
      %v6649 = vmul.f32 %v5951, %v2041
      %v6650 = vmul.f32 %v5956, %v2046
      %v6651 = vmul.f32 %v5961, %v2051
      %v6652 = vmul.f32 %v5966, %v2056
      %v6653 = vmul.f32 %v5971, %v2061
      %v6654 = vmul.f32 %v5976, %v2066
      %v6655 = vmul.f32 %v5981, %v2071
      %v6656 = vmul.f32 %v5986, %v2076
      %v6657 = vmul.f32 %v5991, %v2081
      %v6658 = vmul.f32 %v5996, %v2086
      %v6659 = vmul.f32 %v6001, %v2091
      %v6660 = vmul.f32 %v6006, %v2096
      %v6661 = vmul.f32 %v6011, %v2101
      %v6662 = vmul.f32 %v6016, %v2106
      %v6663 = vmul.f32 %v6021, %v2111
      %v6664 = vmul.f32 %v6026, %v2116
      %v6665 = vmul.f32 %v6031, %v2121
      %v6666 = vmul.f32 %v6036, %v2126
      %v6667 = vmul.f32 %v6041, %v2131
      %v6668 = vmul.f32 %v6046, %v2136
      %v6669 = vmul.f32 %v6051, %v2141
      %v6670 = vmul.f32 %v6056, %v2146
      %v6671 = vmul.f32 %v6061, %v2151
      %v6672 = vmul.f32 %v6066, %v2156
      %v6673 = vmul.f32 %v6071, %v2161
      %v6674 = vmul.f32 %v6076, %v2166
      %v6675 = vmul.f32 %v6081, %v2171
      %v6676 = vmul.f32 %v6086, %v2176
      %v6677 = vmul.f32 %v6091, %v2181
      %v6678 = vmul.f32 %v6096, %v2186
      %v6679 = vmul.f32 %v6101, %v2191
      %v6680 = vmul.f32 %v6106, %v2196
      %v6681 = vmul.f32 %v6111, %v2201
      %v6682 = vmul.f32 %v6116, %v2206
      %v6683 = vmul.f32 %v6121, %v2211
      %v6684 = vmul.f32 %v6126, %v2216
      %v6685 = vmul.f32 %v6131, %v2221
      %v6686 = vmul.f32 %v6136, %v2226
      %v6687 = vmul.f32 %v6141, %v2231
      %v6688 = vmul.f32 %v6146, %v2236
      %v6689 = vmul.f32 %v6151, %v2241
      %v6690 = vmul.f32 %v6156, %v2246
      %v6691 = vmul.f32 %v6161, %v2251
      %v6692 = vmul.f32 %v6166, %v2256
      %v6693 = vmul.f32 %v6171, %v2261
      %v6694 = vmul.f32 %v6176, %v2266
      %v6695 = vmul.f32 %v6181, %v2271
      %v6696 = vmul.f32 %v6186, %v2276
      %v6697 = vmul.f32 %v6191, %v2281
      %v6698 = vmul.f32 %v6196, %v2286
      %v6699 = vmul.f32 %v6201, %v2291
      %v6700 = vmul.f32 %v6206, %v2296
      %v6701 = vmul.f32 %v6211, %v2301
      %v6702 = vmul.f32 %v6216, %v2306
      %v6703 = vmul.f32 %v6221, %v2311
      %v6704 = vmul.f32 %v6226, %v2316
      %v6705 = vmul.f32 %v6231, %v2321
      %v6706 = vmul.f32 %v6236, %v2326
      %v6707 = vmul.f32 %v6241, %v2331
      %v6708 = vmul.f32 %v6246, %v2336
      %v6709 = vmul.f32 %v6251, %v2341
      %v6710 = vmul.f32 %v6256, %v2346
      %v6711 = vmul.f32 %v6261, %v2351
      %v6712 = vmul.f32 %v6266, %v2356
      %v6713 = vmul.f32 %v6271, %v2361
      %v6714 = vmul.f32 %v6276, %v2366
      %v6715 = vmul.f32 %v6281, %v2371
      %v6716 = vmul.f32 %v6286, %v2376
      %v6717 = vmul.f32 %v6291, %v2381
      %v6718 = vmul.f32 %v6296, %v2386
      %v6719 = vmul.f32 %v6301, %v2391
      %v6720 = vmul.f32 %v6306, %v2396
      %v6721 = vmul.f32 %v6311, %v2401
      %v6722 = vmul.f32 %v6316, %v2406
      %v6723 = vmul.f32 %v6321, %v2411
      %v6724 = vmul.f32 %v6326, %v2416
      %v6725 = vmul.f32 %v6331, %v2421
      %v6726 = vmul.f32 %v6336, %v2426
      %v6727 = vmul.f32 %v6341, %v2431
      %v6728 = vmul.f32 %v6346, %v2436
      %v6729 = vmul.f32 %v6351, %v2441
      %v6730 = vmul.f32 %v6356, %v2446
      %v6731 = vmul.f32 %v6361, %v2451
      %v6732 = vmul.f32 %v6366, %v2456
      %v6733 = vmul.f32 %v6371, %v2461
      %v6734 = vmul.f32 %v6376, %v2466
      %v6735 = vmul.f32 %v6381, %v2471
      %v6736 = vmul.f32 %v6386, %v2476
      %v6737 = vmul.f32 %v6391, %v2481
      %v6738 = vmul.f32 %v6396, %v2486
      %v6739 = vmul.f32 %v6401, %v2491
      %v6740 = vmul.f32 %v6406, %v2496
      %v6741 = vmul.f32 %v6411, %v2501
      %v6742 = vmul.f32 %v6416, %v2506
      %v6743 = vmul.f32 %v6421, %v2511
      %v6744 = vmul.f32 %v6426, %v2516
      %v6745 = vmul.f32 %v6431, %v2521
      %v6746 = vmul.f32 %v6436, %v2526
      %v6747 = vmul.f32 %v6441, %v2531
      %v6748 = vmul.f32 %v6446, %v2536
      %v6749 = vmul.f32 %v6451, %v2541
      %v6750 = vmul.f32 %v6456, %v2546
      %v6751 = vmul.f32 %v6461, %v2551
      %v6752 = vmul.f32 %v6466, %v2556
      %v6753 = vmul.f32 %v6471, %v2561
      %v6754 = vmul.f32 %v6476, %v2566
      %v6755 = vmul.f32 %v6481, %v2571
      %v6756 = vmul.f32 %v6486, %v2576
      %v6757 = vmul.f32 %v6491, %v2581
      %v6758 = vmul.f32 %v6496, %v2586
      %v6759 = vmul.f32 %v6501, %v2591
      %vm6760 = vcmask 261120
      %6761 = vst.msk [vmem:[%s221] sm:$0xff] %vm6760, %v6504
      %6762 = vst.msk [vmem:[%s221 + $0x8] sm:$0xff] %vm6760, %v6505
      %6763 = vst.msk [vmem:[%s221 + $0x10] sm:$0xff] %vm6760, %v6506
      %6764 = vst.msk [vmem:[%s221 + $0x18] sm:$0xff] %vm6760, %v6507
      %6765 = vst.msk [vmem:[%s221 + $0x20] sm:$0xff] %vm6760, %v6508
      %6766 = vst.msk [vmem:[%s221 + $0x28] sm:$0xff] %vm6760, %v6509
      %6767 = vst.msk [vmem:[%s221 + $0x30] sm:$0xff] %vm6760, %v6510
      %6768 = vst.msk [vmem:[%s221 + $0x38] sm:$0xff] %vm6760, %v6511
      %6769 = vst.msk [vmem:[%s221 + $0x40] sm:$0xff] %vm6760, %v6512
      %6770 = vst.msk [vmem:[%s221 + $0x48] sm:$0xff] %vm6760, %v6513
      %6771 = vst.msk [vmem:[%s221 + $0x50] sm:$0xff] %vm6760, %v6514
      %6772 = vst.msk [vmem:[%s221 + $0x58] sm:$0xff] %vm6760, %v6515
      %6773 = vst.msk [vmem:[%s221 + $0x60] sm:$0xff] %vm6760, %v6516
      %6774 = vst.msk [vmem:[%s221 + $0x68] sm:$0xff] %vm6760, %v6517
      %6775 = vst.msk [vmem:[%s221 + $0x70] sm:$0xff] %vm6760, %v6518
      %6776 = vst.msk [vmem:[%s221 + $0x78] sm:$0xff] %vm6760, %v6519
      %6777 = vst.msk [vmem:[%s221 + $0x80] sm:$0xff] %vm6760, %v6520
      %6778 = vst.msk [vmem:[%s221 + $0x88] sm:$0xff] %vm6760, %v6521
      %6779 = vst.msk [vmem:[%s221 + $0x90] sm:$0xff] %vm6760, %v6522
      %6780 = vst.msk [vmem:[%s221 + $0x98] sm:$0xff] %vm6760, %v6523
      %6781 = vst.msk [vmem:[%s221 + $0xa0] sm:$0xff] %vm6760, %v6524
      %6782 = vst.msk [vmem:[%s221 + $0xa8] sm:$0xff] %vm6760, %v6525
      %6783 = vst.msk [vmem:[%s221 + $0xb0] sm:$0xff] %vm6760, %v6526
      %6784 = vst.msk [vmem:[%s221 + $0xb8] sm:$0xff] %vm6760, %v6527
      %6785 = vst.msk [vmem:[%s221 + $0xc0] sm:$0xff] %vm6760, %v6528
      %6786 = vst.msk [vmem:[%s221 + $0xc8] sm:$0xff] %vm6760, %v6529
      %6787 = vst.msk [vmem:[%s221 + $0xd0] sm:$0xff] %vm6760, %v6530
      %6788 = vst.msk [vmem:[%s221 + $0xd8] sm:$0xff] %vm6760, %v6531
      %6789 = vst.msk [vmem:[%s221 + $0xe0] sm:$0xff] %vm6760, %v6532
      %6790 = vst.msk [vmem:[%s221 + $0xe8] sm:$0xff] %vm6760, %v6533
      %6791 = vst.msk [vmem:[%s221 + $0xf0] sm:$0xff] %vm6760, %v6534
      %6792 = vst.msk [vmem:[%s221 + $0xf8] sm:$0xff] %vm6760, %v6535
      %6793 = vst.msk [vmem:[%s221 + $0x100] sm:$0xff] %vm6760, %v6536
      %6794 = vst.msk [vmem:[%s221 + $0x108] sm:$0xff] %vm6760, %v6537
      %6795 = vst.msk [vmem:[%s221 + $0x110] sm:$0xff] %vm6760, %v6538
      %6796 = vst.msk [vmem:[%s221 + $0x118] sm:$0xff] %vm6760, %v6539
      %6797 = vst.msk [vmem:[%s221 + $0x120] sm:$0xff] %vm6760, %v6540
      %6798 = vst.msk [vmem:[%s221 + $0x128] sm:$0xff] %vm6760, %v6541
      %6799 = vst.msk [vmem:[%s221 + $0x130] sm:$0xff] %vm6760, %v6542
      %6800 = vst.msk [vmem:[%s221 + $0x138] sm:$0xff] %vm6760, %v6543
      %6801 = vst.msk [vmem:[%s221 + $0x140] sm:$0xff] %vm6760, %v6544
      %6802 = vst.msk [vmem:[%s221 + $0x148] sm:$0xff] %vm6760, %v6545
      %6803 = vst.msk [vmem:[%s221 + $0x150] sm:$0xff] %vm6760, %v6546
      %6804 = vst.msk [vmem:[%s221 + $0x158] sm:$0xff] %vm6760, %v6547
      %6805 = vst.msk [vmem:[%s221 + $0x160] sm:$0xff] %vm6760, %v6548
      %6806 = vst.msk [vmem:[%s221 + $0x168] sm:$0xff] %vm6760, %v6549
      %6807 = vst.msk [vmem:[%s221 + $0x170] sm:$0xff] %vm6760, %v6550
      %6808 = vst.msk [vmem:[%s221 + $0x178] sm:$0xff] %vm6760, %v6551
      %6809 = vst.msk [vmem:[%s221 + $0x180] sm:$0xff] %vm6760, %v6552
      %6810 = vst.msk [vmem:[%s221 + $0x188] sm:$0xff] %vm6760, %v6553
      %6811 = vst.msk [vmem:[%s221 + $0x190] sm:$0xff] %vm6760, %v6554
      %6812 = vst.msk [vmem:[%s221 + $0x198] sm:$0xff] %vm6760, %v6555
      %6813 = vst.msk [vmem:[%s221 + $0x1a0] sm:$0xff] %vm6760, %v6556
      %6814 = vst.msk [vmem:[%s221 + $0x1a8] sm:$0xff] %vm6760, %v6557
      %6815 = vst.msk [vmem:[%s221 + $0x1b0] sm:$0xff] %vm6760, %v6558
      %6816 = vst.msk [vmem:[%s221 + $0x1b8] sm:$0xff] %vm6760, %v6559
      %6817 = vst.msk [vmem:[%s221 + $0x1c0] sm:$0xff] %vm6760, %v6560
      %6818 = vst.msk [vmem:[%s221 + $0x1c8] sm:$0xff] %vm6760, %v6561
      %6819 = vst.msk [vmem:[%s221 + $0x1d0] sm:$0xff] %vm6760, %v6562
      %6820 = vst.msk [vmem:[%s221 + $0x1d8] sm:$0xff] %vm6760, %v6563
      %6821 = vst.msk [vmem:[%s221 + $0x1e0] sm:$0xff] %vm6760, %v6564
      %6822 = vst.msk [vmem:[%s221 + $0x1e8] sm:$0xff] %vm6760, %v6565
      %6823 = vst.msk [vmem:[%s221 + $0x1f0] sm:$0xff] %vm6760, %v6566
      %6824 = vst.msk [vmem:[%s221 + $0x1f8] sm:$0xff] %vm6760, %v6567
      %6825 = vst.msk [vmem:[%s221 + $0x200] sm:$0xff] %vm6760, %v6568
      %6826 = vst.msk [vmem:[%s221 + $0x208] sm:$0xff] %vm6760, %v6569
      %6827 = vst.msk [vmem:[%s221 + $0x210] sm:$0xff] %vm6760, %v6570
      %6828 = vst.msk [vmem:[%s221 + $0x218] sm:$0xff] %vm6760, %v6571
      %6829 = vst.msk [vmem:[%s221 + $0x220] sm:$0xff] %vm6760, %v6572
      %6830 = vst.msk [vmem:[%s221 + $0x228] sm:$0xff] %vm6760, %v6573
      %6831 = vst.msk [vmem:[%s221 + $0x230] sm:$0xff] %vm6760, %v6574
      %6832 = vst.msk [vmem:[%s221 + $0x238] sm:$0xff] %vm6760, %v6575
      %6833 = vst.msk [vmem:[%s221 + $0x240] sm:$0xff] %vm6760, %v6576
      %6834 = vst.msk [vmem:[%s221 + $0x248] sm:$0xff] %vm6760, %v6577
      %6835 = vst.msk [vmem:[%s221 + $0x250] sm:$0xff] %vm6760, %v6578
      %6836 = vst.msk [vmem:[%s221 + $0x258] sm:$0xff] %vm6760, %v6579
      %6837 = vst.msk [vmem:[%s221 + $0x260] sm:$0xff] %vm6760, %v6580
      %6838 = vst.msk [vmem:[%s221 + $0x268] sm:$0xff] %vm6760, %v6581
      %6839 = vst.msk [vmem:[%s221 + $0x270] sm:$0xff] %vm6760, %v6582
      %6840 = vst.msk [vmem:[%s221 + $0x278] sm:$0xff] %vm6760, %v6583
      %6841 = vst.msk [vmem:[%s221 + $0x280] sm:$0xff] %vm6760, %v6584
      %6842 = vst.msk [vmem:[%s221 + $0x288] sm:$0xff] %vm6760, %v6585
      %6843 = vst.msk [vmem:[%s221 + $0x290] sm:$0xff] %vm6760, %v6586
      %6844 = vst.msk [vmem:[%s221 + $0x298] sm:$0xff] %vm6760, %v6587
      %6845 = vst.msk [vmem:[%s221 + $0x2a0] sm:$0xff] %vm6760, %v6588
      %6846 = vst.msk [vmem:[%s221 + $0x2a8] sm:$0xff] %vm6760, %v6589
      %6847 = vst.msk [vmem:[%s221 + $0x2b0] sm:$0xff] %vm6760, %v6590
      %6848 = vst.msk [vmem:[%s221 + $0x2b8] sm:$0xff] %vm6760, %v6591
      %6849 = vst.msk [vmem:[%s221 + $0x2c0] sm:$0xff] %vm6760, %v6592
      %6850 = vst.msk [vmem:[%s221 + $0x2c8] sm:$0xff] %vm6760, %v6593
      %6851 = vst.msk [vmem:[%s221 + $0x2d0] sm:$0xff] %vm6760, %v6594
      %6852 = vst.msk [vmem:[%s221 + $0x2d8] sm:$0xff] %vm6760, %v6595
      %6853 = vst.msk [vmem:[%s221 + $0x2e0] sm:$0xff] %vm6760, %v6596
      %6854 = vst.msk [vmem:[%s221 + $0x2e8] sm:$0xff] %vm6760, %v6597
      %6855 = vst.msk [vmem:[%s221 + $0x2f0] sm:$0xff] %vm6760, %v6598
      %6856 = vst.msk [vmem:[%s221 + $0x2f8] sm:$0xff] %vm6760, %v6599
      %6857 = vst.msk [vmem:[%s221 + $0x300] sm:$0xff] %vm6760, %v6600
      %6858 = vst.msk [vmem:[%s221 + $0x308] sm:$0xff] %vm6760, %v6601
      %6859 = vst.msk [vmem:[%s221 + $0x310] sm:$0xff] %vm6760, %v6602
      %6860 = vst.msk [vmem:[%s221 + $0x318] sm:$0xff] %vm6760, %v6603
      %6861 = vst.msk [vmem:[%s221 + $0x320] sm:$0xff] %vm6760, %v6604
      %6862 = vst.msk [vmem:[%s221 + $0x328] sm:$0xff] %vm6760, %v6605
      %6863 = vst.msk [vmem:[%s221 + $0x330] sm:$0xff] %vm6760, %v6606
      %6864 = vst.msk [vmem:[%s221 + $0x338] sm:$0xff] %vm6760, %v6607
      %6865 = vst.msk [vmem:[%s221 + $0x340] sm:$0xff] %vm6760, %v6608
      %6866 = vst.msk [vmem:[%s221 + $0x348] sm:$0xff] %vm6760, %v6609
      %6867 = vst.msk [vmem:[%s221 + $0x350] sm:$0xff] %vm6760, %v6610
      %6868 = vst.msk [vmem:[%s221 + $0x358] sm:$0xff] %vm6760, %v6611
      %6869 = vst.msk [vmem:[%s221 + $0x360] sm:$0xff] %vm6760, %v6612
      %6870 = vst.msk [vmem:[%s221 + $0x368] sm:$0xff] %vm6760, %v6613
      %6871 = vst.msk [vmem:[%s221 + $0x370] sm:$0xff] %vm6760, %v6614
      %6872 = vst.msk [vmem:[%s221 + $0x378] sm:$0xff] %vm6760, %v6615
      %6873 = vst.msk [vmem:[%s221 + $0x380] sm:$0xff] %vm6760, %v6616
      %6874 = vst.msk [vmem:[%s221 + $0x388] sm:$0xff] %vm6760, %v6617
      %6875 = vst.msk [vmem:[%s221 + $0x390] sm:$0xff] %vm6760, %v6618
      %6876 = vst.msk [vmem:[%s221 + $0x398] sm:$0xff] %vm6760, %v6619
      %6877 = vst.msk [vmem:[%s221 + $0x3a0] sm:$0xff] %vm6760, %v6620
      %6878 = vst.msk [vmem:[%s221 + $0x3a8] sm:$0xff] %vm6760, %v6621
      %6879 = vst.msk [vmem:[%s221 + $0x3b0] sm:$0xff] %vm6760, %v6622
      %6880 = vst.msk [vmem:[%s221 + $0x3b8] sm:$0xff] %vm6760, %v6623
      %6881 = vst.msk [vmem:[%s221 + $0x3c0] sm:$0xff] %vm6760, %v6624
      %6882 = vst.msk [vmem:[%s221 + $0x3c8] sm:$0xff] %vm6760, %v6625
      %6883 = vst.msk [vmem:[%s221 + $0x3d0] sm:$0xff] %vm6760, %v6626
      %6884 = vst.msk [vmem:[%s221 + $0x3d8] sm:$0xff] %vm6760, %v6627
      %6885 = vst.msk [vmem:[%s221 + $0x3e0] sm:$0xff] %vm6760, %v6628
      %6886 = vst.msk [vmem:[%s221 + $0x3e8] sm:$0xff] %vm6760, %v6629
      %6887 = vst.msk [vmem:[%s221 + $0x3f0] sm:$0xff] %vm6760, %v6630
      %6888 = vst.msk [vmem:[%s221 + $0x3f8] sm:$0xff] %vm6760, %v6631
      %6889 = vst.msk [vmem:[%s221 + $0x400] sm:$0xff] %vm6760, %v6632
      %6890 = vst.msk [vmem:[%s221 + $0x408] sm:$0xff] %vm6760, %v6633
      %6891 = vst.msk [vmem:[%s221 + $0x410] sm:$0xff] %vm6760, %v6634
      %6892 = vst.msk [vmem:[%s221 + $0x418] sm:$0xff] %vm6760, %v6635
      %6893 = vst.msk [vmem:[%s221 + $0x420] sm:$0xff] %vm6760, %v6636
      %6894 = vst.msk [vmem:[%s221 + $0x428] sm:$0xff] %vm6760, %v6637
      %6895 = vst.msk [vmem:[%s221 + $0x430] sm:$0xff] %vm6760, %v6638
      %6896 = vst.msk [vmem:[%s221 + $0x438] sm:$0xff] %vm6760, %v6639
      %6897 = vst.msk [vmem:[%s221 + $0x440] sm:$0xff] %vm6760, %v6640
      %6898 = vst.msk [vmem:[%s221 + $0x448] sm:$0xff] %vm6760, %v6641
      %6899 = vst.msk [vmem:[%s221 + $0x450] sm:$0xff] %vm6760, %v6642
      %6900 = vst.msk [vmem:[%s221 + $0x458] sm:$0xff] %vm6760, %v6643
      %6901 = vst.msk [vmem:[%s221 + $0x460] sm:$0xff] %vm6760, %v6644
      %6902 = vst.msk [vmem:[%s221 + $0x468] sm:$0xff] %vm6760, %v6645
      %6903 = vst.msk [vmem:[%s221 + $0x470] sm:$0xff] %vm6760, %v6646
      %6904 = vst.msk [vmem:[%s221 + $0x478] sm:$0xff] %vm6760, %v6647
      %6905 = vst.msk [vmem:[%s221 + $0x480] sm:$0xff] %vm6760, %v6648
      %6906 = vst.msk [vmem:[%s221 + $0x488] sm:$0xff] %vm6760, %v6649
      %6907 = vst.msk [vmem:[%s221 + $0x490] sm:$0xff] %vm6760, %v6650
      %6908 = vst.msk [vmem:[%s221 + $0x498] sm:$0xff] %vm6760, %v6651
      %6909 = vst.msk [vmem:[%s221 + $0x4a0] sm:$0xff] %vm6760, %v6652
      %6910 = vst.msk [vmem:[%s221 + $0x4a8] sm:$0xff] %vm6760, %v6653
      %6911 = vst.msk [vmem:[%s221 + $0x4b0] sm:$0xff] %vm6760, %v6654
      %6912 = vst.msk [vmem:[%s221 + $0x4b8] sm:$0xff] %vm6760, %v6655
      %6913 = vst.msk [vmem:[%s221 + $0x4c0] sm:$0xff] %vm6760, %v6656
      %6914 = vst.msk [vmem:[%s221 + $0x4c8] sm:$0xff] %vm6760, %v6657
      %6915 = vst.msk [vmem:[%s221 + $0x4d0] sm:$0xff] %vm6760, %v6658
      %6916 = vst.msk [vmem:[%s221 + $0x4d8] sm:$0xff] %vm6760, %v6659
      %6917 = vst.msk [vmem:[%s221 + $0x4e0] sm:$0xff] %vm6760, %v6660
      %6918 = vst.msk [vmem:[%s221 + $0x4e8] sm:$0xff] %vm6760, %v6661
      %6919 = vst.msk [vmem:[%s221 + $0x4f0] sm:$0xff] %vm6760, %v6662
      %6920 = vst.msk [vmem:[%s221 + $0x4f8] sm:$0xff] %vm6760, %v6663
      %6921 = vst.msk [vmem:[%s221 + $0x500] sm:$0xff] %vm6760, %v6664
      %6922 = vst.msk [vmem:[%s221 + $0x508] sm:$0xff] %vm6760, %v6665
      %6923 = vst.msk [vmem:[%s221 + $0x510] sm:$0xff] %vm6760, %v6666
      %6924 = vst.msk [vmem:[%s221 + $0x518] sm:$0xff] %vm6760, %v6667
      %6925 = vst.msk [vmem:[%s221 + $0x520] sm:$0xff] %vm6760, %v6668
      %6926 = vst.msk [vmem:[%s221 + $0x528] sm:$0xff] %vm6760, %v6669
      %6927 = vst.msk [vmem:[%s221 + $0x530] sm:$0xff] %vm6760, %v6670
      %6928 = vst.msk [vmem:[%s221 + $0x538] sm:$0xff] %vm6760, %v6671
      %6929 = vst.msk [vmem:[%s221 + $0x540] sm:$0xff] %vm6760, %v6672
      %6930 = vst.msk [vmem:[%s221 + $0x548] sm:$0xff] %vm6760, %v6673
      %6931 = vst.msk [vmem:[%s221 + $0x550] sm:$0xff] %vm6760, %v6674
      %6932 = vst.msk [vmem:[%s221 + $0x558] sm:$0xff] %vm6760, %v6675
      %6933 = vst.msk [vmem:[%s221 + $0x560] sm:$0xff] %vm6760, %v6676
      %6934 = vst.msk [vmem:[%s221 + $0x568] sm:$0xff] %vm6760, %v6677
      %6935 = vst.msk [vmem:[%s221 + $0x570] sm:$0xff] %vm6760, %v6678
      %6936 = vst.msk [vmem:[%s221 + $0x578] sm:$0xff] %vm6760, %v6679
      %6937 = vst.msk [vmem:[%s221 + $0x580] sm:$0xff] %vm6760, %v6680
      %6938 = vst.msk [vmem:[%s221 + $0x588] sm:$0xff] %vm6760, %v6681
      %6939 = vst.msk [vmem:[%s221 + $0x590] sm:$0xff] %vm6760, %v6682
      %6940 = vst.msk [vmem:[%s221 + $0x598] sm:$0xff] %vm6760, %v6683
      %6941 = vst.msk [vmem:[%s221 + $0x5a0] sm:$0xff] %vm6760, %v6684
      %6942 = vst.msk [vmem:[%s221 + $0x5a8] sm:$0xff] %vm6760, %v6685
      %6943 = vst.msk [vmem:[%s221 + $0x5b0] sm:$0xff] %vm6760, %v6686
      %6944 = vst.msk [vmem:[%s221 + $0x5b8] sm:$0xff] %vm6760, %v6687
      %6945 = vst.msk [vmem:[%s221 + $0x5c0] sm:$0xff] %vm6760, %v6688
      %6946 = vst.msk [vmem:[%s221 + $0x5c8] sm:$0xff] %vm6760, %v6689
      %6947 = vst.msk [vmem:[%s221 + $0x5d0] sm:$0xff] %vm6760, %v6690
      %6948 = vst.msk [vmem:[%s221 + $0x5d8] sm:$0xff] %vm6760, %v6691
      %6949 = vst.msk [vmem:[%s221 + $0x5e0] sm:$0xff] %vm6760, %v6692
      %6950 = vst.msk [vmem:[%s221 + $0x5e8] sm:$0xff] %vm6760, %v6693
      %6951 = vst.msk [vmem:[%s221 + $0x5f0] sm:$0xff] %vm6760, %v6694
      %6952 = vst.msk [vmem:[%s221 + $0x5f8] sm:$0xff] %vm6760, %v6695
      %6953 = vst.msk [vmem:[%s221 + $0x600] sm:$0xff] %vm6760, %v6696
      %6954 = vst.msk [vmem:[%s221 + $0x608] sm:$0xff] %vm6760, %v6697
      %6955 = vst.msk [vmem:[%s221 + $0x610] sm:$0xff] %vm6760, %v6698
      %6956 = vst.msk [vmem:[%s221 + $0x618] sm:$0xff] %vm6760, %v6699
      %6957 = vst.msk [vmem:[%s221 + $0x620] sm:$0xff] %vm6760, %v6700
      %6958 = vst.msk [vmem:[%s221 + $0x628] sm:$0xff] %vm6760, %v6701
      %6959 = vst.msk [vmem:[%s221 + $0x630] sm:$0xff] %vm6760, %v6702
      %6960 = vst.msk [vmem:[%s221 + $0x638] sm:$0xff] %vm6760, %v6703
      %6961 = vst.msk [vmem:[%s221 + $0x640] sm:$0xff] %vm6760, %v6704
      %6962 = vst.msk [vmem:[%s221 + $0x648] sm:$0xff] %vm6760, %v6705
      %6963 = vst.msk [vmem:[%s221 + $0x650] sm:$0xff] %vm6760, %v6706
      %6964 = vst.msk [vmem:[%s221 + $0x658] sm:$0xff] %vm6760, %v6707
      %6965 = vst.msk [vmem:[%s221 + $0x660] sm:$0xff] %vm6760, %v6708
      %6966 = vst.msk [vmem:[%s221 + $0x668] sm:$0xff] %vm6760, %v6709
      %6967 = vst.msk [vmem:[%s221 + $0x670] sm:$0xff] %vm6760, %v6710
      %6968 = vst.msk [vmem:[%s221 + $0x678] sm:$0xff] %vm6760, %v6711
      %6969 = vst.msk [vmem:[%s221 + $0x680] sm:$0xff] %vm6760, %v6712
      %6970 = vst.msk [vmem:[%s221 + $0x688] sm:$0xff] %vm6760, %v6713
      %6971 = vst.msk [vmem:[%s221 + $0x690] sm:$0xff] %vm6760, %v6714
      %6972 = vst.msk [vmem:[%s221 + $0x698] sm:$0xff] %vm6760, %v6715
      %6973 = vst.msk [vmem:[%s221 + $0x6a0] sm:$0xff] %vm6760, %v6716
      %6974 = vst.msk [vmem:[%s221 + $0x6a8] sm:$0xff] %vm6760, %v6717
      %6975 = vst.msk [vmem:[%s221 + $0x6b0] sm:$0xff] %vm6760, %v6718
      %6976 = vst.msk [vmem:[%s221 + $0x6b8] sm:$0xff] %vm6760, %v6719
      %6977 = vst.msk [vmem:[%s221 + $0x6c0] sm:$0xff] %vm6760, %v6720
      %6978 = vst.msk [vmem:[%s221 + $0x6c8] sm:$0xff] %vm6760, %v6721
      %6979 = vst.msk [vmem:[%s221 + $0x6d0] sm:$0xff] %vm6760, %v6722
      %6980 = vst.msk [vmem:[%s221 + $0x6d8] sm:$0xff] %vm6760, %v6723
      %6981 = vst.msk [vmem:[%s221 + $0x6e0] sm:$0xff] %vm6760, %v6724
      %6982 = vst.msk [vmem:[%s221 + $0x6e8] sm:$0xff] %vm6760, %v6725
      %6983 = vst.msk [vmem:[%s221 + $0x6f0] sm:$0xff] %vm6760, %v6726
      %6984 = vst.msk [vmem:[%s221 + $0x6f8] sm:$0xff] %vm6760, %v6727
      %6985 = vst.msk [vmem:[%s221 + $0x700] sm:$0xff] %vm6760, %v6728
      %6986 = vst.msk [vmem:[%s221 + $0x708] sm:$0xff] %vm6760, %v6729
      %6987 = vst.msk [vmem:[%s221 + $0x710] sm:$0xff] %vm6760, %v6730
      %6988 = vst.msk [vmem:[%s221 + $0x718] sm:$0xff] %vm6760, %v6731
      %6989 = vst.msk [vmem:[%s221 + $0x720] sm:$0xff] %vm6760, %v6732
      %6990 = vst.msk [vmem:[%s221 + $0x728] sm:$0xff] %vm6760, %v6733
      %6991 = vst.msk [vmem:[%s221 + $0x730] sm:$0xff] %vm6760, %v6734
      %6992 = vst.msk [vmem:[%s221 + $0x738] sm:$0xff] %vm6760, %v6735
      %6993 = vst.msk [vmem:[%s221 + $0x740] sm:$0xff] %vm6760, %v6736
      %6994 = vst.msk [vmem:[%s221 + $0x748] sm:$0xff] %vm6760, %v6737
      %6995 = vst.msk [vmem:[%s221 + $0x750] sm:$0xff] %vm6760, %v6738
      %6996 = vst.msk [vmem:[%s221 + $0x758] sm:$0xff] %vm6760, %v6739
      %6997 = vst.msk [vmem:[%s221 + $0x760] sm:$0xff] %vm6760, %v6740
      %6998 = vst.msk [vmem:[%s221 + $0x768] sm:$0xff] %vm6760, %v6741
      %6999 = vst.msk [vmem:[%s221 + $0x770] sm:$0xff] %vm6760, %v6742
      %7000 = vst.msk [vmem:[%s221 + $0x778] sm:$0xff] %vm6760, %v6743
      %7001 = vst.msk [vmem:[%s221 + $0x780] sm:$0xff] %vm6760, %v6744
      %7002 = vst.msk [vmem:[%s221 + $0x788] sm:$0xff] %vm6760, %v6745
      %7003 = vst.msk [vmem:[%s221 + $0x790] sm:$0xff] %vm6760, %v6746
      %7004 = vst.msk [vmem:[%s221 + $0x798] sm:$0xff] %vm6760, %v6747
      %7005 = vst.msk [vmem:[%s221 + $0x7a0] sm:$0xff] %vm6760, %v6748
      %7006 = vst.msk [vmem:[%s221 + $0x7a8] sm:$0xff] %vm6760, %v6749
      %7007 = vst.msk [vmem:[%s221 + $0x7b0] sm:$0xff] %vm6760, %v6750
      %7008 = vst.msk [vmem:[%s221 + $0x7b8] sm:$0xff] %vm6760, %v6751
      %7009 = vst.msk [vmem:[%s221 + $0x7c0] sm:$0xff] %vm6760, %v6752
      %7010 = vst.msk [vmem:[%s221 + $0x7c8] sm:$0xff] %vm6760, %v6753
      %7011 = vst.msk [vmem:[%s221 + $0x7d0] sm:$0xff] %vm6760, %v6754
      %7012 = vst.msk [vmem:[%s221 + $0x7d8] sm:$0xff] %vm6760, %v6755
      %7013 = vst.msk [vmem:[%s221 + $0x7e0] sm:$0xff] %vm6760, %v6756
      %7014 = vst.msk [vmem:[%s221 + $0x7e8] sm:$0xff] %vm6760, %v6757
      %7015 = vst.msk [vmem:[%s221 + $0x7f0] sm:$0xff] %vm6760, %v6758
      %7016 = vst.msk [vmem:[%s221 + $0x7f8] sm:$0xff] %vm6760, %v6759
      %s7017 = smul.u32 256, %s15
      %p7018 = scmp.lt.s32.totalorder %s7017, 511
      %s7019 = scalar_select %p7018, %s7017, 511
      %s7020 = smul.addr %s7019, 8
      %s7021 = scalar_lea.vmem %s4, %s7020
      // Predicated region
      $region37: #{tpu_custom_call.1} parent=35 // pred_check
        %p7022 = pneg %p127
      $region38: #{tpu_custom_call.1} parent=35 // pred_check_branch
        %7024 = sbr.rel (%p7022) target = $region40
      $region39: #{tpu_custom_call.1} parent=35 // pred_region
        %s7025 = smul.u32 256, %s15
      $region40: #{tpu_custom_call.1} parent=35 // pred_fallthru
        _
    $region36: #{tpu_custom_call.1} parent=5 // pred_fallthru
      _
    %p7026 = scmp.le.s32.totalorder 2, %s10
    // Predicated region
    $region41: #{tpu_custom_call.1} parent=5 // pred_check
      %p7027 = pneg %p7026
    $region42: #{tpu_custom_call.1} parent=5 // pred_check_branch
      %7029 = sbr.rel (%p7027) target = $region44
    $region43: #{tpu_custom_call.1} parent=5 // pred_region
      %s7030 = ssub.s32 %s10, 2
      // Predicated region
      $region45: #{tpu_custom_call.1} parent=43 // pred_check
        %p7031 = pneg %p133
      $region46: #{tpu_custom_call.1} parent=43 // pred_check_branch
        %7033 = sbr.rel (%p7031) target = $region48
      $region47: #{tpu_custom_call.1} parent=43 // pred_region
        %s7034 = smul.u32 256, %s16
        %p7035 = scmp.lt.s32.totalorder %s7034, 511
        %s7036 = scalar_select %p7035, %s7034, 511
        %s7037 = smul.addr %s7036, 8
        %s7038 = scalar_lea.vmem %s4, %s7037
      $region48: #{tpu_custom_call.1} parent=43 // pred_fallthru
        _
    $region44: #{tpu_custom_call.1} parent=5 // pred_fallthru
      _
  $region6: #{tpu_custom_call.1} parent=0 // loop_footer
    %s14 = sadd.s32 1, %s10
  $region7: #{tpu_custom_call.1} parent=0 // loop_footer_branch
    %9 = sbr.rel target = $region3
  $region8: #{tpu_custom_call.1} parent=0 // loop_exit
    _

</llo_original>
